<compile_context>
chip_gen: v5e
topology: v5e:2x2
jax: 0.10.0
libtpu: 0.0.40
codegen_flags: <defaults>
</compile_context>

<pallas_src>
import functools

import numpy as np
import jax
import jax.numpy as jnp
from jax import lax
from jax.experimental import pallas as pl
from jax.experimental.pallas import tpu as pltpu

NODE_TYPE_SIZE = 9          # common.NodeType.SIZE
OUTPUT_SIZE = 3             # 2D velocity + pressure (decoupled: model1 -> 2, model2 -> 1)
LATENT_SIZE = 128           # latent_size (reduced from default 256 for the small demo)
MP_STEPS = 2                # message_passing_steps (reduced from default 15 for the demo)
MAX_ROW_TILE = 512          # row tile for large inputs (keeps VMEM use ~3.5 MB)
LANE = 128                  # lane-dense output width
LN_EPS = 1e-5
STD_EPS = 1e-8
NUM_MODELS = 2              # model1 (velocity, 2 outputs) + model2 (pressure, 1 output)


def _round_up(x, m):
    return ((x + m - 1) // m) * m


def _pad_rows(m):
    """Pad a row count: multiple of 8 when it fits one tile, else of MAX_ROW_TILE."""
    if m <= MAX_ROW_TILE:
        return _round_up(m, 8)
    return _round_up(m, MAX_ROW_TILE)


# --------------------------------------------------------------------------
# Pallas kernel: fused 3-layer MLP over the two stacked models.
#   y = (relu(sum_k x_k @ W1_k + b1) @ W2 + b2) -> relu -> @ W3 + b3
#   [+ LayerNorm] [+ residual]
# Grid = (model, row_tile); weights stay resident across row tiles of a model;
# heavy matmuls (contraction dim >= 128) run in bf16 on the MXU with f32 acc.
# --------------------------------------------------------------------------
def _mxu_dot(a, b):
    if a.shape[-1] >= 128:                      # heavy matmul -> bf16 MXU path
        a = a.astype(jnp.bfloat16)
        b = b.astype(jnp.bfloat16)
    return jnp.dot(a, b, preferred_element_type=jnp.float32)


def _mlp_kernel(*refs, n_x, layer_norm, has_res):
    xs = refs[:n_x]
    w1s = refs[n_x:2 * n_x]
    i = 2 * n_x
    b1, w2, b2, w3, b3 = refs[i:i + 5]
    i += 5
    if layer_norm:
        gamma, beta = refs[i:i + 2]
        i += 2
    if has_res:
        res = refs[i]
        i += 1
    o_ref = refs[i]

    acc = _mxu_dot(xs[0][...], w1s[0][...])
    for k in range(1, n_x):
        acc = acc + _mxu_dot(xs[k][...], w1s[k][...])
    h = jnp.maximum(acc + b1[...], 0.0)
    h = jnp.maximum(_mxu_dot(h, w2[...]) + b2[...], 0.0)
    y = _mxu_dot(h, w3[...]) + b3[...]
    if layer_norm:                               # f32 LayerNorm
        mu = jnp.mean(y, axis=-1, keepdims=True)
        var = jnp.mean(jnp.square(y - mu), axis=-1, keepdims=True)
        y = (y - mu) * lax.rsqrt(var + LN_EPS) * gamma[...] + beta[...]
    if has_res:                                  # fused residual add
        y = y + res[...]
    o_ref[...] = y


def fused_mlp(xs, p, *, layer_norm, residual=None):
    """3-layer MLP applied to both stacked models in one pallas_call.

    xs       : list of inputs; each is (M, d_i) shared across models, or
               (2, M, d_i) per-model.  W1 is split per input (no concat).
    p        : stacked params (leading axis 2); p["w1"] is a list of blocks.
    residual : optional (2, M, dout) added to the output inside the kernel.
    returns  : (2, M, dout) float32.  M must be padded via _pad_rows().
    """
    m = xs[0].shape[-2]
    row_tile = m if m <= MAX_ROW_TILE else MAX_ROW_TILE
    assert m % row_tile == 0 and row_tile % 8 == 0, (m, row_tile)
    dh = p["w2"].shape[-1]
    dout = p["w3"].shape[-1]
    n_x = len(xs)
    has_res = residual is not None

    in_specs = []
    args = []
    for x in xs:
        d = x.shape[-1]
        if x.ndim == 2:          # shared across both models
            in_specs.append(pl.BlockSpec((row_tile, d), lambda mdl, i: (i, 0)))
        else:                    # per-model (leading dim squeezed in the kernel)
            in_specs.append(pl.BlockSpec((None, row_tile, d),
                                         lambda mdl, i: (mdl, i, 0)))
        args.append(x)

    def wspec(shape):
        return pl.BlockSpec((None,) + shape,
                            lambda mdl, i: (mdl,) + (0,) * len(shape))

    for w in p["w1"]:
        in_specs.append(wspec(w.shape[1:]))
        args.append(w)
    in_specs += [wspec((1, dh)), wspec((dh, dh)), wspec((1, dh)),
                 wspec((dh, dout)), wspec((1, dout))]
    args += [p["b1"], p["w2"], p["b2"], p["w3"], p["b3"]]
    if layer_norm:
        in_specs += [wspec((1, dout)), wspec((1, dout))]
        args += [p["gamma"], p["beta"]]
    if has_res:
        in_specs.append(pl.BlockSpec((None, row_tile, dout),
                                     lambda mdl, i: (mdl, i, 0)))
        args.append(residual)

    kernel = functools.partial(_mlp_kernel, n_x=n_x, layer_norm=layer_norm,
                               has_res=has_res)
    return pl.pallas_call(
        kernel,
        out_shape=jax.ShapeDtypeStruct((NUM_MODELS, m, dout), jnp.float32),
        grid=(NUM_MODELS, m // row_tile),
        in_specs=in_specs,
        out_specs=pl.BlockSpec((None, row_tile, dout),
                               lambda mdl, i: (mdl, i, 0)),
        compiler_params=pltpu.CompilerParams(
            dimension_semantics=("parallel", "parallel")),
    )(*args)


# --------------------------------------------------------------------------
# Parameter construction: the two decoupled models are stacked on a leading
# axis of size 2 so one pallas_call serves both.
# --------------------------------------------------------------------------
def init_mlp_pair(key, din_blocks, dh, douts, dout_pad, layer_norm):
    nb = len(din_blocks)
    ks = jax.random.split(key, 2 * (nb + 2))
    fan_in = float(sum(din_blocks))

    def one(mks, dout):
        w1 = [jax.random.normal(mks[j], (din_blocks[j], dh), jnp.float32)
              / np.sqrt(fan_in) for j in range(nb)]
        w2 = jax.random.normal(mks[nb], (dh, dh), jnp.float32) / np.sqrt(dh)
        w3 = jax.random.normal(mks[nb + 1], (dh, dout), jnp.float32) / np.sqrt(dh)
        w3 = jnp.pad(w3, ((0, 0), (0, dout_pad - dout)))   # lane-dense output
        return w1, w2, w3

    w1a, w2a, w3a = one(ks[:nb + 2], douts[0])
    w1b, w2b, w3b = one(ks[nb + 2:], douts[1])
    p = dict(
        w1=[jnp.stack([a, b]) for a, b in zip(w1a, w1b)],
        b1=jnp.zeros((NUM_MODELS, 1, dh), jnp.float32),
        w2=jnp.stack([w2a, w2b]),
        b2=jnp.zeros((NUM_MODELS, 1, dh), jnp.float32),
        w3=jnp.stack([w3a, w3b]),
        b3=jnp.zeros((NUM_MODELS, 1, dout_pad), jnp.float32),
    )
    if layer_norm:
        p["gamma"] = jnp.ones((NUM_MODELS, 1, dout_pad), jnp.float32)
        p["beta"] = jnp.zeros((NUM_MODELS, 1, dout_pad), jnp.float32)
    return p


def init_params(key):
    ks = jax.random.split(key, 3 + 2 * MP_STEPS)
    node_in = 1 + NODE_TYPE_SIZE
    edge_in = (OUTPUT_SIZE - 1) * 2 + 2
    L = LATENT_SIZE
    return dict(
        node_enc=init_mlp_pair(ks[0], [node_in], L, (L, L), L, True),
        edge_enc=init_mlp_pair(ks[1], [edge_in], L, (L, L), L, True),
        # decoder outputs: model1 -> 2 cols, model2 -> 1 col; padded to 128 lanes
        decoder=init_mlp_pair(ks[2], [L], L, (OUTPUT_SIZE - 1, 1), LANE, False),
        blocks=[dict(
            edge_mlp=init_mlp_pair(ks[3 + 2 * i], [L, L, L], L, (L, L), L, True),
            node_mlp=init_mlp_pair(ks[4 + 2 * i], [L, L], L, (L, L), L, True))
            for i in range(MP_STEPS)],
    )


# --------------------------------------------------------------------------
# Model pieces
# --------------------------------------------------------------------------
def normalizer(x):
    # Normalizer: (x - mean) / max(std, eps), stats from the current batch
    # (training-time first accumulate()); computed on the REAL rows only.
    mean = jnp.mean(x, axis=0, keepdims=True)
    var = jnp.maximum(jnp.mean(jnp.square(x), axis=0, keepdims=True)
                      - jnp.square(mean), 0.0)
    std = jnp.maximum(jnp.sqrt(var), STD_EPS)
    return (x - mean) / std


def encode_process_decode(nf_p, ef_p, senders_p, receivers_p, seg_ids, n_p, params):
    """Both decoupled models processed together; latents are (2, rows, L)."""
    node_lat = fused_mlp([nf_p], params["node_enc"], layer_norm=True)   # (2, Np, L)
    edge_lat = fused_mlp([ef_p], params["edge_enc"], layer_norm=True)   # (2, Ep, L)

    # O(E) 'sum' aggregation over (sorted) receivers; padded edges dump into a
    # padded node slot (seg id == n_real), accumulation stays in f32.
    segsum = jax.vmap(lambda d: jax.ops.segment_sum(
        d, seg_ids, num_segments=n_p, indices_are_sorted=True))

    for blk in params["blocks"]:
        s_lat = jnp.take(node_lat, senders_p, axis=1)                   # (2, Ep, L)
        r_lat = jnp.take(node_lat, receivers_p, axis=1)
        # split-W1 MLP: no (E, 3L) concat materialized; residual fused in-kernel
        edge_lat = fused_mlp([s_lat, r_lat, edge_lat], blk["edge_mlp"],
                             layer_norm=True, residual=edge_lat)
        agg = segsum(edge_lat)                                          # (2, Np, L)
        node_lat = fused_mlp([node_lat, agg], blk["node_mlp"],
                             layer_norm=True, residual=node_lat)
    # decoder (no LayerNorm); output padded to 128 lanes for a dense store
    return fused_mlp([node_lat], params["decoder"], layer_norm=False)   # (2, Np, 128)


def model_forward(inputs, senders, receivers, params):
    # ---- build_graph ----
    velocity = inputs["velocity"]                                  # (N, 1)
    node_type = inputs["node_type"]                                # (N, 1) int
    node_type_oh = jax.nn.one_hot(node_type[:, 0].astype(jnp.int32),
                                  NODE_TYPE_SIZE, dtype=jnp.float32)
    node_features = jnp.concatenate([velocity, node_type_oh], axis=-1)   # (N, 10)

    world_pos = inputs["world_pos"]
    mesh_pos = inputs["mesh_pos"]
    rel_wp = jnp.take(world_pos, senders, axis=0) - jnp.take(world_pos, receivers, axis=0)
    rel_mp = jnp.take(mesh_pos, senders, axis=0) - jnp.take(mesh_pos, receivers, axis=0)
    edge_features = jnp.concatenate(
        [rel_wp, jnp.linalg.norm(rel_wp, axis=-1, keepdims=True),
         rel_mp, jnp.linalg.norm(rel_mp, axis=-1, keepdims=True)], axis=-1)  # (E, 6)

    # ---- graph_normalization ----
    nf = normalizer(node_features)
    ef = normalizer(edge_features)

    # ---- pad once (loop-invariant); never re-padded inside the MP loop ----
    n = node_features.shape[0]
    e = senders.shape[0]
    n_p = _pad_rows(n + 1)    # >= n+1: guarantees a dump slot for padded edges
    e_p = _pad_rows(e)
    pad_e = e_p - e
    nf_p = jnp.pad(nf, ((0, n_p - n), (0, 0)))
    ef_p = jnp.pad(ef, ((0, pad_e), (0, 0)))
    senders_p = jnp.concatenate([senders, jnp.zeros((pad_e,), senders.dtype)])
    receivers_p = jnp.concatenate([receivers, jnp.zeros((pad_e,), receivers.dtype)])
    # segment ids for aggregation: padded edges -> first padded node slot (id n)
    seg_ids = jnp.concatenate([receivers, jnp.full((pad_e,), n, receivers.dtype)])

    # ---- decoupled learned models (fused: both run in the same kernels) ----
    dec = encode_process_decode(nf_p, ef_p, senders_p, receivers_p, seg_ids,
                                n_p, params)                       # (2, Np, 128)
    out1 = dec[0, :n, :OUTPUT_SIZE - 1]                            # (N, 2)
    out2 = dec[1, :n, :1]                                          # (N, 1)
    return jnp.concatenate([out1, out2], axis=-1)                  # (N, 3)


# --------------------------------------------------------------------------
# common.triangles_to_edges (type=3: mixed triangles + rectangles), numpy glue
# --------------------------------------------------------------------------
def triangles_to_edges_np(triangles, rectangles):
    e = []
    t = triangles
    e += [np.stack([t[:, 0], t[:, 1]], 1),
          np.stack([t[:, 1], t[:, 2]], 1),
          np.stack([t[:, 2], t[:, 0]], 1)]
    r = rectangles
    e += [np.stack([r[:, 0], r[:, 1]], 1),
          np.stack([r[:, 1], r[:, 2]], 1),
          np.stack([r[:, 2], r[:, 3]], 1),
          np.stack([r[:, 3], r[:, 0]], 1)]
    e = np.concatenate(e, axis=0).astype(np.int64)
    lo = np.minimum(e[:, 0], e[:, 1])
    hi = np.maximum(e[:, 0], e[:, 1])
    packed = np.unique(lo * 1_000_000 + hi)
    lo = (packed // 1_000_000).astype(np.int32)
    hi = (packed % 1_000_000).astype(np.int32)
    senders = np.concatenate([lo, hi])
    receivers = np.concatenate([hi, lo])
    # sort edges by receiver once (host side) so the segment-sum sees sorted ids
    # ('sum' aggregation is permutation-invariant, so semantics are unchanged)
    order = np.argsort(receivers, kind="stable")
    return senders[order], receivers[order]


# --------------------------------------------------------------------------
if __name__ == "__main__":
    key = jax.random.PRNGKey(0)
    grid_n = 8
    N = grid_n * grid_n  # 64 mesh nodes

    # structured mesh: 8x8 grid of nodes, quads + a strip split into triangles
    quads = []
    for rr in range(grid_n - 1):
        for cc in range(grid_n - 1):
            quads.append([rr * grid_n + cc, rr * grid_n + cc + 1,
                          (rr + 1) * grid_n + cc + 1, (rr + 1) * grid_n + cc])
    tri = []
    for a, b, c, d in quads[:8]:
        tri.append([a, b, c])
        tri.append([a, c, d])
    triangles = np.array(tri, dtype=np.int32)              # (16, 3)
    rectangles = np.array(quads[8:], dtype=np.int32)       # (41, 4)
    senders_np, receivers_np = triangles_to_edges_np(triangles, rectangles)

    keys = jax.random.split(key, 5)
    xs, ys = np.meshgrid(np.arange(grid_n, dtype=np.float32),
                         np.arange(grid_n, dtype=np.float32))
    mesh_pos = jnp.asarray(np.stack([xs.ravel(), ys.ravel()], -1))        # (64, 2)
    world_pos = mesh_pos + 0.05 * jax.random.normal(keys[0], (N, 2), jnp.float32)
    velocity = jax.random.normal(keys[1], (N, 1), jnp.float32)
    node_type = jax.random.randint(keys[2], (N, 1), 0, NODE_TYPE_SIZE).astype(jnp.int32)

    inputs = dict(velocity=velocity, node_type=node_type,
                  mesh_pos=mesh_pos, world_pos=world_pos)
    params = init_params(keys[3])

    senders = jnp.asarray(senders_np)
    receivers = jnp.asarray(receivers_np)

    fwd = jax.jit(model_forward)
    out = fwd(inputs, senders, receivers, params)   # training path: cat(out1, out2)
    out = jax.block_until_ready(out)

    assert out.shape == (N, OUTPUT_SIZE), out.shape
    assert bool(jnp.all(jnp.isfinite(out)))
    print("KERNEL_OK")
</pallas_src>

<mosaic_0001>
module attributes {stable_mosaic.version = 11 : i64} {
  func.func @_mlp_kernel(%arg0: i32, %arg1: i32, %arg2: memref<240x6xf32, #tpu.memory_space<vmem>>, %arg3: memref<1x6x128xf32, #tpu.memory_space<vmem>>, %arg4: memref<1x1x128xf32, #tpu.memory_space<vmem>>, %arg5: memref<1x128x128xf32, #tpu.memory_space<vmem>>, %arg6: memref<1x1x128xf32, #tpu.memory_space<vmem>>, %arg7: memref<1x128x128xf32, #tpu.memory_space<vmem>>, %arg8: memref<1x1x128xf32, #tpu.memory_space<vmem>>, %arg9: memref<1x1x128xf32, #tpu.memory_space<vmem>>, %arg10: memref<1x1x128xf32, #tpu.memory_space<vmem>>, %arg11: memref<1x240x128xf32, #tpu.memory_space<vmem>>) attributes {dimension_semantics = [#tpu.dimension_semantics<parallel>, #tpu.dimension_semantics<parallel>], iteration_bounds = array<i64: 2, 1>, scalar_prefetch = 0 : i64, scratch_operands = 0 : i64, tpu.core_type = #tpu.core_type<tc>, window_params = [{transform_indices = @transform_0, window_bounds = array<i64: 240, 6>}, {transform_indices = @transform_1, window_bounds = array<i64: 1, 6, 128>}, {transform_indices = @transform_2, window_bounds = array<i64: 1, 1, 128>}, {transform_indices = @transform_3, window_bounds = array<i64: 1, 128, 128>}, {transform_indices = @transform_4, window_bounds = array<i64: 1, 1, 128>}, {transform_indices = @transform_5, window_bounds = array<i64: 1, 128, 128>}, {transform_indices = @transform_6, window_bounds = array<i64: 1, 1, 128>}, {transform_indices = @transform_7, window_bounds = array<i64: 1, 1, 128>}, {transform_indices = @transform_8, window_bounds = array<i64: 1, 1, 128>}, {transform_indices = @transform_9, window_bounds = array<i64: 1, 240, 128>}]} {
    %c0 = arith.constant 0 : index
    %c0_0 = arith.constant 0 : index
    %0 = vector.load %arg2[%c0, %c0_0] : memref<240x6xf32, #tpu.memory_space<vmem>>, vector<240x6xf32>
    %c0_1 = arith.constant 0 : index
    %c0_2 = arith.constant 0 : index
    %c0_3 = arith.constant 0 : index
    %1 = vector.load %arg3[%c0_1, %c0_2, %c0_3] : memref<1x6x128xf32, #tpu.memory_space<vmem>>, vector<1x6x128xf32>
    %2 = vector.shape_cast %1 : vector<1x6x128xf32> to vector<6x128xf32>
    %cst = arith.constant dense<0.000000e+00> : vector<240x128xf32>
    %3 = tpu.matmul %0, %2, %cst {dimension_numbers = #tpu.dot_dimension_numbers<[1], [0], [0], [1], [0, 0, 1, 1], [], []>} : vector<240x6xf32>, vector<6x128xf32>, vector<240x128xf32> -> vector<240x128xf32>
    %c0_4 = arith.constant 0 : index
    %c0_5 = arith.constant 0 : index
    %c0_6 = arith.constant 0 : index
    %4 = vector.load %arg4[%c0_4, %c0_5, %c0_6] : memref<1x1x128xf32, #tpu.memory_space<vmem>>, vector<1x1x128xf32>
    %5 = vector.shape_cast %4 : vector<1x1x128xf32> to vector<1x128xf32>
    %6 = vector.broadcast %5 : vector<1x128xf32> to vector<240x128xf32>
    %7 = arith.addf %3, %6 : vector<240x128xf32>
    %cst_7 = arith.constant 0.000000e+00 : f32
    %8 = vector.broadcast %cst_7 : f32 to vector<240x128xf32>
    %9 = arith.maximumf %7, %8 : vector<240x128xf32>
    %c0_8 = arith.constant 0 : index
    %c0_9 = arith.constant 0 : index
    %c0_10 = arith.constant 0 : index
    %10 = vector.load %arg5[%c0_8, %c0_9, %c0_10] : memref<1x128x128xf32, #tpu.memory_space<vmem>>, vector<1x128x128xf32>
    %11 = vector.shape_cast %10 : vector<1x128x128xf32> to vector<128x128xf32>
    %12 = arith.truncf %9 : vector<240x128xf32> to vector<240x128xbf16>
    %13 = arith.truncf %11 : vector<128x128xf32> to vector<128x128xbf16>
    %cst_11 = arith.constant dense<0.000000e+00> : vector<240x128xf32>
    %14 = tpu.matmul %12, %13, %cst_11 {dimension_numbers = #tpu.dot_dimension_numbers<[1], [0], [0], [1], [0, 0, 1, 1], [], []>} : vector<240x128xbf16>, vector<128x128xbf16>, vector<240x128xf32> -> vector<240x128xf32>
    %c0_12 = arith.constant 0 : index
    %c0_13 = arith.constant 0 : index
    %c0_14 = arith.constant 0 : index
    %15 = vector.load %arg6[%c0_12, %c0_13, %c0_14] : memref<1x1x128xf32, #tpu.memory_space<vmem>>, vector<1x1x128xf32>
    %16 = vector.shape_cast %15 : vector<1x1x128xf32> to vector<1x128xf32>
    %17 = vector.broadcast %16 : vector<1x128xf32> to vector<240x128xf32>
    %18 = arith.addf %14, %17 : vector<240x128xf32>
    %cst_15 = arith.constant 0.000000e+00 : f32
    %19 = vector.broadcast %cst_15 : f32 to vector<240x128xf32>
    %20 = arith.maximumf %18, %19 : vector<240x128xf32>
    %c0_16 = arith.constant 0 : index
    %c0_17 = arith.constant 0 : index
    %c0_18 = arith.constant 0 : index
    %21 = vector.load %arg7[%c0_16, %c0_17, %c0_18] : memref<1x128x128xf32, #tpu.memory_space<vmem>>, vector<1x128x128xf32>
    %22 = vector.shape_cast %21 : vector<1x128x128xf32> to vector<128x128xf32>
    %23 = arith.truncf %20 : vector<240x128xf32> to vector<240x128xbf16>
    %24 = arith.truncf %22 : vector<128x128xf32> to vector<128x128xbf16>
    %cst_19 = arith.constant dense<0.000000e+00> : vector<240x128xf32>
    %25 = tpu.matmul %23, %24, %cst_19 {dimension_numbers = #tpu.dot_dimension_numbers<[1], [0], [0], [1], [0, 0, 1, 1], [], []>} : vector<240x128xbf16>, vector<128x128xbf16>, vector<240x128xf32> -> vector<240x128xf32>
    %c0_20 = arith.constant 0 : index
    %c0_21 = arith.constant 0 : index
    %c0_22 = arith.constant 0 : index
    %26 = vector.load %arg8[%c0_20, %c0_21, %c0_22] : memref<1x1x128xf32, #tpu.memory_space<vmem>>, vector<1x1x128xf32>
    %27 = vector.shape_cast %26 : vector<1x1x128xf32> to vector<1x128xf32>
    %28 = vector.broadcast %27 : vector<1x128xf32> to vector<240x128xf32>
    %29 = arith.addf %25, %28 : vector<240x128xf32>
    %cst_23 = arith.constant dense<0.000000e+00> : vector<240xf32>
    %30 = vector.multi_reduction <add>, %29, %cst_23 [1] : vector<240x128xf32> to vector<240xf32>
    %31 = vector.shape_cast %30 : vector<240xf32> to vector<240x1xf32>
    %cst_24 = arith.constant 1.280000e+02 : f32
    %32 = vector.broadcast %cst_24 : f32 to vector<240x1xf32>
    %33 = arith.divf %31, %32 : vector<240x1xf32>
    %34 = vector.broadcast %33 : vector<240x1xf32> to vector<240x128xf32>
    %35 = arith.subf %29, %34 : vector<240x128xf32>
    %36 = arith.mulf %35, %35 : vector<240x128xf32>
    %cst_25 = arith.constant dense<0.000000e+00> : vector<240xf32>
    %37 = vector.multi_reduction <add>, %36, %cst_25 [1] : vector<240x128xf32> to vector<240xf32>
    %38 = vector.shape_cast %37 : vector<240xf32> to vector<240x1xf32>
    %cst_26 = arith.constant 1.280000e+02 : f32
    %39 = vector.broadcast %cst_26 : f32 to vector<240x1xf32>
    %40 = arith.divf %38, %39 : vector<240x1xf32>
    %41 = vector.broadcast %33 : vector<240x1xf32> to vector<240x128xf32>
    %42 = arith.subf %29, %41 : vector<240x128xf32>
    %cst_27 = arith.constant 9.99999974E-6 : f32
    %43 = vector.broadcast %cst_27 : f32 to vector<240x1xf32>
    %44 = arith.addf %40, %43 : vector<240x1xf32>
    %45 = math.rsqrt %44 : vector<240x1xf32>
    %46 = vector.broadcast %45 : vector<240x1xf32> to vector<240x128xf32>
    %47 = arith.mulf %42, %46 : vector<240x128xf32>
    %c0_28 = arith.constant 0 : index
    %c0_29 = arith.constant 0 : index
    %c0_30 = arith.constant 0 : index
    %48 = vector.load %arg9[%c0_28, %c0_29, %c0_30] : memref<1x1x128xf32, #tpu.memory_space<vmem>>, vector<1x1x128xf32>
    %49 = vector.shape_cast %48 : vector<1x1x128xf32> to vector<1x128xf32>
    %50 = vector.broadcast %49 : vector<1x128xf32> to vector<240x128xf32>
    %51 = arith.mulf %47, %50 : vector<240x128xf32>
    %c0_31 = arith.constant 0 : index
    %c0_32 = arith.constant 0 : index
    %c0_33 = arith.constant 0 : index
    %52 = vector.load %arg10[%c0_31, %c0_32, %c0_33] : memref<1x1x128xf32, #tpu.memory_space<vmem>>, vector<1x1x128xf32>
    %53 = vector.shape_cast %52 : vector<1x1x128xf32> to vector<1x128xf32>
    %54 = vector.broadcast %53 : vector<1x128xf32> to vector<240x128xf32>
    %55 = arith.addf %51, %54 : vector<240x128xf32>
    %c0_34 = arith.constant 0 : index
    %c0_35 = arith.constant 0 : index
    %c0_36 = arith.constant 0 : index
    %56 = vector.load %arg11[%c0_34, %c0_35, %c0_36] : memref<1x240x128xf32, #tpu.memory_space<vmem>>, vector<1x240x128xf32>
    %57 = vector.shape_cast %56 : vector<1x240x128xf32> to vector<240x128xf32>
    %58 = vector.shape_cast %55 : vector<240x128xf32> to vector<1x240x128xf32>
    tpu.vector_store %arg11[%c0_34, %c0_35, %c0_36], %58 {strides = array<i32>} : memref<1x240x128xf32, #tpu.memory_space<vmem>>, vector<1x240x128xf32>,
    return
  }
  func.func @transform_0(%arg0: i32, %arg1: i32) -> (i32, i32) {
    %c0_i32 = arith.constant 0 : i32
    %c0_i32_0 = arith.constant 0 : i32
    return %arg1, %c0_i32 : i32, i32
  }
  func.func @transform_1(%arg0: i32, %arg1: i32) -> (i32, i32, i32) {
    %c0_i32 = arith.constant 0 : i32
    %c0_i32_0 = arith.constant 0 : i32
    %c0_i32_1 = arith.constant 0 : i32
    return %arg0, %c0_i32, %c0_i32_0 : i32, i32, i32
  }
  func.func @transform_2(%arg0: i32, %arg1: i32) -> (i32, i32, i32) {
    %c0_i32 = arith.constant 0 : i32
    %c0_i32_0 = arith.constant 0 : i32
    %c0_i32_1 = arith.constant 0 : i32
    return %arg0, %c0_i32, %c0_i32_0 : i32, i32, i32
  }
  func.func @transform_3(%arg0: i32, %arg1: i32) -> (i32, i32, i32) {
    %c0_i32 = arith.constant 0 : i32
    %c0_i32_0 = arith.constant 0 : i32
    %c0_i32_1 = arith.constant 0 : i32
    return %arg0, %c0_i32, %c0_i32_0 : i32, i32, i32
  }
  func.func @transform_4(%arg0: i32, %arg1: i32) -> (i32, i32, i32) {
    %c0_i32 = arith.constant 0 : i32
    %c0_i32_0 = arith.constant 0 : i32
    %c0_i32_1 = arith.constant 0 : i32
    return %arg0, %c0_i32, %c0_i32_0 : i32, i32, i32
  }
  func.func @transform_5(%arg0: i32, %arg1: i32) -> (i32, i32, i32) {
    %c0_i32 = arith.constant 0 : i32
    %c0_i32_0 = arith.constant 0 : i32
    %c0_i32_1 = arith.constant 0 : i32
    return %arg0, %c0_i32, %c0_i32_0 : i32, i32, i32
  }
  func.func @transform_6(%arg0: i32, %arg1: i32) -> (i32, i32, i32) {
    %c0_i32 = arith.constant 0 : i32
    %c0_i32_0 = arith.constant 0 : i32
    %c0_i32_1 = arith.constant 0 : i32
    return %arg0, %c0_i32, %c0_i32_0 : i32, i32, i32
  }
  func.func @transform_7(%arg0: i32, %arg1: i32) -> (i32, i32, i32) {
    %c0_i32 = arith.constant 0 : i32
    %c0_i32_0 = arith.constant 0 : i32
    %c0_i32_1 = arith.constant 0 : i32
    return %arg0, %c0_i32, %c0_i32_0 : i32, i32, i32
  }
  func.func @transform_8(%arg0: i32, %arg1: i32) -> (i32, i32, i32) {
    %c0_i32 = arith.constant 0 : i32
    %c0_i32_0 = arith.constant 0 : i32
    %c0_i32_1 = arith.constant 0 : i32
    return %arg0, %c0_i32, %c0_i32_0 : i32, i32, i32
  }
  func.func @transform_9(%arg0: i32, %arg1: i32) -> (i32, i32, i32) {
    %c0_i32 = arith.constant 0 : i32
    %c0_i32_0 = arith.constant 0 : i32
    return %arg0, %arg1, %c0_i32 : i32, i32, i32
  }
}

module attributes {stable_mosaic.version = 11 : i64} {
  func.func @_mlp_kernel(%arg0: i32, %arg1: i32, %arg2: memref<72x10xf32, #tpu.memory_space<vmem>>, %arg3: memref<1x10x128xf32, #tpu.memory_space<vmem>>, %arg4: memref<1x1x128xf32, #tpu.memory_space<vmem>>, %arg5: memref<1x128x128xf32, #tpu.memory_space<vmem>>, %arg6: memref<1x1x128xf32, #tpu.memory_space<vmem>>, %arg7: memref<1x128x128xf32, #tpu.memory_space<vmem>>, %arg8: memref<1x1x128xf32, #tpu.memory_space<vmem>>, %arg9: memref<1x1x128xf32, #tpu.memory_space<vmem>>, %arg10: memref<1x1x128xf32, #tpu.memory_space<vmem>>, %arg11: memref<1x72x128xf32, #tpu.memory_space<vmem>>) attributes {dimension_semantics = [#tpu.dimension_semantics<parallel>, #tpu.dimension_semantics<parallel>], iteration_bounds = array<i64: 2, 1>, scalar_prefetch = 0 : i64, scratch_operands = 0 : i64, tpu.core_type = #tpu.core_type<tc>, window_params = [{transform_indices = @transform_0, window_bounds = array<i64: 72, 10>}, {transform_indices = @transform_1, window_bounds = array<i64: 1, 10, 128>}, {transform_indices = @transform_2, window_bounds = array<i64: 1, 1, 128>}, {transform_indices = @transform_3, window_bounds = array<i64: 1, 128, 128>}, {transform_indices = @transform_4, window_bounds = array<i64: 1, 1, 128>}, {transform_indices = @transform_5, window_bounds = array<i64: 1, 128, 128>}, {transform_indices = @transform_6, window_bounds = array<i64: 1, 1, 128>}, {transform_indices = @transform_7, window_bounds = array<i64: 1, 1, 128>}, {transform_indices = @transform_8, window_bounds = array<i64: 1, 1, 128>}, {transform_indices = @transform_9, window_bounds = array<i64: 1, 72, 128>}]} {
    %c0 = arith.constant 0 : index
    %c0_0 = arith.constant 0 : index
    %0 = vector.load %arg2[%c0, %c0_0] : memref<72x10xf32, #tpu.memory_space<vmem>>, vector<72x10xf32>
    %c0_1 = arith.constant 0 : index
    %c0_2 = arith.constant 0 : index
    %c0_3 = arith.constant 0 : index
    %1 = vector.load %arg3[%c0_1, %c0_2, %c0_3] : memref<1x10x128xf32, #tpu.memory_space<vmem>>, vector<1x10x128xf32>
    %2 = vector.shape_cast %1 : vector<1x10x128xf32> to vector<10x128xf32>
    %cst = arith.constant dense<0.000000e+00> : vector<72x128xf32>
    %3 = tpu.matmul %0, %2, %cst {dimension_numbers = #tpu.dot_dimension_numbers<[1], [0], [0], [1], [0, 0, 1, 1], [], []>} : vector<72x10xf32>, vector<10x128xf32>, vector<72x128xf32> -> vector<72x128xf32>
    %c0_4 = arith.constant 0 : index
    %c0_5 = arith.constant 0 : index
    %c0_6 = arith.constant 0 : index
    %4 = vector.load %arg4[%c0_4, %c0_5, %c0_6] : memref<1x1x128xf32, #tpu.memory_space<vmem>>, vector<1x1x128xf32>
    %5 = vector.shape_cast %4 : vector<1x1x128xf32> to vector<1x128xf32>
    %6 = vector.broadcast %5 : vector<1x128xf32> to vector<72x128xf32>
    %7 = arith.addf %3, %6 : vector<72x128xf32>
    %cst_7 = arith.constant 0.000000e+00 : f32
    %8 = vector.broadcast %cst_7 : f32 to vector<72x128xf32>
    %9 = arith.maximumf %7, %8 : vector<72x128xf32>
    %c0_8 = arith.constant 0 : index
    %c0_9 = arith.constant 0 : index
    %c0_10 = arith.constant 0 : index
    %10 = vector.load %arg5[%c0_8, %c0_9, %c0_10] : memref<1x128x128xf32, #tpu.memory_space<vmem>>, vector<1x128x128xf32>
    %11 = vector.shape_cast %10 : vector<1x128x128xf32> to vector<128x128xf32>
    %12 = arith.truncf %9 : vector<72x128xf32> to vector<72x128xbf16>
    %13 = arith.truncf %11 : vector<128x128xf32> to vector<128x128xbf16>
    %cst_11 = arith.constant dense<0.000000e+00> : vector<72x128xf32>
    %14 = tpu.matmul %12, %13, %cst_11 {dimension_numbers = #tpu.dot_dimension_numbers<[1], [0], [0], [1], [0, 0, 1, 1], [], []>} : vector<72x128xbf16>, vector<128x128xbf16>, vector<72x128xf32> -> vector<72x128xf32>
    %c0_12 = arith.constant 0 : index
    %c0_13 = arith.constant 0 : index
    %c0_14 = arith.constant 0 : index
    %15 = vector.load %arg6[%c0_12, %c0_13, %c0_14] : memref<1x1x128xf32, #tpu.memory_space<vmem>>, vector<1x1x128xf32>
    %16 = vector.shape_cast %15 : vector<1x1x128xf32> to vector<1x128xf32>
    %17 = vector.broadcast %16 : vector<1x128xf32> to vector<72x128xf32>
    %18 = arith.addf %14, %17 : vector<72x128xf32>
    %cst_15 = arith.constant 0.000000e+00 : f32
    %19 = vector.broadcast %cst_15 : f32 to vector<72x128xf32>
    %20 = arith.maximumf %18, %19 : vector<72x128xf32>
    %c0_16 = arith.constant 0 : index
    %c0_17 = arith.constant 0 : index
    %c0_18 = arith.constant 0 : index
    %21 = vector.load %arg7[%c0_16, %c0_17, %c0_18] : memref<1x128x128xf32, #tpu.memory_space<vmem>>, vector<1x128x128xf32>
    %22 = vector.shape_cast %21 : vector<1x128x128xf32> to vector<128x128xf32>
    %23 = arith.truncf %20 : vector<72x128xf32> to vector<72x128xbf16>
    %24 = arith.truncf %22 : vector<128x128xf32> to vector<128x128xbf16>
    %cst_19 = arith.constant dense<0.000000e+00> : vector<72x128xf32>
    %25 = tpu.matmul %23, %24, %cst_19 {dimension_numbers = #tpu.dot_dimension_numbers<[1], [0], [0], [1], [0, 0, 1, 1], [], []>} : vector<72x128xbf16>, vector<128x128xbf16>, vector<72x128xf32> -> vector<72x128xf32>
    %c0_20 = arith.constant 0 : index
    %c0_21 = arith.constant 0 : index
    %c0_22 = arith.constant 0 : index
    %26 = vector.load %arg8[%c0_20, %c0_21, %c0_22] : memref<1x1x128xf32, #tpu.memory_space<vmem>>, vector<1x1x128xf32>
    %27 = vector.shape_cast %26 : vector<1x1x128xf32> to vector<1x128xf32>
    %28 = vector.broadcast %27 : vector<1x128xf32> to vector<72x128xf32>
    %29 = arith.addf %25, %28 : vector<72x128xf32>
    %cst_23 = arith.constant dense<0.000000e+00> : vector<72xf32>
    %30 = vector.multi_reduction <add>, %29, %cst_23 [1] : vector<72x128xf32> to vector<72xf32>
    %31 = vector.shape_cast %30 : vector<72xf32> to vector<72x1xf32>
    %cst_24 = arith.constant 1.280000e+02 : f32
    %32 = vector.broadcast %cst_24 : f32 to vector<72x1xf32>
    %33 = arith.divf %31, %32 : vector<72x1xf32>
    %34 = vector.broadcast %33 : vector<72x1xf32> to vector<72x128xf32>
    %35 = arith.subf %29, %34 : vector<72x128xf32>
    %36 = arith.mulf %35, %35 : vector<72x128xf32>
    %cst_25 = arith.constant dense<0.000000e+00> : vector<72xf32>
    %37 = vector.multi_reduction <add>, %36, %cst_25 [1] : vector<72x128xf32> to vector<72xf32>
    %38 = vector.shape_cast %37 : vector<72xf32> to vector<72x1xf32>
    %cst_26 = arith.constant 1.280000e+02 : f32
    %39 = vector.broadcast %cst_26 : f32 to vector<72x1xf32>
    %40 = arith.divf %38, %39 : vector<72x1xf32>
    %41 = vector.broadcast %33 : vector<72x1xf32> to vector<72x128xf32>
    %42 = arith.subf %29, %41 : vector<72x128xf32>
    %cst_27 = arith.constant 9.99999974E-6 : f32
    %43 = vector.broadcast %cst_27 : f32 to vector<72x1xf32>
    %44 = arith.addf %40, %43 : vector<72x1xf32>
    %45 = math.rsqrt %44 : vector<72x1xf32>
    %46 = vector.broadcast %45 : vector<72x1xf32> to vector<72x128xf32>
    %47 = arith.mulf %42, %46 : vector<72x128xf32>
    %c0_28 = arith.constant 0 : index
    %c0_29 = arith.constant 0 : index
    %c0_30 = arith.constant 0 : index
    %48 = vector.load %arg9[%c0_28, %c0_29, %c0_30] : memref<1x1x128xf32, #tpu.memory_space<vmem>>, vector<1x1x128xf32>
    %49 = vector.shape_cast %48 : vector<1x1x128xf32> to vector<1x128xf32>
    %50 = vector.broadcast %49 : vector<1x128xf32> to vector<72x128xf32>
    %51 = arith.mulf %47, %50 : vector<72x128xf32>
    %c0_31 = arith.constant 0 : index
    %c0_32 = arith.constant 0 : index
    %c0_33 = arith.constant 0 : index
    %52 = vector.load %arg10[%c0_31, %c0_32, %c0_33] : memref<1x1x128xf32, #tpu.memory_space<vmem>>, vector<1x1x128xf32>
    %53 = vector.shape_cast %52 : vector<1x1x128xf32> to vector<1x128xf32>
    %54 = vector.broadcast %53 : vector<1x128xf32> to vector<72x128xf32>
    %55 = arith.addf %51, %54 : vector<72x128xf32>
    %c0_34 = arith.constant 0 : index
    %c0_35 = arith.constant 0 : index
    %c0_36 = arith.constant 0 : index
    %56 = vector.load %arg11[%c0_34, %c0_35, %c0_36] : memref<1x72x128xf32, #tpu.memory_space<vmem>>, vector<1x72x128xf32>
    %57 = vector.shape_cast %56 : vector<1x72x128xf32> to vector<72x128xf32>
    %58 = vector.shape_cast %55 : vector<72x128xf32> to vector<1x72x128xf32>
    tpu.vector_store %arg11[%c0_34, %c0_35, %c0_36], %58 {strides = array<i32>} : memref<1x72x128xf32, #tpu.memory_space<vmem>>, vector<1x72x128xf32>,
    return
  }
  func.func @transform_0(%arg0: i32, %arg1: i32) -> (i32, i32) {
    %c0_i32 = arith.constant 0 : i32
    %c0_i32_0 = arith.constant 0 : i32
    return %arg1, %c0_i32 : i32, i32
  }
  func.func @transform_1(%arg0: i32, %arg1: i32) -> (i32, i32, i32) {
    %c0_i32 = arith.constant 0 : i32
    %c0_i32_0 = arith.constant 0 : i32
    %c0_i32_1 = arith.constant 0 : i32
    return %arg0, %c0_i32, %c0_i32_0 : i32, i32, i32
  }
  func.func @transform_2(%arg0: i32, %arg1: i32) -> (i32, i32, i32) {
    %c0_i32 = arith.constant 0 : i32
    %c0_i32_0 = arith.constant 0 : i32
    %c0_i32_1 = arith.constant 0 : i32
    return %arg0, %c0_i32, %c0_i32_0 : i32, i32, i32
  }
  func.func @transform_3(%arg0: i32, %arg1: i32) -> (i32, i32, i32) {
    %c0_i32 = arith.constant 0 : i32
    %c0_i32_0 = arith.constant 0 : i32
    %c0_i32_1 = arith.constant 0 : i32
    return %arg0, %c0_i32, %c0_i32_0 : i32, i32, i32
  }
  func.func @transform_4(%arg0: i32, %arg1: i32) -> (i32, i32, i32) {
    %c0_i32 = arith.constant 0 : i32
    %c0_i32_0 = arith.constant 0 : i32
    %c0_i32_1 = arith.constant 0 : i32
    return %arg0, %c0_i32, %c0_i32_0 : i32, i32, i32
  }
  func.func @transform_5(%arg0: i32, %arg1: i32) -> (i32, i32, i32) {
    %c0_i32 = arith.constant 0 : i32
    %c0_i32_0 = arith.constant 0 : i32
    %c0_i32_1 = arith.constant 0 : i32
    return %arg0, %c0_i32, %c0_i32_0 : i32, i32, i32
  }
  func.func @transform_6(%arg0: i32, %arg1: i32) -> (i32, i32, i32) {
    %c0_i32 = arith.constant 0 : i32
    %c0_i32_0 = arith.constant 0 : i32
    %c0_i32_1 = arith.constant 0 : i32
    return %arg0, %c0_i32, %c0_i32_0 : i32, i32, i32
  }
  func.func @transform_7(%arg0: i32, %arg1: i32) -> (i32, i32, i32) {
    %c0_i32 = arith.constant 0 : i32
    %c0_i32_0 = arith.constant 0 : i32
    %c0_i32_1 = arith.constant 0 : i32
    return %arg0, %c0_i32, %c0_i32_0 : i32, i32, i32
  }
  func.func @transform_8(%arg0: i32, %arg1: i32) -> (i32, i32, i32) {
    %c0_i32 = arith.constant 0 : i32
    %c0_i32_0 = arith.constant 0 : i32
    %c0_i32_1 = arith.constant 0 : i32
    return %arg0, %c0_i32, %c0_i32_0 : i32, i32, i32
  }
  func.func @transform_9(%arg0: i32, %arg1: i32) -> (i32, i32, i32) {
    %c0_i32 = arith.constant 0 : i32
    %c0_i32_0 = arith.constant 0 : i32
    return %arg0, %arg1, %c0_i32 : i32, i32, i32
  }
}

module attributes {stable_mosaic.version = 11 : i64} {
  func.func @_mlp_kernel(%arg0: i32, %arg1: i32, %arg2: memref<1x240x128xf32, #tpu.memory_space<vmem>>, %arg3: memref<1x240x128xf32, #tpu.memory_space<vmem>>, %arg4: memref<1x240x128xf32, #tpu.memory_space<vmem>>, %arg5: memref<1x128x128xf32, #tpu.memory_space<vmem>>, %arg6: memref<1x128x128xf32, #tpu.memory_space<vmem>>, %arg7: memref<1x128x128xf32, #tpu.memory_space<vmem>>, %arg8: memref<1x1x128xf32, #tpu.memory_space<vmem>>, %arg9: memref<1x128x128xf32, #tpu.memory_space<vmem>>, %arg10: memref<1x1x128xf32, #tpu.memory_space<vmem>>, %arg11: memref<1x128x128xf32, #tpu.memory_space<vmem>>, %arg12: memref<1x1x128xf32, #tpu.memory_space<vmem>>, %arg13: memref<1x1x128xf32, #tpu.memory_space<vmem>>, %arg14: memref<1x1x128xf32, #tpu.memory_space<vmem>>, %arg15: memref<1x240x128xf32, #tpu.memory_space<vmem>>, %arg16: memref<1x240x128xf32, #tpu.memory_space<vmem>>) attributes {dimension_semantics = [#tpu.dimension_semantics<parallel>, #tpu.dimension_semantics<parallel>], iteration_bounds = array<i64: 2, 1>, scalar_prefetch = 0 : i64, scratch_operands = 0 : i64, tpu.core_type = #tpu.core_type<tc>, window_params = [{transform_indices = @transform_0, window_bounds = array<i64: 1, 240, 128>}, {transform_indices = @transform_1, window_bounds = array<i64: 1, 240, 128>}, {transform_indices = @transform_2, window_bounds = array<i64: 1, 240, 128>}, {transform_indices = @transform_3, window_bounds = array<i64: 1, 128, 128>}, {transform_indices = @transform_4, window_bounds = array<i64: 1, 128, 128>}, {transform_indices = @transform_5, window_bounds = array<i64: 1, 128, 128>}, {transform_indices = @transform_6, window_bounds = array<i64: 1, 1, 128>}, {transform_indices = @transform_7, window_bounds = array<i64: 1, 128, 128>}, {transform_indices = @transform_8, window_bounds = array<i64: 1, 1, 128>}, {transform_indices = @transform_9, window_bounds = array<i64: 1, 128, 128>}, {transform_indices = @transform_10, window_bounds = array<i64: 1, 1, 128>}, {transform_indices = @transform_11, window_bounds = array<i64: 1, 1, 128>}, {transform_indices = @transform_12, window_bounds = array<i64: 1, 1, 128>}, {transform_indices = @transform_13, window_bounds = array<i64: 1, 240, 128>}, {transform_indices = @transform_14, window_bounds = array<i64: 1, 240, 128>}]} {
    %c0 = arith.constant 0 : index
    %c0_0 = arith.constant 0 : index
    %c0_1 = arith.constant 0 : index
    %0 = vector.load %arg2[%c0, %c0_0, %c0_1] : memref<1x240x128xf32, #tpu.memory_space<vmem>>, vector<1x240x128xf32>
    %1 = vector.shape_cast %0 : vector<1x240x128xf32> to vector<240x128xf32>
    %c0_2 = arith.constant 0 : index
    %c0_3 = arith.constant 0 : index
    %c0_4 = arith.constant 0 : index
    %2 = vector.load %arg5[%c0_2, %c0_3, %c0_4] : memref<1x128x128xf32, #tpu.memory_space<vmem>>, vector<1x128x128xf32>
    %3 = vector.shape_cast %2 : vector<1x128x128xf32> to vector<128x128xf32>
    %4 = arith.truncf %1 : vector<240x128xf32> to vector<240x128xbf16>
    %5 = arith.truncf %3 : vector<128x128xf32> to vector<128x128xbf16>
    %cst = arith.constant dense<0.000000e+00> : vector<240x128xf32>
    %6 = tpu.matmul %4, %5, %cst {dimension_numbers = #tpu.dot_dimension_numbers<[1], [0], [0], [1], [0, 0, 1, 1], [], []>} : vector<240x128xbf16>, vector<128x128xbf16>, vector<240x128xf32> -> vector<240x128xf32>
    %c0_5 = arith.constant 0 : index
    %c0_6 = arith.constant 0 : index
    %c0_7 = arith.constant 0 : index
    %7 = vector.load %arg3[%c0_5, %c0_6, %c0_7] : memref<1x240x128xf32, #tpu.memory_space<vmem>>, vector<1x240x128xf32>
    %8 = vector.shape_cast %7 : vector<1x240x128xf32> to vector<240x128xf32>
    %c0_8 = arith.constant 0 : index
    %c0_9 = arith.constant 0 : index
    %c0_10 = arith.constant 0 : index
    %9 = vector.load %arg6[%c0_8, %c0_9, %c0_10] : memref<1x128x128xf32, #tpu.memory_space<vmem>>, vector<1x128x128xf32>
    %10 = vector.shape_cast %9 : vector<1x128x128xf32> to vector<128x128xf32>
    %11 = arith.truncf %8 : vector<240x128xf32> to vector<240x128xbf16>
    %12 = arith.truncf %10 : vector<128x128xf32> to vector<128x128xbf16>
    %cst_11 = arith.constant dense<0.000000e+00> : vector<240x128xf32>
    %13 = tpu.matmul %11, %12, %cst_11 {dimension_numbers = #tpu.dot_dimension_numbers<[1], [0], [0], [1], [0, 0, 1, 1], [], []>} : vector<240x128xbf16>, vector<128x128xbf16>, vector<240x128xf32> -> vector<240x128xf32>
    %14 = arith.addf %6, %13 : vector<240x128xf32>
    %c0_12 = arith.constant 0 : index
    %c0_13 = arith.constant 0 : index
    %c0_14 = arith.constant 0 : index
    %15 = vector.load %arg4[%c0_12, %c0_13, %c0_14] : memref<1x240x128xf32, #tpu.memory_space<vmem>>, vector<1x240x128xf32>
    %16 = vector.shape_cast %15 : vector<1x240x128xf32> to vector<240x128xf32>
    %c0_15 = arith.constant 0 : index
    %c0_16 = arith.constant 0 : index
    %c0_17 = arith.constant 0 : index
    %17 = vector.load %arg7[%c0_15, %c0_16, %c0_17] : memref<1x128x128xf32, #tpu.memory_space<vmem>>, vector<1x128x128xf32>
    %18 = vector.shape_cast %17 : vector<1x128x128xf32> to vector<128x128xf32>
    %19 = arith.truncf %16 : vector<240x128xf32> to vector<240x128xbf16>
    %20 = arith.truncf %18 : vector<128x128xf32> to vector<128x128xbf16>
    %cst_18 = arith.constant dense<0.000000e+00> : vector<240x128xf32>
    %21 = tpu.matmul %19, %20, %cst_18 {dimension_numbers = #tpu.dot_dimension_numbers<[1], [0], [0], [1], [0, 0, 1, 1], [], []>} : vector<240x128xbf16>, vector<128x128xbf16>, vector<240x128xf32> -> vector<240x128xf32>
    %22 = arith.addf %14, %21 : vector<240x128xf32>
    %c0_19 = arith.constant 0 : index
    %c0_20 = arith.constant 0 : index
    %c0_21 = arith.constant 0 : index
    %23 = vector.load %arg8[%c0_19, %c0_20, %c0_21] : memref<1x1x128xf32, #tpu.memory_space<vmem>>, vector<1x1x128xf32>
    %24 = vector.shape_cast %23 : vector<1x1x128xf32> to vector<1x128xf32>
    %25 = vector.broadcast %24 : vector<1x128xf32> to vector<240x128xf32>
    %26 = arith.addf %22, %25 : vector<240x128xf32>
    %cst_22 = arith.constant 0.000000e+00 : f32
    %27 = vector.broadcast %cst_22 : f32 to vector<240x128xf32>
    %28 = arith.maximumf %26, %27 : vector<240x128xf32>
    %c0_23 = arith.constant 0 : index
    %c0_24 = arith.constant 0 : index
    %c0_25 = arith.constant 0 : index
    %29 = vector.load %arg9[%c0_23, %c0_24, %c0_25] : memref<1x128x128xf32, #tpu.memory_space<vmem>>, vector<1x128x128xf32>
    %30 = vector.shape_cast %29 : vector<1x128x128xf32> to vector<128x128xf32>
    %31 = arith.truncf %28 : vector<240x128xf32> to vector<240x128xbf16>
    %32 = arith.truncf %30 : vector<128x128xf32> to vector<128x128xbf16>
    %cst_26 = arith.constant dense<0.000000e+00> : vector<240x128xf32>
    %33 = tpu.matmul %31, %32, %cst_26 {dimension_numbers = #tpu.dot_dimension_numbers<[1], [0], [0], [1], [0, 0, 1, 1], [], []>} : vector<240x128xbf16>, vector<128x128xbf16>, vector<240x128xf32> -> vector<240x128xf32>
    %c0_27 = arith.constant 0 : index
    %c0_28 = arith.constant 0 : index
    %c0_29 = arith.constant 0 : index
    %34 = vector.load %arg10[%c0_27, %c0_28, %c0_29] : memref<1x1x128xf32, #tpu.memory_space<vmem>>, vector<1x1x128xf32>
    %35 = vector.shape_cast %34 : vector<1x1x128xf32> to vector<1x128xf32>
    %36 = vector.broadcast %35 : vector<1x128xf32> to vector<240x128xf32>
    %37 = arith.addf %33, %36 : vector<240x128xf32>
    %cst_30 = arith.constant 0.000000e+00 : f32
    %38 = vector.broadcast %cst_30 : f32 to vector<240x128xf32>
    %39 = arith.maximumf %37, %38 : vector<240x128xf32>
    %c0_31 = arith.constant 0 : index
    %c0_32 = arith.constant 0 : index
    %c0_33 = arith.constant 0 : index
    %40 = vector.load %arg11[%c0_31, %c0_32, %c0_33] : memref<1x128x128xf32, #tpu.memory_space<vmem>>, vector<1x128x128xf32>
    %41 = vector.shape_cast %40 : vector<1x128x128xf32> to vector<128x128xf32>
    %42 = arith.truncf %39 : vector<240x128xf32> to vector<240x128xbf16>
    %43 = arith.truncf %41 : vector<128x128xf32> to vector<128x128xbf16>
    %cst_34 = arith.constant dense<0.000000e+00> : vector<240x128xf32>
    %44 = tpu.matmul %42, %43, %cst_34 {dimension_numbers = #tpu.dot_dimension_numbers<[1], [0], [0], [1], [0, 0, 1, 1], [], []>} : vector<240x128xbf16>, vector<128x128xbf16>, vector<240x128xf32> -> vector<240x128xf32>
    %c0_35 = arith.constant 0 : index
    %c0_36 = arith.constant 0 : index
    %c0_37 = arith.constant 0 : index
    %45 = vector.load %arg12[%c0_35, %c0_36, %c0_37] : memref<1x1x128xf32, #tpu.memory_space<vmem>>, vector<1x1x128xf32>
    %46 = vector.shape_cast %45 : vector<1x1x128xf32> to vector<1x128xf32>
    %47 = vector.broadcast %46 : vector<1x128xf32> to vector<240x128xf32>
    %48 = arith.addf %44, %47 : vector<240x128xf32>
    %cst_38 = arith.constant dense<0.000000e+00> : vector<240xf32>
    %49 = vector.multi_reduction <add>, %48, %cst_38 [1] : vector<240x128xf32> to vector<240xf32>
    %50 = vector.shape_cast %49 : vector<240xf32> to vector<240x1xf32>
    %cst_39 = arith.constant 1.280000e+02 : f32
    %51 = vector.broadcast %cst_39 : f32 to vector<240x1xf32>
    %52 = arith.divf %50, %51 : vector<240x1xf32>
    %53 = vector.broadcast %52 : vector<240x1xf32> to vector<240x128xf32>
    %54 = arith.subf %48, %53 : vector<240x128xf32>
    %55 = arith.mulf %54, %54 : vector<240x128xf32>
    %cst_40 = arith.constant dense<0.000000e+00> : vector<240xf32>
    %56 = vector.multi_reduction <add>, %55, %cst_40 [1] : vector<240x128xf32> to vector<240xf32>
    %57 = vector.shape_cast %56 : vector<240xf32> to vector<240x1xf32>
    %cst_41 = arith.constant 1.280000e+02 : f32
    %58 = vector.broadcast %cst_41 : f32 to vector<240x1xf32>
    %59 = arith.divf %57, %58 : vector<240x1xf32>
    %60 = vector.broadcast %52 : vector<240x1xf32> to vector<240x128xf32>
    %61 = arith.subf %48, %60 : vector<240x128xf32>
    %cst_42 = arith.constant 9.99999974E-6 : f32
    %62 = vector.broadcast %cst_42 : f32 to vector<240x1xf32>
    %63 = arith.addf %59, %62 : vector<240x1xf32>
    %64 = math.rsqrt %63 : vector<240x1xf32>
    %65 = vector.broadcast %64 : vector<240x1xf32> to vector<240x128xf32>
    %66 = arith.mulf %61, %65 : vector<240x128xf32>
    %c0_43 = arith.constant 0 : index
    %c0_44 = arith.constant 0 : index
    %c0_45 = arith.constant 0 : index
    %67 = vector.load %arg13[%c0_43, %c0_44, %c0_45] : memref<1x1x128xf32, #tpu.memory_space<vmem>>, vector<1x1x128xf32>
    %68 = vector.shape_cast %67 : vector<1x1x128xf32> to vector<1x128xf32>
    %69 = vector.broadcast %68 : vector<1x128xf32> to vector<240x128xf32>
    %70 = arith.mulf %66, %69 : vector<240x128xf32>
    %c0_46 = arith.constant 0 : index
    %c0_47 = arith.constant 0 : index
    %c0_48 = arith.constant 0 : index
    %71 = vector.load %arg14[%c0_46, %c0_47, %c0_48] : memref<1x1x128xf32, #tpu.memory_space<vmem>>, vector<1x1x128xf32>
    %72 = vector.shape_cast %71 : vector<1x1x128xf32> to vector<1x128xf32>
    %73 = vector.broadcast %72 : vector<1x128xf32> to vector<240x128xf32>
    %74 = arith.addf %70, %73 : vector<240x128xf32>
    %c0_49 = arith.constant 0 : index
    %c0_50 = arith.constant 0 : index
    %c0_51 = arith.constant 0 : index
    %75 = vector.load %arg15[%c0_49, %c0_50, %c0_51] : memref<1x240x128xf32, #tpu.memory_space<vmem>>, vector<1x240x128xf32>
    %76 = vector.shape_cast %75 : vector<1x240x128xf32> to vector<240x128xf32>
    %77 = arith.addf %74, %76 : vector<240x128xf32>
    %c0_52 = arith.constant 0 : index
    %c0_53 = arith.constant 0 : index
    %c0_54 = arith.constant 0 : index
    %78 = vector.load %arg16[%c0_52, %c0_53, %c0_54] : memref<1x240x128xf32, #tpu.memory_space<vmem>>, vector<1x240x128xf32>
    %79 = vector.shape_cast %78 : vector<1x240x128xf32> to vector<240x128xf32>
    %80 = vector.shape_cast %77 : vector<240x128xf32> to vector<1x240x128xf32>
    tpu.vector_store %arg16[%c0_52, %c0_53, %c0_54], %80 {strides = array<i32>} : memref<1x240x128xf32, #tpu.memory_space<vmem>>, vector<1x240x128xf32>,
    return
  }
  func.func @transform_0(%arg0: i32, %arg1: i32) -> (i32, i32, i32) {
    %c0_i32 = arith.constant 0 : i32
    %c0_i32_0 = arith.constant 0 : i32
    return %arg0, %arg1, %c0_i32 : i32, i32, i32
  }
  func.func @transform_1(%arg0: i32, %arg1: i32) -> (i32, i32, i32) {
    %c0_i32 = arith.constant 0 : i32
    %c0_i32_0 = arith.constant 0 : i32
    return %arg0, %arg1, %c0_i32 : i32, i32, i32
  }
  func.func @transform_2(%arg0: i32, %arg1: i32) -> (i32, i32, i32) {
    %c0_i32 = arith.constant 0 : i32
    %c0_i32_0 = arith.constant 0 : i32
    return %arg0, %arg1, %c0_i32 : i32, i32, i32
  }
  func.func @transform_3(%arg0: i32, %arg1: i32) -> (i32, i32, i32) {
    %c0_i32 = arith.constant 0 : i32
    %c0_i32_0 = arith.constant 0 : i32
    %c0_i32_1 = arith.constant 0 : i32
    return %arg0, %c0_i32, %c0_i32_0 : i32, i32, i32
  }
  func.func @transform_4(%arg0: i32, %arg1: i32) -> (i32, i32, i32) {
    %c0_i32 = arith.constant 0 : i32
    %c0_i32_0 = arith.constant 0 : i32
    %c0_i32_1 = arith.constant 0 : i32
    return %arg0, %c0_i32, %c0_i32_0 : i32, i32, i32
  }
  func.func @transform_5(%arg0: i32, %arg1: i32) -> (i32, i32, i32) {
    %c0_i32 = arith.constant 0 : i32
    %c0_i32_0 = arith.constant 0 : i32
    %c0_i32_1 = arith.constant 0 : i32
    return %arg0, %c0_i32, %c0_i32_0 : i32, i32, i32
  }
  func.func @transform_6(%arg0: i32, %arg1: i32) -> (i32, i32, i32) {
    %c0_i32 = arith.constant 0 : i32
    %c0_i32_0 = arith.constant 0 : i32
    %c0_i32_1 = arith.constant 0 : i32
    return %arg0, %c0_i32, %c0_i32_0 : i32, i32, i32
  }
  func.func @transform_7(%arg0: i32, %arg1: i32) -> (i32, i32, i32) {
    %c0_i32 = arith.constant 0 : i32
    %c0_i32_0 = arith.constant 0 : i32
    %c0_i32_1 = arith.constant 0 : i32
    return %arg0, %c0_i32, %c0_i32_0 : i32, i32, i32
  }
  func.func @transform_8(%arg0: i32, %arg1: i32) -> (i32, i32, i32) {
    %c0_i32 = arith.constant 0 : i32
    %c0_i32_0 = arith.constant 0 : i32
    %c0_i32_1 = arith.constant 0 : i32
    return %arg0, %c0_i32, %c0_i32_0 : i32, i32, i32
  }
  func.func @transform_9(%arg0: i32, %arg1: i32) -> (i32, i32, i32) {
    %c0_i32 = arith.constant 0 : i32
    %c0_i32_0 = arith.constant 0 : i32
    %c0_i32_1 = arith.constant 0 : i32
    return %arg0, %c0_i32, %c0_i32_0 : i32, i32, i32
  }
  func.func @transform_10(%arg0: i32, %arg1: i32) -> (i32, i32, i32) {
    %c0_i32 = arith.constant 0 : i32
    %c0_i32_0 = arith.constant 0 : i32
    %c0_i32_1 = arith.constant 0 : i32
    return %arg0, %c0_i32, %c0_i32_0 : i32, i32, i32
  }
  func.func @transform_11(%arg0: i32, %arg1: i32) -> (i32, i32, i32) {
    %c0_i32 = arith.constant 0 : i32
    %c0_i32_0 = arith.constant 0 : i32
    %c0_i32_1 = arith.constant 0 : i32
    return %arg0, %c0_i32, %c0_i32_0 : i32, i32, i32
  }
  func.func @transform_12(%arg0: i32, %arg1: i32) -> (i32, i32, i32) {
    %c0_i32 = arith.constant 0 : i32
    %c0_i32_0 = arith.constant 0 : i32
    %c0_i32_1 = arith.constant 0 : i32
    return %arg0, %c0_i32, %c0_i32_0 : i32, i32, i32
  }
  func.func @transform_13(%arg0: i32, %arg1: i32) -> (i32, i32, i32) {
    %c0_i32 = arith.constant 0 : i32
    %c0_i32_0 = arith.constant 0 : i32
    return %arg0, %arg1, %c0_i32 : i32, i32, i32
  }
  func.func @transform_14(%arg0: i32, %arg1: i32) -> (i32, i32, i32) {
    %c0_i32 = arith.constant 0 : i32
    %c0_i32_0 = arith.constant 0 : i32
    return %arg0, %arg1, %c0_i32 : i32, i32, i32
  }
}

module attributes {stable_mosaic.version = 11 : i64} {
  func.func @_mlp_kernel(%arg0: i32, %arg1: i32, %arg2: memref<1x72x128xf32, #tpu.memory_space<vmem>>, %arg3: memref<1x72x128xf32, #tpu.memory_space<vmem>>, %arg4: memref<1x128x128xf32, #tpu.memory_space<vmem>>, %arg5: memref<1x128x128xf32, #tpu.memory_space<vmem>>, %arg6: memref<1x1x128xf32, #tpu.memory_space<vmem>>, %arg7: memref<1x128x128xf32, #tpu.memory_space<vmem>>, %arg8: memref<1x1x128xf32, #tpu.memory_space<vmem>>, %arg9: memref<1x128x128xf32, #tpu.memory_space<vmem>>, %arg10: memref<1x1x128xf32, #tpu.memory_space<vmem>>, %arg11: memref<1x1x128xf32, #tpu.memory_space<vmem>>, %arg12: memref<1x1x128xf32, #tpu.memory_space<vmem>>, %arg13: memref<1x72x128xf32, #tpu.memory_space<vmem>>, %arg14: memref<1x72x128xf32, #tpu.memory_space<vmem>>) attributes {dimension_semantics = [#tpu.dimension_semantics<parallel>, #tpu.dimension_semantics<parallel>], iteration_bounds = array<i64: 2, 1>, scalar_prefetch = 0 : i64, scratch_operands = 0 : i64, tpu.core_type = #tpu.core_type<tc>, window_params = [{transform_indices = @transform_0, window_bounds = array<i64: 1, 72, 128>}, {transform_indices = @transform_1, window_bounds = array<i64: 1, 72, 128>}, {transform_indices = @transform_2, window_bounds = array<i64: 1, 128, 128>}, {transform_indices = @transform_3, window_bounds = array<i64: 1, 128, 128>}, {transform_indices = @transform_4, window_bounds = array<i64: 1, 1, 128>}, {transform_indices = @transform_5, window_bounds = array<i64: 1, 128, 128>}, {transform_indices = @transform_6, window_bounds = array<i64: 1, 1, 128>}, {transform_indices = @transform_7, window_bounds = array<i64: 1, 128, 128>}, {transform_indices = @transform_8, window_bounds = array<i64: 1, 1, 128>}, {transform_indices = @transform_9, window_bounds = array<i64: 1, 1, 128>}, {transform_indices = @transform_10, window_bounds = array<i64: 1, 1, 128>}, {transform_indices = @transform_11, window_bounds = array<i64: 1, 72, 128>}, {transform_indices = @transform_12, window_bounds = array<i64: 1, 72, 128>}]} {
    %c0 = arith.constant 0 : index
    %c0_0 = arith.constant 0 : index
    %c0_1 = arith.constant 0 : index
    %0 = vector.load %arg2[%c0, %c0_0, %c0_1] : memref<1x72x128xf32, #tpu.memory_space<vmem>>, vector<1x72x128xf32>
    %1 = vector.shape_cast %0 : vector<1x72x128xf32> to vector<72x128xf32>
    %c0_2 = arith.constant 0 : index
    %c0_3 = arith.constant 0 : index
    %c0_4 = arith.constant 0 : index
    %2 = vector.load %arg4[%c0_2, %c0_3, %c0_4] : memref<1x128x128xf32, #tpu.memory_space<vmem>>, vector<1x128x128xf32>
    %3 = vector.shape_cast %2 : vector<1x128x128xf32> to vector<128x128xf32>
    %4 = arith.truncf %1 : vector<72x128xf32> to vector<72x128xbf16>
    %5 = arith.truncf %3 : vector<128x128xf32> to vector<128x128xbf16>
    %cst = arith.constant dense<0.000000e+00> : vector<72x128xf32>
    %6 = tpu.matmul %4, %5, %cst {dimension_numbers = #tpu.dot_dimension_numbers<[1], [0], [0], [1], [0, 0, 1, 1], [], []>} : vector<72x128xbf16>, vector<128x128xbf16>, vector<72x128xf32> -> vector<72x128xf32>
    %c0_5 = arith.constant 0 : index
    %c0_6 = arith.constant 0 : index
    %c0_7 = arith.constant 0 : index
    %7 = vector.load %arg3[%c0_5, %c0_6, %c0_7] : memref<1x72x128xf32, #tpu.memory_space<vmem>>, vector<1x72x128xf32>
    %8 = vector.shape_cast %7 : vector<1x72x128xf32> to vector<72x128xf32>
    %c0_8 = arith.constant 0 : index
    %c0_9 = arith.constant 0 : index
    %c0_10 = arith.constant 0 : index
    %9 = vector.load %arg5[%c0_8, %c0_9, %c0_10] : memref<1x128x128xf32, #tpu.memory_space<vmem>>, vector<1x128x128xf32>
    %10 = vector.shape_cast %9 : vector<1x128x128xf32> to vector<128x128xf32>
    %11 = arith.truncf %8 : vector<72x128xf32> to vector<72x128xbf16>
    %12 = arith.truncf %10 : vector<128x128xf32> to vector<128x128xbf16>
    %cst_11 = arith.constant dense<0.000000e+00> : vector<72x128xf32>
    %13 = tpu.matmul %11, %12, %cst_11 {dimension_numbers = #tpu.dot_dimension_numbers<[1], [0], [0], [1], [0, 0, 1, 1], [], []>} : vector<72x128xbf16>, vector<128x128xbf16>, vector<72x128xf32> -> vector<72x128xf32>
    %14 = arith.addf %6, %13 : vector<72x128xf32>
    %c0_12 = arith.constant 0 : index
    %c0_13 = arith.constant 0 : index
    %c0_14 = arith.constant 0 : index
    %15 = vector.load %arg6[%c0_12, %c0_13, %c0_14] : memref<1x1x128xf32, #tpu.memory_space<vmem>>, vector<1x1x128xf32>
    %16 = vector.shape_cast %15 : vector<1x1x128xf32> to vector<1x128xf32>
    %17 = vector.broadcast %16 : vector<1x128xf32> to vector<72x128xf32>
    %18 = arith.addf %14, %17 : vector<72x128xf32>
    %cst_15 = arith.constant 0.000000e+00 : f32
    %19 = vector.broadcast %cst_15 : f32 to vector<72x128xf32>
    %20 = arith.maximumf %18, %19 : vector<72x128xf32>
    %c0_16 = arith.constant 0 : index
    %c0_17 = arith.constant 0 : index
    %c0_18 = arith.constant 0 : index
    %21 = vector.load %arg7[%c0_16, %c0_17, %c0_18] : memref<1x128x128xf32, #tpu.memory_space<vmem>>, vector<1x128x128xf32>
    %22 = vector.shape_cast %21 : vector<1x128x128xf32> to vector<128x128xf32>
    %23 = arith.truncf %20 : vector<72x128xf32> to vector<72x128xbf16>
    %24 = arith.truncf %22 : vector<128x128xf32> to vector<128x128xbf16>
    %cst_19 = arith.constant dense<0.000000e+00> : vector<72x128xf32>
    %25 = tpu.matmul %23, %24, %cst_19 {dimension_numbers = #tpu.dot_dimension_numbers<[1], [0], [0], [1], [0, 0, 1, 1], [], []>} : vector<72x128xbf16>, vector<128x128xbf16>, vector<72x128xf32> -> vector<72x128xf32>
    %c0_20 = arith.constant 0 : index
    %c0_21 = arith.constant 0 : index
    %c0_22 = arith.constant 0 : index
    %26 = vector.load %arg8[%c0_20, %c0_21, %c0_22] : memref<1x1x128xf32, #tpu.memory_space<vmem>>, vector<1x1x128xf32>
    %27 = vector.shape_cast %26 : vector<1x1x128xf32> to vector<1x128xf32>
    %28 = vector.broadcast %27 : vector<1x128xf32> to vector<72x128xf32>
    %29 = arith.addf %25, %28 : vector<72x128xf32>
    %cst_23 = arith.constant 0.000000e+00 : f32
    %30 = vector.broadcast %cst_23 : f32 to vector<72x128xf32>
    %31 = arith.maximumf %29, %30 : vector<72x128xf32>
    %c0_24 = arith.constant 0 : index
    %c0_25 = arith.constant 0 : index
    %c0_26 = arith.constant 0 : index
    %32 = vector.load %arg9[%c0_24, %c0_25, %c0_26] : memref<1x128x128xf32, #tpu.memory_space<vmem>>, vector<1x128x128xf32>
    %33 = vector.shape_cast %32 : vector<1x128x128xf32> to vector<128x128xf32>
    %34 = arith.truncf %31 : vector<72x128xf32> to vector<72x128xbf16>
    %35 = arith.truncf %33 : vector<128x128xf32> to vector<128x128xbf16>
    %cst_27 = arith.constant dense<0.000000e+00> : vector<72x128xf32>
    %36 = tpu.matmul %34, %35, %cst_27 {dimension_numbers = #tpu.dot_dimension_numbers<[1], [0], [0], [1], [0, 0, 1, 1], [], []>} : vector<72x128xbf16>, vector<128x128xbf16>, vector<72x128xf32> -> vector<72x128xf32>
    %c0_28 = arith.constant 0 : index
    %c0_29 = arith.constant 0 : index
    %c0_30 = arith.constant 0 : index
    %37 = vector.load %arg10[%c0_28, %c0_29, %c0_30] : memref<1x1x128xf32, #tpu.memory_space<vmem>>, vector<1x1x128xf32>
    %38 = vector.shape_cast %37 : vector<1x1x128xf32> to vector<1x128xf32>
    %39 = vector.broadcast %38 : vector<1x128xf32> to vector<72x128xf32>
    %40 = arith.addf %36, %39 : vector<72x128xf32>
    %cst_31 = arith.constant dense<0.000000e+00> : vector<72xf32>
    %41 = vector.multi_reduction <add>, %40, %cst_31 [1] : vector<72x128xf32> to vector<72xf32>
    %42 = vector.shape_cast %41 : vector<72xf32> to vector<72x1xf32>
    %cst_32 = arith.constant 1.280000e+02 : f32
    %43 = vector.broadcast %cst_32 : f32 to vector<72x1xf32>
    %44 = arith.divf %42, %43 : vector<72x1xf32>
    %45 = vector.broadcast %44 : vector<72x1xf32> to vector<72x128xf32>
    %46 = arith.subf %40, %45 : vector<72x128xf32>
    %47 = arith.mulf %46, %46 : vector<72x128xf32>
    %cst_33 = arith.constant dense<0.000000e+00> : vector<72xf32>
    %48 = vector.multi_reduction <add>, %47, %cst_33 [1] : vector<72x128xf32> to vector<72xf32>
    %49 = vector.shape_cast %48 : vector<72xf32> to vector<72x1xf32>
    %cst_34 = arith.constant 1.280000e+02 : f32
    %50 = vector.broadcast %cst_34 : f32 to vector<72x1xf32>
    %51 = arith.divf %49, %50 : vector<72x1xf32>
    %52 = vector.broadcast %44 : vector<72x1xf32> to vector<72x128xf32>
    %53 = arith.subf %40, %52 : vector<72x128xf32>
    %cst_35 = arith.constant 9.99999974E-6 : f32
    %54 = vector.broadcast %cst_35 : f32 to vector<72x1xf32>
    %55 = arith.addf %51, %54 : vector<72x1xf32>
    %56 = math.rsqrt %55 : vector<72x1xf32>
    %57 = vector.broadcast %56 : vector<72x1xf32> to vector<72x128xf32>
    %58 = arith.mulf %53, %57 : vector<72x128xf32>
    %c0_36 = arith.constant 0 : index
    %c0_37 = arith.constant 0 : index
    %c0_38 = arith.constant 0 : index
    %59 = vector.load %arg11[%c0_36, %c0_37, %c0_38] : memref<1x1x128xf32, #tpu.memory_space<vmem>>, vector<1x1x128xf32>
    %60 = vector.shape_cast %59 : vector<1x1x128xf32> to vector<1x128xf32>
    %61 = vector.broadcast %60 : vector<1x128xf32> to vector<72x128xf32>
    %62 = arith.mulf %58, %61 : vector<72x128xf32>
    %c0_39 = arith.constant 0 : index
    %c0_40 = arith.constant 0 : index
    %c0_41 = arith.constant 0 : index
    %63 = vector.load %arg12[%c0_39, %c0_40, %c0_41] : memref<1x1x128xf32, #tpu.memory_space<vmem>>, vector<1x1x128xf32>
    %64 = vector.shape_cast %63 : vector<1x1x128xf32> to vector<1x128xf32>
    %65 = vector.broadcast %64 : vector<1x128xf32> to vector<72x128xf32>
    %66 = arith.addf %62, %65 : vector<72x128xf32>
    %c0_42 = arith.constant 0 : index
    %c0_43 = arith.constant 0 : index
    %c0_44 = arith.constant 0 : index
    %67 = vector.load %arg13[%c0_42, %c0_43, %c0_44] : memref<1x72x128xf32, #tpu.memory_space<vmem>>, vector<1x72x128xf32>
    %68 = vector.shape_cast %67 : vector<1x72x128xf32> to vector<72x128xf32>
    %69 = arith.addf %66, %68 : vector<72x128xf32>
    %c0_45 = arith.constant 0 : index
    %c0_46 = arith.constant 0 : index
    %c0_47 = arith.constant 0 : index
    %70 = vector.load %arg14[%c0_45, %c0_46, %c0_47] : memref<1x72x128xf32, #tpu.memory_space<vmem>>, vector<1x72x128xf32>
    %71 = vector.shape_cast %70 : vector<1x72x128xf32> to vector<72x128xf32>
    %72 = vector.shape_cast %69 : vector<72x128xf32> to vector<1x72x128xf32>
    tpu.vector_store %arg14[%c0_45, %c0_46, %c0_47], %72 {strides = array<i32>} : memref<1x72x128xf32, #tpu.memory_space<vmem>>, vector<1x72x128xf32>,
    return
  }
  func.func @transform_0(%arg0: i32, %arg1: i32) -> (i32, i32, i32) {
    %c0_i32 = arith.constant 0 : i32
    %c0_i32_0 = arith.constant 0 : i32
    return %arg0, %arg1, %c0_i32 : i32, i32, i32
  }
  func.func @transform_1(%arg0: i32, %arg1: i32) -> (i32, i32, i32) {
    %c0_i32 = arith.constant 0 : i32
    %c0_i32_0 = arith.constant 0 : i32
    return %arg0, %arg1, %c0_i32 : i32, i32, i32
  }
  func.func @transform_2(%arg0: i32, %arg1: i32) -> (i32, i32, i32) {
    %c0_i32 = arith.constant 0 : i32
    %c0_i32_0 = arith.constant 0 : i32
    %c0_i32_1 = arith.constant 0 : i32
    return %arg0, %c0_i32, %c0_i32_0 : i32, i32, i32
  }
  func.func @transform_3(%arg0: i32, %arg1: i32) -> (i32, i32, i32) {
    %c0_i32 = arith.constant 0 : i32
    %c0_i32_0 = arith.constant 0 : i32
    %c0_i32_1 = arith.constant 0 : i32
    return %arg0, %c0_i32, %c0_i32_0 : i32, i32, i32
  }
  func.func @transform_4(%arg0: i32, %arg1: i32) -> (i32, i32, i32) {
    %c0_i32 = arith.constant 0 : i32
    %c0_i32_0 = arith.constant 0 : i32
    %c0_i32_1 = arith.constant 0 : i32
    return %arg0, %c0_i32, %c0_i32_0 : i32, i32, i32
  }
  func.func @transform_5(%arg0: i32, %arg1: i32) -> (i32, i32, i32) {
    %c0_i32 = arith.constant 0 : i32
    %c0_i32_0 = arith.constant 0 : i32
    %c0_i32_1 = arith.constant 0 : i32
    return %arg0, %c0_i32, %c0_i32_0 : i32, i32, i32
  }
  func.func @transform_6(%arg0: i32, %arg1: i32) -> (i32, i32, i32) {
    %c0_i32 = arith.constant 0 : i32
    %c0_i32_0 = arith.constant 0 : i32
    %c0_i32_1 = arith.constant 0 : i32
    return %arg0, %c0_i32, %c0_i32_0 : i32, i32, i32
  }
  func.func @transform_7(%arg0: i32, %arg1: i32) -> (i32, i32, i32) {
    %c0_i32 = arith.constant 0 : i32
    %c0_i32_0 = arith.constant 0 : i32
    %c0_i32_1 = arith.constant 0 : i32
    return %arg0, %c0_i32, %c0_i32_0 : i32, i32, i32
  }
  func.func @transform_8(%arg0: i32, %arg1: i32) -> (i32, i32, i32) {
    %c0_i32 = arith.constant 0 : i32
    %c0_i32_0 = arith.constant 0 : i32
    %c0_i32_1 = arith.constant 0 : i32
    return %arg0, %c0_i32, %c0_i32_0 : i32, i32, i32
  }
  func.func @transform_9(%arg0: i32, %arg1: i32) -> (i32, i32, i32) {
    %c0_i32 = arith.constant 0 : i32
    %c0_i32_0 = arith.constant 0 : i32
    %c0_i32_1 = arith.constant 0 : i32
    return %arg0, %c0_i32, %c0_i32_0 : i32, i32, i32
  }
  func.func @transform_10(%arg0: i32, %arg1: i32) -> (i32, i32, i32) {
    %c0_i32 = arith.constant 0 : i32
    %c0_i32_0 = arith.constant 0 : i32
    %c0_i32_1 = arith.constant 0 : i32
    return %arg0, %c0_i32, %c0_i32_0 : i32, i32, i32
  }
  func.func @transform_11(%arg0: i32, %arg1: i32) -> (i32, i32, i32) {
    %c0_i32 = arith.constant 0 : i32
    %c0_i32_0 = arith.constant 0 : i32
    return %arg0, %arg1, %c0_i32 : i32, i32, i32
  }
  func.func @transform_12(%arg0: i32, %arg1: i32) -> (i32, i32, i32) {
    %c0_i32 = arith.constant 0 : i32
    %c0_i32_0 = arith.constant 0 : i32
    return %arg0, %arg1, %c0_i32 : i32, i32, i32
  }
}

module attributes {stable_mosaic.version = 11 : i64} {
  func.func @_mlp_kernel(%arg0: i32, %arg1: i32, %arg2: memref<1x72x128xf32, #tpu.memory_space<vmem>>, %arg3: memref<1x128x128xf32, #tpu.memory_space<vmem>>, %arg4: memref<1x1x128xf32, #tpu.memory_space<vmem>>, %arg5: memref<1x128x128xf32, #tpu.memory_space<vmem>>, %arg6: memref<1x1x128xf32, #tpu.memory_space<vmem>>, %arg7: memref<1x128x128xf32, #tpu.memory_space<vmem>>, %arg8: memref<1x1x128xf32, #tpu.memory_space<vmem>>, %arg9: memref<1x72x128xf32, #tpu.memory_space<vmem>>) attributes {dimension_semantics = [#tpu.dimension_semantics<parallel>, #tpu.dimension_semantics<parallel>], iteration_bounds = array<i64: 2, 1>, scalar_prefetch = 0 : i64, scratch_operands = 0 : i64, tpu.core_type = #tpu.core_type<tc>, window_params = [{transform_indices = @transform_0, window_bounds = array<i64: 1, 72, 128>}, {transform_indices = @transform_1, window_bounds = array<i64: 1, 128, 128>}, {transform_indices = @transform_2, window_bounds = array<i64: 1, 1, 128>}, {transform_indices = @transform_3, window_bounds = array<i64: 1, 128, 128>}, {transform_indices = @transform_4, window_bounds = array<i64: 1, 1, 128>}, {transform_indices = @transform_5, window_bounds = array<i64: 1, 128, 128>}, {transform_indices = @transform_6, window_bounds = array<i64: 1, 1, 128>}, {transform_indices = @transform_7, window_bounds = array<i64: 1, 72, 128>}]} {
    %c0 = arith.constant 0 : index
    %c0_0 = arith.constant 0 : index
    %c0_1 = arith.constant 0 : index
    %0 = vector.load %arg2[%c0, %c0_0, %c0_1] : memref<1x72x128xf32, #tpu.memory_space<vmem>>, vector<1x72x128xf32>
    %1 = vector.shape_cast %0 : vector<1x72x128xf32> to vector<72x128xf32>
    %c0_2 = arith.constant 0 : index
    %c0_3 = arith.constant 0 : index
    %c0_4 = arith.constant 0 : index
    %2 = vector.load %arg3[%c0_2, %c0_3, %c0_4] : memref<1x128x128xf32, #tpu.memory_space<vmem>>, vector<1x128x128xf32>
    %3 = vector.shape_cast %2 : vector<1x128x128xf32> to vector<128x128xf32>
    %4 = arith.truncf %1 : vector<72x128xf32> to vector<72x128xbf16>
    %5 = arith.truncf %3 : vector<128x128xf32> to vector<128x128xbf16>
    %cst = arith.constant dense<0.000000e+00> : vector<72x128xf32>
    %6 = tpu.matmul %4, %5, %cst {dimension_numbers = #tpu.dot_dimension_numbers<[1], [0], [0], [1], [0, 0, 1, 1], [], []>} : vector<72x128xbf16>, vector<128x128xbf16>, vector<72x128xf32> -> vector<72x128xf32>
    %c0_5 = arith.constant 0 : index
    %c0_6 = arith.constant 0 : index
    %c0_7 = arith.constant 0 : index
    %7 = vector.load %arg4[%c0_5, %c0_6, %c0_7] : memref<1x1x128xf32, #tpu.memory_space<vmem>>, vector<1x1x128xf32>
    %8 = vector.shape_cast %7 : vector<1x1x128xf32> to vector<1x128xf32>
    %9 = vector.broadcast %8 : vector<1x128xf32> to vector<72x128xf32>
    %10 = arith.addf %6, %9 : vector<72x128xf32>
    %cst_8 = arith.constant 0.000000e+00 : f32
    %11 = vector.broadcast %cst_8 : f32 to vector<72x128xf32>
    %12 = arith.maximumf %10, %11 : vector<72x128xf32>
    %c0_9 = arith.constant 0 : index
    %c0_10 = arith.constant 0 : index
    %c0_11 = arith.constant 0 : index
    %13 = vector.load %arg5[%c0_9, %c0_10, %c0_11] : memref<1x128x128xf32, #tpu.memory_space<vmem>>, vector<1x128x128xf32>
    %14 = vector.shape_cast %13 : vector<1x128x128xf32> to vector<128x128xf32>
    %15 = arith.truncf %12 : vector<72x128xf32> to vector<72x128xbf16>
    %16 = arith.truncf %14 : vector<128x128xf32> to vector<128x128xbf16>
    %cst_12 = arith.constant dense<0.000000e+00> : vector<72x128xf32>
    %17 = tpu.matmul %15, %16, %cst_12 {dimension_numbers = #tpu.dot_dimension_numbers<[1], [0], [0], [1], [0, 0, 1, 1], [], []>} : vector<72x128xbf16>, vector<128x128xbf16>, vector<72x128xf32> -> vector<72x128xf32>
    %c0_13 = arith.constant 0 : index
    %c0_14 = arith.constant 0 : index
    %c0_15 = arith.constant 0 : index
    %18 = vector.load %arg6[%c0_13, %c0_14, %c0_15] : memref<1x1x128xf32, #tpu.memory_space<vmem>>, vector<1x1x128xf32>
    %19 = vector.shape_cast %18 : vector<1x1x128xf32> to vector<1x128xf32>
    %20 = vector.broadcast %19 : vector<1x128xf32> to vector<72x128xf32>
    %21 = arith.addf %17, %20 : vector<72x128xf32>
    %cst_16 = arith.constant 0.000000e+00 : f32
    %22 = vector.broadcast %cst_16 : f32 to vector<72x128xf32>
    %23 = arith.maximumf %21, %22 : vector<72x128xf32>
    %c0_17 = arith.constant 0 : index
    %c0_18 = arith.constant 0 : index
    %c0_19 = arith.constant 0 : index
    %24 = vector.load %arg7[%c0_17, %c0_18, %c0_19] : memref<1x128x128xf32, #tpu.memory_space<vmem>>, vector<1x128x128xf32>
    %25 = vector.shape_cast %24 : vector<1x128x128xf32> to vector<128x128xf32>
    %26 = arith.truncf %23 : vector<72x128xf32> to vector<72x128xbf16>
    %27 = arith.truncf %25 : vector<128x128xf32> to vector<128x128xbf16>
    %cst_20 = arith.constant dense<0.000000e+00> : vector<72x128xf32>
    %28 = tpu.matmul %26, %27, %cst_20 {dimension_numbers = #tpu.dot_dimension_numbers<[1], [0], [0], [1], [0, 0, 1, 1], [], []>} : vector<72x128xbf16>, vector<128x128xbf16>, vector<72x128xf32> -> vector<72x128xf32>
    %c0_21 = arith.constant 0 : index
    %c0_22 = arith.constant 0 : index
    %c0_23 = arith.constant 0 : index
    %29 = vector.load %arg8[%c0_21, %c0_22, %c0_23] : memref<1x1x128xf32, #tpu.memory_space<vmem>>, vector<1x1x128xf32>
    %30 = vector.shape_cast %29 : vector<1x1x128xf32> to vector<1x128xf32>
    %31 = vector.broadcast %30 : vector<1x128xf32> to vector<72x128xf32>
    %32 = arith.addf %28, %31 : vector<72x128xf32>
    %c0_24 = arith.constant 0 : index
    %c0_25 = arith.constant 0 : index
    %c0_26 = arith.constant 0 : index
    %33 = vector.load %arg9[%c0_24, %c0_25, %c0_26] : memref<1x72x128xf32, #tpu.memory_space<vmem>>, vector<1x72x128xf32>
    %34 = vector.shape_cast %33 : vector<1x72x128xf32> to vector<72x128xf32>
    %35 = vector.shape_cast %32 : vector<72x128xf32> to vector<1x72x128xf32>
    tpu.vector_store %arg9[%c0_24, %c0_25, %c0_26], %35 {strides = array<i32>} : memref<1x72x128xf32, #tpu.memory_space<vmem>>, vector<1x72x128xf32>,
    return
  }
  func.func @transform_0(%arg0: i32, %arg1: i32) -> (i32, i32, i32) {
    %c0_i32 = arith.constant 0 : i32
    %c0_i32_0 = arith.constant 0 : i32
    return %arg0, %arg1, %c0_i32 : i32, i32, i32
  }
  func.func @transform_1(%arg0: i32, %arg1: i32) -> (i32, i32, i32) {
    %c0_i32 = arith.constant 0 : i32
    %c0_i32_0 = arith.constant 0 : i32
    %c0_i32_1 = arith.constant 0 : i32
    return %arg0, %c0_i32, %c0_i32_0 : i32, i32, i32
  }
  func.func @transform_2(%arg0: i32, %arg1: i32) -> (i32, i32, i32) {
    %c0_i32 = arith.constant 0 : i32
    %c0_i32_0 = arith.constant 0 : i32
    %c0_i32_1 = arith.constant 0 : i32
    return %arg0, %c0_i32, %c0_i32_0 : i32, i32, i32
  }
  func.func @transform_3(%arg0: i32, %arg1: i32) -> (i32, i32, i32) {
    %c0_i32 = arith.constant 0 : i32
    %c0_i32_0 = arith.constant 0 : i32
    %c0_i32_1 = arith.constant 0 : i32
    return %arg0, %c0_i32, %c0_i32_0 : i32, i32, i32
  }
  func.func @transform_4(%arg0: i32, %arg1: i32) -> (i32, i32, i32) {
    %c0_i32 = arith.constant 0 : i32
    %c0_i32_0 = arith.constant 0 : i32
    %c0_i32_1 = arith.constant 0 : i32
    return %arg0, %c0_i32, %c0_i32_0 : i32, i32, i32
  }
  func.func @transform_5(%arg0: i32, %arg1: i32) -> (i32, i32, i32) {
    %c0_i32 = arith.constant 0 : i32
    %c0_i32_0 = arith.constant 0 : i32
    %c0_i32_1 = arith.constant 0 : i32
    return %arg0, %c0_i32, %c0_i32_0 : i32, i32, i32
  }
  func.func @transform_6(%arg0: i32, %arg1: i32) -> (i32, i32, i32) {
    %c0_i32 = arith.constant 0 : i32
    %c0_i32_0 = arith.constant 0 : i32
    %c0_i32_1 = arith.constant 0 : i32
    return %arg0, %c0_i32, %c0_i32_0 : i32, i32, i32
  }
  func.func @transform_7(%arg0: i32, %arg1: i32) -> (i32, i32, i32) {
    %c0_i32 = arith.constant 0 : i32
    %c0_i32_0 = arith.constant 0 : i32
    return %arg0, %arg1, %c0_i32 : i32, i32, i32
  }
}

</mosaic_0001>

<llo_original>
// kernel: model_forward.7
$region0: #{model_forward.7}
  #allocation0 [shape = 'u32[]', space=smem, size = 0x4, offset = 0x4, fixed_abs, tag = 'smem constant byte address 0x4 - core index']
  #allocation1 [shape = 'u32[72,128]{1,0:T(1,128)}', space=vmem, size = 0x9000, scoped, tag = 'internal scratch']
  %s0 = inlined_call_operand.vmem [shape: f32[72,10], index: 0, kind: input, shape index: {}]
  %s1 = inlined_call_operand.vmem [shape: f32[2,10,128], index: 1, kind: input, shape index: {}]
  %s2 = inlined_call_operand.vmem [shape: f32[2,1,128], index: 2, kind: input, shape index: {}]
  %s3 = inlined_call_operand.vmem [shape: f32[2,128,128], index: 3, kind: input, shape index: {}]
  %s4 = inlined_call_operand.vmem [shape: f32[2,1,128], index: 4, kind: input, shape index: {}]
  %s5 = inlined_call_operand.vmem [shape: f32[2,128,128], index: 5, kind: input, shape index: {}]
  %s6 = inlined_call_operand.vmem [shape: f32[2,1,128], index: 6, kind: input, shape index: {}]
  %s7 = inlined_call_operand.vmem [shape: f32[2,1,128], index: 7, kind: input, shape index: {}]
  %s8 = inlined_call_operand.vmem [shape: f32[2,1,128], index: 8, kind: input, shape index: {}]
  %s9 = inlined_call_operand.vmem [shape: f32[2,72,128], index: 9, kind: output, shape index: {}]
  %s10 = sld [smem:[#allocation0]]
  $region69: #{model_forward.7} parent=0
    _
  %s12 = ssub.s32 1, %s10
  %s13 = scalar_select 0, %s12, %s10
  loop: start=0, step=1, limit=4
  $region2: #{model_forward.7} parent=0 // loop_pre_header
    _
  $region3: #{model_forward.7} parent=0 // loop_header
    %s15 = sphi 0, %s19
    %p16 = scmp.ge.s32.totalorder %s15, 4
    %s22 = sphi 0, %s34
    %s23 = sphi 0, %s30
    %s24 = sphi 0, %s22
    %s25 = sphi 0, %s23
    %s26 = sphi 0, %s24
    %s27 = sphi 0, %s25
    %s37 = sphi 0, %s39
    %s40 = sphi 0, %s37
    %s41 = sphi 0, %s40
    %s57 = sphi 0, %s41
    %s63 = sphi 0, %s65
    %s66 = sphi 0, %s63
    %s67 = sphi 0, %s66
    %s83 = sphi 0, %s67
    %s89 = sphi 0, %s91
    %s92 = sphi 0, %s89
    %s93 = sphi 0, %s92
    %s109 = sphi 0, %s93
    %s115 = sphi 0, %s117
    %s118 = sphi 0, %s115
    %s119 = sphi 0, %s118
    %s135 = sphi 0, %s119
    %s141 = sphi 0, %s143
    %s144 = sphi 0, %s141
    %s145 = sphi 0, %s144
    %s161 = sphi 0, %s145
    %s167 = sphi 0, %s169
    %s170 = sphi 0, %s167
    %s171 = sphi 0, %s170
    %s187 = sphi 0, %s171
    %s193 = sphi 0, %s195
    %s196 = sphi 0, %s193
    %s197 = sphi 0, %s196
    %s213 = sphi 0, %s197
    %s219 = sphi 0, %s221
    %s222 = sphi 0, %s219
    %s223 = sphi 0, %s222
    %s239 = sphi 0, %s223
    %s245 = sphi 0, %s247
    %s248 = sphi 0, %s245
    %s249 = sphi 0, %s248
    %s265 = sphi 0, %s249
    %s273 = sphi 0, %s275
    %s276 = sphi 0, %s273
    %s277 = sphi 0, %s276
    %s293 = sphi 0, %s277
  $region4: #{model_forward.7} parent=0 // loop_header_branch
    %18 = sbr.rel (%p16) target = $region8
  $region5: #{model_forward.7} parent=0 // loop_body
    %s20 = ssub.s32 %s15, 1
    %s21 = ssub.s32 %s15, 2
    %s28 = sadd.s32 1, %s23
    %p29 = scmp.ge.s32.totalorder %s28, 1
    %s30 = scalar_select %p29, 0, %s28
    %s31 = sadd.s32 1, %s22
    %s32 = scalar_select %p29, %s31, %s22
    %p33 = scmp.ge.s32.totalorder %s32, 2
    %s34 = scalar_select %p33, 0, %s32
    %s35 = ssub.s32 %s23, %s30
    %p36 = scmp.eq.s32.totalorder %s35, 0
    %s38 = sadd.s32 %s37, 1
    %s39 = scalar_select %p36, %s37, %s38
    %p42 = pneg %p36
    %p43 = scmp.eq.s32.totalorder %s15, 1
    %p44 = por %p42, %p43
    %p45 = scmp.ne.s32.totalorder %s37, %s40
    %p46 = scmp.eq.s32.totalorder %s15, 0
    %p47 = por %p45, %p46
    %p48 = scmp.ne.s32.totalorder %s37, %s40
    %p49 = scmp.eq.s32.totalorder %s20, 1
    %p50 = por %p48, %p49
    %p51 = scmp.ne.s32.totalorder %s40, %s41
    %p52 = scmp.eq.s32.totalorder %s20, 0
    %p53 = por %p51, %p52
    %p54 = scmp.ne.s32.totalorder %s40, %s41
    %p55 = scmp.eq.s32.totalorder %s21, 1
    %p56 = por %p54, %p55
    %p58 = scmp.ne.s32.totalorder %s41, %s57
    %p59 = scmp.eq.s32.totalorder %s21, 0
    %p60 = por %p58, %p59
    %s61 = ssub.s32 %s22, %s34
    %p62 = scmp.eq.s32.totalorder %s61, 0
    %s64 = sadd.s32 %s63, 1
    %s65 = scalar_select %p62, %s63, %s64
    %p68 = pneg %p62
    %p69 = scmp.eq.s32.totalorder %s15, 1
    %p70 = por %p68, %p69
    %p71 = scmp.ne.s32.totalorder %s63, %s66
    %p72 = scmp.eq.s32.totalorder %s15, 0
    %p73 = por %p71, %p72
    %p74 = scmp.ne.s32.totalorder %s63, %s66
    %p75 = scmp.eq.s32.totalorder %s20, 1
    %p76 = por %p74, %p75
    %p77 = scmp.ne.s32.totalorder %s66, %s67
    %p78 = scmp.eq.s32.totalorder %s20, 0
    %p79 = por %p77, %p78
    %p80 = scmp.ne.s32.totalorder %s66, %s67
    %p81 = scmp.eq.s32.totalorder %s21, 1
    %p82 = por %p80, %p81
    %p84 = scmp.ne.s32.totalorder %s67, %s83
    %p85 = scmp.eq.s32.totalorder %s21, 0
    %p86 = por %p84, %p85
    %s87 = ssub.s32 %s22, %s34
    %p88 = scmp.eq.s32.totalorder %s87, 0
    %s90 = sadd.s32 %s89, 1
    %s91 = scalar_select %p88, %s89, %s90
    %p94 = pneg %p88
    %p95 = scmp.eq.s32.totalorder %s15, 1
    %p96 = por %p94, %p95
    %p97 = scmp.ne.s32.totalorder %s89, %s92
    %p98 = scmp.eq.s32.totalorder %s15, 0
    %p99 = por %p97, %p98
    %p100 = scmp.ne.s32.totalorder %s89, %s92
    %p101 = scmp.eq.s32.totalorder %s20, 1
    %p102 = por %p100, %p101
    %p103 = scmp.ne.s32.totalorder %s92, %s93
    %p104 = scmp.eq.s32.totalorder %s20, 0
    %p105 = por %p103, %p104
    %p106 = scmp.ne.s32.totalorder %s92, %s93
    %p107 = scmp.eq.s32.totalorder %s21, 1
    %p108 = por %p106, %p107
    %p110 = scmp.ne.s32.totalorder %s93, %s109
    %p111 = scmp.eq.s32.totalorder %s21, 0
    %p112 = por %p110, %p111
    %s113 = ssub.s32 %s22, %s34
    %p114 = scmp.eq.s32.totalorder %s113, 0
    %s116 = sadd.s32 %s115, 1
    %s117 = scalar_select %p114, %s115, %s116
    %p120 = pneg %p114
    %p121 = scmp.eq.s32.totalorder %s15, 1
    %p122 = por %p120, %p121
    %p123 = scmp.ne.s32.totalorder %s115, %s118
    %p124 = scmp.eq.s32.totalorder %s15, 0
    %p125 = por %p123, %p124
    %p126 = scmp.ne.s32.totalorder %s115, %s118
    %p127 = scmp.eq.s32.totalorder %s20, 1
    %p128 = por %p126, %p127
    %p129 = scmp.ne.s32.totalorder %s118, %s119
    %p130 = scmp.eq.s32.totalorder %s20, 0
    %p131 = por %p129, %p130
    %p132 = scmp.ne.s32.totalorder %s118, %s119
    %p133 = scmp.eq.s32.totalorder %s21, 1
    %p134 = por %p132, %p133
    %p136 = scmp.ne.s32.totalorder %s119, %s135
    %p137 = scmp.eq.s32.totalorder %s21, 0
    %p138 = por %p136, %p137
    %s139 = ssub.s32 %s22, %s34
    %p140 = scmp.eq.s32.totalorder %s139, 0
    %s142 = sadd.s32 %s141, 1
    %s143 = scalar_select %p140, %s141, %s142
    %p146 = pneg %p140
    %p147 = scmp.eq.s32.totalorder %s15, 1
    %p148 = por %p146, %p147
    %p149 = scmp.ne.s32.totalorder %s141, %s144
    %p150 = scmp.eq.s32.totalorder %s15, 0
    %p151 = por %p149, %p150
    %p152 = scmp.ne.s32.totalorder %s141, %s144
    %p153 = scmp.eq.s32.totalorder %s20, 1
    %p154 = por %p152, %p153
    %p155 = scmp.ne.s32.totalorder %s144, %s145
    %p156 = scmp.eq.s32.totalorder %s20, 0
    %p157 = por %p155, %p156
    %p158 = scmp.ne.s32.totalorder %s144, %s145
    %p159 = scmp.eq.s32.totalorder %s21, 1
    %p160 = por %p158, %p159
    %p162 = scmp.ne.s32.totalorder %s145, %s161
    %p163 = scmp.eq.s32.totalorder %s21, 0
    %p164 = por %p162, %p163
    %s165 = ssub.s32 %s22, %s34
    %p166 = scmp.eq.s32.totalorder %s165, 0
    %s168 = sadd.s32 %s167, 1
    %s169 = scalar_select %p166, %s167, %s168
    %p172 = pneg %p166
    %p173 = scmp.eq.s32.totalorder %s15, 1
    %p174 = por %p172, %p173
    %p175 = scmp.ne.s32.totalorder %s167, %s170
    %p176 = scmp.eq.s32.totalorder %s15, 0
    %p177 = por %p175, %p176
    %p178 = scmp.ne.s32.totalorder %s167, %s170
    %p179 = scmp.eq.s32.totalorder %s20, 1
    %p180 = por %p178, %p179
    %p181 = scmp.ne.s32.totalorder %s170, %s171
    %p182 = scmp.eq.s32.totalorder %s20, 0
    %p183 = por %p181, %p182
    %p184 = scmp.ne.s32.totalorder %s170, %s171
    %p185 = scmp.eq.s32.totalorder %s21, 1
    %p186 = por %p184, %p185
    %p188 = scmp.ne.s32.totalorder %s171, %s187
    %p189 = scmp.eq.s32.totalorder %s21, 0
    %p190 = por %p188, %p189
    %s191 = ssub.s32 %s22, %s34
    %p192 = scmp.eq.s32.totalorder %s191, 0
    %s194 = sadd.s32 %s193, 1
    %s195 = scalar_select %p192, %s193, %s194
    %p198 = pneg %p192
    %p199 = scmp.eq.s32.totalorder %s15, 1
    %p200 = por %p198, %p199
    %p201 = scmp.ne.s32.totalorder %s193, %s196
    %p202 = scmp.eq.s32.totalorder %s15, 0
    %p203 = por %p201, %p202
    %p204 = scmp.ne.s32.totalorder %s193, %s196
    %p205 = scmp.eq.s32.totalorder %s20, 1
    %p206 = por %p204, %p205
    %p207 = scmp.ne.s32.totalorder %s196, %s197
    %p208 = scmp.eq.s32.totalorder %s20, 0
    %p209 = por %p207, %p208
    %p210 = scmp.ne.s32.totalorder %s196, %s197
    %p211 = scmp.eq.s32.totalorder %s21, 1
    %p212 = por %p210, %p211
    %p214 = scmp.ne.s32.totalorder %s197, %s213
    %p215 = scmp.eq.s32.totalorder %s21, 0
    %p216 = por %p214, %p215
    %s217 = ssub.s32 %s22, %s34
    %p218 = scmp.eq.s32.totalorder %s217, 0
    %s220 = sadd.s32 %s219, 1
    %s221 = scalar_select %p218, %s219, %s220
    %p224 = pneg %p218
    %p225 = scmp.eq.s32.totalorder %s15, 1
    %p226 = por %p224, %p225
    %p227 = scmp.ne.s32.totalorder %s219, %s222
    %p228 = scmp.eq.s32.totalorder %s15, 0
    %p229 = por %p227, %p228
    %p230 = scmp.ne.s32.totalorder %s219, %s222
    %p231 = scmp.eq.s32.totalorder %s20, 1
    %p232 = por %p230, %p231
    %p233 = scmp.ne.s32.totalorder %s222, %s223
    %p234 = scmp.eq.s32.totalorder %s20, 0
    %p235 = por %p233, %p234
    %p236 = scmp.ne.s32.totalorder %s222, %s223
    %p237 = scmp.eq.s32.totalorder %s21, 1
    %p238 = por %p236, %p237
    %p240 = scmp.ne.s32.totalorder %s223, %s239
    %p241 = scmp.eq.s32.totalorder %s21, 0
    %p242 = por %p240, %p241
    %s243 = ssub.s32 %s22, %s34
    %p244 = scmp.eq.s32.totalorder %s243, 0
    %s246 = sadd.s32 %s245, 1
    %s247 = scalar_select %p244, %s245, %s246
    %p250 = pneg %p244
    %p251 = scmp.eq.s32.totalorder %s15, 1
    %p252 = por %p250, %p251
    %p253 = scmp.ne.s32.totalorder %s245, %s248
    %p254 = scmp.eq.s32.totalorder %s15, 0
    %p255 = por %p253, %p254
    %p256 = scmp.ne.s32.totalorder %s245, %s248
    %p257 = scmp.eq.s32.totalorder %s20, 1
    %p258 = por %p256, %p257
    %p259 = scmp.ne.s32.totalorder %s248, %s249
    %p260 = scmp.eq.s32.totalorder %s20, 0
    %p261 = por %p259, %p260
    %p262 = scmp.ne.s32.totalorder %s248, %s249
    %p263 = scmp.eq.s32.totalorder %s21, 1
    %p264 = por %p262, %p263
    %p266 = scmp.ne.s32.totalorder %s249, %s265
    %p267 = scmp.eq.s32.totalorder %s21, 0
    %p268 = por %p266, %p267
    %s269 = ssub.s32 %s22, %s34
    %s270 = ssub.s32 %s23, %s30
    %s271 = sor.u32 %s269, %s270
    %p272 = scmp.eq.s32.totalorder %s271, 0
    %s274 = sadd.s32 %s273, 1
    %s275 = scalar_select %p272, %s273, %s274
    %p278 = pneg %p272
    %p279 = scmp.eq.s32.totalorder %s15, 1
    %p280 = por %p278, %p279
    %p281 = scmp.ne.s32.totalorder %s273, %s276
    %p282 = scmp.eq.s32.totalorder %s15, 0
    %p283 = por %p281, %p282
    %p284 = scmp.ne.s32.totalorder %s273, %s276
    %p285 = scmp.eq.s32.totalorder %s20, 1
    %p286 = por %p284, %p285
    %p287 = scmp.ne.s32.totalorder %s276, %s277
    %p288 = scmp.eq.s32.totalorder %s20, 0
    %p289 = por %p287, %p288
    %p290 = scmp.ne.s32.totalorder %s276, %s277
    %p291 = scmp.eq.s32.totalorder %s21, 1
    %p292 = por %p290, %p291
    %p294 = scmp.ne.s32.totalorder %s277, %s293
    %p295 = scmp.eq.s32.totalorder %s21, 0
    %p296 = por %p294, %p295
    %p297 = scmp.le.s32.totalorder 1, %s15
    %p298 = scmp.lt.s32.totalorder %s15, 3
    %p299 = pnand %p297, %p298
    %p300 = pneg %p299
    // Predicated region
    $region9: #{model_forward.7} parent=5 // pred_check
      _
    $region10: #{model_forward.7} parent=5 // pred_check_branch
      %302 = sbr.rel (%p299) target = $region12
    $region11: #{model_forward.7} parent=5 // pred_region
      %s303 = ssub.s32 %s15, 1
      // Predicated region
      $region13: #{model_forward.7} parent=11 // pred_check
        %p304 = pneg %p53
      $region14: #{model_forward.7} parent=11 // pred_check_branch
        %306 = sbr.rel (%p304) target = $region16
      $region15: #{model_forward.7} parent=11 // pred_region
        %s307 = smul.u32 9, %s25
        %p308 = scmp.lt.s32.totalorder %s307, 8
        %s309 = scalar_select %p308, %s307, 8
        %s310 = smul.addr %s309, 8
        %s311 = scalar_lea.vmem %s0, %s310
        %s312 = smul.u32 9, %s25
      $region16: #{model_forward.7} parent=11 // pred_fallthru
        _
    $region12: #{model_forward.7} parent=5 // pred_fallthru
      _
    %p313 = scmp.lt.s32.totalorder %s15, 2
    // Predicated region
    $region17: #{model_forward.7} parent=5 // pred_check
      %p314 = pneg %p313
    $region18: #{model_forward.7} parent=5 // pred_check_branch
      %316 = sbr.rel (%p314) target = $region20
    $region19: #{model_forward.7} parent=5 // pred_region
      // Predicated region
      $region21: #{model_forward.7} parent=19 // pred_check
        %p317 = pneg %p73
      $region22: #{model_forward.7} parent=19 // pred_check_branch
        %319 = sbr.rel (%p317) target = $region24
      $region23: #{model_forward.7} parent=19 // pred_region
        %p320 = scmp.lt.s32.totalorder %s22, 1
        %s321 = scalar_select %p320, %s22, 1
        %s322 = smul.addr %s321, 2
        %s323 = smul.addr %s322, 8
        %s324 = scalar_lea.vmem %s1, %s323
      $region24: #{model_forward.7} parent=19 // pred_fallthru
        _
      // Predicated region
      $region25: #{model_forward.7} parent=19 // pred_check
        %p325 = pneg %p99
      $region26: #{model_forward.7} parent=19 // pred_check_branch
        %327 = sbr.rel (%p325) target = $region28
      $region27: #{model_forward.7} parent=19 // pred_region
        %p328 = scmp.lt.s32.totalorder %s22, 1
        %s329 = scalar_select %p328, %s22, 1
        %s330 = scalar_lea.vmem %s2, %s329
      $region28: #{model_forward.7} parent=19 // pred_fallthru
        _
      // Predicated region
      $region29: #{model_forward.7} parent=19 // pred_check
        %p331 = pneg %p125
      $region30: #{model_forward.7} parent=19 // pred_check_branch
        %333 = sbr.rel (%p331) target = $region32
      $region31: #{model_forward.7} parent=19 // pred_region
        %p334 = scmp.lt.s32.totalorder %s22, 1
        %s335 = scalar_select %p334, %s22, 1
        %s336 = smul.addr %s335, 16
        %s337 = smul.addr %s336, 8
        %s338 = scalar_lea.vmem %s3, %s337
      $region32: #{model_forward.7} parent=19 // pred_fallthru
        _
      // Predicated region
      $region33: #{model_forward.7} parent=19 // pred_check
        %p339 = pneg %p151
      $region34: #{model_forward.7} parent=19 // pred_check_branch
        %341 = sbr.rel (%p339) target = $region36
      $region35: #{model_forward.7} parent=19 // pred_region
        %p342 = scmp.lt.s32.totalorder %s22, 1
        %s343 = scalar_select %p342, %s22, 1
        %s344 = scalar_lea.vmem %s4, %s343
      $region36: #{model_forward.7} parent=19 // pred_fallthru
        _
      // Predicated region
      $region37: #{model_forward.7} parent=19 // pred_check
        %p345 = pneg %p177
      $region38: #{model_forward.7} parent=19 // pred_check_branch
        %347 = sbr.rel (%p345) target = $region40
      $region39: #{model_forward.7} parent=19 // pred_region
        %p348 = scmp.lt.s32.totalorder %s22, 1
        %s349 = scalar_select %p348, %s22, 1
        %s350 = smul.addr %s349, 16
        %s351 = smul.addr %s350, 8
        %s352 = scalar_lea.vmem %s5, %s351
      $region40: #{model_forward.7} parent=19 // pred_fallthru
        _
      // Predicated region
      $region41: #{model_forward.7} parent=19 // pred_check
        %p353 = pneg %p203
      $region42: #{model_forward.7} parent=19 // pred_check_branch
        %355 = sbr.rel (%p353) target = $region44
      $region43: #{model_forward.7} parent=19 // pred_region
        %p356 = scmp.lt.s32.totalorder %s22, 1
        %s357 = scalar_select %p356, %s22, 1
        %s358 = scalar_lea.vmem %s6, %s357
      $region44: #{model_forward.7} parent=19 // pred_fallthru
        _
      // Predicated region
      $region45: #{model_forward.7} parent=19 // pred_check
        %p359 = pneg %p229
      $region46: #{model_forward.7} parent=19 // pred_check_branch
        %361 = sbr.rel (%p359) target = $region48
      $region47: #{model_forward.7} parent=19 // pred_region
        %p362 = scmp.lt.s32.totalorder %s22, 1
        %s363 = scalar_select %p362, %s22, 1
        %s364 = scalar_lea.vmem %s7, %s363
      $region48: #{model_forward.7} parent=19 // pred_fallthru
        _
      // Predicated region
      $region49: #{model_forward.7} parent=19 // pred_check
        %p365 = pneg %p255
      $region50: #{model_forward.7} parent=19 // pred_check_branch
        %367 = sbr.rel (%p365) target = $region52
      $region51: #{model_forward.7} parent=19 // pred_region
        %p368 = scmp.lt.s32.totalorder %s22, 1
        %s369 = scalar_select %p368, %s22, 1
        %s370 = scalar_lea.vmem %s8, %s369
      $region52: #{model_forward.7} parent=19 // pred_fallthru
        _
    $region20: #{model_forward.7} parent=5 // pred_fallthru
      _
    %p371 = scmp.le.s32.totalorder 1, %s15
    %p372 = scmp.lt.s32.totalorder %s15, 3
    %p373 = pnand %p371, %p372
    %p374 = pneg %p373
    // Predicated region
    $region53: #{model_forward.7} parent=5 // pred_check
      _
    $region54: #{model_forward.7} parent=5 // pred_check_branch
      %376 = sbr.rel (%p373) target = $region56
    $region55: #{model_forward.7} parent=5 // pred_region
      %s377 = ssub.s32 %s15, 1
      %s378 = smul.u32 9, %s25
      %p379 = scmp.lt.s32.totalorder %s378, 8
      %s380 = scalar_select %p379, %s378, 8
      %s381 = smul.addr %s380, 8
      %s382 = scalar_lea.vmem %s0, %s381
      %p383 = pneg %p53
      %p384 = pneg %p50
      %p385 = scmp.lt.s32.totalorder %s24, 1
      %s386 = scalar_select %p385, %s24, 1
      %s387 = smul.addr %s386, 2
      %s388 = smul.addr %s387, 8
      %s389 = scalar_lea.vmem %s1, %s388
      %p390 = pneg %p79
      %p391 = pneg %p76
      %p392 = scmp.lt.s32.totalorder %s24, 1
      %s393 = scalar_select %p392, %s24, 1
      %s394 = scalar_lea.vmem %s2, %s393
      %p395 = pneg %p105
      %p396 = pneg %p102
      %p397 = scmp.lt.s32.totalorder %s24, 1
      %s398 = scalar_select %p397, %s24, 1
      %s399 = smul.addr %s398, 16
      %s400 = smul.addr %s399, 8
      %s401 = scalar_lea.vmem %s3, %s400
      %p402 = pneg %p131
      %p403 = pneg %p128
      %p404 = scmp.lt.s32.totalorder %s24, 1
      %s405 = scalar_select %p404, %s24, 1
      %s406 = scalar_lea.vmem %s4, %s405
      %p407 = pneg %p157
      %p408 = pneg %p154
      %p409 = scmp.lt.s32.totalorder %s24, 1
      %s410 = scalar_select %p409, %s24, 1
      %s411 = smul.addr %s410, 16
      %s412 = smul.addr %s411, 8
      %s413 = scalar_lea.vmem %s5, %s412
      %p414 = pneg %p183
      %p415 = pneg %p180
      %p416 = scmp.lt.s32.totalorder %s24, 1
      %s417 = scalar_select %p416, %s24, 1
      %s418 = scalar_lea.vmem %s6, %s417
      %p419 = pneg %p209
      %p420 = pneg %p206
      %p421 = scmp.lt.s32.totalorder %s24, 1
      %s422 = scalar_select %p421, %s24, 1
      %s423 = scalar_lea.vmem %s7, %s422
      %p424 = pneg %p235
      %p425 = pneg %p232
      %p426 = scmp.lt.s32.totalorder %s24, 1
      %s427 = scalar_select %p426, %s24, 1
      %s428 = scalar_lea.vmem %s8, %s427
      %p429 = pneg %p261
      %p430 = pneg %p258
      %p431 = pneg %p289
      %p432 = pneg %p286
      %s433 = smul.u32 9, %s25
      %p434 = scmp.lt.s32.totalorder %s24, 1
      %s435 = scalar_select %p434, %s24, 1
      %p436 = scmp.lt.s32.totalorder %s433, 8
      %s437 = scalar_select %p436, %s433, 8
      %s438 = smul.addr %s435, 9
      %s439 = sadd.s32 %s437, %s438
      %s440 = smul.addr %s439, 8
      %s441 = scalar_lea.vmem %s9, %s440
      %s442 = smul.u32 9, %s25
      %p443 = scmp.lt.s32.totalorder %s442, 8
      %s444 = scalar_select %p443, %s442, 8
      %s445 = smul.addr %s444, 8
      %s446 = scalar_lea.vmem %s0, %s445
      %s447 = smul.u32 9, %s25
      %p448 = scmp.lt.s32.totalorder %s24, 1
      %s449 = scalar_select %p448, %s24, 1
      %s450 = smul.addr %s449, 2
      %s451 = smul.addr %s450, 8
      %s452 = scalar_lea.vmem %s1, %s451
      %p453 = scmp.lt.s32.totalorder %s24, 1
      %s454 = scalar_select %p453, %s24, 1
      %s455 = scalar_lea.vmem %s2, %s454
      %p456 = scmp.lt.s32.totalorder %s24, 1
      %s457 = scalar_select %p456, %s24, 1
      %s458 = smul.addr %s457, 16
      %s459 = smul.addr %s458, 8
      %s460 = scalar_lea.vmem %s3, %s459
      %p461 = scmp.lt.s32.totalorder %s24, 1
      %s462 = scalar_select %p461, %s24, 1
      %s463 = scalar_lea.vmem %s4, %s462
      %p464 = scmp.lt.s32.totalorder %s24, 1
      %s465 = scalar_select %p464, %s24, 1
      %s466 = smul.addr %s465, 16
      %s467 = smul.addr %s466, 8
      %s468 = scalar_lea.vmem %s5, %s467
      %p469 = scmp.lt.s32.totalorder %s24, 1
      %s470 = scalar_select %p469, %s24, 1
      %s471 = scalar_lea.vmem %s6, %s470
      %p472 = scmp.lt.s32.totalorder %s24, 1
      %s473 = scalar_select %p472, %s24, 1
      %s474 = scalar_lea.vmem %s7, %s473
      %p475 = scmp.lt.s32.totalorder %s24, 1
      %s476 = scalar_select %p475, %s24, 1
      %s477 = scalar_lea.vmem %s8, %s476
      %s478 = smul.u32 9, %s25
      %p479 = scmp.lt.s32.totalorder %s24, 1
      %s480 = scalar_select %p479, %s24, 1
      %p481 = scmp.lt.s32.totalorder %s478, 8
      %s482 = scalar_select %p481, %s478, 8
      %s483 = smul.addr %s480, 9
      %s484 = sadd.s32 %s482, %s483
      %s485 = smul.addr %s484, 8
      %s486 = scalar_lea.vmem %s9, %s485
      %s487 = smul.u32 9, %s25
      %v488 = vld [vmem:[%s446] sm:$0xff]
      %v489 = vld [vmem:[%s446 + $0x8] sm:$0xff]
      %v490 = vld [vmem:[%s446 + $0x10] sm:$0xff]
      %v491 = vld [vmem:[%s446 + $0x18] sm:$0xff]
      %v492 = vld [vmem:[%s446 + $0x20] sm:$0xff]
      %v493 = vld [vmem:[%s446 + $0x28] sm:$0xff]
      %v494 = vld [vmem:[%s446 + $0x30] sm:$0xff]
      %v495 = vld [vmem:[%s446 + $0x38] sm:$0xff]
      %v496 = vld [vmem:[%s446 + $0x40] sm:$0xff]
      %v497 = vld [vmem:[%s452] sm:$0xff]
      %v498 = vld [vmem:[%s452 + $0x8] sm:$0x3]
      %v499 = vld [vmem:[%s455] sm:$0x1]
      %v501 = vperm.slane %v499, 0
      %vm503 = vcmask 80896
      %v505 = vsel %vm503, %v488, 0
      %v508 = vsel %vm503, %v489, 0
      %v511 = vsel %vm503, %v490, 0
      %v514 = vsel %vm503, %v491, 0
      %v517 = vsel %vm503, %v492, 0
      %v520 = vsel %vm503, %v493, 0
      %v523 = vsel %vm503, %v494, 0
      %v526 = vsel %vm503, %v495, 0
      %v529 = vsel %vm503, %v496, 0
      %vm531 = vcmask 1041408
      %v533 = vsel %vm531, %v498, 0
      %535 = vmatpush.msra.mxu0 0.0
      %536 = vmatpush.msra.mxu0 0.0
      %537 = vmatpush.msra.mxu0 0.0
      %538 = vmatpush.msra.mxu0 0.0
      %539 = vmatpush.msra.mxu0 0.0
      %540 = vmatpush.msra.mxu0 0.0
      %541 = vmatpush.msra.mxu0 0.0
      %542 = vmatpush.msra.mxu0 0.0
      %543 = vmatpush.msra.mxu0 0.0
      %544 = vmatpush.msra.mxu0 0.0
      %545 = vmatpush.msra.mxu0 0.0
      %546 = vmatpush.msra.mxu0 0.0
      %547 = vmatpush.msra.mxu0 0.0
      %548 = vmatpush.msra.mxu0 0.0
      %549 = vmatpush.msra.mxu0 %v533
      %550 = vmatpush.msra.mxu0 %v497
      %551 = vmatmul.f32.gmra.mxu0 %v505
      %v552 = vpop.f32.mrf.mxu0
      %v553 = vadd.f32 %v501, %v552
      %554 = vmatmul.f32.gmra.mxu0 %v508
      %v555 = vpop.f32.mrf.mxu0
      %v556 = vadd.f32 %v501, %v555
      %557 = vmatmul.f32.gmra.mxu0 %v511
      %v558 = vpop.f32.mrf.mxu0
      %v559 = vadd.f32 %v501, %v558
      %560 = vmatmul.f32.gmra.mxu0 %v514
      %v561 = vpop.f32.mrf.mxu0
      %v562 = vadd.f32 %v501, %v561
      %563 = vmatmul.f32.gmra.mxu0 %v517
      %v564 = vpop.f32.mrf.mxu0
      %v565 = vadd.f32 %v501, %v564
      %566 = vmatmul.f32.gmra.mxu0 %v520
      %v567 = vpop.f32.mrf.mxu0
      %v568 = vadd.f32 %v501, %v567
      %569 = vmatmul.f32.gmra.mxu0 %v523
      %v570 = vpop.f32.mrf.mxu0
      %v571 = vadd.f32 %v501, %v570
      %572 = vmatmul.f32.gmra.mxu0 %v526
      %v573 = vpop.f32.mrf.mxu0
      %v574 = vadd.f32 %v501, %v573
      %575 = vmatmul.f32.gmra.mxu0 %v529
      %v576 = vpop.f32.mrf.mxu0
      %v577 = vadd.f32 %v501, %v576
      %578 = vdwg.mxu0
      %v579 = vmax.f32 %v553, 0.0
      %v580 = vmax.f32 %v556, 0.0
      %v581 = vmax.f32 %v559, 0.0
      %v582 = vmax.f32 %v562, 0.0
      %v583 = vmax.f32 %v565, 0.0
      %v584 = vmax.f32 %v568, 0.0
      %v585 = vmax.f32 %v571, 0.0
      %v586 = vmax.f32 %v574, 0.0
      %v587 = vmax.f32 %v577, 0.0
      %v588 = vld [vmem:[%s460] sm:$0xff]
      %v589 = vld [vmem:[%s460 + $0x8] sm:$0xff]
      %v590 = vld [vmem:[%s460 + $0x10] sm:$0xff]
      %v591 = vld [vmem:[%s460 + $0x18] sm:$0xff]
      %v592 = vld [vmem:[%s460 + $0x20] sm:$0xff]
      %v593 = vld [vmem:[%s460 + $0x28] sm:$0xff]
      %v594 = vld [vmem:[%s460 + $0x30] sm:$0xff]
      %v595 = vld [vmem:[%s460 + $0x38] sm:$0xff]
      %v596 = vld [vmem:[%s460 + $0x40] sm:$0xff]
      %v597 = vld [vmem:[%s460 + $0x48] sm:$0xff]
      %v598 = vld [vmem:[%s460 + $0x50] sm:$0xff]
      %v599 = vld [vmem:[%s460 + $0x58] sm:$0xff]
      %v600 = vld [vmem:[%s460 + $0x60] sm:$0xff]
      %v601 = vld [vmem:[%s460 + $0x68] sm:$0xff]
      %v602 = vld [vmem:[%s460 + $0x70] sm:$0xff]
      %v603 = vld [vmem:[%s460 + $0x78] sm:$0xff]
      %v604 = vpack.c.bf16 %v580, %v579
      %v605 = vpack.c.bf16 %v582, %v581
      %v606 = vpack.c.bf16 %v584, %v583
      %v607 = vpack.c.bf16 %v586, %v585
      %v608 = vpack.c.bf16 %v587, %v587
      %v609 = vpack.c.bf16 %v589, %v588
      %v610 = vpack.c.bf16 %v591, %v590
      %v611 = vpack.c.bf16 %v593, %v592
      %v612 = vpack.c.bf16 %v595, %v594
      %v613 = vpack.c.bf16 %v597, %v596
      %v614 = vpack.c.bf16 %v599, %v598
      %v615 = vpack.c.bf16 %v601, %v600
      %v616 = vpack.c.bf16 %v603, %v602
      %v617 = vld [vmem:[%s463] sm:$0x1]
      %v619 = vperm.slane %v617, 0
      %621 = vmatpush.bf16.msra.mxu0 %v616
      %622 = vmatpush.bf16.msra.mxu0 %v615
      %623 = vmatpush.bf16.msra.mxu0 %v614
      %624 = vmatpush.bf16.msra.mxu0 %v613
      %625 = vmatpush.bf16.msra.mxu0 %v612
      %626 = vmatpush.bf16.msra.mxu0 %v611
      %627 = vmatpush.bf16.msra.mxu0 %v610
      %628 = vmatpush.bf16.msra.mxu0 %v609
      %629 = vmatmul.bf16.gmra.mxu0 %v604
      %v630 = vpop.f32.mrf.mxu0
      %v631 = vadd.f32 %v619, %v630
      %v632 = vpop.f32.mrf.mxu0
      %v633 = vadd.f32 %v619, %v632
      %634 = vmatmul.bf16.gmra.mxu0 %v605
      %v635 = vpop.f32.mrf.mxu0
      %v636 = vadd.f32 %v619, %v635
      %v637 = vpop.f32.mrf.mxu0
      %v638 = vadd.f32 %v619, %v637
      %639 = vmatmul.bf16.gmra.mxu0 %v606
      %v640 = vpop.f32.mrf.mxu0
      %v641 = vadd.f32 %v619, %v640
      %v642 = vpop.f32.mrf.mxu0
      %v643 = vadd.f32 %v619, %v642
      %644 = vmatmul.bf16.gmra.mxu0 %v607
      %v645 = vpop.f32.mrf.mxu0
      %v646 = vadd.f32 %v619, %v645
      %v647 = vpop.f32.mrf.mxu0
      %v648 = vadd.f32 %v619, %v647
      %649 = vmatmul.bf16.gmra.mxu0 %v608
      %v650 = vpop.f32.mrf.mxu0
      %v651 = vadd.f32 %v619, %v650
      %v652 = vpop.f32.mrf.mxu0
      %653 = vdwg.mxu0
      %v654 = vmax.f32 %v631, 0.0
      %v655 = vmax.f32 %v633, 0.0
      %v656 = vmax.f32 %v636, 0.0
      %v657 = vmax.f32 %v638, 0.0
      %v658 = vmax.f32 %v641, 0.0
      %v659 = vmax.f32 %v643, 0.0
      %v660 = vmax.f32 %v646, 0.0
      %v661 = vmax.f32 %v648, 0.0
      %v662 = vmax.f32 %v651, 0.0
      %v663 = vld [vmem:[%s468] sm:$0xff]
      %v664 = vld [vmem:[%s468 + $0x8] sm:$0xff]
      %v665 = vld [vmem:[%s468 + $0x10] sm:$0xff]
      %v666 = vld [vmem:[%s468 + $0x18] sm:$0xff]
      %v667 = vld [vmem:[%s468 + $0x20] sm:$0xff]
      %v668 = vld [vmem:[%s468 + $0x28] sm:$0xff]
      %v669 = vld [vmem:[%s468 + $0x30] sm:$0xff]
      %v670 = vld [vmem:[%s468 + $0x38] sm:$0xff]
      %v671 = vld [vmem:[%s468 + $0x40] sm:$0xff]
      %v672 = vld [vmem:[%s468 + $0x48] sm:$0xff]
      %v673 = vld [vmem:[%s468 + $0x50] sm:$0xff]
      %v674 = vld [vmem:[%s468 + $0x58] sm:$0xff]
      %v675 = vld [vmem:[%s468 + $0x60] sm:$0xff]
      %v676 = vld [vmem:[%s468 + $0x68] sm:$0xff]
      %v677 = vld [vmem:[%s468 + $0x70] sm:$0xff]
      %v678 = vld [vmem:[%s468 + $0x78] sm:$0xff]
      %v679 = vpack.c.bf16 %v655, %v654
      %v680 = vpack.c.bf16 %v657, %v656
      %v681 = vpack.c.bf16 %v659, %v658
      %v682 = vpack.c.bf16 %v661, %v660
      %v683 = vpack.c.bf16 %v662, %v662
      %v684 = vpack.c.bf16 %v664, %v663
      %v685 = vpack.c.bf16 %v666, %v665
      %v686 = vpack.c.bf16 %v668, %v667
      %v687 = vpack.c.bf16 %v670, %v669
      %v688 = vpack.c.bf16 %v672, %v671
      %v689 = vpack.c.bf16 %v674, %v673
      %v690 = vpack.c.bf16 %v676, %v675
      %v691 = vpack.c.bf16 %v678, %v677
      %v692 = vld [vmem:[%s471] sm:$0x1]
      %v694 = vperm.slane %v692, 0
      %696 = vmatpush.bf16.msra.mxu0 %v691
      %697 = vmatpush.bf16.msra.mxu0 %v690
      %698 = vmatpush.bf16.msra.mxu0 %v689
      %699 = vmatpush.bf16.msra.mxu0 %v688
      %700 = vmatpush.bf16.msra.mxu0 %v687
      %701 = vmatpush.bf16.msra.mxu0 %v686
      %702 = vmatpush.bf16.msra.mxu0 %v685
      %703 = vmatpush.bf16.msra.mxu0 %v684
      %704 = vmatmul.bf16.gmra.mxu0 %v679
      %v705 = vpop.f32.mrf.mxu0
      %v706 = vadd.f32 %v694, %v705
      %v707 = vpop.f32.mrf.mxu0
      %v708 = vadd.f32 %v694, %v707
      %709 = vmatmul.bf16.gmra.mxu0 %v680
      %v710 = vpop.f32.mrf.mxu0
      %v711 = vadd.f32 %v694, %v710
      %v712 = vpop.f32.mrf.mxu0
      %v713 = vadd.f32 %v694, %v712
      %714 = vmatmul.bf16.gmra.mxu0 %v681
      %v715 = vpop.f32.mrf.mxu0
      %v716 = vadd.f32 %v694, %v715
      %v717 = vpop.f32.mrf.mxu0
      %v718 = vadd.f32 %v694, %v717
      %719 = vmatmul.bf16.gmra.mxu0 %v682
      %v720 = vpop.f32.mrf.mxu0
      %v721 = vadd.f32 %v694, %v720
      %v722 = vpop.f32.mrf.mxu0
      %v723 = vadd.f32 %v694, %v722
      %724 = vmatmul.bf16.gmra.mxu0 %v683
      %v725 = vpop.f32.mrf.mxu0
      %v726 = vadd.f32 %v694, %v725
      %v727 = vpop.f32.mrf.mxu0
      %728 = vdwg.mxu0
      %729 = vadd.xlane.f32.xlu0 %v706
      %v730 = vpop.xlane.xlu0 %729
      %731 = vadd.xlane.f32.xlu0 %v708
      %v732 = vpop.xlane.xlu0 %731
      %733 = vadd.xlane.f32.xlu0 %v711
      %v734 = vpop.xlane.xlu0 %733
      %735 = vadd.xlane.f32.xlu0 %v713
      %v736 = vpop.xlane.xlu0 %735
      %737 = vadd.xlane.f32.xlu0 %v716
      %v738 = vpop.xlane.xlu0 %737
      %739 = vadd.xlane.f32.xlu0 %v718
      %v740 = vpop.xlane.xlu0 %739
      %741 = vadd.xlane.f32.xlu0 %v721
      %v742 = vpop.xlane.xlu0 %741
      %743 = vadd.xlane.f32.xlu0 %v723
      %v744 = vpop.xlane.xlu0 %743
      %745 = vadd.xlane.f32.xlu0 %v726
      %v746 = vpop.xlane.xlu0 %745
      %v747 = vrcp.pop 128.0
      %v748 = vmul.f32 128.0, %v747
      %v749 = vsub.f32 1.0, %v748
      %v750 = vmul.f32 %v747, %v749
      %v751 = vadd.f32 %v747, %v750
      %vm752 = vweird.f32 %v747
      %v753 = vsel %vm752, %v747, %v751
      %v754 = vmul.f32 %v730, %v753
      %v755 = vmul.f32 %v732, %v753
      %v756 = vmul.f32 %v734, %v753
      %v757 = vmul.f32 %v736, %v753
      %v758 = vmul.f32 %v738, %v753
      %v759 = vmul.f32 %v740, %v753
      %v760 = vmul.f32 %v742, %v753
      %v761 = vmul.f32 %v744, %v753
      %v762 = vmul.f32 %v746, %v753
      %v763 = vsub.f32 %v706, %v754
      %v764 = vsub.f32 %v708, %v755
      %v765 = vsub.f32 %v711, %v756
      %v766 = vsub.f32 %v713, %v757
      %v767 = vsub.f32 %v716, %v758
      %v768 = vsub.f32 %v718, %v759
      %v769 = vsub.f32 %v721, %v760
      %v770 = vsub.f32 %v723, %v761
      %v771 = vsub.f32 %v726, %v762
      %v772 = vmul.f32 %v763, %v763
      %v773 = vmul.f32 %v764, %v764
      %v774 = vmul.f32 %v765, %v765
      %v775 = vmul.f32 %v766, %v766
      %v776 = vmul.f32 %v767, %v767
      %v777 = vmul.f32 %v768, %v768
      %v778 = vmul.f32 %v769, %v769
      %v779 = vmul.f32 %v770, %v770
      %v780 = vmul.f32 %v771, %v771
      %781 = vadd.xlane.f32.xlu0 %v772
      %v782 = vpop.xlane.xlu0 %781
      %783 = vadd.xlane.f32.xlu0 %v773
      %v784 = vpop.xlane.xlu0 %783
      %785 = vadd.xlane.f32.xlu0 %v774
      %v786 = vpop.xlane.xlu0 %785
      %787 = vadd.xlane.f32.xlu0 %v775
      %v788 = vpop.xlane.xlu0 %787
      %789 = vadd.xlane.f32.xlu0 %v776
      %v790 = vpop.xlane.xlu0 %789
      %791 = vadd.xlane.f32.xlu0 %v777
      %v792 = vpop.xlane.xlu0 %791
      %793 = vadd.xlane.f32.xlu0 %v778
      %v794 = vpop.xlane.xlu0 %793
      %795 = vadd.xlane.f32.xlu0 %v779
      %v796 = vpop.xlane.xlu0 %795
      %797 = vadd.xlane.f32.xlu0 %v780
      %v798 = vpop.xlane.xlu0 %797
      %v799 = vmul.f32 %v782, %v753
      %v800 = vmul.f32 %v784, %v753
      %v801 = vmul.f32 %v786, %v753
      %v802 = vmul.f32 %v788, %v753
      %v803 = vmul.f32 %v790, %v753
      %v804 = vmul.f32 %v792, %v753
      %v805 = vmul.f32 %v794, %v753
      %v806 = vmul.f32 %v796, %v753
      %v807 = vmul.f32 %v798, %v753
      %v808 = vadd.f32 %v799, 1e-05
      %v809 = vadd.f32 %v800, 1e-05
      %v810 = vadd.f32 %v801, 1e-05
      %v811 = vadd.f32 %v802, 1e-05
      %v812 = vadd.f32 %v803, 1e-05
      %v813 = vadd.f32 %v804, 1e-05
      %v814 = vadd.f32 %v805, 1e-05
      %v815 = vadd.f32 %v806, 1e-05
      %v816 = vadd.f32 %v807, 1e-05
      %v817 = vrsqrt.pop %v808
      %v818 = vmul.f32 %v817, %v808
      %v819 = vmul.f32 %v818, %v817
      %v820 = vmul.f32 0.5, %v819
      %v821 = vsub.f32 1.5, %v820
      %v822 = vmul.f32 %v817, %v821
      %vm823 = vweird.f32 %v808
      %vm824 = vweird.f32 %v817
      %vm825 = vmor %vm823, %vm824
      %v826 = vsel %vm825, %v817, %v822
      %v827 = vrsqrt.pop %v809
      %v828 = vmul.f32 %v827, %v809
      %v829 = vmul.f32 %v828, %v827
      %v830 = vmul.f32 0.5, %v829
      %v831 = vsub.f32 1.5, %v830
      %v832 = vmul.f32 %v827, %v831
      %vm833 = vweird.f32 %v809
      %vm834 = vweird.f32 %v827
      %vm835 = vmor %vm833, %vm834
      %v836 = vsel %vm835, %v827, %v832
      %v837 = vrsqrt.pop %v810
      %v838 = vmul.f32 %v837, %v810
      %v839 = vmul.f32 %v838, %v837
      %v840 = vmul.f32 0.5, %v839
      %v841 = vsub.f32 1.5, %v840
      %v842 = vmul.f32 %v837, %v841
      %vm843 = vweird.f32 %v810
      %vm844 = vweird.f32 %v837
      %vm845 = vmor %vm843, %vm844
      %v846 = vsel %vm845, %v837, %v842
      %v847 = vrsqrt.pop %v811
      %v848 = vmul.f32 %v847, %v811
      %v849 = vmul.f32 %v848, %v847
      %v850 = vmul.f32 0.5, %v849
      %v851 = vsub.f32 1.5, %v850
      %v852 = vmul.f32 %v847, %v851
      %vm853 = vweird.f32 %v811
      %vm854 = vweird.f32 %v847
      %vm855 = vmor %vm853, %vm854
      %v856 = vsel %vm855, %v847, %v852
      %v857 = vrsqrt.pop %v812
      %v858 = vmul.f32 %v857, %v812
      %v859 = vmul.f32 %v858, %v857
      %v860 = vmul.f32 0.5, %v859
      %v861 = vsub.f32 1.5, %v860
      %v862 = vmul.f32 %v857, %v861
      %vm863 = vweird.f32 %v812
      %vm864 = vweird.f32 %v857
      %vm865 = vmor %vm863, %vm864
      %v866 = vsel %vm865, %v857, %v862
      %v867 = vrsqrt.pop %v813
      %v868 = vmul.f32 %v867, %v813
      %v869 = vmul.f32 %v868, %v867
      %v870 = vmul.f32 0.5, %v869
      %v871 = vsub.f32 1.5, %v870
      %v872 = vmul.f32 %v867, %v871
      %vm873 = vweird.f32 %v813
      %vm874 = vweird.f32 %v867
      %vm875 = vmor %vm873, %vm874
      %v876 = vsel %vm875, %v867, %v872
      %v877 = vrsqrt.pop %v814
      %v878 = vmul.f32 %v877, %v814
      %v879 = vmul.f32 %v878, %v877
      %v880 = vmul.f32 0.5, %v879
      %v881 = vsub.f32 1.5, %v880
      %v882 = vmul.f32 %v877, %v881
      %vm883 = vweird.f32 %v814
      %vm884 = vweird.f32 %v877
      %vm885 = vmor %vm883, %vm884
      %v886 = vsel %vm885, %v877, %v882
      %v887 = vrsqrt.pop %v815
      %v888 = vmul.f32 %v887, %v815
      %v889 = vmul.f32 %v888, %v887
      %v890 = vmul.f32 0.5, %v889
      %v891 = vsub.f32 1.5, %v890
      %v892 = vmul.f32 %v887, %v891
      %vm893 = vweird.f32 %v815
      %vm894 = vweird.f32 %v887
      %vm895 = vmor %vm893, %vm894
      %v896 = vsel %vm895, %v887, %v892
      %v897 = vrsqrt.pop %v816
      %v898 = vmul.f32 %v897, %v816
      %v899 = vmul.f32 %v898, %v897
      %v900 = vmul.f32 0.5, %v899
      %v901 = vsub.f32 1.5, %v900
      %v902 = vmul.f32 %v897, %v901
      %vm903 = vweird.f32 %v816
      %vm904 = vweird.f32 %v897
      %vm905 = vmor %vm903, %vm904
      %v906 = vsel %vm905, %v897, %v902
      %v907 = vmul.f32 %v763, %v826
      %v908 = vmul.f32 %v764, %v836
      %v909 = vmul.f32 %v765, %v846
      %v910 = vmul.f32 %v766, %v856
      %v911 = vmul.f32 %v767, %v866
      %v912 = vmul.f32 %v768, %v876
      %v913 = vmul.f32 %v769, %v886
      %v914 = vmul.f32 %v770, %v896
      %v915 = vmul.f32 %v771, %v906
      %v916 = vld [vmem:[%s474] sm:$0x1]
      %v918 = vperm.slane %v916, 0
      %v920 = vmul.f32 %v907, %v918
      %v921 = vmul.f32 %v908, %v918
      %v922 = vmul.f32 %v909, %v918
      %v923 = vmul.f32 %v910, %v918
      %v924 = vmul.f32 %v911, %v918
      %v925 = vmul.f32 %v912, %v918
      %v926 = vmul.f32 %v913, %v918
      %v927 = vmul.f32 %v914, %v918
      %v928 = vmul.f32 %v915, %v918
      %v929 = vld [vmem:[%s477] sm:$0x1]
      %v931 = vperm.slane %v929, 0
      %v933 = vadd.f32 %v920, %v931
      %v934 = vadd.f32 %v921, %v931
      %v935 = vadd.f32 %v922, %v931
      %v936 = vadd.f32 %v923, %v931
      %v937 = vadd.f32 %v924, %v931
      %v938 = vadd.f32 %v925, %v931
      %v939 = vadd.f32 %v926, %v931
      %v940 = vadd.f32 %v927, %v931
      %v941 = vadd.f32 %v928, %v931
      %942 = vst [vmem:[%s486] sm:$0xff] %v933
      %943 = vst [vmem:[%s486 + $0x8] sm:$0xff] %v934
      %944 = vst [vmem:[%s486 + $0x10] sm:$0xff] %v935
      %945 = vst [vmem:[%s486 + $0x18] sm:$0xff] %v936
      %946 = vst [vmem:[%s486 + $0x20] sm:$0xff] %v937
      %947 = vst [vmem:[%s486 + $0x28] sm:$0xff] %v938
      %948 = vst [vmem:[%s486 + $0x30] sm:$0xff] %v939
      %949 = vst [vmem:[%s486 + $0x38] sm:$0xff] %v940
      %950 = vst [vmem:[%s486 + $0x40] sm:$0xff] %v941
      %s951 = smul.u32 9, %s25
      %p952 = scmp.lt.s32.totalorder %s24, 1
      %s953 = scalar_select %p952, %s24, 1
      %p954 = scmp.lt.s32.totalorder %s951, 8
      %s955 = scalar_select %p954, %s951, 8
      %s956 = smul.addr %s953, 9
      %s957 = sadd.s32 %s955, %s956
      %s958 = smul.addr %s957, 8
      %s959 = scalar_lea.vmem %s9, %s958
      // Predicated region
      $region57: #{model_forward.7} parent=55 // pred_check
        %p960 = pneg %p286
      $region58: #{model_forward.7} parent=55 // pred_check_branch
        %962 = sbr.rel (%p960) target = $region60
      $region59: #{model_forward.7} parent=55 // pred_region
        %s963 = smul.u32 9, %s25
      $region60: #{model_forward.7} parent=55 // pred_fallthru
        _
    $region56: #{model_forward.7} parent=5 // pred_fallthru
      _
    %p964 = scmp.le.s32.totalorder 2, %s15
    // Predicated region
    $region61: #{model_forward.7} parent=5 // pred_check
      %p965 = pneg %p964
    $region62: #{model_forward.7} parent=5 // pred_check_branch
      %967 = sbr.rel (%p965) target = $region64
    $region63: #{model_forward.7} parent=5 // pred_region
      %s968 = ssub.s32 %s15, 2
      // Predicated region
      $region65: #{model_forward.7} parent=63 // pred_check
        %p969 = pneg %p292
      $region66: #{model_forward.7} parent=63 // pred_check_branch
        %971 = sbr.rel (%p969) target = $region68
      $region67: #{model_forward.7} parent=63 // pred_region
        %s972 = smul.u32 9, %s27
        %p973 = scmp.lt.s32.totalorder %s26, 1
        %s974 = scalar_select %p973, %s26, 1
        %p975 = scmp.lt.s32.totalorder %s972, 8
        %s976 = scalar_select %p975, %s972, 8
        %s977 = smul.addr %s974, 9
        %s978 = sadd.s32 %s976, %s977
        %s979 = smul.addr %s978, 8
        %s980 = scalar_lea.vmem %s9, %s979
      $region68: #{model_forward.7} parent=63 // pred_fallthru
        _
    $region64: #{model_forward.7} parent=5 // pred_fallthru
      _
  $region6: #{model_forward.7} parent=0 // loop_footer
    %s19 = sadd.s32 1, %s15
  $region7: #{model_forward.7} parent=0 // loop_footer_branch
    %14 = sbr.rel target = $region3
  $region8: #{model_forward.7} parent=0 // loop_exit
    _

// kernel: model_forward.8
$region0: #{model_forward.8}
  #allocation0 [shape = 'u32[]', space=smem, size = 0x4, offset = 0x4, fixed_abs, tag = 'smem constant byte address 0x4 - core index']
  #allocation1 [shape = 'u32[72,128]{1,0:T(1,128)}', space=vmem, size = 0x9000, scoped, tag = 'internal scratch']
  %s0 = inlined_call_operand.vmem [shape: f32[240,6], index: 0, kind: input, shape index: {}]
  %s1 = inlined_call_operand.vmem [shape: f32[2,6,128], index: 1, kind: input, shape index: {}]
  %s2 = inlined_call_operand.vmem [shape: f32[2,1,128], index: 2, kind: input, shape index: {}]
  %s3 = inlined_call_operand.vmem [shape: f32[2,128,128], index: 3, kind: input, shape index: {}]
  %s4 = inlined_call_operand.vmem [shape: f32[2,1,128], index: 4, kind: input, shape index: {}]
  %s5 = inlined_call_operand.vmem [shape: f32[2,128,128], index: 5, kind: input, shape index: {}]
  %s6 = inlined_call_operand.vmem [shape: f32[2,1,128], index: 6, kind: input, shape index: {}]
  %s7 = inlined_call_operand.vmem [shape: f32[2,1,128], index: 7, kind: input, shape index: {}]
  %s8 = inlined_call_operand.vmem [shape: f32[2,1,128], index: 8, kind: input, shape index: {}]
  %s9 = inlined_call_operand.vmem [shape: f32[2,240,128], index: 9, kind: output, shape index: {}]
  %s10 = sld [smem:[#allocation0]]
  $region69: #{model_forward.8} parent=0
    _
  %s12 = ssub.s32 1, %s10
  %s13 = scalar_select 0, %s12, %s10
  loop: start=0, step=1, limit=4
  $region2: #{model_forward.8} parent=0 // loop_pre_header
    _
  $region3: #{model_forward.8} parent=0 // loop_header
    %s15 = sphi 0, %s19
    %p16 = scmp.ge.s32.totalorder %s15, 4
    %s22 = sphi 0, %s34
    %s23 = sphi 0, %s30
    %s24 = sphi 0, %s22
    %s25 = sphi 0, %s23
    %s26 = sphi 0, %s24
    %s27 = sphi 0, %s25
    %s37 = sphi 0, %s39
    %s40 = sphi 0, %s37
    %s41 = sphi 0, %s40
    %s57 = sphi 0, %s41
    %s63 = sphi 0, %s65
    %s66 = sphi 0, %s63
    %s67 = sphi 0, %s66
    %s83 = sphi 0, %s67
    %s89 = sphi 0, %s91
    %s92 = sphi 0, %s89
    %s93 = sphi 0, %s92
    %s109 = sphi 0, %s93
    %s115 = sphi 0, %s117
    %s118 = sphi 0, %s115
    %s119 = sphi 0, %s118
    %s135 = sphi 0, %s119
    %s141 = sphi 0, %s143
    %s144 = sphi 0, %s141
    %s145 = sphi 0, %s144
    %s161 = sphi 0, %s145
    %s167 = sphi 0, %s169
    %s170 = sphi 0, %s167
    %s171 = sphi 0, %s170
    %s187 = sphi 0, %s171
    %s193 = sphi 0, %s195
    %s196 = sphi 0, %s193
    %s197 = sphi 0, %s196
    %s213 = sphi 0, %s197
    %s219 = sphi 0, %s221
    %s222 = sphi 0, %s219
    %s223 = sphi 0, %s222
    %s239 = sphi 0, %s223
    %s245 = sphi 0, %s247
    %s248 = sphi 0, %s245
    %s249 = sphi 0, %s248
    %s265 = sphi 0, %s249
    %s273 = sphi 0, %s275
    %s276 = sphi 0, %s273
    %s277 = sphi 0, %s276
    %s293 = sphi 0, %s277
  $region4: #{model_forward.8} parent=0 // loop_header_branch
    %18 = sbr.rel (%p16) target = $region8
  $region5: #{model_forward.8} parent=0 // loop_body
    %s20 = ssub.s32 %s15, 1
    %s21 = ssub.s32 %s15, 2
    %s28 = sadd.s32 1, %s23
    %p29 = scmp.ge.s32.totalorder %s28, 1
    %s30 = scalar_select %p29, 0, %s28
    %s31 = sadd.s32 1, %s22
    %s32 = scalar_select %p29, %s31, %s22
    %p33 = scmp.ge.s32.totalorder %s32, 2
    %s34 = scalar_select %p33, 0, %s32
    %s35 = ssub.s32 %s23, %s30
    %p36 = scmp.eq.s32.totalorder %s35, 0
    %s38 = sadd.s32 %s37, 1
    %s39 = scalar_select %p36, %s37, %s38
    %p42 = pneg %p36
    %p43 = scmp.eq.s32.totalorder %s15, 1
    %p44 = por %p42, %p43
    %p45 = scmp.ne.s32.totalorder %s37, %s40
    %p46 = scmp.eq.s32.totalorder %s15, 0
    %p47 = por %p45, %p46
    %p48 = scmp.ne.s32.totalorder %s37, %s40
    %p49 = scmp.eq.s32.totalorder %s20, 1
    %p50 = por %p48, %p49
    %p51 = scmp.ne.s32.totalorder %s40, %s41
    %p52 = scmp.eq.s32.totalorder %s20, 0
    %p53 = por %p51, %p52
    %p54 = scmp.ne.s32.totalorder %s40, %s41
    %p55 = scmp.eq.s32.totalorder %s21, 1
    %p56 = por %p54, %p55
    %p58 = scmp.ne.s32.totalorder %s41, %s57
    %p59 = scmp.eq.s32.totalorder %s21, 0
    %p60 = por %p58, %p59
    %s61 = ssub.s32 %s22, %s34
    %p62 = scmp.eq.s32.totalorder %s61, 0
    %s64 = sadd.s32 %s63, 1
    %s65 = scalar_select %p62, %s63, %s64
    %p68 = pneg %p62
    %p69 = scmp.eq.s32.totalorder %s15, 1
    %p70 = por %p68, %p69
    %p71 = scmp.ne.s32.totalorder %s63, %s66
    %p72 = scmp.eq.s32.totalorder %s15, 0
    %p73 = por %p71, %p72
    %p74 = scmp.ne.s32.totalorder %s63, %s66
    %p75 = scmp.eq.s32.totalorder %s20, 1
    %p76 = por %p74, %p75
    %p77 = scmp.ne.s32.totalorder %s66, %s67
    %p78 = scmp.eq.s32.totalorder %s20, 0
    %p79 = por %p77, %p78
    %p80 = scmp.ne.s32.totalorder %s66, %s67
    %p81 = scmp.eq.s32.totalorder %s21, 1
    %p82 = por %p80, %p81
    %p84 = scmp.ne.s32.totalorder %s67, %s83
    %p85 = scmp.eq.s32.totalorder %s21, 0
    %p86 = por %p84, %p85
    %s87 = ssub.s32 %s22, %s34
    %p88 = scmp.eq.s32.totalorder %s87, 0
    %s90 = sadd.s32 %s89, 1
    %s91 = scalar_select %p88, %s89, %s90
    %p94 = pneg %p88
    %p95 = scmp.eq.s32.totalorder %s15, 1
    %p96 = por %p94, %p95
    %p97 = scmp.ne.s32.totalorder %s89, %s92
    %p98 = scmp.eq.s32.totalorder %s15, 0
    %p99 = por %p97, %p98
    %p100 = scmp.ne.s32.totalorder %s89, %s92
    %p101 = scmp.eq.s32.totalorder %s20, 1
    %p102 = por %p100, %p101
    %p103 = scmp.ne.s32.totalorder %s92, %s93
    %p104 = scmp.eq.s32.totalorder %s20, 0
    %p105 = por %p103, %p104
    %p106 = scmp.ne.s32.totalorder %s92, %s93
    %p107 = scmp.eq.s32.totalorder %s21, 1
    %p108 = por %p106, %p107
    %p110 = scmp.ne.s32.totalorder %s93, %s109
    %p111 = scmp.eq.s32.totalorder %s21, 0
    %p112 = por %p110, %p111
    %s113 = ssub.s32 %s22, %s34
    %p114 = scmp.eq.s32.totalorder %s113, 0
    %s116 = sadd.s32 %s115, 1
    %s117 = scalar_select %p114, %s115, %s116
    %p120 = pneg %p114
    %p121 = scmp.eq.s32.totalorder %s15, 1
    %p122 = por %p120, %p121
    %p123 = scmp.ne.s32.totalorder %s115, %s118
    %p124 = scmp.eq.s32.totalorder %s15, 0
    %p125 = por %p123, %p124
    %p126 = scmp.ne.s32.totalorder %s115, %s118
    %p127 = scmp.eq.s32.totalorder %s20, 1
    %p128 = por %p126, %p127
    %p129 = scmp.ne.s32.totalorder %s118, %s119
    %p130 = scmp.eq.s32.totalorder %s20, 0
    %p131 = por %p129, %p130
    %p132 = scmp.ne.s32.totalorder %s118, %s119
    %p133 = scmp.eq.s32.totalorder %s21, 1
    %p134 = por %p132, %p133
    %p136 = scmp.ne.s32.totalorder %s119, %s135
    %p137 = scmp.eq.s32.totalorder %s21, 0
    %p138 = por %p136, %p137
    %s139 = ssub.s32 %s22, %s34
    %p140 = scmp.eq.s32.totalorder %s139, 0
    %s142 = sadd.s32 %s141, 1
    %s143 = scalar_select %p140, %s141, %s142
    %p146 = pneg %p140
    %p147 = scmp.eq.s32.totalorder %s15, 1
    %p148 = por %p146, %p147
    %p149 = scmp.ne.s32.totalorder %s141, %s144
    %p150 = scmp.eq.s32.totalorder %s15, 0
    %p151 = por %p149, %p150
    %p152 = scmp.ne.s32.totalorder %s141, %s144
    %p153 = scmp.eq.s32.totalorder %s20, 1
    %p154 = por %p152, %p153
    %p155 = scmp.ne.s32.totalorder %s144, %s145
    %p156 = scmp.eq.s32.totalorder %s20, 0
    %p157 = por %p155, %p156
    %p158 = scmp.ne.s32.totalorder %s144, %s145
    %p159 = scmp.eq.s32.totalorder %s21, 1
    %p160 = por %p158, %p159
    %p162 = scmp.ne.s32.totalorder %s145, %s161
    %p163 = scmp.eq.s32.totalorder %s21, 0
    %p164 = por %p162, %p163
    %s165 = ssub.s32 %s22, %s34
    %p166 = scmp.eq.s32.totalorder %s165, 0
    %s168 = sadd.s32 %s167, 1
    %s169 = scalar_select %p166, %s167, %s168
    %p172 = pneg %p166
    %p173 = scmp.eq.s32.totalorder %s15, 1
    %p174 = por %p172, %p173
    %p175 = scmp.ne.s32.totalorder %s167, %s170
    %p176 = scmp.eq.s32.totalorder %s15, 0
    %p177 = por %p175, %p176
    %p178 = scmp.ne.s32.totalorder %s167, %s170
    %p179 = scmp.eq.s32.totalorder %s20, 1
    %p180 = por %p178, %p179
    %p181 = scmp.ne.s32.totalorder %s170, %s171
    %p182 = scmp.eq.s32.totalorder %s20, 0
    %p183 = por %p181, %p182
    %p184 = scmp.ne.s32.totalorder %s170, %s171
    %p185 = scmp.eq.s32.totalorder %s21, 1
    %p186 = por %p184, %p185
    %p188 = scmp.ne.s32.totalorder %s171, %s187
    %p189 = scmp.eq.s32.totalorder %s21, 0
    %p190 = por %p188, %p189
    %s191 = ssub.s32 %s22, %s34
    %p192 = scmp.eq.s32.totalorder %s191, 0
    %s194 = sadd.s32 %s193, 1
    %s195 = scalar_select %p192, %s193, %s194
    %p198 = pneg %p192
    %p199 = scmp.eq.s32.totalorder %s15, 1
    %p200 = por %p198, %p199
    %p201 = scmp.ne.s32.totalorder %s193, %s196
    %p202 = scmp.eq.s32.totalorder %s15, 0
    %p203 = por %p201, %p202
    %p204 = scmp.ne.s32.totalorder %s193, %s196
    %p205 = scmp.eq.s32.totalorder %s20, 1
    %p206 = por %p204, %p205
    %p207 = scmp.ne.s32.totalorder %s196, %s197
    %p208 = scmp.eq.s32.totalorder %s20, 0
    %p209 = por %p207, %p208
    %p210 = scmp.ne.s32.totalorder %s196, %s197
    %p211 = scmp.eq.s32.totalorder %s21, 1
    %p212 = por %p210, %p211
    %p214 = scmp.ne.s32.totalorder %s197, %s213
    %p215 = scmp.eq.s32.totalorder %s21, 0
    %p216 = por %p214, %p215
    %s217 = ssub.s32 %s22, %s34
    %p218 = scmp.eq.s32.totalorder %s217, 0
    %s220 = sadd.s32 %s219, 1
    %s221 = scalar_select %p218, %s219, %s220
    %p224 = pneg %p218
    %p225 = scmp.eq.s32.totalorder %s15, 1
    %p226 = por %p224, %p225
    %p227 = scmp.ne.s32.totalorder %s219, %s222
    %p228 = scmp.eq.s32.totalorder %s15, 0
    %p229 = por %p227, %p228
    %p230 = scmp.ne.s32.totalorder %s219, %s222
    %p231 = scmp.eq.s32.totalorder %s20, 1
    %p232 = por %p230, %p231
    %p233 = scmp.ne.s32.totalorder %s222, %s223
    %p234 = scmp.eq.s32.totalorder %s20, 0
    %p235 = por %p233, %p234
    %p236 = scmp.ne.s32.totalorder %s222, %s223
    %p237 = scmp.eq.s32.totalorder %s21, 1
    %p238 = por %p236, %p237
    %p240 = scmp.ne.s32.totalorder %s223, %s239
    %p241 = scmp.eq.s32.totalorder %s21, 0
    %p242 = por %p240, %p241
    %s243 = ssub.s32 %s22, %s34
    %p244 = scmp.eq.s32.totalorder %s243, 0
    %s246 = sadd.s32 %s245, 1
    %s247 = scalar_select %p244, %s245, %s246
    %p250 = pneg %p244
    %p251 = scmp.eq.s32.totalorder %s15, 1
    %p252 = por %p250, %p251
    %p253 = scmp.ne.s32.totalorder %s245, %s248
    %p254 = scmp.eq.s32.totalorder %s15, 0
    %p255 = por %p253, %p254
    %p256 = scmp.ne.s32.totalorder %s245, %s248
    %p257 = scmp.eq.s32.totalorder %s20, 1
    %p258 = por %p256, %p257
    %p259 = scmp.ne.s32.totalorder %s248, %s249
    %p260 = scmp.eq.s32.totalorder %s20, 0
    %p261 = por %p259, %p260
    %p262 = scmp.ne.s32.totalorder %s248, %s249
    %p263 = scmp.eq.s32.totalorder %s21, 1
    %p264 = por %p262, %p263
    %p266 = scmp.ne.s32.totalorder %s249, %s265
    %p267 = scmp.eq.s32.totalorder %s21, 0
    %p268 = por %p266, %p267
    %s269 = ssub.s32 %s22, %s34
    %s270 = ssub.s32 %s23, %s30
    %s271 = sor.u32 %s269, %s270
    %p272 = scmp.eq.s32.totalorder %s271, 0
    %s274 = sadd.s32 %s273, 1
    %s275 = scalar_select %p272, %s273, %s274
    %p278 = pneg %p272
    %p279 = scmp.eq.s32.totalorder %s15, 1
    %p280 = por %p278, %p279
    %p281 = scmp.ne.s32.totalorder %s273, %s276
    %p282 = scmp.eq.s32.totalorder %s15, 0
    %p283 = por %p281, %p282
    %p284 = scmp.ne.s32.totalorder %s273, %s276
    %p285 = scmp.eq.s32.totalorder %s20, 1
    %p286 = por %p284, %p285
    %p287 = scmp.ne.s32.totalorder %s276, %s277
    %p288 = scmp.eq.s32.totalorder %s20, 0
    %p289 = por %p287, %p288
    %p290 = scmp.ne.s32.totalorder %s276, %s277
    %p291 = scmp.eq.s32.totalorder %s21, 1
    %p292 = por %p290, %p291
    %p294 = scmp.ne.s32.totalorder %s277, %s293
    %p295 = scmp.eq.s32.totalorder %s21, 0
    %p296 = por %p294, %p295
    %p297 = scmp.le.s32.totalorder 1, %s15
    %p298 = scmp.lt.s32.totalorder %s15, 3
    %p299 = pnand %p297, %p298
    %p300 = pneg %p299
    // Predicated region
    $region9: #{model_forward.8} parent=5 // pred_check
      _
    $region10: #{model_forward.8} parent=5 // pred_check_branch
      %302 = sbr.rel (%p299) target = $region12
    $region11: #{model_forward.8} parent=5 // pred_region
      %s303 = ssub.s32 %s15, 1
      // Predicated region
      $region13: #{model_forward.8} parent=11 // pred_check
        %p304 = pneg %p53
      $region14: #{model_forward.8} parent=11 // pred_check_branch
        %306 = sbr.rel (%p304) target = $region16
      $region15: #{model_forward.8} parent=11 // pred_region
        %s307 = smul.u32 30, %s25
        %p308 = scmp.lt.s32.totalorder %s307, 29
        %s309 = scalar_select %p308, %s307, 29
        %s310 = smul.addr %s309, 8
        %s311 = scalar_lea.vmem %s0, %s310
        %s312 = smul.u32 30, %s25
      $region16: #{model_forward.8} parent=11 // pred_fallthru
        _
    $region12: #{model_forward.8} parent=5 // pred_fallthru
      _
    %p313 = scmp.lt.s32.totalorder %s15, 2
    // Predicated region
    $region17: #{model_forward.8} parent=5 // pred_check
      %p314 = pneg %p313
    $region18: #{model_forward.8} parent=5 // pred_check_branch
      %316 = sbr.rel (%p314) target = $region20
    $region19: #{model_forward.8} parent=5 // pred_region
      // Predicated region
      $region21: #{model_forward.8} parent=19 // pred_check
        %p317 = pneg %p73
      $region22: #{model_forward.8} parent=19 // pred_check_branch
        %319 = sbr.rel (%p317) target = $region24
      $region23: #{model_forward.8} parent=19 // pred_region
        %p320 = scmp.lt.s32.totalorder %s22, 1
        %s321 = scalar_select %p320, %s22, 1
        %s322 = smul.addr %s321, 8
        %s323 = scalar_lea.vmem %s1, %s322
      $region24: #{model_forward.8} parent=19 // pred_fallthru
        _
      // Predicated region
      $region25: #{model_forward.8} parent=19 // pred_check
        %p324 = pneg %p99
      $region26: #{model_forward.8} parent=19 // pred_check_branch
        %326 = sbr.rel (%p324) target = $region28
      $region27: #{model_forward.8} parent=19 // pred_region
        %p327 = scmp.lt.s32.totalorder %s22, 1
        %s328 = scalar_select %p327, %s22, 1
        %s329 = scalar_lea.vmem %s2, %s328
      $region28: #{model_forward.8} parent=19 // pred_fallthru
        _
      // Predicated region
      $region29: #{model_forward.8} parent=19 // pred_check
        %p330 = pneg %p125
      $region30: #{model_forward.8} parent=19 // pred_check_branch
        %332 = sbr.rel (%p330) target = $region32
      $region31: #{model_forward.8} parent=19 // pred_region
        %p333 = scmp.lt.s32.totalorder %s22, 1
        %s334 = scalar_select %p333, %s22, 1
        %s335 = smul.addr %s334, 16
        %s336 = smul.addr %s335, 8
        %s337 = scalar_lea.vmem %s3, %s336
      $region32: #{model_forward.8} parent=19 // pred_fallthru
        _
      // Predicated region
      $region33: #{model_forward.8} parent=19 // pred_check
        %p338 = pneg %p151
      $region34: #{model_forward.8} parent=19 // pred_check_branch
        %340 = sbr.rel (%p338) target = $region36
      $region35: #{model_forward.8} parent=19 // pred_region
        %p341 = scmp.lt.s32.totalorder %s22, 1
        %s342 = scalar_select %p341, %s22, 1
        %s343 = scalar_lea.vmem %s4, %s342
      $region36: #{model_forward.8} parent=19 // pred_fallthru
        _
      // Predicated region
      $region37: #{model_forward.8} parent=19 // pred_check
        %p344 = pneg %p177
      $region38: #{model_forward.8} parent=19 // pred_check_branch
        %346 = sbr.rel (%p344) target = $region40
      $region39: #{model_forward.8} parent=19 // pred_region
        %p347 = scmp.lt.s32.totalorder %s22, 1
        %s348 = scalar_select %p347, %s22, 1
        %s349 = smul.addr %s348, 16
        %s350 = smul.addr %s349, 8
        %s351 = scalar_lea.vmem %s5, %s350
      $region40: #{model_forward.8} parent=19 // pred_fallthru
        _
      // Predicated region
      $region41: #{model_forward.8} parent=19 // pred_check
        %p352 = pneg %p203
      $region42: #{model_forward.8} parent=19 // pred_check_branch
        %354 = sbr.rel (%p352) target = $region44
      $region43: #{model_forward.8} parent=19 // pred_region
        %p355 = scmp.lt.s32.totalorder %s22, 1
        %s356 = scalar_select %p355, %s22, 1
        %s357 = scalar_lea.vmem %s6, %s356
      $region44: #{model_forward.8} parent=19 // pred_fallthru
        _
      // Predicated region
      $region45: #{model_forward.8} parent=19 // pred_check
        %p358 = pneg %p229
      $region46: #{model_forward.8} parent=19 // pred_check_branch
        %360 = sbr.rel (%p358) target = $region48
      $region47: #{model_forward.8} parent=19 // pred_region
        %p361 = scmp.lt.s32.totalorder %s22, 1
        %s362 = scalar_select %p361, %s22, 1
        %s363 = scalar_lea.vmem %s7, %s362
      $region48: #{model_forward.8} parent=19 // pred_fallthru
        _
      // Predicated region
      $region49: #{model_forward.8} parent=19 // pred_check
        %p364 = pneg %p255
      $region50: #{model_forward.8} parent=19 // pred_check_branch
        %366 = sbr.rel (%p364) target = $region52
      $region51: #{model_forward.8} parent=19 // pred_region
        %p367 = scmp.lt.s32.totalorder %s22, 1
        %s368 = scalar_select %p367, %s22, 1
        %s369 = scalar_lea.vmem %s8, %s368
      $region52: #{model_forward.8} parent=19 // pred_fallthru
        _
    $region20: #{model_forward.8} parent=5 // pred_fallthru
      _
    %p370 = scmp.le.s32.totalorder 1, %s15
    %p371 = scmp.lt.s32.totalorder %s15, 3
    %p372 = pnand %p370, %p371
    %p373 = pneg %p372
    // Predicated region
    $region53: #{model_forward.8} parent=5 // pred_check
      _
    $region54: #{model_forward.8} parent=5 // pred_check_branch
      %375 = sbr.rel (%p372) target = $region56
    $region55: #{model_forward.8} parent=5 // pred_region
      %s376 = ssub.s32 %s15, 1
      %s377 = smul.u32 30, %s25
      %p378 = scmp.lt.s32.totalorder %s377, 29
      %s379 = scalar_select %p378, %s377, 29
      %s380 = smul.addr %s379, 8
      %s381 = scalar_lea.vmem %s0, %s380
      %p382 = pneg %p53
      %p383 = pneg %p50
      %p384 = scmp.lt.s32.totalorder %s24, 1
      %s385 = scalar_select %p384, %s24, 1
      %s386 = smul.addr %s385, 8
      %s387 = scalar_lea.vmem %s1, %s386
      %p388 = pneg %p79
      %p389 = pneg %p76
      %p390 = scmp.lt.s32.totalorder %s24, 1
      %s391 = scalar_select %p390, %s24, 1
      %s392 = scalar_lea.vmem %s2, %s391
      %p393 = pneg %p105
      %p394 = pneg %p102
      %p395 = scmp.lt.s32.totalorder %s24, 1
      %s396 = scalar_select %p395, %s24, 1
      %s397 = smul.addr %s396, 16
      %s398 = smul.addr %s397, 8
      %s399 = scalar_lea.vmem %s3, %s398
      %p400 = pneg %p131
      %p401 = pneg %p128
      %p402 = scmp.lt.s32.totalorder %s24, 1
      %s403 = scalar_select %p402, %s24, 1
      %s404 = scalar_lea.vmem %s4, %s403
      %p405 = pneg %p157
      %p406 = pneg %p154
      %p407 = scmp.lt.s32.totalorder %s24, 1
      %s408 = scalar_select %p407, %s24, 1
      %s409 = smul.addr %s408, 16
      %s410 = smul.addr %s409, 8
      %s411 = scalar_lea.vmem %s5, %s410
      %p412 = pneg %p183
      %p413 = pneg %p180
      %p414 = scmp.lt.s32.totalorder %s24, 1
      %s415 = scalar_select %p414, %s24, 1
      %s416 = scalar_lea.vmem %s6, %s415
      %p417 = pneg %p209
      %p418 = pneg %p206
      %p419 = scmp.lt.s32.totalorder %s24, 1
      %s420 = scalar_select %p419, %s24, 1
      %s421 = scalar_lea.vmem %s7, %s420
      %p422 = pneg %p235
      %p423 = pneg %p232
      %p424 = scmp.lt.s32.totalorder %s24, 1
      %s425 = scalar_select %p424, %s24, 1
      %s426 = scalar_lea.vmem %s8, %s425
      %p427 = pneg %p261
      %p428 = pneg %p258
      %p429 = pneg %p289
      %p430 = pneg %p286
      %s431 = smul.u32 30, %s25
      %p432 = scmp.lt.s32.totalorder %s24, 1
      %s433 = scalar_select %p432, %s24, 1
      %p434 = scmp.lt.s32.totalorder %s431, 29
      %s435 = scalar_select %p434, %s431, 29
      %s436 = smul.addr %s433, 30
      %s437 = sadd.s32 %s435, %s436
      %s438 = smul.addr %s437, 8
      %s439 = scalar_lea.vmem %s9, %s438
      %s440 = smul.u32 30, %s25
      %p441 = scmp.lt.s32.totalorder %s440, 29
      %s442 = scalar_select %p441, %s440, 29
      %s443 = smul.addr %s442, 8
      %s444 = scalar_lea.vmem %s0, %s443
      %s445 = smul.u32 30, %s25
      %p446 = scmp.lt.s32.totalorder %s24, 1
      %s447 = scalar_select %p446, %s24, 1
      %s448 = smul.addr %s447, 8
      %s449 = scalar_lea.vmem %s1, %s448
      %p450 = scmp.lt.s32.totalorder %s24, 1
      %s451 = scalar_select %p450, %s24, 1
      %s452 = scalar_lea.vmem %s2, %s451
      %p453 = scmp.lt.s32.totalorder %s24, 1
      %s454 = scalar_select %p453, %s24, 1
      %s455 = smul.addr %s454, 16
      %s456 = smul.addr %s455, 8
      %s457 = scalar_lea.vmem %s3, %s456
      %p458 = scmp.lt.s32.totalorder %s24, 1
      %s459 = scalar_select %p458, %s24, 1
      %s460 = scalar_lea.vmem %s4, %s459
      %p461 = scmp.lt.s32.totalorder %s24, 1
      %s462 = scalar_select %p461, %s24, 1
      %s463 = smul.addr %s462, 16
      %s464 = smul.addr %s463, 8
      %s465 = scalar_lea.vmem %s5, %s464
      %p466 = scmp.lt.s32.totalorder %s24, 1
      %s467 = scalar_select %p466, %s24, 1
      %s468 = scalar_lea.vmem %s6, %s467
      %p469 = scmp.lt.s32.totalorder %s24, 1
      %s470 = scalar_select %p469, %s24, 1
      %s471 = scalar_lea.vmem %s7, %s470
      %p472 = scmp.lt.s32.totalorder %s24, 1
      %s473 = scalar_select %p472, %s24, 1
      %s474 = scalar_lea.vmem %s8, %s473
      %s475 = smul.u32 30, %s25
      %p476 = scmp.lt.s32.totalorder %s24, 1
      %s477 = scalar_select %p476, %s24, 1
      %p478 = scmp.lt.s32.totalorder %s475, 29
      %s479 = scalar_select %p478, %s475, 29
      %s480 = smul.addr %s477, 30
      %s481 = sadd.s32 %s479, %s480
      %s482 = smul.addr %s481, 8
      %s483 = scalar_lea.vmem %s9, %s482
      %s484 = smul.u32 30, %s25
      %v485 = vld [vmem:[%s444] sm:$0xff]
      %v486 = vld [vmem:[%s444 + $0x8] sm:$0xff]
      %v487 = vld [vmem:[%s444 + $0x10] sm:$0xff]
      %v488 = vld [vmem:[%s444 + $0x18] sm:$0xff]
      %v489 = vld [vmem:[%s444 + $0x20] sm:$0xff]
      %v490 = vld [vmem:[%s444 + $0x28] sm:$0xff]
      %v491 = vld [vmem:[%s444 + $0x30] sm:$0xff]
      %v492 = vld [vmem:[%s444 + $0x38] sm:$0xff]
      %v493 = vld [vmem:[%s444 + $0x40] sm:$0xff]
      %v494 = vld [vmem:[%s444 + $0x48] sm:$0xff]
      %v495 = vld [vmem:[%s444 + $0x50] sm:$0xff]
      %v496 = vld [vmem:[%s444 + $0x58] sm:$0xff]
      %v497 = vld [vmem:[%s444 + $0x60] sm:$0xff]
      %v498 = vld [vmem:[%s444 + $0x68] sm:$0xff]
      %v499 = vld [vmem:[%s444 + $0x70] sm:$0xff]
      %v500 = vld [vmem:[%s444 + $0x78] sm:$0xff]
      %v501 = vld [vmem:[%s444 + $0x80] sm:$0xff]
      %v502 = vld [vmem:[%s444 + $0x88] sm:$0xff]
      %v503 = vld [vmem:[%s444 + $0x90] sm:$0xff]
      %v504 = vld [vmem:[%s444 + $0x98] sm:$0xff]
      %v505 = vld [vmem:[%s444 + $0xa0] sm:$0xff]
      %v506 = vld [vmem:[%s444 + $0xa8] sm:$0xff]
      %v507 = vld [vmem:[%s444 + $0xb0] sm:$0xff]
      %v508 = vld [vmem:[%s444 + $0xb8] sm:$0xff]
      %v509 = vld [vmem:[%s444 + $0xc0] sm:$0xff]
      %v510 = vld [vmem:[%s444 + $0xc8] sm:$0xff]
      %v511 = vld [vmem:[%s444 + $0xd0] sm:$0xff]
      %v512 = vld [vmem:[%s444 + $0xd8] sm:$0xff]
      %v513 = vld [vmem:[%s444 + $0xe0] sm:$0xff]
      %v514 = vld [vmem:[%s444 + $0xe8] sm:$0xff]
      %v515 = vld [vmem:[%s449] sm:$0x3f]
      %v516 = vld [vmem:[%s452] sm:$0x1]
      %v518 = vperm.slane %v516, 0
      %vm520 = vcmask 48128
      %v522 = vsel %vm520, %v485, 0
      %v525 = vsel %vm520, %v486, 0
      %v528 = vsel %vm520, %v487, 0
      %v531 = vsel %vm520, %v488, 0
      %v534 = vsel %vm520, %v489, 0
      %v537 = vsel %vm520, %v490, 0
      %v540 = vsel %vm520, %v491, 0
      %v543 = vsel %vm520, %v492, 0
      %v546 = vsel %vm520, %v493, 0
      %v549 = vsel %vm520, %v494, 0
      %v552 = vsel %vm520, %v495, 0
      %v555 = vsel %vm520, %v496, 0
      %v558 = vsel %vm520, %v497, 0
      %v561 = vsel %vm520, %v498, 0
      %v564 = vsel %vm520, %v499, 0
      %v567 = vsel %vm520, %v500, 0
      %v570 = vsel %vm520, %v501, 0
      %v573 = vsel %vm520, %v502, 0
      %v576 = vsel %vm520, %v503, 0
      %v579 = vsel %vm520, %v504, 0
      %v582 = vsel %vm520, %v505, 0
      %v585 = vsel %vm520, %v506, 0
      %v588 = vsel %vm520, %v507, 0
      %v591 = vsel %vm520, %v508, 0
      %v594 = vsel %vm520, %v509, 0
      %v597 = vsel %vm520, %v510, 0
      %v600 = vsel %vm520, %v511, 0
      %v603 = vsel %vm520, %v512, 0
      %v606 = vsel %vm520, %v513, 0
      %v609 = vsel %vm520, %v514, 0
      %vm611 = vcmask 1045504
      %v613 = vsel %vm611, %v515, 0
      %615 = vmatpush.msra.mxu0 0.0
      %616 = vmatpush.msra.mxu0 0.0
      %617 = vmatpush.msra.mxu0 0.0
      %618 = vmatpush.msra.mxu0 0.0
      %619 = vmatpush.msra.mxu0 0.0
      %620 = vmatpush.msra.mxu0 0.0
      %621 = vmatpush.msra.mxu0 0.0
      %622 = vmatpush.msra.mxu0 0.0
      %623 = vmatpush.msra.mxu0 0.0
      %624 = vmatpush.msra.mxu0 0.0
      %625 = vmatpush.msra.mxu0 0.0
      %626 = vmatpush.msra.mxu0 0.0
      %627 = vmatpush.msra.mxu0 0.0
      %628 = vmatpush.msra.mxu0 0.0
      %629 = vmatpush.msra.mxu0 0.0
      %630 = vmatpush.msra.mxu0 %v613
      %631 = vmatmul.f32.gmra.mxu0 %v522
      %v632 = vpop.f32.mrf.mxu0
      %v633 = vadd.f32 %v518, %v632
      %634 = vmatmul.f32.gmra.mxu0 %v525
      %v635 = vpop.f32.mrf.mxu0
      %v636 = vadd.f32 %v518, %v635
      %637 = vmatmul.f32.gmra.mxu0 %v528
      %v638 = vpop.f32.mrf.mxu0
      %v639 = vadd.f32 %v518, %v638
      %640 = vmatmul.f32.gmra.mxu0 %v531
      %v641 = vpop.f32.mrf.mxu0
      %v642 = vadd.f32 %v518, %v641
      %643 = vmatmul.f32.gmra.mxu0 %v534
      %v644 = vpop.f32.mrf.mxu0
      %v645 = vadd.f32 %v518, %v644
      %646 = vmatmul.f32.gmra.mxu0 %v537
      %v647 = vpop.f32.mrf.mxu0
      %v648 = vadd.f32 %v518, %v647
      %649 = vmatmul.f32.gmra.mxu0 %v540
      %v650 = vpop.f32.mrf.mxu0
      %v651 = vadd.f32 %v518, %v650
      %652 = vmatmul.f32.gmra.mxu0 %v543
      %v653 = vpop.f32.mrf.mxu0
      %v654 = vadd.f32 %v518, %v653
      %655 = vmatmul.f32.gmra.mxu0 %v546
      %v656 = vpop.f32.mrf.mxu0
      %v657 = vadd.f32 %v518, %v656
      %658 = vmatmul.f32.gmra.mxu0 %v549
      %v659 = vpop.f32.mrf.mxu0
      %v660 = vadd.f32 %v518, %v659
      %661 = vmatmul.f32.gmra.mxu0 %v552
      %v662 = vpop.f32.mrf.mxu0
      %v663 = vadd.f32 %v518, %v662
      %664 = vmatmul.f32.gmra.mxu0 %v555
      %v665 = vpop.f32.mrf.mxu0
      %v666 = vadd.f32 %v518, %v665
      %667 = vmatmul.f32.gmra.mxu0 %v558
      %v668 = vpop.f32.mrf.mxu0
      %v669 = vadd.f32 %v518, %v668
      %670 = vmatmul.f32.gmra.mxu0 %v561
      %v671 = vpop.f32.mrf.mxu0
      %v672 = vadd.f32 %v518, %v671
      %673 = vmatmul.f32.gmra.mxu0 %v564
      %v674 = vpop.f32.mrf.mxu0
      %v675 = vadd.f32 %v518, %v674
      %676 = vmatmul.f32.gmra.mxu0 %v567
      %v677 = vpop.f32.mrf.mxu0
      %v678 = vadd.f32 %v518, %v677
      %679 = vmatmul.f32.gmra.mxu0 %v570
      %v680 = vpop.f32.mrf.mxu0
      %v681 = vadd.f32 %v518, %v680
      %682 = vmatmul.f32.gmra.mxu0 %v573
      %v683 = vpop.f32.mrf.mxu0
      %v684 = vadd.f32 %v518, %v683
      %685 = vmatmul.f32.gmra.mxu0 %v576
      %v686 = vpop.f32.mrf.mxu0
      %v687 = vadd.f32 %v518, %v686
      %688 = vmatmul.f32.gmra.mxu0 %v579
      %v689 = vpop.f32.mrf.mxu0
      %v690 = vadd.f32 %v518, %v689
      %691 = vmatmul.f32.gmra.mxu0 %v582
      %v692 = vpop.f32.mrf.mxu0
      %v693 = vadd.f32 %v518, %v692
      %694 = vmatmul.f32.gmra.mxu0 %v585
      %v695 = vpop.f32.mrf.mxu0
      %v696 = vadd.f32 %v518, %v695
      %697 = vmatmul.f32.gmra.mxu0 %v588
      %v698 = vpop.f32.mrf.mxu0
      %v699 = vadd.f32 %v518, %v698
      %700 = vmatmul.f32.gmra.mxu0 %v591
      %v701 = vpop.f32.mrf.mxu0
      %v702 = vadd.f32 %v518, %v701
      %703 = vmatmul.f32.gmra.mxu0 %v594
      %v704 = vpop.f32.mrf.mxu0
      %v705 = vadd.f32 %v518, %v704
      %706 = vmatmul.f32.gmra.mxu0 %v597
      %v707 = vpop.f32.mrf.mxu0
      %v708 = vadd.f32 %v518, %v707
      %709 = vmatmul.f32.gmra.mxu0 %v600
      %v710 = vpop.f32.mrf.mxu0
      %v711 = vadd.f32 %v518, %v710
      %712 = vmatmul.f32.gmra.mxu0 %v603
      %v713 = vpop.f32.mrf.mxu0
      %v714 = vadd.f32 %v518, %v713
      %715 = vmatmul.f32.gmra.mxu0 %v606
      %v716 = vpop.f32.mrf.mxu0
      %v717 = vadd.f32 %v518, %v716
      %718 = vmatmul.f32.gmra.mxu0 %v609
      %v719 = vpop.f32.mrf.mxu0
      %v720 = vadd.f32 %v518, %v719
      %721 = vdwg.mxu0
      %v722 = vmax.f32 %v633, 0.0
      %v723 = vmax.f32 %v636, 0.0
      %v724 = vmax.f32 %v639, 0.0
      %v725 = vmax.f32 %v642, 0.0
      %v726 = vmax.f32 %v645, 0.0
      %v727 = vmax.f32 %v648, 0.0
      %v728 = vmax.f32 %v651, 0.0
      %v729 = vmax.f32 %v654, 0.0
      %v730 = vmax.f32 %v657, 0.0
      %v731 = vmax.f32 %v660, 0.0
      %v732 = vmax.f32 %v663, 0.0
      %v733 = vmax.f32 %v666, 0.0
      %v734 = vmax.f32 %v669, 0.0
      %v735 = vmax.f32 %v672, 0.0
      %v736 = vmax.f32 %v675, 0.0
      %v737 = vmax.f32 %v678, 0.0
      %v738 = vmax.f32 %v681, 0.0
      %v739 = vmax.f32 %v684, 0.0
      %v740 = vmax.f32 %v687, 0.0
      %v741 = vmax.f32 %v690, 0.0
      %v742 = vmax.f32 %v693, 0.0
      %v743 = vmax.f32 %v696, 0.0
      %v744 = vmax.f32 %v699, 0.0
      %v745 = vmax.f32 %v702, 0.0
      %v746 = vmax.f32 %v705, 0.0
      %v747 = vmax.f32 %v708, 0.0
      %v748 = vmax.f32 %v711, 0.0
      %v749 = vmax.f32 %v714, 0.0
      %v750 = vmax.f32 %v717, 0.0
      %v751 = vmax.f32 %v720, 0.0
      %v752 = vld [vmem:[%s457] sm:$0xff]
      %v753 = vld [vmem:[%s457 + $0x8] sm:$0xff]
      %v754 = vld [vmem:[%s457 + $0x10] sm:$0xff]
      %v755 = vld [vmem:[%s457 + $0x18] sm:$0xff]
      %v756 = vld [vmem:[%s457 + $0x20] sm:$0xff]
      %v757 = vld [vmem:[%s457 + $0x28] sm:$0xff]
      %v758 = vld [vmem:[%s457 + $0x30] sm:$0xff]
      %v759 = vld [vmem:[%s457 + $0x38] sm:$0xff]
      %v760 = vld [vmem:[%s457 + $0x40] sm:$0xff]
      %v761 = vld [vmem:[%s457 + $0x48] sm:$0xff]
      %v762 = vld [vmem:[%s457 + $0x50] sm:$0xff]
      %v763 = vld [vmem:[%s457 + $0x58] sm:$0xff]
      %v764 = vld [vmem:[%s457 + $0x60] sm:$0xff]
      %v765 = vld [vmem:[%s457 + $0x68] sm:$0xff]
      %v766 = vld [vmem:[%s457 + $0x70] sm:$0xff]
      %v767 = vld [vmem:[%s457 + $0x78] sm:$0xff]
      %v768 = vpack.c.bf16 %v723, %v722
      %v769 = vpack.c.bf16 %v725, %v724
      %v770 = vpack.c.bf16 %v727, %v726
      %v771 = vpack.c.bf16 %v729, %v728
      %v772 = vpack.c.bf16 %v731, %v730
      %v773 = vpack.c.bf16 %v733, %v732
      %v774 = vpack.c.bf16 %v735, %v734
      %v775 = vpack.c.bf16 %v737, %v736
      %v776 = vpack.c.bf16 %v739, %v738
      %v777 = vpack.c.bf16 %v741, %v740
      %v778 = vpack.c.bf16 %v743, %v742
      %v779 = vpack.c.bf16 %v745, %v744
      %v780 = vpack.c.bf16 %v747, %v746
      %v781 = vpack.c.bf16 %v749, %v748
      %v782 = vpack.c.bf16 %v751, %v750
      %v783 = vpack.c.bf16 %v753, %v752
      %v784 = vpack.c.bf16 %v755, %v754
      %v785 = vpack.c.bf16 %v757, %v756
      %v786 = vpack.c.bf16 %v759, %v758
      %v787 = vpack.c.bf16 %v761, %v760
      %v788 = vpack.c.bf16 %v763, %v762
      %v789 = vpack.c.bf16 %v765, %v764
      %v790 = vpack.c.bf16 %v767, %v766
      %v791 = vld [vmem:[%s460] sm:$0x1]
      %v793 = vperm.slane %v791, 0
      %795 = vmatpush.bf16.msra.mxu0 %v790
      %796 = vmatpush.bf16.msra.mxu0 %v789
      %797 = vmatpush.bf16.msra.mxu0 %v788
      %798 = vmatpush.bf16.msra.mxu0 %v787
      %799 = vmatpush.bf16.msra.mxu0 %v786
      %800 = vmatpush.bf16.msra.mxu0 %v785
      %801 = vmatpush.bf16.msra.mxu0 %v784
      %802 = vmatpush.bf16.msra.mxu0 %v783
      %803 = vmatmul.bf16.gmra.mxu0 %v768
      %v804 = vpop.f32.mrf.mxu0
      %v805 = vadd.f32 %v793, %v804
      %v806 = vpop.f32.mrf.mxu0
      %v807 = vadd.f32 %v793, %v806
      %808 = vmatmul.bf16.gmra.mxu0 %v769
      %v809 = vpop.f32.mrf.mxu0
      %v810 = vadd.f32 %v793, %v809
      %v811 = vpop.f32.mrf.mxu0
      %v812 = vadd.f32 %v793, %v811
      %813 = vmatmul.bf16.gmra.mxu0 %v770
      %v814 = vpop.f32.mrf.mxu0
      %v815 = vadd.f32 %v793, %v814
      %v816 = vpop.f32.mrf.mxu0
      %v817 = vadd.f32 %v793, %v816
      %818 = vmatmul.bf16.gmra.mxu0 %v771
      %v819 = vpop.f32.mrf.mxu0
      %v820 = vadd.f32 %v793, %v819
      %v821 = vpop.f32.mrf.mxu0
      %v822 = vadd.f32 %v793, %v821
      %823 = vmatmul.bf16.gmra.mxu0 %v772
      %v824 = vpop.f32.mrf.mxu0
      %v825 = vadd.f32 %v793, %v824
      %v826 = vpop.f32.mrf.mxu0
      %v827 = vadd.f32 %v793, %v826
      %828 = vmatmul.bf16.gmra.mxu0 %v773
      %v829 = vpop.f32.mrf.mxu0
      %v830 = vadd.f32 %v793, %v829
      %v831 = vpop.f32.mrf.mxu0
      %v832 = vadd.f32 %v793, %v831
      %833 = vmatmul.bf16.gmra.mxu0 %v774
      %v834 = vpop.f32.mrf.mxu0
      %v835 = vadd.f32 %v793, %v834
      %v836 = vpop.f32.mrf.mxu0
      %v837 = vadd.f32 %v793, %v836
      %838 = vmatmul.bf16.gmra.mxu0 %v775
      %v839 = vpop.f32.mrf.mxu0
      %v840 = vadd.f32 %v793, %v839
      %v841 = vpop.f32.mrf.mxu0
      %v842 = vadd.f32 %v793, %v841
      %843 = vmatmul.bf16.gmra.mxu0 %v776
      %v844 = vpop.f32.mrf.mxu0
      %v845 = vadd.f32 %v793, %v844
      %v846 = vpop.f32.mrf.mxu0
      %v847 = vadd.f32 %v793, %v846
      %848 = vmatmul.bf16.gmra.mxu0 %v777
      %v849 = vpop.f32.mrf.mxu0
      %v850 = vadd.f32 %v793, %v849
      %v851 = vpop.f32.mrf.mxu0
      %v852 = vadd.f32 %v793, %v851
      %853 = vmatmul.bf16.gmra.mxu0 %v778
      %v854 = vpop.f32.mrf.mxu0
      %v855 = vadd.f32 %v793, %v854
      %v856 = vpop.f32.mrf.mxu0
      %v857 = vadd.f32 %v793, %v856
      %858 = vmatmul.bf16.gmra.mxu0 %v779
      %v859 = vpop.f32.mrf.mxu0
      %v860 = vadd.f32 %v793, %v859
      %v861 = vpop.f32.mrf.mxu0
      %v862 = vadd.f32 %v793, %v861
      %863 = vmatmul.bf16.gmra.mxu0 %v780
      %v864 = vpop.f32.mrf.mxu0
      %v865 = vadd.f32 %v793, %v864
      %v866 = vpop.f32.mrf.mxu0
      %v867 = vadd.f32 %v793, %v866
      %868 = vmatmul.bf16.gmra.mxu0 %v781
      %v869 = vpop.f32.mrf.mxu0
      %v870 = vadd.f32 %v793, %v869
      %v871 = vpop.f32.mrf.mxu0
      %v872 = vadd.f32 %v793, %v871
      %873 = vmatmul.bf16.gmra.mxu0 %v782
      %v874 = vpop.f32.mrf.mxu0
      %v875 = vadd.f32 %v793, %v874
      %v876 = vpop.f32.mrf.mxu0
      %v877 = vadd.f32 %v793, %v876
      %878 = vdwg.mxu0
      %v879 = vmax.f32 %v805, 0.0
      %v880 = vmax.f32 %v807, 0.0
      %v881 = vmax.f32 %v810, 0.0
      %v882 = vmax.f32 %v812, 0.0
      %v883 = vmax.f32 %v815, 0.0
      %v884 = vmax.f32 %v817, 0.0
      %v885 = vmax.f32 %v820, 0.0
      %v886 = vmax.f32 %v822, 0.0
      %v887 = vmax.f32 %v825, 0.0
      %v888 = vmax.f32 %v827, 0.0
      %v889 = vmax.f32 %v830, 0.0
      %v890 = vmax.f32 %v832, 0.0
      %v891 = vmax.f32 %v835, 0.0
      %v892 = vmax.f32 %v837, 0.0
      %v893 = vmax.f32 %v840, 0.0
      %v894 = vmax.f32 %v842, 0.0
      %v895 = vmax.f32 %v845, 0.0
      %v896 = vmax.f32 %v847, 0.0
      %v897 = vmax.f32 %v850, 0.0
      %v898 = vmax.f32 %v852, 0.0
      %v899 = vmax.f32 %v855, 0.0
      %v900 = vmax.f32 %v857, 0.0
      %v901 = vmax.f32 %v860, 0.0
      %v902 = vmax.f32 %v862, 0.0
      %v903 = vmax.f32 %v865, 0.0
      %v904 = vmax.f32 %v867, 0.0
      %v905 = vmax.f32 %v870, 0.0
      %v906 = vmax.f32 %v872, 0.0
      %v907 = vmax.f32 %v875, 0.0
      %v908 = vmax.f32 %v877, 0.0
      %v909 = vld [vmem:[%s465] sm:$0xff]
      %v910 = vld [vmem:[%s465 + $0x8] sm:$0xff]
      %v911 = vld [vmem:[%s465 + $0x10] sm:$0xff]
      %v912 = vld [vmem:[%s465 + $0x18] sm:$0xff]
      %v913 = vld [vmem:[%s465 + $0x20] sm:$0xff]
      %v914 = vld [vmem:[%s465 + $0x28] sm:$0xff]
      %v915 = vld [vmem:[%s465 + $0x30] sm:$0xff]
      %v916 = vld [vmem:[%s465 + $0x38] sm:$0xff]
      %v917 = vld [vmem:[%s465 + $0x40] sm:$0xff]
      %v918 = vld [vmem:[%s465 + $0x48] sm:$0xff]
      %v919 = vld [vmem:[%s465 + $0x50] sm:$0xff]
      %v920 = vld [vmem:[%s465 + $0x58] sm:$0xff]
      %v921 = vld [vmem:[%s465 + $0x60] sm:$0xff]
      %v922 = vld [vmem:[%s465 + $0x68] sm:$0xff]
      %v923 = vld [vmem:[%s465 + $0x70] sm:$0xff]
      %v924 = vld [vmem:[%s465 + $0x78] sm:$0xff]
      %v925 = vpack.c.bf16 %v880, %v879
      %v926 = vpack.c.bf16 %v882, %v881
      %v927 = vpack.c.bf16 %v884, %v883
      %v928 = vpack.c.bf16 %v886, %v885
      %v929 = vpack.c.bf16 %v888, %v887
      %v930 = vpack.c.bf16 %v890, %v889
      %v931 = vpack.c.bf16 %v892, %v891
      %v932 = vpack.c.bf16 %v894, %v893
      %v933 = vpack.c.bf16 %v896, %v895
      %v934 = vpack.c.bf16 %v898, %v897
      %v935 = vpack.c.bf16 %v900, %v899
      %v936 = vpack.c.bf16 %v902, %v901
      %v937 = vpack.c.bf16 %v904, %v903
      %v938 = vpack.c.bf16 %v906, %v905
      %v939 = vpack.c.bf16 %v908, %v907
      %v940 = vpack.c.bf16 %v910, %v909
      %v941 = vpack.c.bf16 %v912, %v911
      %v942 = vpack.c.bf16 %v914, %v913
      %v943 = vpack.c.bf16 %v916, %v915
      %v944 = vpack.c.bf16 %v918, %v917
      %v945 = vpack.c.bf16 %v920, %v919
      %v946 = vpack.c.bf16 %v922, %v921
      %v947 = vpack.c.bf16 %v924, %v923
      %v948 = vld [vmem:[%s468] sm:$0x1]
      %v950 = vperm.slane %v948, 0
      %952 = vmatpush.bf16.msra.mxu0 %v947
      %953 = vmatpush.bf16.msra.mxu0 %v946
      %954 = vmatpush.bf16.msra.mxu0 %v945
      %955 = vmatpush.bf16.msra.mxu0 %v944
      %956 = vmatpush.bf16.msra.mxu0 %v943
      %957 = vmatpush.bf16.msra.mxu0 %v942
      %958 = vmatpush.bf16.msra.mxu0 %v941
      %959 = vmatpush.bf16.msra.mxu0 %v940
      %960 = vmatmul.bf16.gmra.mxu0 %v925
      %v961 = vpop.f32.mrf.mxu0
      %v962 = vadd.f32 %v950, %v961
      %v963 = vpop.f32.mrf.mxu0
      %v964 = vadd.f32 %v950, %v963
      %965 = vmatmul.bf16.gmra.mxu0 %v926
      %v966 = vpop.f32.mrf.mxu0
      %v967 = vadd.f32 %v950, %v966
      %v968 = vpop.f32.mrf.mxu0
      %v969 = vadd.f32 %v950, %v968
      %970 = vmatmul.bf16.gmra.mxu0 %v927
      %v971 = vpop.f32.mrf.mxu0
      %v972 = vadd.f32 %v950, %v971
      %v973 = vpop.f32.mrf.mxu0
      %v974 = vadd.f32 %v950, %v973
      %975 = vmatmul.bf16.gmra.mxu0 %v928
      %v976 = vpop.f32.mrf.mxu0
      %v977 = vadd.f32 %v950, %v976
      %v978 = vpop.f32.mrf.mxu0
      %v979 = vadd.f32 %v950, %v978
      %980 = vmatmul.bf16.gmra.mxu0 %v929
      %v981 = vpop.f32.mrf.mxu0
      %v982 = vadd.f32 %v950, %v981
      %v983 = vpop.f32.mrf.mxu0
      %v984 = vadd.f32 %v950, %v983
      %985 = vmatmul.bf16.gmra.mxu0 %v930
      %v986 = vpop.f32.mrf.mxu0
      %v987 = vadd.f32 %v950, %v986
      %v988 = vpop.f32.mrf.mxu0
      %v989 = vadd.f32 %v950, %v988
      %990 = vmatmul.bf16.gmra.mxu0 %v931
      %v991 = vpop.f32.mrf.mxu0
      %v992 = vadd.f32 %v950, %v991
      %v993 = vpop.f32.mrf.mxu0
      %v994 = vadd.f32 %v950, %v993
      %995 = vmatmul.bf16.gmra.mxu0 %v932
      %v996 = vpop.f32.mrf.mxu0
      %v997 = vadd.f32 %v950, %v996
      %v998 = vpop.f32.mrf.mxu0
      %v999 = vadd.f32 %v950, %v998
      %1000 = vmatmul.bf16.gmra.mxu0 %v933
      %v1001 = vpop.f32.mrf.mxu0
      %v1002 = vadd.f32 %v950, %v1001
      %v1003 = vpop.f32.mrf.mxu0
      %v1004 = vadd.f32 %v950, %v1003
      %1005 = vmatmul.bf16.gmra.mxu0 %v934
      %v1006 = vpop.f32.mrf.mxu0
      %v1007 = vadd.f32 %v950, %v1006
      %v1008 = vpop.f32.mrf.mxu0
      %v1009 = vadd.f32 %v950, %v1008
      %1010 = vmatmul.bf16.gmra.mxu0 %v935
      %v1011 = vpop.f32.mrf.mxu0
      %v1012 = vadd.f32 %v950, %v1011
      %v1013 = vpop.f32.mrf.mxu0
      %v1014 = vadd.f32 %v950, %v1013
      %1015 = vmatmul.bf16.gmra.mxu0 %v936
      %v1016 = vpop.f32.mrf.mxu0
      %v1017 = vadd.f32 %v950, %v1016
      %v1018 = vpop.f32.mrf.mxu0
      %v1019 = vadd.f32 %v950, %v1018
      %1020 = vmatmul.bf16.gmra.mxu0 %v937
      %v1021 = vpop.f32.mrf.mxu0
      %v1022 = vadd.f32 %v950, %v1021
      %v1023 = vpop.f32.mrf.mxu0
      %v1024 = vadd.f32 %v950, %v1023
      %1025 = vmatmul.bf16.gmra.mxu0 %v938
      %v1026 = vpop.f32.mrf.mxu0
      %v1027 = vadd.f32 %v950, %v1026
      %v1028 = vpop.f32.mrf.mxu0
      %v1029 = vadd.f32 %v950, %v1028
      %1030 = vmatmul.bf16.gmra.mxu0 %v939
      %v1031 = vpop.f32.mrf.mxu0
      %v1032 = vadd.f32 %v950, %v1031
      %v1033 = vpop.f32.mrf.mxu0
      %v1034 = vadd.f32 %v950, %v1033
      %1035 = vdwg.mxu0
      %1036 = vadd.xlane.f32.xlu0 %v962
      %v1037 = vpop.xlane.xlu0 %1036
      %1038 = vadd.xlane.f32.xlu0 %v964
      %v1039 = vpop.xlane.xlu0 %1038
      %1040 = vadd.xlane.f32.xlu0 %v967
      %v1041 = vpop.xlane.xlu0 %1040
      %1042 = vadd.xlane.f32.xlu0 %v969
      %v1043 = vpop.xlane.xlu0 %1042
      %1044 = vadd.xlane.f32.xlu0 %v972
      %v1045 = vpop.xlane.xlu0 %1044
      %1046 = vadd.xlane.f32.xlu0 %v974
      %v1047 = vpop.xlane.xlu0 %1046
      %1048 = vadd.xlane.f32.xlu0 %v977
      %v1049 = vpop.xlane.xlu0 %1048
      %1050 = vadd.xlane.f32.xlu0 %v979
      %v1051 = vpop.xlane.xlu0 %1050
      %1052 = vadd.xlane.f32.xlu0 %v982
      %v1053 = vpop.xlane.xlu0 %1052
      %1054 = vadd.xlane.f32.xlu0 %v984
      %v1055 = vpop.xlane.xlu0 %1054
      %1056 = vadd.xlane.f32.xlu0 %v987
      %v1057 = vpop.xlane.xlu0 %1056
      %1058 = vadd.xlane.f32.xlu0 %v989
      %v1059 = vpop.xlane.xlu0 %1058
      %1060 = vadd.xlane.f32.xlu0 %v992
      %v1061 = vpop.xlane.xlu0 %1060
      %1062 = vadd.xlane.f32.xlu0 %v994
      %v1063 = vpop.xlane.xlu0 %1062
      %1064 = vadd.xlane.f32.xlu0 %v997
      %v1065 = vpop.xlane.xlu0 %1064
      %1066 = vadd.xlane.f32.xlu0 %v999
      %v1067 = vpop.xlane.xlu0 %1066
      %1068 = vadd.xlane.f32.xlu0 %v1002
      %v1069 = vpop.xlane.xlu0 %1068
      %1070 = vadd.xlane.f32.xlu0 %v1004
      %v1071 = vpop.xlane.xlu0 %1070
      %1072 = vadd.xlane.f32.xlu0 %v1007
      %v1073 = vpop.xlane.xlu0 %1072
      %1074 = vadd.xlane.f32.xlu0 %v1009
      %v1075 = vpop.xlane.xlu0 %1074
      %1076 = vadd.xlane.f32.xlu0 %v1012
      %v1077 = vpop.xlane.xlu0 %1076
      %1078 = vadd.xlane.f32.xlu0 %v1014
      %v1079 = vpop.xlane.xlu0 %1078
      %1080 = vadd.xlane.f32.xlu0 %v1017
      %v1081 = vpop.xlane.xlu0 %1080
      %1082 = vadd.xlane.f32.xlu0 %v1019
      %v1083 = vpop.xlane.xlu0 %1082
      %1084 = vadd.xlane.f32.xlu0 %v1022
      %v1085 = vpop.xlane.xlu0 %1084
      %1086 = vadd.xlane.f32.xlu0 %v1024
      %v1087 = vpop.xlane.xlu0 %1086
      %1088 = vadd.xlane.f32.xlu0 %v1027
      %v1089 = vpop.xlane.xlu0 %1088
      %1090 = vadd.xlane.f32.xlu0 %v1029
      %v1091 = vpop.xlane.xlu0 %1090
      %1092 = vadd.xlane.f32.xlu0 %v1032
      %v1093 = vpop.xlane.xlu0 %1092
      %1094 = vadd.xlane.f32.xlu0 %v1034
      %v1095 = vpop.xlane.xlu0 %1094
      %v1096 = vrcp.pop 128.0
      %v1097 = vmul.f32 128.0, %v1096
      %v1098 = vsub.f32 1.0, %v1097
      %v1099 = vmul.f32 %v1096, %v1098
      %v1100 = vadd.f32 %v1096, %v1099
      %vm1101 = vweird.f32 %v1096
      %v1102 = vsel %vm1101, %v1096, %v1100
      %v1103 = vmul.f32 %v1037, %v1102
      %v1104 = vmul.f32 %v1039, %v1102
      %v1105 = vmul.f32 %v1041, %v1102
      %v1106 = vmul.f32 %v1043, %v1102
      %v1107 = vmul.f32 %v1045, %v1102
      %v1108 = vmul.f32 %v1047, %v1102
      %v1109 = vmul.f32 %v1049, %v1102
      %v1110 = vmul.f32 %v1051, %v1102
      %v1111 = vmul.f32 %v1053, %v1102
      %v1112 = vmul.f32 %v1055, %v1102
      %v1113 = vmul.f32 %v1057, %v1102
      %v1114 = vmul.f32 %v1059, %v1102
      %v1115 = vmul.f32 %v1061, %v1102
      %v1116 = vmul.f32 %v1063, %v1102
      %v1117 = vmul.f32 %v1065, %v1102
      %v1118 = vmul.f32 %v1067, %v1102
      %v1119 = vmul.f32 %v1069, %v1102
      %v1120 = vmul.f32 %v1071, %v1102
      %v1121 = vmul.f32 %v1073, %v1102
      %v1122 = vmul.f32 %v1075, %v1102
      %v1123 = vmul.f32 %v1077, %v1102
      %v1124 = vmul.f32 %v1079, %v1102
      %v1125 = vmul.f32 %v1081, %v1102
      %v1126 = vmul.f32 %v1083, %v1102
      %v1127 = vmul.f32 %v1085, %v1102
      %v1128 = vmul.f32 %v1087, %v1102
      %v1129 = vmul.f32 %v1089, %v1102
      %v1130 = vmul.f32 %v1091, %v1102
      %v1131 = vmul.f32 %v1093, %v1102
      %v1132 = vmul.f32 %v1095, %v1102
      %v1133 = vsub.f32 %v962, %v1103
      %v1134 = vsub.f32 %v964, %v1104
      %v1135 = vsub.f32 %v967, %v1105
      %v1136 = vsub.f32 %v969, %v1106
      %v1137 = vsub.f32 %v972, %v1107
      %v1138 = vsub.f32 %v974, %v1108
      %v1139 = vsub.f32 %v977, %v1109
      %v1140 = vsub.f32 %v979, %v1110
      %v1141 = vsub.f32 %v982, %v1111
      %v1142 = vsub.f32 %v984, %v1112
      %v1143 = vsub.f32 %v987, %v1113
      %v1144 = vsub.f32 %v989, %v1114
      %v1145 = vsub.f32 %v992, %v1115
      %v1146 = vsub.f32 %v994, %v1116
      %v1147 = vsub.f32 %v997, %v1117
      %v1148 = vsub.f32 %v999, %v1118
      %v1149 = vsub.f32 %v1002, %v1119
      %v1150 = vsub.f32 %v1004, %v1120
      %v1151 = vsub.f32 %v1007, %v1121
      %v1152 = vsub.f32 %v1009, %v1122
      %v1153 = vsub.f32 %v1012, %v1123
      %v1154 = vsub.f32 %v1014, %v1124
      %v1155 = vsub.f32 %v1017, %v1125
      %v1156 = vsub.f32 %v1019, %v1126
      %v1157 = vsub.f32 %v1022, %v1127
      %v1158 = vsub.f32 %v1024, %v1128
      %v1159 = vsub.f32 %v1027, %v1129
      %v1160 = vsub.f32 %v1029, %v1130
      %v1161 = vsub.f32 %v1032, %v1131
      %v1162 = vsub.f32 %v1034, %v1132
      %v1163 = vmul.f32 %v1133, %v1133
      %v1164 = vmul.f32 %v1134, %v1134
      %v1165 = vmul.f32 %v1135, %v1135
      %v1166 = vmul.f32 %v1136, %v1136
      %v1167 = vmul.f32 %v1137, %v1137
      %v1168 = vmul.f32 %v1138, %v1138
      %v1169 = vmul.f32 %v1139, %v1139
      %v1170 = vmul.f32 %v1140, %v1140
      %v1171 = vmul.f32 %v1141, %v1141
      %v1172 = vmul.f32 %v1142, %v1142
      %v1173 = vmul.f32 %v1143, %v1143
      %v1174 = vmul.f32 %v1144, %v1144
      %v1175 = vmul.f32 %v1145, %v1145
      %v1176 = vmul.f32 %v1146, %v1146
      %v1177 = vmul.f32 %v1147, %v1147
      %v1178 = vmul.f32 %v1148, %v1148
      %v1179 = vmul.f32 %v1149, %v1149
      %v1180 = vmul.f32 %v1150, %v1150
      %v1181 = vmul.f32 %v1151, %v1151
      %v1182 = vmul.f32 %v1152, %v1152
      %v1183 = vmul.f32 %v1153, %v1153
      %v1184 = vmul.f32 %v1154, %v1154
      %v1185 = vmul.f32 %v1155, %v1155
      %v1186 = vmul.f32 %v1156, %v1156
      %v1187 = vmul.f32 %v1157, %v1157
      %v1188 = vmul.f32 %v1158, %v1158
      %v1189 = vmul.f32 %v1159, %v1159
      %v1190 = vmul.f32 %v1160, %v1160
      %v1191 = vmul.f32 %v1161, %v1161
      %v1192 = vmul.f32 %v1162, %v1162
      %1193 = vadd.xlane.f32.xlu0 %v1163
      %v1194 = vpop.xlane.xlu0 %1193
      %1195 = vadd.xlane.f32.xlu0 %v1164
      %v1196 = vpop.xlane.xlu0 %1195
      %1197 = vadd.xlane.f32.xlu0 %v1165
      %v1198 = vpop.xlane.xlu0 %1197
      %1199 = vadd.xlane.f32.xlu0 %v1166
      %v1200 = vpop.xlane.xlu0 %1199
      %1201 = vadd.xlane.f32.xlu0 %v1167
      %v1202 = vpop.xlane.xlu0 %1201
      %1203 = vadd.xlane.f32.xlu0 %v1168
      %v1204 = vpop.xlane.xlu0 %1203
      %1205 = vadd.xlane.f32.xlu0 %v1169
      %v1206 = vpop.xlane.xlu0 %1205
      %1207 = vadd.xlane.f32.xlu0 %v1170
      %v1208 = vpop.xlane.xlu0 %1207
      %1209 = vadd.xlane.f32.xlu0 %v1171
      %v1210 = vpop.xlane.xlu0 %1209
      %1211 = vadd.xlane.f32.xlu0 %v1172
      %v1212 = vpop.xlane.xlu0 %1211
      %1213 = vadd.xlane.f32.xlu0 %v1173
      %v1214 = vpop.xlane.xlu0 %1213
      %1215 = vadd.xlane.f32.xlu0 %v1174
      %v1216 = vpop.xlane.xlu0 %1215
      %1217 = vadd.xlane.f32.xlu0 %v1175
      %v1218 = vpop.xlane.xlu0 %1217
      %1219 = vadd.xlane.f32.xlu0 %v1176
      %v1220 = vpop.xlane.xlu0 %1219
      %1221 = vadd.xlane.f32.xlu0 %v1177
      %v1222 = vpop.xlane.xlu0 %1221
      %1223 = vadd.xlane.f32.xlu0 %v1178
      %v1224 = vpop.xlane.xlu0 %1223
      %1225 = vadd.xlane.f32.xlu0 %v1179
      %v1226 = vpop.xlane.xlu0 %1225
      %1227 = vadd.xlane.f32.xlu0 %v1180
      %v1228 = vpop.xlane.xlu0 %1227
      %1229 = vadd.xlane.f32.xlu0 %v1181
      %v1230 = vpop.xlane.xlu0 %1229
      %1231 = vadd.xlane.f32.xlu0 %v1182
      %v1232 = vpop.xlane.xlu0 %1231
      %1233 = vadd.xlane.f32.xlu0 %v1183
      %v1234 = vpop.xlane.xlu0 %1233
      %1235 = vadd.xlane.f32.xlu0 %v1184
      %v1236 = vpop.xlane.xlu0 %1235
      %1237 = vadd.xlane.f32.xlu0 %v1185
      %v1238 = vpop.xlane.xlu0 %1237
      %1239 = vadd.xlane.f32.xlu0 %v1186
      %v1240 = vpop.xlane.xlu0 %1239
      %1241 = vadd.xlane.f32.xlu0 %v1187
      %v1242 = vpop.xlane.xlu0 %1241
      %1243 = vadd.xlane.f32.xlu0 %v1188
      %v1244 = vpop.xlane.xlu0 %1243
      %1245 = vadd.xlane.f32.xlu0 %v1189
      %v1246 = vpop.xlane.xlu0 %1245
      %1247 = vadd.xlane.f32.xlu0 %v1190
      %v1248 = vpop.xlane.xlu0 %1247
      %1249 = vadd.xlane.f32.xlu0 %v1191
      %v1250 = vpop.xlane.xlu0 %1249
      %1251 = vadd.xlane.f32.xlu0 %v1192
      %v1252 = vpop.xlane.xlu0 %1251
      %v1253 = vmul.f32 %v1194, %v1102
      %v1254 = vmul.f32 %v1196, %v1102
      %v1255 = vmul.f32 %v1198, %v1102
      %v1256 = vmul.f32 %v1200, %v1102
      %v1257 = vmul.f32 %v1202, %v1102
      %v1258 = vmul.f32 %v1204, %v1102
      %v1259 = vmul.f32 %v1206, %v1102
      %v1260 = vmul.f32 %v1208, %v1102
      %v1261 = vmul.f32 %v1210, %v1102
      %v1262 = vmul.f32 %v1212, %v1102
      %v1263 = vmul.f32 %v1214, %v1102
      %v1264 = vmul.f32 %v1216, %v1102
      %v1265 = vmul.f32 %v1218, %v1102
      %v1266 = vmul.f32 %v1220, %v1102
      %v1267 = vmul.f32 %v1222, %v1102
      %v1268 = vmul.f32 %v1224, %v1102
      %v1269 = vmul.f32 %v1226, %v1102
      %v1270 = vmul.f32 %v1228, %v1102
      %v1271 = vmul.f32 %v1230, %v1102
      %v1272 = vmul.f32 %v1232, %v1102
      %v1273 = vmul.f32 %v1234, %v1102
      %v1274 = vmul.f32 %v1236, %v1102
      %v1275 = vmul.f32 %v1238, %v1102
      %v1276 = vmul.f32 %v1240, %v1102
      %v1277 = vmul.f32 %v1242, %v1102
      %v1278 = vmul.f32 %v1244, %v1102
      %v1279 = vmul.f32 %v1246, %v1102
      %v1280 = vmul.f32 %v1248, %v1102
      %v1281 = vmul.f32 %v1250, %v1102
      %v1282 = vmul.f32 %v1252, %v1102
      %v1283 = vadd.f32 %v1253, 1e-05
      %v1284 = vadd.f32 %v1254, 1e-05
      %v1285 = vadd.f32 %v1255, 1e-05
      %v1286 = vadd.f32 %v1256, 1e-05
      %v1287 = vadd.f32 %v1257, 1e-05
      %v1288 = vadd.f32 %v1258, 1e-05
      %v1289 = vadd.f32 %v1259, 1e-05
      %v1290 = vadd.f32 %v1260, 1e-05
      %v1291 = vadd.f32 %v1261, 1e-05
      %v1292 = vadd.f32 %v1262, 1e-05
      %v1293 = vadd.f32 %v1263, 1e-05
      %v1294 = vadd.f32 %v1264, 1e-05
      %v1295 = vadd.f32 %v1265, 1e-05
      %v1296 = vadd.f32 %v1266, 1e-05
      %v1297 = vadd.f32 %v1267, 1e-05
      %v1298 = vadd.f32 %v1268, 1e-05
      %v1299 = vadd.f32 %v1269, 1e-05
      %v1300 = vadd.f32 %v1270, 1e-05
      %v1301 = vadd.f32 %v1271, 1e-05
      %v1302 = vadd.f32 %v1272, 1e-05
      %v1303 = vadd.f32 %v1273, 1e-05
      %v1304 = vadd.f32 %v1274, 1e-05
      %v1305 = vadd.f32 %v1275, 1e-05
      %v1306 = vadd.f32 %v1276, 1e-05
      %v1307 = vadd.f32 %v1277, 1e-05
      %v1308 = vadd.f32 %v1278, 1e-05
      %v1309 = vadd.f32 %v1279, 1e-05
      %v1310 = vadd.f32 %v1280, 1e-05
      %v1311 = vadd.f32 %v1281, 1e-05
      %v1312 = vadd.f32 %v1282, 1e-05
      %v1313 = vrsqrt.pop %v1283
      %v1314 = vmul.f32 %v1313, %v1283
      %v1315 = vmul.f32 %v1314, %v1313
      %v1316 = vmul.f32 0.5, %v1315
      %v1317 = vsub.f32 1.5, %v1316
      %v1318 = vmul.f32 %v1313, %v1317
      %vm1319 = vweird.f32 %v1283
      %vm1320 = vweird.f32 %v1313
      %vm1321 = vmor %vm1319, %vm1320
      %v1322 = vsel %vm1321, %v1313, %v1318
      %v1323 = vrsqrt.pop %v1284
      %v1324 = vmul.f32 %v1323, %v1284
      %v1325 = vmul.f32 %v1324, %v1323
      %v1326 = vmul.f32 0.5, %v1325
      %v1327 = vsub.f32 1.5, %v1326
      %v1328 = vmul.f32 %v1323, %v1327
      %vm1329 = vweird.f32 %v1284
      %vm1330 = vweird.f32 %v1323
      %vm1331 = vmor %vm1329, %vm1330
      %v1332 = vsel %vm1331, %v1323, %v1328
      %v1333 = vrsqrt.pop %v1285
      %v1334 = vmul.f32 %v1333, %v1285
      %v1335 = vmul.f32 %v1334, %v1333
      %v1336 = vmul.f32 0.5, %v1335
      %v1337 = vsub.f32 1.5, %v1336
      %v1338 = vmul.f32 %v1333, %v1337
      %vm1339 = vweird.f32 %v1285
      %vm1340 = vweird.f32 %v1333
      %vm1341 = vmor %vm1339, %vm1340
      %v1342 = vsel %vm1341, %v1333, %v1338
      %v1343 = vrsqrt.pop %v1286
      %v1344 = vmul.f32 %v1343, %v1286
      %v1345 = vmul.f32 %v1344, %v1343
      %v1346 = vmul.f32 0.5, %v1345
      %v1347 = vsub.f32 1.5, %v1346
      %v1348 = vmul.f32 %v1343, %v1347
      %vm1349 = vweird.f32 %v1286
      %vm1350 = vweird.f32 %v1343
      %vm1351 = vmor %vm1349, %vm1350
      %v1352 = vsel %vm1351, %v1343, %v1348
      %v1353 = vrsqrt.pop %v1287
      %v1354 = vmul.f32 %v1353, %v1287
      %v1355 = vmul.f32 %v1354, %v1353
      %v1356 = vmul.f32 0.5, %v1355
      %v1357 = vsub.f32 1.5, %v1356
      %v1358 = vmul.f32 %v1353, %v1357
      %vm1359 = vweird.f32 %v1287
      %vm1360 = vweird.f32 %v1353
      %vm1361 = vmor %vm1359, %vm1360
      %v1362 = vsel %vm1361, %v1353, %v1358
      %v1363 = vrsqrt.pop %v1288
      %v1364 = vmul.f32 %v1363, %v1288
      %v1365 = vmul.f32 %v1364, %v1363
      %v1366 = vmul.f32 0.5, %v1365
      %v1367 = vsub.f32 1.5, %v1366
      %v1368 = vmul.f32 %v1363, %v1367
      %vm1369 = vweird.f32 %v1288
      %vm1370 = vweird.f32 %v1363
      %vm1371 = vmor %vm1369, %vm1370
      %v1372 = vsel %vm1371, %v1363, %v1368
      %v1373 = vrsqrt.pop %v1289
      %v1374 = vmul.f32 %v1373, %v1289
      %v1375 = vmul.f32 %v1374, %v1373
      %v1376 = vmul.f32 0.5, %v1375
      %v1377 = vsub.f32 1.5, %v1376
      %v1378 = vmul.f32 %v1373, %v1377
      %vm1379 = vweird.f32 %v1289
      %vm1380 = vweird.f32 %v1373
      %vm1381 = vmor %vm1379, %vm1380
      %v1382 = vsel %vm1381, %v1373, %v1378
      %v1383 = vrsqrt.pop %v1290
      %v1384 = vmul.f32 %v1383, %v1290
      %v1385 = vmul.f32 %v1384, %v1383
      %v1386 = vmul.f32 0.5, %v1385
      %v1387 = vsub.f32 1.5, %v1386
      %v1388 = vmul.f32 %v1383, %v1387
      %vm1389 = vweird.f32 %v1290
      %vm1390 = vweird.f32 %v1383
      %vm1391 = vmor %vm1389, %vm1390
      %v1392 = vsel %vm1391, %v1383, %v1388
      %v1393 = vrsqrt.pop %v1291
      %v1394 = vmul.f32 %v1393, %v1291
      %v1395 = vmul.f32 %v1394, %v1393
      %v1396 = vmul.f32 0.5, %v1395
      %v1397 = vsub.f32 1.5, %v1396
      %v1398 = vmul.f32 %v1393, %v1397
      %vm1399 = vweird.f32 %v1291
      %vm1400 = vweird.f32 %v1393
      %vm1401 = vmor %vm1399, %vm1400
      %v1402 = vsel %vm1401, %v1393, %v1398
      %v1403 = vrsqrt.pop %v1292
      %v1404 = vmul.f32 %v1403, %v1292
      %v1405 = vmul.f32 %v1404, %v1403
      %v1406 = vmul.f32 0.5, %v1405
      %v1407 = vsub.f32 1.5, %v1406
      %v1408 = vmul.f32 %v1403, %v1407
      %vm1409 = vweird.f32 %v1292
      %vm1410 = vweird.f32 %v1403
      %vm1411 = vmor %vm1409, %vm1410
      %v1412 = vsel %vm1411, %v1403, %v1408
      %v1413 = vrsqrt.pop %v1293
      %v1414 = vmul.f32 %v1413, %v1293
      %v1415 = vmul.f32 %v1414, %v1413
      %v1416 = vmul.f32 0.5, %v1415
      %v1417 = vsub.f32 1.5, %v1416
      %v1418 = vmul.f32 %v1413, %v1417
      %vm1419 = vweird.f32 %v1293
      %vm1420 = vweird.f32 %v1413
      %vm1421 = vmor %vm1419, %vm1420
      %v1422 = vsel %vm1421, %v1413, %v1418
      %v1423 = vrsqrt.pop %v1294
      %v1424 = vmul.f32 %v1423, %v1294
      %v1425 = vmul.f32 %v1424, %v1423
      %v1426 = vmul.f32 0.5, %v1425
      %v1427 = vsub.f32 1.5, %v1426
      %v1428 = vmul.f32 %v1423, %v1427
      %vm1429 = vweird.f32 %v1294
      %vm1430 = vweird.f32 %v1423
      %vm1431 = vmor %vm1429, %vm1430
      %v1432 = vsel %vm1431, %v1423, %v1428
      %v1433 = vrsqrt.pop %v1295
      %v1434 = vmul.f32 %v1433, %v1295
      %v1435 = vmul.f32 %v1434, %v1433
      %v1436 = vmul.f32 0.5, %v1435
      %v1437 = vsub.f32 1.5, %v1436
      %v1438 = vmul.f32 %v1433, %v1437
      %vm1439 = vweird.f32 %v1295
      %vm1440 = vweird.f32 %v1433
      %vm1441 = vmor %vm1439, %vm1440
      %v1442 = vsel %vm1441, %v1433, %v1438
      %v1443 = vrsqrt.pop %v1296
      %v1444 = vmul.f32 %v1443, %v1296
      %v1445 = vmul.f32 %v1444, %v1443
      %v1446 = vmul.f32 0.5, %v1445
      %v1447 = vsub.f32 1.5, %v1446
      %v1448 = vmul.f32 %v1443, %v1447
      %vm1449 = vweird.f32 %v1296
      %vm1450 = vweird.f32 %v1443
      %vm1451 = vmor %vm1449, %vm1450
      %v1452 = vsel %vm1451, %v1443, %v1448
      %v1453 = vrsqrt.pop %v1297
      %v1454 = vmul.f32 %v1453, %v1297
      %v1455 = vmul.f32 %v1454, %v1453
      %v1456 = vmul.f32 0.5, %v1455
      %v1457 = vsub.f32 1.5, %v1456
      %v1458 = vmul.f32 %v1453, %v1457
      %vm1459 = vweird.f32 %v1297
      %vm1460 = vweird.f32 %v1453
      %vm1461 = vmor %vm1459, %vm1460
      %v1462 = vsel %vm1461, %v1453, %v1458
      %v1463 = vrsqrt.pop %v1298
      %v1464 = vmul.f32 %v1463, %v1298
      %v1465 = vmul.f32 %v1464, %v1463
      %v1466 = vmul.f32 0.5, %v1465
      %v1467 = vsub.f32 1.5, %v1466
      %v1468 = vmul.f32 %v1463, %v1467
      %vm1469 = vweird.f32 %v1298
      %vm1470 = vweird.f32 %v1463
      %vm1471 = vmor %vm1469, %vm1470
      %v1472 = vsel %vm1471, %v1463, %v1468
      %v1473 = vrsqrt.pop %v1299
      %v1474 = vmul.f32 %v1473, %v1299
      %v1475 = vmul.f32 %v1474, %v1473
      %v1476 = vmul.f32 0.5, %v1475
      %v1477 = vsub.f32 1.5, %v1476
      %v1478 = vmul.f32 %v1473, %v1477
      %vm1479 = vweird.f32 %v1299
      %vm1480 = vweird.f32 %v1473
      %vm1481 = vmor %vm1479, %vm1480
      %v1482 = vsel %vm1481, %v1473, %v1478
      %v1483 = vrsqrt.pop %v1300
      %v1484 = vmul.f32 %v1483, %v1300
      %v1485 = vmul.f32 %v1484, %v1483
      %v1486 = vmul.f32 0.5, %v1485
      %v1487 = vsub.f32 1.5, %v1486
      %v1488 = vmul.f32 %v1483, %v1487
      %vm1489 = vweird.f32 %v1300
      %vm1490 = vweird.f32 %v1483
      %vm1491 = vmor %vm1489, %vm1490
      %v1492 = vsel %vm1491, %v1483, %v1488
      %v1493 = vrsqrt.pop %v1301
      %v1494 = vmul.f32 %v1493, %v1301
      %v1495 = vmul.f32 %v1494, %v1493
      %v1496 = vmul.f32 0.5, %v1495
      %v1497 = vsub.f32 1.5, %v1496
      %v1498 = vmul.f32 %v1493, %v1497
      %vm1499 = vweird.f32 %v1301
      %vm1500 = vweird.f32 %v1493
      %vm1501 = vmor %vm1499, %vm1500
      %v1502 = vsel %vm1501, %v1493, %v1498
      %v1503 = vrsqrt.pop %v1302
      %v1504 = vmul.f32 %v1503, %v1302
      %v1505 = vmul.f32 %v1504, %v1503
      %v1506 = vmul.f32 0.5, %v1505
      %v1507 = vsub.f32 1.5, %v1506
      %v1508 = vmul.f32 %v1503, %v1507
      %vm1509 = vweird.f32 %v1302
      %vm1510 = vweird.f32 %v1503
      %vm1511 = vmor %vm1509, %vm1510
      %v1512 = vsel %vm1511, %v1503, %v1508
      %v1513 = vrsqrt.pop %v1303
      %v1514 = vmul.f32 %v1513, %v1303
      %v1515 = vmul.f32 %v1514, %v1513
      %v1516 = vmul.f32 0.5, %v1515
      %v1517 = vsub.f32 1.5, %v1516
      %v1518 = vmul.f32 %v1513, %v1517
      %vm1519 = vweird.f32 %v1303
      %vm1520 = vweird.f32 %v1513
      %vm1521 = vmor %vm1519, %vm1520
      %v1522 = vsel %vm1521, %v1513, %v1518
      %v1523 = vrsqrt.pop %v1304
      %v1524 = vmul.f32 %v1523, %v1304
      %v1525 = vmul.f32 %v1524, %v1523
      %v1526 = vmul.f32 0.5, %v1525
      %v1527 = vsub.f32 1.5, %v1526
      %v1528 = vmul.f32 %v1523, %v1527
      %vm1529 = vweird.f32 %v1304
      %vm1530 = vweird.f32 %v1523
      %vm1531 = vmor %vm1529, %vm1530
      %v1532 = vsel %vm1531, %v1523, %v1528
      %v1533 = vrsqrt.pop %v1305
      %v1534 = vmul.f32 %v1533, %v1305
      %v1535 = vmul.f32 %v1534, %v1533
      %v1536 = vmul.f32 0.5, %v1535
      %v1537 = vsub.f32 1.5, %v1536
      %v1538 = vmul.f32 %v1533, %v1537
      %vm1539 = vweird.f32 %v1305
      %vm1540 = vweird.f32 %v1533
      %vm1541 = vmor %vm1539, %vm1540
      %v1542 = vsel %vm1541, %v1533, %v1538
      %v1543 = vrsqrt.pop %v1306
      %v1544 = vmul.f32 %v1543, %v1306
      %v1545 = vmul.f32 %v1544, %v1543
      %v1546 = vmul.f32 0.5, %v1545
      %v1547 = vsub.f32 1.5, %v1546
      %v1548 = vmul.f32 %v1543, %v1547
      %vm1549 = vweird.f32 %v1306
      %vm1550 = vweird.f32 %v1543
      %vm1551 = vmor %vm1549, %vm1550
      %v1552 = vsel %vm1551, %v1543, %v1548
      %v1553 = vrsqrt.pop %v1307
      %v1554 = vmul.f32 %v1553, %v1307
      %v1555 = vmul.f32 %v1554, %v1553
      %v1556 = vmul.f32 0.5, %v1555
      %v1557 = vsub.f32 1.5, %v1556
      %v1558 = vmul.f32 %v1553, %v1557
      %vm1559 = vweird.f32 %v1307
      %vm1560 = vweird.f32 %v1553
      %vm1561 = vmor %vm1559, %vm1560
      %v1562 = vsel %vm1561, %v1553, %v1558
      %v1563 = vrsqrt.pop %v1308
      %v1564 = vmul.f32 %v1563, %v1308
      %v1565 = vmul.f32 %v1564, %v1563
      %v1566 = vmul.f32 0.5, %v1565
      %v1567 = vsub.f32 1.5, %v1566
      %v1568 = vmul.f32 %v1563, %v1567
      %vm1569 = vweird.f32 %v1308
      %vm1570 = vweird.f32 %v1563
      %vm1571 = vmor %vm1569, %vm1570
      %v1572 = vsel %vm1571, %v1563, %v1568
      %v1573 = vrsqrt.pop %v1309
      %v1574 = vmul.f32 %v1573, %v1309
      %v1575 = vmul.f32 %v1574, %v1573
      %v1576 = vmul.f32 0.5, %v1575
      %v1577 = vsub.f32 1.5, %v1576
      %v1578 = vmul.f32 %v1573, %v1577
      %vm1579 = vweird.f32 %v1309
      %vm1580 = vweird.f32 %v1573
      %vm1581 = vmor %vm1579, %vm1580
      %v1582 = vsel %vm1581, %v1573, %v1578
      %v1583 = vrsqrt.pop %v1310
      %v1584 = vmul.f32 %v1583, %v1310
      %v1585 = vmul.f32 %v1584, %v1583
      %v1586 = vmul.f32 0.5, %v1585
      %v1587 = vsub.f32 1.5, %v1586
      %v1588 = vmul.f32 %v1583, %v1587
      %vm1589 = vweird.f32 %v1310
      %vm1590 = vweird.f32 %v1583
      %vm1591 = vmor %vm1589, %vm1590
      %v1592 = vsel %vm1591, %v1583, %v1588
      %v1593 = vrsqrt.pop %v1311
      %v1594 = vmul.f32 %v1593, %v1311
      %v1595 = vmul.f32 %v1594, %v1593
      %v1596 = vmul.f32 0.5, %v1595
      %v1597 = vsub.f32 1.5, %v1596
      %v1598 = vmul.f32 %v1593, %v1597
      %vm1599 = vweird.f32 %v1311
      %vm1600 = vweird.f32 %v1593
      %vm1601 = vmor %vm1599, %vm1600
      %v1602 = vsel %vm1601, %v1593, %v1598
      %v1603 = vrsqrt.pop %v1312
      %v1604 = vmul.f32 %v1603, %v1312
      %v1605 = vmul.f32 %v1604, %v1603
      %v1606 = vmul.f32 0.5, %v1605
      %v1607 = vsub.f32 1.5, %v1606
      %v1608 = vmul.f32 %v1603, %v1607
      %vm1609 = vweird.f32 %v1312
      %vm1610 = vweird.f32 %v1603
      %vm1611 = vmor %vm1609, %vm1610
      %v1612 = vsel %vm1611, %v1603, %v1608
      %v1613 = vmul.f32 %v1133, %v1322
      %v1614 = vmul.f32 %v1134, %v1332
      %v1615 = vmul.f32 %v1135, %v1342
      %v1616 = vmul.f32 %v1136, %v1352
      %v1617 = vmul.f32 %v1137, %v1362
      %v1618 = vmul.f32 %v1138, %v1372
      %v1619 = vmul.f32 %v1139, %v1382
      %v1620 = vmul.f32 %v1140, %v1392
      %v1621 = vmul.f32 %v1141, %v1402
      %v1622 = vmul.f32 %v1142, %v1412
      %v1623 = vmul.f32 %v1143, %v1422
      %v1624 = vmul.f32 %v1144, %v1432
      %v1625 = vmul.f32 %v1145, %v1442
      %v1626 = vmul.f32 %v1146, %v1452
      %v1627 = vmul.f32 %v1147, %v1462
      %v1628 = vmul.f32 %v1148, %v1472
      %v1629 = vmul.f32 %v1149, %v1482
      %v1630 = vmul.f32 %v1150, %v1492
      %v1631 = vmul.f32 %v1151, %v1502
      %v1632 = vmul.f32 %v1152, %v1512
      %v1633 = vmul.f32 %v1153, %v1522
      %v1634 = vmul.f32 %v1154, %v1532
      %v1635 = vmul.f32 %v1155, %v1542
      %v1636 = vmul.f32 %v1156, %v1552
      %v1637 = vmul.f32 %v1157, %v1562
      %v1638 = vmul.f32 %v1158, %v1572
      %v1639 = vmul.f32 %v1159, %v1582
      %v1640 = vmul.f32 %v1160, %v1592
      %v1641 = vmul.f32 %v1161, %v1602
      %v1642 = vmul.f32 %v1162, %v1612
      %v1643 = vld [vmem:[%s471] sm:$0x1]
      %v1645 = vperm.slane %v1643, 0
      %v1647 = vmul.f32 %v1613, %v1645
      %v1648 = vmul.f32 %v1614, %v1645
      %v1649 = vmul.f32 %v1615, %v1645
      %v1650 = vmul.f32 %v1616, %v1645
      %v1651 = vmul.f32 %v1617, %v1645
      %v1652 = vmul.f32 %v1618, %v1645
      %v1653 = vmul.f32 %v1619, %v1645
      %v1654 = vmul.f32 %v1620, %v1645
      %v1655 = vmul.f32 %v1621, %v1645
      %v1656 = vmul.f32 %v1622, %v1645
      %v1657 = vmul.f32 %v1623, %v1645
      %v1658 = vmul.f32 %v1624, %v1645
      %v1659 = vmul.f32 %v1625, %v1645
      %v1660 = vmul.f32 %v1626, %v1645
      %v1661 = vmul.f32 %v1627, %v1645
      %v1662 = vmul.f32 %v1628, %v1645
      %v1663 = vmul.f32 %v1629, %v1645
      %v1664 = vmul.f32 %v1630, %v1645
      %v1665 = vmul.f32 %v1631, %v1645
      %v1666 = vmul.f32 %v1632, %v1645
      %v1667 = vmul.f32 %v1633, %v1645
      %v1668 = vmul.f32 %v1634, %v1645
      %v1669 = vmul.f32 %v1635, %v1645
      %v1670 = vmul.f32 %v1636, %v1645
      %v1671 = vmul.f32 %v1637, %v1645
      %v1672 = vmul.f32 %v1638, %v1645
      %v1673 = vmul.f32 %v1639, %v1645
      %v1674 = vmul.f32 %v1640, %v1645
      %v1675 = vmul.f32 %v1641, %v1645
      %v1676 = vmul.f32 %v1642, %v1645
      %v1677 = vld [vmem:[%s474] sm:$0x1]
      %v1679 = vperm.slane %v1677, 0
      %v1681 = vadd.f32 %v1647, %v1679
      %v1682 = vadd.f32 %v1648, %v1679
      %v1683 = vadd.f32 %v1649, %v1679
      %v1684 = vadd.f32 %v1650, %v1679
      %v1685 = vadd.f32 %v1651, %v1679
      %v1686 = vadd.f32 %v1652, %v1679
      %v1687 = vadd.f32 %v1653, %v1679
      %v1688 = vadd.f32 %v1654, %v1679
      %v1689 = vadd.f32 %v1655, %v1679
      %v1690 = vadd.f32 %v1656, %v1679
      %v1691 = vadd.f32 %v1657, %v1679
      %v1692 = vadd.f32 %v1658, %v1679
      %v1693 = vadd.f32 %v1659, %v1679
      %v1694 = vadd.f32 %v1660, %v1679
      %v1695 = vadd.f32 %v1661, %v1679
      %v1696 = vadd.f32 %v1662, %v1679
      %v1697 = vadd.f32 %v1663, %v1679
      %v1698 = vadd.f32 %v1664, %v1679
      %v1699 = vadd.f32 %v1665, %v1679
      %v1700 = vadd.f32 %v1666, %v1679
      %v1701 = vadd.f32 %v1667, %v1679
      %v1702 = vadd.f32 %v1668, %v1679
      %v1703 = vadd.f32 %v1669, %v1679
      %v1704 = vadd.f32 %v1670, %v1679
      %v1705 = vadd.f32 %v1671, %v1679
      %v1706 = vadd.f32 %v1672, %v1679
      %v1707 = vadd.f32 %v1673, %v1679
      %v1708 = vadd.f32 %v1674, %v1679
      %v1709 = vadd.f32 %v1675, %v1679
      %v1710 = vadd.f32 %v1676, %v1679
      %1711 = vst [vmem:[%s483] sm:$0xff] %v1681
      %1712 = vst [vmem:[%s483 + $0x8] sm:$0xff] %v1682
      %1713 = vst [vmem:[%s483 + $0x10] sm:$0xff] %v1683
      %1714 = vst [vmem:[%s483 + $0x18] sm:$0xff] %v1684
      %1715 = vst [vmem:[%s483 + $0x20] sm:$0xff] %v1685
      %1716 = vst [vmem:[%s483 + $0x28] sm:$0xff] %v1686
      %1717 = vst [vmem:[%s483 + $0x30] sm:$0xff] %v1687
      %1718 = vst [vmem:[%s483 + $0x38] sm:$0xff] %v1688
      %1719 = vst [vmem:[%s483 + $0x40] sm:$0xff] %v1689
      %1720 = vst [vmem:[%s483 + $0x48] sm:$0xff] %v1690
      %1721 = vst [vmem:[%s483 + $0x50] sm:$0xff] %v1691
      %1722 = vst [vmem:[%s483 + $0x58] sm:$0xff] %v1692
      %1723 = vst [vmem:[%s483 + $0x60] sm:$0xff] %v1693
      %1724 = vst [vmem:[%s483 + $0x68] sm:$0xff] %v1694
      %1725 = vst [vmem:[%s483 + $0x70] sm:$0xff] %v1695
      %1726 = vst [vmem:[%s483 + $0x78] sm:$0xff] %v1696
      %1727 = vst [vmem:[%s483 + $0x80] sm:$0xff] %v1697
      %1728 = vst [vmem:[%s483 + $0x88] sm:$0xff] %v1698
      %1729 = vst [vmem:[%s483 + $0x90] sm:$0xff] %v1699
      %1730 = vst [vmem:[%s483 + $0x98] sm:$0xff] %v1700
      %1731 = vst [vmem:[%s483 + $0xa0] sm:$0xff] %v1701
      %1732 = vst [vmem:[%s483 + $0xa8] sm:$0xff] %v1702
      %1733 = vst [vmem:[%s483 + $0xb0] sm:$0xff] %v1703
      %1734 = vst [vmem:[%s483 + $0xb8] sm:$0xff] %v1704
      %1735 = vst [vmem:[%s483 + $0xc0] sm:$0xff] %v1705
      %1736 = vst [vmem:[%s483 + $0xc8] sm:$0xff] %v1706
      %1737 = vst [vmem:[%s483 + $0xd0] sm:$0xff] %v1707
      %1738 = vst [vmem:[%s483 + $0xd8] sm:$0xff] %v1708
      %1739 = vst [vmem:[%s483 + $0xe0] sm:$0xff] %v1709
      %1740 = vst [vmem:[%s483 + $0xe8] sm:$0xff] %v1710
      %s1741 = smul.u32 30, %s25
      %p1742 = scmp.lt.s32.totalorder %s24, 1
      %s1743 = scalar_select %p1742, %s24, 1
      %p1744 = scmp.lt.s32.totalorder %s1741, 29
      %s1745 = scalar_select %p1744, %s1741, 29
      %s1746 = smul.addr %s1743, 30
      %s1747 = sadd.s32 %s1745, %s1746
      %s1748 = smul.addr %s1747, 8
      %s1749 = scalar_lea.vmem %s9, %s1748
      // Predicated region
      $region57: #{model_forward.8} parent=55 // pred_check
        %p1750 = pneg %p286
      $region58: #{model_forward.8} parent=55 // pred_check_branch
        %1752 = sbr.rel (%p1750) target = $region60
      $region59: #{model_forward.8} parent=55 // pred_region
        %s1753 = smul.u32 30, %s25
      $region60: #{model_forward.8} parent=55 // pred_fallthru
        _
    $region56: #{model_forward.8} parent=5 // pred_fallthru
      _
    %p1754 = scmp.le.s32.totalorder 2, %s15
    // Predicated region
    $region61: #{model_forward.8} parent=5 // pred_check
      %p1755 = pneg %p1754
    $region62: #{model_forward.8} parent=5 // pred_check_branch
      %1757 = sbr.rel (%p1755) target = $region64
    $region63: #{model_forward.8} parent=5 // pred_region
      %s1758 = ssub.s32 %s15, 2
      // Predicated region
      $region65: #{model_forward.8} parent=63 // pred_check
        %p1759 = pneg %p292
      $region66: #{model_forward.8} parent=63 // pred_check_branch
        %1761 = sbr.rel (%p1759) target = $region68
      $region67: #{model_forward.8} parent=63 // pred_region
        %s1762 = smul.u32 30, %s27
        %p1763 = scmp.lt.s32.totalorder %s26, 1
        %s1764 = scalar_select %p1763, %s26, 1
        %p1765 = scmp.lt.s32.totalorder %s1762, 29
        %s1766 = scalar_select %p1765, %s1762, 29
        %s1767 = smul.addr %s1764, 30
        %s1768 = sadd.s32 %s1766, %s1767
        %s1769 = smul.addr %s1768, 8
        %s1770 = scalar_lea.vmem %s9, %s1769
      $region68: #{model_forward.8} parent=63 // pred_fallthru
        _
    $region64: #{model_forward.8} parent=5 // pred_fallthru
      _
  $region6: #{model_forward.8} parent=0 // loop_footer
    %s19 = sadd.s32 1, %s15
  $region7: #{model_forward.8} parent=0 // loop_footer_branch
    %14 = sbr.rel target = $region3
  $region8: #{model_forward.8} parent=0 // loop_exit
    _

// kernel: model_forward.9
$region0: #{model_forward.9}
  #allocation0 [shape = 'u32[]', space=smem, size = 0x4, offset = 0x4, fixed_abs, tag = 'smem constant byte address 0x4 - core index']
  #allocation1 [shape = 'u32[72,128]{1,0:T(1,128)}', space=vmem, size = 0x9000, scoped, tag = 'internal scratch']
  %s0 = inlined_call_operand.vmem [shape: f32[2,240,128], index: 0, kind: input, shape index: {}]
  %s1 = inlined_call_operand.vmem [shape: f32[2,240,128], index: 1, kind: input, shape index: {}]
  %s2 = inlined_call_operand.vmem [shape: f32[2,240,128], index: 2, kind: input, shape index: {}, may-alias: {2,13}]
  %s3 = inlined_call_operand.vmem [shape: f32[2,128,128], index: 3, kind: input, shape index: {}]
  %s4 = inlined_call_operand.vmem [shape: f32[2,128,128], index: 4, kind: input, shape index: {}]
  %s5 = inlined_call_operand.vmem [shape: f32[2,128,128], index: 5, kind: input, shape index: {}]
  %s6 = inlined_call_operand.vmem [shape: f32[2,1,128], index: 6, kind: input, shape index: {}]
  %s7 = inlined_call_operand.vmem [shape: f32[2,128,128], index: 7, kind: input, shape index: {}]
  %s8 = inlined_call_operand.vmem [shape: f32[2,1,128], index: 8, kind: input, shape index: {}]
  %s9 = inlined_call_operand.vmem [shape: f32[2,128,128], index: 9, kind: input, shape index: {}]
  %s10 = inlined_call_operand.vmem [shape: f32[2,1,128], index: 10, kind: input, shape index: {}]
  %s11 = inlined_call_operand.vmem [shape: f32[2,1,128], index: 11, kind: input, shape index: {}]
  %s12 = inlined_call_operand.vmem [shape: f32[2,1,128], index: 12, kind: input, shape index: {}]
  %s13 = inlined_call_operand.vmem [shape: f32[2,240,128], index: 13, kind: input, shape index: {}, may-alias: {2,13}]
  %s14 = inlined_call_operand.vmem [shape: f32[2,240,128], index: 14, kind: output, shape index: {}]
  %s15 = sld [smem:[#allocation0]]
  $region89: #{model_forward.9} parent=0
    _
  %s17 = ssub.s32 1, %s15
  %s18 = scalar_select 0, %s17, %s15
  loop: start=0, step=1, limit=4
  $region2: #{model_forward.9} parent=0 // loop_pre_header
    _
  $region3: #{model_forward.9} parent=0 // loop_header
    %s20 = sphi 0, %s24
    %p21 = scmp.ge.s32.totalorder %s20, 4
    %s27 = sphi 0, %s39
    %s28 = sphi 0, %s35
    %s29 = sphi 0, %s27
    %s30 = sphi 0, %s28
    %s31 = sphi 0, %s29
    %s32 = sphi 0, %s30
    %s44 = sphi 0, %s46
    %s47 = sphi 0, %s44
    %s48 = sphi 0, %s47
    %s64 = sphi 0, %s48
    %s72 = sphi 0, %s74
    %s75 = sphi 0, %s72
    %s76 = sphi 0, %s75
    %s92 = sphi 0, %s76
    %s100 = sphi 0, %s102
    %s103 = sphi 0, %s100
    %s104 = sphi 0, %s103
    %s120 = sphi 0, %s104
    %s126 = sphi 0, %s128
    %s129 = sphi 0, %s126
    %s130 = sphi 0, %s129
    %s146 = sphi 0, %s130
    %s152 = sphi 0, %s154
    %s155 = sphi 0, %s152
    %s156 = sphi 0, %s155
    %s172 = sphi 0, %s156
    %s178 = sphi 0, %s180
    %s181 = sphi 0, %s178
    %s182 = sphi 0, %s181
    %s198 = sphi 0, %s182
    %s204 = sphi 0, %s206
    %s207 = sphi 0, %s204
    %s208 = sphi 0, %s207
    %s224 = sphi 0, %s208
    %s230 = sphi 0, %s232
    %s233 = sphi 0, %s230
    %s234 = sphi 0, %s233
    %s250 = sphi 0, %s234
    %s256 = sphi 0, %s258
    %s259 = sphi 0, %s256
    %s260 = sphi 0, %s259
    %s276 = sphi 0, %s260
    %s282 = sphi 0, %s284
    %s285 = sphi 0, %s282
    %s286 = sphi 0, %s285
    %s302 = sphi 0, %s286
    %s308 = sphi 0, %s310
    %s311 = sphi 0, %s308
    %s312 = sphi 0, %s311
    %s328 = sphi 0, %s312
    %s334 = sphi 0, %s336
    %s337 = sphi 0, %s334
    %s338 = sphi 0, %s337
    %s354 = sphi 0, %s338
    %s360 = sphi 0, %s362
    %s363 = sphi 0, %s360
    %s364 = sphi 0, %s363
    %s380 = sphi 0, %s364
    %s388 = sphi 0, %s390
    %s391 = sphi 0, %s388
    %s392 = sphi 0, %s391
    %s408 = sphi 0, %s392
    %s416 = sphi 0, %s418
    %s419 = sphi 0, %s416
    %s420 = sphi 0, %s419
    %s436 = sphi 0, %s420
  $region4: #{model_forward.9} parent=0 // loop_header_branch
    %23 = sbr.rel (%p21) target = $region8
  $region5: #{model_forward.9} parent=0 // loop_body
    %s25 = ssub.s32 %s20, 1
    %s26 = ssub.s32 %s20, 2
    %s33 = sadd.s32 1, %s28
    %p34 = scmp.ge.s32.totalorder %s33, 1
    %s35 = scalar_select %p34, 0, %s33
    %s36 = sadd.s32 1, %s27
    %s37 = scalar_select %p34, %s36, %s27
    %p38 = scmp.ge.s32.totalorder %s37, 2
    %s39 = scalar_select %p38, 0, %s37
    %s40 = ssub.s32 %s27, %s39
    %s41 = ssub.s32 %s28, %s35
    %s42 = sor.u32 %s40, %s41
    %p43 = scmp.eq.s32.totalorder %s42, 0
    %s45 = sadd.s32 %s44, 1
    %s46 = scalar_select %p43, %s44, %s45
    %p49 = pneg %p43
    %p50 = scmp.eq.s32.totalorder %s20, 1
    %p51 = por %p49, %p50
    %p52 = scmp.ne.s32.totalorder %s44, %s47
    %p53 = scmp.eq.s32.totalorder %s20, 0
    %p54 = por %p52, %p53
    %p55 = scmp.ne.s32.totalorder %s44, %s47
    %p56 = scmp.eq.s32.totalorder %s25, 1
    %p57 = por %p55, %p56
    %p58 = scmp.ne.s32.totalorder %s47, %s48
    %p59 = scmp.eq.s32.totalorder %s25, 0
    %p60 = por %p58, %p59
    %p61 = scmp.ne.s32.totalorder %s47, %s48
    %p62 = scmp.eq.s32.totalorder %s26, 1
    %p63 = por %p61, %p62
    %p65 = scmp.ne.s32.totalorder %s48, %s64
    %p66 = scmp.eq.s32.totalorder %s26, 0
    %p67 = por %p65, %p66
    %s68 = ssub.s32 %s27, %s39
    %s69 = ssub.s32 %s28, %s35
    %s70 = sor.u32 %s68, %s69
    %p71 = scmp.eq.s32.totalorder %s70, 0
    %s73 = sadd.s32 %s72, 1
    %s74 = scalar_select %p71, %s72, %s73
    %p77 = pneg %p71
    %p78 = scmp.eq.s32.totalorder %s20, 1
    %p79 = por %p77, %p78
    %p80 = scmp.ne.s32.totalorder %s72, %s75
    %p81 = scmp.eq.s32.totalorder %s20, 0
    %p82 = por %p80, %p81
    %p83 = scmp.ne.s32.totalorder %s72, %s75
    %p84 = scmp.eq.s32.totalorder %s25, 1
    %p85 = por %p83, %p84
    %p86 = scmp.ne.s32.totalorder %s75, %s76
    %p87 = scmp.eq.s32.totalorder %s25, 0
    %p88 = por %p86, %p87
    %p89 = scmp.ne.s32.totalorder %s75, %s76
    %p90 = scmp.eq.s32.totalorder %s26, 1
    %p91 = por %p89, %p90
    %p93 = scmp.ne.s32.totalorder %s76, %s92
    %p94 = scmp.eq.s32.totalorder %s26, 0
    %p95 = por %p93, %p94
    %s96 = ssub.s32 %s27, %s39
    %s97 = ssub.s32 %s28, %s35
    %s98 = sor.u32 %s96, %s97
    %p99 = scmp.eq.s32.totalorder %s98, 0
    %s101 = sadd.s32 %s100, 1
    %s102 = scalar_select %p99, %s100, %s101
    %p105 = pneg %p99
    %p106 = scmp.eq.s32.totalorder %s20, 1
    %p107 = por %p105, %p106
    %p108 = scmp.ne.s32.totalorder %s100, %s103
    %p109 = scmp.eq.s32.totalorder %s20, 0
    %p110 = por %p108, %p109
    %p111 = scmp.ne.s32.totalorder %s100, %s103
    %p112 = scmp.eq.s32.totalorder %s25, 1
    %p113 = por %p111, %p112
    %p114 = scmp.ne.s32.totalorder %s103, %s104
    %p115 = scmp.eq.s32.totalorder %s25, 0
    %p116 = por %p114, %p115
    %p117 = scmp.ne.s32.totalorder %s103, %s104
    %p118 = scmp.eq.s32.totalorder %s26, 1
    %p119 = por %p117, %p118
    %p121 = scmp.ne.s32.totalorder %s104, %s120
    %p122 = scmp.eq.s32.totalorder %s26, 0
    %p123 = por %p121, %p122
    %s124 = ssub.s32 %s27, %s39
    %p125 = scmp.eq.s32.totalorder %s124, 0
    %s127 = sadd.s32 %s126, 1
    %s128 = scalar_select %p125, %s126, %s127
    %p131 = pneg %p125
    %p132 = scmp.eq.s32.totalorder %s20, 1
    %p133 = por %p131, %p132
    %p134 = scmp.ne.s32.totalorder %s126, %s129
    %p135 = scmp.eq.s32.totalorder %s20, 0
    %p136 = por %p134, %p135
    %p137 = scmp.ne.s32.totalorder %s126, %s129
    %p138 = scmp.eq.s32.totalorder %s25, 1
    %p139 = por %p137, %p138
    %p140 = scmp.ne.s32.totalorder %s129, %s130
    %p141 = scmp.eq.s32.totalorder %s25, 0
    %p142 = por %p140, %p141
    %p143 = scmp.ne.s32.totalorder %s129, %s130
    %p144 = scmp.eq.s32.totalorder %s26, 1
    %p145 = por %p143, %p144
    %p147 = scmp.ne.s32.totalorder %s130, %s146
    %p148 = scmp.eq.s32.totalorder %s26, 0
    %p149 = por %p147, %p148
    %s150 = ssub.s32 %s27, %s39
    %p151 = scmp.eq.s32.totalorder %s150, 0
    %s153 = sadd.s32 %s152, 1
    %s154 = scalar_select %p151, %s152, %s153
    %p157 = pneg %p151
    %p158 = scmp.eq.s32.totalorder %s20, 1
    %p159 = por %p157, %p158
    %p160 = scmp.ne.s32.totalorder %s152, %s155
    %p161 = scmp.eq.s32.totalorder %s20, 0
    %p162 = por %p160, %p161
    %p163 = scmp.ne.s32.totalorder %s152, %s155
    %p164 = scmp.eq.s32.totalorder %s25, 1
    %p165 = por %p163, %p164
    %p166 = scmp.ne.s32.totalorder %s155, %s156
    %p167 = scmp.eq.s32.totalorder %s25, 0
    %p168 = por %p166, %p167
    %p169 = scmp.ne.s32.totalorder %s155, %s156
    %p170 = scmp.eq.s32.totalorder %s26, 1
    %p171 = por %p169, %p170
    %p173 = scmp.ne.s32.totalorder %s156, %s172
    %p174 = scmp.eq.s32.totalorder %s26, 0
    %p175 = por %p173, %p174
    %s176 = ssub.s32 %s27, %s39
    %p177 = scmp.eq.s32.totalorder %s176, 0
    %s179 = sadd.s32 %s178, 1
    %s180 = scalar_select %p177, %s178, %s179
    %p183 = pneg %p177
    %p184 = scmp.eq.s32.totalorder %s20, 1
    %p185 = por %p183, %p184
    %p186 = scmp.ne.s32.totalorder %s178, %s181
    %p187 = scmp.eq.s32.totalorder %s20, 0
    %p188 = por %p186, %p187
    %p189 = scmp.ne.s32.totalorder %s178, %s181
    %p190 = scmp.eq.s32.totalorder %s25, 1
    %p191 = por %p189, %p190
    %p192 = scmp.ne.s32.totalorder %s181, %s182
    %p193 = scmp.eq.s32.totalorder %s25, 0
    %p194 = por %p192, %p193
    %p195 = scmp.ne.s32.totalorder %s181, %s182
    %p196 = scmp.eq.s32.totalorder %s26, 1
    %p197 = por %p195, %p196
    %p199 = scmp.ne.s32.totalorder %s182, %s198
    %p200 = scmp.eq.s32.totalorder %s26, 0
    %p201 = por %p199, %p200
    %s202 = ssub.s32 %s27, %s39
    %p203 = scmp.eq.s32.totalorder %s202, 0
    %s205 = sadd.s32 %s204, 1
    %s206 = scalar_select %p203, %s204, %s205
    %p209 = pneg %p203
    %p210 = scmp.eq.s32.totalorder %s20, 1
    %p211 = por %p209, %p210
    %p212 = scmp.ne.s32.totalorder %s204, %s207
    %p213 = scmp.eq.s32.totalorder %s20, 0
    %p214 = por %p212, %p213
    %p215 = scmp.ne.s32.totalorder %s204, %s207
    %p216 = scmp.eq.s32.totalorder %s25, 1
    %p217 = por %p215, %p216
    %p218 = scmp.ne.s32.totalorder %s207, %s208
    %p219 = scmp.eq.s32.totalorder %s25, 0
    %p220 = por %p218, %p219
    %p221 = scmp.ne.s32.totalorder %s207, %s208
    %p222 = scmp.eq.s32.totalorder %s26, 1
    %p223 = por %p221, %p222
    %p225 = scmp.ne.s32.totalorder %s208, %s224
    %p226 = scmp.eq.s32.totalorder %s26, 0
    %p227 = por %p225, %p226
    %s228 = ssub.s32 %s27, %s39
    %p229 = scmp.eq.s32.totalorder %s228, 0
    %s231 = sadd.s32 %s230, 1
    %s232 = scalar_select %p229, %s230, %s231
    %p235 = pneg %p229
    %p236 = scmp.eq.s32.totalorder %s20, 1
    %p237 = por %p235, %p236
    %p238 = scmp.ne.s32.totalorder %s230, %s233
    %p239 = scmp.eq.s32.totalorder %s20, 0
    %p240 = por %p238, %p239
    %p241 = scmp.ne.s32.totalorder %s230, %s233
    %p242 = scmp.eq.s32.totalorder %s25, 1
    %p243 = por %p241, %p242
    %p244 = scmp.ne.s32.totalorder %s233, %s234
    %p245 = scmp.eq.s32.totalorder %s25, 0
    %p246 = por %p244, %p245
    %p247 = scmp.ne.s32.totalorder %s233, %s234
    %p248 = scmp.eq.s32.totalorder %s26, 1
    %p249 = por %p247, %p248
    %p251 = scmp.ne.s32.totalorder %s234, %s250
    %p252 = scmp.eq.s32.totalorder %s26, 0
    %p253 = por %p251, %p252
    %s254 = ssub.s32 %s27, %s39
    %p255 = scmp.eq.s32.totalorder %s254, 0
    %s257 = sadd.s32 %s256, 1
    %s258 = scalar_select %p255, %s256, %s257
    %p261 = pneg %p255
    %p262 = scmp.eq.s32.totalorder %s20, 1
    %p263 = por %p261, %p262
    %p264 = scmp.ne.s32.totalorder %s256, %s259
    %p265 = scmp.eq.s32.totalorder %s20, 0
    %p266 = por %p264, %p265
    %p267 = scmp.ne.s32.totalorder %s256, %s259
    %p268 = scmp.eq.s32.totalorder %s25, 1
    %p269 = por %p267, %p268
    %p270 = scmp.ne.s32.totalorder %s259, %s260
    %p271 = scmp.eq.s32.totalorder %s25, 0
    %p272 = por %p270, %p271
    %p273 = scmp.ne.s32.totalorder %s259, %s260
    %p274 = scmp.eq.s32.totalorder %s26, 1
    %p275 = por %p273, %p274
    %p277 = scmp.ne.s32.totalorder %s260, %s276
    %p278 = scmp.eq.s32.totalorder %s26, 0
    %p279 = por %p277, %p278
    %s280 = ssub.s32 %s27, %s39
    %p281 = scmp.eq.s32.totalorder %s280, 0
    %s283 = sadd.s32 %s282, 1
    %s284 = scalar_select %p281, %s282, %s283
    %p287 = pneg %p281
    %p288 = scmp.eq.s32.totalorder %s20, 1
    %p289 = por %p287, %p288
    %p290 = scmp.ne.s32.totalorder %s282, %s285
    %p291 = scmp.eq.s32.totalorder %s20, 0
    %p292 = por %p290, %p291
    %p293 = scmp.ne.s32.totalorder %s282, %s285
    %p294 = scmp.eq.s32.totalorder %s25, 1
    %p295 = por %p293, %p294
    %p296 = scmp.ne.s32.totalorder %s285, %s286
    %p297 = scmp.eq.s32.totalorder %s25, 0
    %p298 = por %p296, %p297
    %p299 = scmp.ne.s32.totalorder %s285, %s286
    %p300 = scmp.eq.s32.totalorder %s26, 1
    %p301 = por %p299, %p300
    %p303 = scmp.ne.s32.totalorder %s286, %s302
    %p304 = scmp.eq.s32.totalorder %s26, 0
    %p305 = por %p303, %p304
    %s306 = ssub.s32 %s27, %s39
    %p307 = scmp.eq.s32.totalorder %s306, 0
    %s309 = sadd.s32 %s308, 1
    %s310 = scalar_select %p307, %s308, %s309
    %p313 = pneg %p307
    %p314 = scmp.eq.s32.totalorder %s20, 1
    %p315 = por %p313, %p314
    %p316 = scmp.ne.s32.totalorder %s308, %s311
    %p317 = scmp.eq.s32.totalorder %s20, 0
    %p318 = por %p316, %p317
    %p319 = scmp.ne.s32.totalorder %s308, %s311
    %p320 = scmp.eq.s32.totalorder %s25, 1
    %p321 = por %p319, %p320
    %p322 = scmp.ne.s32.totalorder %s311, %s312
    %p323 = scmp.eq.s32.totalorder %s25, 0
    %p324 = por %p322, %p323
    %p325 = scmp.ne.s32.totalorder %s311, %s312
    %p326 = scmp.eq.s32.totalorder %s26, 1
    %p327 = por %p325, %p326
    %p329 = scmp.ne.s32.totalorder %s312, %s328
    %p330 = scmp.eq.s32.totalorder %s26, 0
    %p331 = por %p329, %p330
    %s332 = ssub.s32 %s27, %s39
    %p333 = scmp.eq.s32.totalorder %s332, 0
    %s335 = sadd.s32 %s334, 1
    %s336 = scalar_select %p333, %s334, %s335
    %p339 = pneg %p333
    %p340 = scmp.eq.s32.totalorder %s20, 1
    %p341 = por %p339, %p340
    %p342 = scmp.ne.s32.totalorder %s334, %s337
    %p343 = scmp.eq.s32.totalorder %s20, 0
    %p344 = por %p342, %p343
    %p345 = scmp.ne.s32.totalorder %s334, %s337
    %p346 = scmp.eq.s32.totalorder %s25, 1
    %p347 = por %p345, %p346
    %p348 = scmp.ne.s32.totalorder %s337, %s338
    %p349 = scmp.eq.s32.totalorder %s25, 0
    %p350 = por %p348, %p349
    %p351 = scmp.ne.s32.totalorder %s337, %s338
    %p352 = scmp.eq.s32.totalorder %s26, 1
    %p353 = por %p351, %p352
    %p355 = scmp.ne.s32.totalorder %s338, %s354
    %p356 = scmp.eq.s32.totalorder %s26, 0
    %p357 = por %p355, %p356
    %s358 = ssub.s32 %s27, %s39
    %p359 = scmp.eq.s32.totalorder %s358, 0
    %s361 = sadd.s32 %s360, 1
    %s362 = scalar_select %p359, %s360, %s361
    %p365 = pneg %p359
    %p366 = scmp.eq.s32.totalorder %s20, 1
    %p367 = por %p365, %p366
    %p368 = scmp.ne.s32.totalorder %s360, %s363
    %p369 = scmp.eq.s32.totalorder %s20, 0
    %p370 = por %p368, %p369
    %p371 = scmp.ne.s32.totalorder %s360, %s363
    %p372 = scmp.eq.s32.totalorder %s25, 1
    %p373 = por %p371, %p372
    %p374 = scmp.ne.s32.totalorder %s363, %s364
    %p375 = scmp.eq.s32.totalorder %s25, 0
    %p376 = por %p374, %p375
    %p377 = scmp.ne.s32.totalorder %s363, %s364
    %p378 = scmp.eq.s32.totalorder %s26, 1
    %p379 = por %p377, %p378
    %p381 = scmp.ne.s32.totalorder %s364, %s380
    %p382 = scmp.eq.s32.totalorder %s26, 0
    %p383 = por %p381, %p382
    %s384 = ssub.s32 %s27, %s39
    %s385 = ssub.s32 %s28, %s35
    %s386 = sor.u32 %s384, %s385
    %p387 = scmp.eq.s32.totalorder %s386, 0
    %s389 = sadd.s32 %s388, 1
    %s390 = scalar_select %p387, %s388, %s389
    %p393 = pneg %p387
    %p394 = scmp.eq.s32.totalorder %s20, 1
    %p395 = por %p393, %p394
    %p396 = scmp.ne.s32.totalorder %s388, %s391
    %p397 = scmp.eq.s32.totalorder %s20, 0
    %p398 = por %p396, %p397
    %p399 = scmp.ne.s32.totalorder %s388, %s391
    %p400 = scmp.eq.s32.totalorder %s25, 1
    %p401 = por %p399, %p400
    %p402 = scmp.ne.s32.totalorder %s391, %s392
    %p403 = scmp.eq.s32.totalorder %s25, 0
    %p404 = por %p402, %p403
    %p405 = scmp.ne.s32.totalorder %s391, %s392
    %p406 = scmp.eq.s32.totalorder %s26, 1
    %p407 = por %p405, %p406
    %p409 = scmp.ne.s32.totalorder %s392, %s408
    %p410 = scmp.eq.s32.totalorder %s26, 0
    %p411 = por %p409, %p410
    %s412 = ssub.s32 %s27, %s39
    %s413 = ssub.s32 %s28, %s35
    %s414 = sor.u32 %s412, %s413
    %p415 = scmp.eq.s32.totalorder %s414, 0
    %s417 = sadd.s32 %s416, 1
    %s418 = scalar_select %p415, %s416, %s417
    %p421 = pneg %p415
    %p422 = scmp.eq.s32.totalorder %s20, 1
    %p423 = por %p421, %p422
    %p424 = scmp.ne.s32.totalorder %s416, %s419
    %p425 = scmp.eq.s32.totalorder %s20, 0
    %p426 = por %p424, %p425
    %p427 = scmp.ne.s32.totalorder %s416, %s419
    %p428 = scmp.eq.s32.totalorder %s25, 1
    %p429 = por %p427, %p428
    %p430 = scmp.ne.s32.totalorder %s419, %s420
    %p431 = scmp.eq.s32.totalorder %s25, 0
    %p432 = por %p430, %p431
    %p433 = scmp.ne.s32.totalorder %s419, %s420
    %p434 = scmp.eq.s32.totalorder %s26, 1
    %p435 = por %p433, %p434
    %p437 = scmp.ne.s32.totalorder %s420, %s436
    %p438 = scmp.eq.s32.totalorder %s26, 0
    %p439 = por %p437, %p438
    %p440 = scmp.le.s32.totalorder 1, %s20
    %p441 = scmp.lt.s32.totalorder %s20, 3
    %p442 = pnand %p440, %p441
    %p443 = pneg %p442
    // Predicated region
    $region9: #{model_forward.9} parent=5 // pred_check
      _
    $region10: #{model_forward.9} parent=5 // pred_check_branch
      %445 = sbr.rel (%p442) target = $region12
    $region11: #{model_forward.9} parent=5 // pred_region
      %s446 = ssub.s32 %s20, 1
    $region12: #{model_forward.9} parent=5 // pred_fallthru
      _
    %p447 = scmp.lt.s32.totalorder %s20, 2
    // Predicated region
    $region13: #{model_forward.9} parent=5 // pred_check
      %p448 = pneg %p447
    $region14: #{model_forward.9} parent=5 // pred_check_branch
      %450 = sbr.rel (%p448) target = $region16
    $region15: #{model_forward.9} parent=5 // pred_region
      // Predicated region
      $region17: #{model_forward.9} parent=15 // pred_check
        %p451 = pneg %p54
      $region18: #{model_forward.9} parent=15 // pred_check_branch
        %453 = sbr.rel (%p451) target = $region20
      $region19: #{model_forward.9} parent=15 // pred_region
        %s454 = smul.u32 30, %s28
        %p455 = scmp.lt.s32.totalorder %s27, 1
        %s456 = scalar_select %p455, %s27, 1
        %p457 = scmp.lt.s32.totalorder %s454, 29
        %s458 = scalar_select %p457, %s454, 29
        %s459 = smul.addr %s456, 30
        %s460 = sadd.s32 %s458, %s459
        %s461 = smul.addr %s460, 8
        %s462 = scalar_lea.vmem %s0, %s461
        %s463 = smul.u32 30, %s28
      $region20: #{model_forward.9} parent=15 // pred_fallthru
        _
      // Predicated region
      $region21: #{model_forward.9} parent=15 // pred_check
        %p464 = pneg %p82
      $region22: #{model_forward.9} parent=15 // pred_check_branch
        %466 = sbr.rel (%p464) target = $region24
      $region23: #{model_forward.9} parent=15 // pred_region
        %s467 = smul.u32 30, %s28
        %p468 = scmp.lt.s32.totalorder %s27, 1
        %s469 = scalar_select %p468, %s27, 1
        %p470 = scmp.lt.s32.totalorder %s467, 29
        %s471 = scalar_select %p470, %s467, 29
        %s472 = smul.addr %s469, 30
        %s473 = sadd.s32 %s471, %s472
        %s474 = smul.addr %s473, 8
        %s475 = scalar_lea.vmem %s1, %s474
        %s476 = smul.u32 30, %s28
      $region24: #{model_forward.9} parent=15 // pred_fallthru
        _
      // Predicated region
      $region25: #{model_forward.9} parent=15 // pred_check
        %p477 = pneg %p110
      $region26: #{model_forward.9} parent=15 // pred_check_branch
        %479 = sbr.rel (%p477) target = $region28
      $region27: #{model_forward.9} parent=15 // pred_region
        %s480 = smul.u32 30, %s28
        %p481 = scmp.lt.s32.totalorder %s27, 1
        %s482 = scalar_select %p481, %s27, 1
        %p483 = scmp.lt.s32.totalorder %s480, 29
        %s484 = scalar_select %p483, %s480, 29
        %s485 = smul.addr %s482, 30
        %s486 = sadd.s32 %s484, %s485
        %s487 = smul.addr %s486, 8
        %s488 = scalar_lea.vmem %s2, %s487
        %s489 = smul.u32 30, %s28
      $region28: #{model_forward.9} parent=15 // pred_fallthru
        _
      // Predicated region
      $region29: #{model_forward.9} parent=15 // pred_check
        %p490 = pneg %p136
      $region30: #{model_forward.9} parent=15 // pred_check_branch
        %492 = sbr.rel (%p490) target = $region32
      $region31: #{model_forward.9} parent=15 // pred_region
        %p493 = scmp.lt.s32.totalorder %s27, 1
        %s494 = scalar_select %p493, %s27, 1
        %s495 = smul.addr %s494, 16
        %s496 = smul.addr %s495, 8
        %s497 = scalar_lea.vmem %s3, %s496
      $region32: #{model_forward.9} parent=15 // pred_fallthru
        _
      // Predicated region
      $region33: #{model_forward.9} parent=15 // pred_check
        %p498 = pneg %p162
      $region34: #{model_forward.9} parent=15 // pred_check_branch
        %500 = sbr.rel (%p498) target = $region36
      $region35: #{model_forward.9} parent=15 // pred_region
        %p501 = scmp.lt.s32.totalorder %s27, 1
        %s502 = scalar_select %p501, %s27, 1
        %s503 = smul.addr %s502, 16
        %s504 = smul.addr %s503, 8
        %s505 = scalar_lea.vmem %s4, %s504
      $region36: #{model_forward.9} parent=15 // pred_fallthru
        _
      // Predicated region
      $region37: #{model_forward.9} parent=15 // pred_check
        %p506 = pneg %p188
      $region38: #{model_forward.9} parent=15 // pred_check_branch
        %508 = sbr.rel (%p506) target = $region40
      $region39: #{model_forward.9} parent=15 // pred_region
        %p509 = scmp.lt.s32.totalorder %s27, 1
        %s510 = scalar_select %p509, %s27, 1
        %s511 = smul.addr %s510, 16
        %s512 = smul.addr %s511, 8
        %s513 = scalar_lea.vmem %s5, %s512
      $region40: #{model_forward.9} parent=15 // pred_fallthru
        _
      // Predicated region
      $region41: #{model_forward.9} parent=15 // pred_check
        %p514 = pneg %p214
      $region42: #{model_forward.9} parent=15 // pred_check_branch
        %516 = sbr.rel (%p514) target = $region44
      $region43: #{model_forward.9} parent=15 // pred_region
        %p517 = scmp.lt.s32.totalorder %s27, 1
        %s518 = scalar_select %p517, %s27, 1
        %s519 = scalar_lea.vmem %s6, %s518
      $region44: #{model_forward.9} parent=15 // pred_fallthru
        _
      // Predicated region
      $region45: #{model_forward.9} parent=15 // pred_check
        %p520 = pneg %p240
      $region46: #{model_forward.9} parent=15 // pred_check_branch
        %522 = sbr.rel (%p520) target = $region48
      $region47: #{model_forward.9} parent=15 // pred_region
        %p523 = scmp.lt.s32.totalorder %s27, 1
        %s524 = scalar_select %p523, %s27, 1
        %s525 = smul.addr %s524, 16
        %s526 = smul.addr %s525, 8
        %s527 = scalar_lea.vmem %s7, %s526
      $region48: #{model_forward.9} parent=15 // pred_fallthru
        _
      // Predicated region
      $region49: #{model_forward.9} parent=15 // pred_check
        %p528 = pneg %p266
      $region50: #{model_forward.9} parent=15 // pred_check_branch
        %530 = sbr.rel (%p528) target = $region52
      $region51: #{model_forward.9} parent=15 // pred_region
        %p531 = scmp.lt.s32.totalorder %s27, 1
        %s532 = scalar_select %p531, %s27, 1
        %s533 = scalar_lea.vmem %s8, %s532
      $region52: #{model_forward.9} parent=15 // pred_fallthru
        _
      // Predicated region
      $region53: #{model_forward.9} parent=15 // pred_check
        %p534 = pneg %p292
      $region54: #{model_forward.9} parent=15 // pred_check_branch
        %536 = sbr.rel (%p534) target = $region56
      $region55: #{model_forward.9} parent=15 // pred_region
        %p537 = scmp.lt.s32.totalorder %s27, 1
        %s538 = scalar_select %p537, %s27, 1
        %s539 = smul.addr %s538, 16
        %s540 = smul.addr %s539, 8
        %s541 = scalar_lea.vmem %s9, %s540
      $region56: #{model_forward.9} parent=15 // pred_fallthru
        _
      // Predicated region
      $region57: #{model_forward.9} parent=15 // pred_check
        %p542 = pneg %p318
      $region58: #{model_forward.9} parent=15 // pred_check_branch
        %544 = sbr.rel (%p542) target = $region60
      $region59: #{model_forward.9} parent=15 // pred_region
        %p545 = scmp.lt.s32.totalorder %s27, 1
        %s546 = scalar_select %p545, %s27, 1
        %s547 = scalar_lea.vmem %s10, %s546
      $region60: #{model_forward.9} parent=15 // pred_fallthru
        _
      // Predicated region
      $region61: #{model_forward.9} parent=15 // pred_check
        %p548 = pneg %p344
      $region62: #{model_forward.9} parent=15 // pred_check_branch
        %550 = sbr.rel (%p548) target = $region64
      $region63: #{model_forward.9} parent=15 // pred_region
        %p551 = scmp.lt.s32.totalorder %s27, 1
        %s552 = scalar_select %p551, %s27, 1
        %s553 = scalar_lea.vmem %s11, %s552
      $region64: #{model_forward.9} parent=15 // pred_fallthru
        _
      // Predicated region
      $region65: #{model_forward.9} parent=15 // pred_check
        %p554 = pneg %p370
      $region66: #{model_forward.9} parent=15 // pred_check_branch
        %556 = sbr.rel (%p554) target = $region68
      $region67: #{model_forward.9} parent=15 // pred_region
        %p557 = scmp.lt.s32.totalorder %s27, 1
        %s558 = scalar_select %p557, %s27, 1
        %s559 = scalar_lea.vmem %s12, %s558
      $region68: #{model_forward.9} parent=15 // pred_fallthru
        _
      // Predicated region
      $region69: #{model_forward.9} parent=15 // pred_check
        %p560 = pneg %p398
      $region70: #{model_forward.9} parent=15 // pred_check_branch
        %562 = sbr.rel (%p560) target = $region72
      $region71: #{model_forward.9} parent=15 // pred_region
        %s563 = smul.u32 30, %s28
        %p564 = scmp.lt.s32.totalorder %s27, 1
        %s565 = scalar_select %p564, %s27, 1
        %p566 = scmp.lt.s32.totalorder %s563, 29
        %s567 = scalar_select %p566, %s563, 29
        %s568 = smul.addr %s565, 30
        %s569 = sadd.s32 %s567, %s568
        %s570 = smul.addr %s569, 8
        %s571 = scalar_lea.vmem %s13, %s570
        %s572 = smul.u32 30, %s28
      $region72: #{model_forward.9} parent=15 // pred_fallthru
        _
    $region16: #{model_forward.9} parent=5 // pred_fallthru
      _
    %p573 = scmp.le.s32.totalorder 1, %s20
    %p574 = scmp.lt.s32.totalorder %s20, 3
    %p575 = pnand %p573, %p574
    %p576 = pneg %p575
    // Predicated region
    $region73: #{model_forward.9} parent=5 // pred_check
      _
    $region74: #{model_forward.9} parent=5 // pred_check_branch
      %578 = sbr.rel (%p575) target = $region76
    $region75: #{model_forward.9} parent=5 // pred_region
      %s579 = ssub.s32 %s20, 1
      %s580 = smul.u32 30, %s30
      %p581 = scmp.lt.s32.totalorder %s29, 1
      %s582 = scalar_select %p581, %s29, 1
      %p583 = scmp.lt.s32.totalorder %s580, 29
      %s584 = scalar_select %p583, %s580, 29
      %s585 = smul.addr %s582, 30
      %s586 = sadd.s32 %s584, %s585
      %s587 = smul.addr %s586, 8
      %s588 = scalar_lea.vmem %s0, %s587
      %p589 = pneg %p60
      %p590 = pneg %p57
      %s591 = smul.u32 30, %s30
      %p592 = scmp.lt.s32.totalorder %s29, 1
      %s593 = scalar_select %p592, %s29, 1
      %p594 = scmp.lt.s32.totalorder %s591, 29
      %s595 = scalar_select %p594, %s591, 29
      %s596 = smul.addr %s593, 30
      %s597 = sadd.s32 %s595, %s596
      %s598 = smul.addr %s597, 8
      %s599 = scalar_lea.vmem %s1, %s598
      %p600 = pneg %p88
      %p601 = pneg %p85
      %s602 = smul.u32 30, %s30
      %p603 = scmp.lt.s32.totalorder %s29, 1
      %s604 = scalar_select %p603, %s29, 1
      %p605 = scmp.lt.s32.totalorder %s602, 29
      %s606 = scalar_select %p605, %s602, 29
      %s607 = smul.addr %s604, 30
      %s608 = sadd.s32 %s606, %s607
      %s609 = smul.addr %s608, 8
      %s610 = scalar_lea.vmem %s2, %s609
      %p611 = pneg %p116
      %p612 = pneg %p113
      %p613 = scmp.lt.s32.totalorder %s29, 1
      %s614 = scalar_select %p613, %s29, 1
      %s615 = smul.addr %s614, 16
      %s616 = smul.addr %s615, 8
      %s617 = scalar_lea.vmem %s3, %s616
      %p618 = pneg %p142
      %p619 = pneg %p139
      %p620 = scmp.lt.s32.totalorder %s29, 1
      %s621 = scalar_select %p620, %s29, 1
      %s622 = smul.addr %s621, 16
      %s623 = smul.addr %s622, 8
      %s624 = scalar_lea.vmem %s4, %s623
      %p625 = pneg %p168
      %p626 = pneg %p165
      %p627 = scmp.lt.s32.totalorder %s29, 1
      %s628 = scalar_select %p627, %s29, 1
      %s629 = smul.addr %s628, 16
      %s630 = smul.addr %s629, 8
      %s631 = scalar_lea.vmem %s5, %s630
      %p632 = pneg %p194
      %p633 = pneg %p191
      %p634 = scmp.lt.s32.totalorder %s29, 1
      %s635 = scalar_select %p634, %s29, 1
      %s636 = scalar_lea.vmem %s6, %s635
      %p637 = pneg %p220
      %p638 = pneg %p217
      %p639 = scmp.lt.s32.totalorder %s29, 1
      %s640 = scalar_select %p639, %s29, 1
      %s641 = smul.addr %s640, 16
      %s642 = smul.addr %s641, 8
      %s643 = scalar_lea.vmem %s7, %s642
      %p644 = pneg %p246
      %p645 = pneg %p243
      %p646 = scmp.lt.s32.totalorder %s29, 1
      %s647 = scalar_select %p646, %s29, 1
      %s648 = scalar_lea.vmem %s8, %s647
      %p649 = pneg %p272
      %p650 = pneg %p269
      %p651 = scmp.lt.s32.totalorder %s29, 1
      %s652 = scalar_select %p651, %s29, 1
      %s653 = smul.addr %s652, 16
      %s654 = smul.addr %s653, 8
      %s655 = scalar_lea.vmem %s9, %s654
      %p656 = pneg %p298
      %p657 = pneg %p295
      %p658 = scmp.lt.s32.totalorder %s29, 1
      %s659 = scalar_select %p658, %s29, 1
      %s660 = scalar_lea.vmem %s10, %s659
      %p661 = pneg %p324
      %p662 = pneg %p321
      %p663 = scmp.lt.s32.totalorder %s29, 1
      %s664 = scalar_select %p663, %s29, 1
      %s665 = scalar_lea.vmem %s11, %s664
      %p666 = pneg %p350
      %p667 = pneg %p347
      %p668 = scmp.lt.s32.totalorder %s29, 1
      %s669 = scalar_select %p668, %s29, 1
      %s670 = scalar_lea.vmem %s12, %s669
      %p671 = pneg %p376
      %p672 = pneg %p373
      %s673 = smul.u32 30, %s30
      %p674 = scmp.lt.s32.totalorder %s29, 1
      %s675 = scalar_select %p674, %s29, 1
      %p676 = scmp.lt.s32.totalorder %s673, 29
      %s677 = scalar_select %p676, %s673, 29
      %s678 = smul.addr %s675, 30
      %s679 = sadd.s32 %s677, %s678
      %s680 = smul.addr %s679, 8
      %s681 = scalar_lea.vmem %s13, %s680
      %p682 = pneg %p404
      %p683 = pneg %p401
      %p684 = pneg %p432
      %p685 = pneg %p429
      %s686 = smul.u32 30, %s30
      %p687 = scmp.lt.s32.totalorder %s29, 1
      %s688 = scalar_select %p687, %s29, 1
      %p689 = scmp.lt.s32.totalorder %s686, 29
      %s690 = scalar_select %p689, %s686, 29
      %s691 = smul.addr %s688, 30
      %s692 = sadd.s32 %s690, %s691
      %s693 = smul.addr %s692, 8
      %s694 = scalar_lea.vmem %s14, %s693
      %s695 = smul.u32 30, %s30
      %p696 = scmp.lt.s32.totalorder %s29, 1
      %s697 = scalar_select %p696, %s29, 1
      %p698 = scmp.lt.s32.totalorder %s695, 29
      %s699 = scalar_select %p698, %s695, 29
      %s700 = smul.addr %s697, 30
      %s701 = sadd.s32 %s699, %s700
      %s702 = smul.addr %s701, 8
      %s703 = scalar_lea.vmem %s0, %s702
      %s704 = smul.u32 30, %s30
      %s705 = smul.u32 30, %s30
      %p706 = scmp.lt.s32.totalorder %s29, 1
      %s707 = scalar_select %p706, %s29, 1
      %p708 = scmp.lt.s32.totalorder %s705, 29
      %s709 = scalar_select %p708, %s705, 29
      %s710 = smul.addr %s707, 30
      %s711 = sadd.s32 %s709, %s710
      %s712 = smul.addr %s711, 8
      %s713 = scalar_lea.vmem %s1, %s712
      %s714 = smul.u32 30, %s30
      %s715 = smul.u32 30, %s30
      %p716 = scmp.lt.s32.totalorder %s29, 1
      %s717 = scalar_select %p716, %s29, 1
      %p718 = scmp.lt.s32.totalorder %s715, 29
      %s719 = scalar_select %p718, %s715, 29
      %s720 = smul.addr %s717, 30
      %s721 = sadd.s32 %s719, %s720
      %s722 = smul.addr %s721, 8
      %s723 = scalar_lea.vmem %s2, %s722
      %s724 = smul.u32 30, %s30
      %p725 = scmp.lt.s32.totalorder %s29, 1
      %s726 = scalar_select %p725, %s29, 1
      %s727 = smul.addr %s726, 16
      %s728 = smul.addr %s727, 8
      %s729 = scalar_lea.vmem %s3, %s728
      %p730 = scmp.lt.s32.totalorder %s29, 1
      %s731 = scalar_select %p730, %s29, 1
      %s732 = smul.addr %s731, 16
      %s733 = smul.addr %s732, 8
      %s734 = scalar_lea.vmem %s4, %s733
      %p735 = scmp.lt.s32.totalorder %s29, 1
      %s736 = scalar_select %p735, %s29, 1
      %s737 = smul.addr %s736, 16
      %s738 = smul.addr %s737, 8
      %s739 = scalar_lea.vmem %s5, %s738
      %p740 = scmp.lt.s32.totalorder %s29, 1
      %s741 = scalar_select %p740, %s29, 1
      %s742 = scalar_lea.vmem %s6, %s741
      %p743 = scmp.lt.s32.totalorder %s29, 1
      %s744 = scalar_select %p743, %s29, 1
      %s745 = smul.addr %s744, 16
      %s746 = smul.addr %s745, 8
      %s747 = scalar_lea.vmem %s7, %s746
      %p748 = scmp.lt.s32.totalorder %s29, 1
      %s749 = scalar_select %p748, %s29, 1
      %s750 = scalar_lea.vmem %s8, %s749
      %p751 = scmp.lt.s32.totalorder %s29, 1
      %s752 = scalar_select %p751, %s29, 1
      %s753 = smul.addr %s752, 16
      %s754 = smul.addr %s753, 8
      %s755 = scalar_lea.vmem %s9, %s754
      %p756 = scmp.lt.s32.totalorder %s29, 1
      %s757 = scalar_select %p756, %s29, 1
      %s758 = scalar_lea.vmem %s10, %s757
      %p759 = scmp.lt.s32.totalorder %s29, 1
      %s760 = scalar_select %p759, %s29, 1
      %s761 = scalar_lea.vmem %s11, %s760
      %p762 = scmp.lt.s32.totalorder %s29, 1
      %s763 = scalar_select %p762, %s29, 1
      %s764 = scalar_lea.vmem %s12, %s763
      %s765 = smul.u32 30, %s30
      %p766 = scmp.lt.s32.totalorder %s29, 1
      %s767 = scalar_select %p766, %s29, 1
      %p768 = scmp.lt.s32.totalorder %s765, 29
      %s769 = scalar_select %p768, %s765, 29
      %s770 = smul.addr %s767, 30
      %s771 = sadd.s32 %s769, %s770
      %s772 = smul.addr %s771, 8
      %s773 = scalar_lea.vmem %s13, %s772
      %s774 = smul.u32 30, %s30
      %s775 = smul.u32 30, %s30
      %p776 = scmp.lt.s32.totalorder %s29, 1
      %s777 = scalar_select %p776, %s29, 1
      %p778 = scmp.lt.s32.totalorder %s775, 29
      %s779 = scalar_select %p778, %s775, 29
      %s780 = smul.addr %s777, 30
      %s781 = sadd.s32 %s779, %s780
      %s782 = smul.addr %s781, 8
      %s783 = scalar_lea.vmem %s14, %s782
      %s784 = smul.u32 30, %s30
      %v785 = vld [vmem:[%s703] sm:$0xff]
      %v786 = vld [vmem:[%s703 + $0x8] sm:$0xff]
      %v787 = vld [vmem:[%s703 + $0x10] sm:$0xff]
      %v788 = vld [vmem:[%s703 + $0x18] sm:$0xff]
      %v789 = vld [vmem:[%s703 + $0x20] sm:$0xff]
      %v790 = vld [vmem:[%s703 + $0x28] sm:$0xff]
      %v791 = vld [vmem:[%s703 + $0x30] sm:$0xff]
      %v792 = vld [vmem:[%s703 + $0x38] sm:$0xff]
      %v793 = vld [vmem:[%s703 + $0x40] sm:$0xff]
      %v794 = vld [vmem:[%s703 + $0x48] sm:$0xff]
      %v795 = vld [vmem:[%s703 + $0x50] sm:$0xff]
      %v796 = vld [vmem:[%s703 + $0x58] sm:$0xff]
      %v797 = vld [vmem:[%s703 + $0x60] sm:$0xff]
      %v798 = vld [vmem:[%s703 + $0x68] sm:$0xff]
      %v799 = vld [vmem:[%s703 + $0x70] sm:$0xff]
      %v800 = vld [vmem:[%s703 + $0x78] sm:$0xff]
      %v801 = vld [vmem:[%s703 + $0x80] sm:$0xff]
      %v802 = vld [vmem:[%s703 + $0x88] sm:$0xff]
      %v803 = vld [vmem:[%s703 + $0x90] sm:$0xff]
      %v804 = vld [vmem:[%s703 + $0x98] sm:$0xff]
      %v805 = vld [vmem:[%s703 + $0xa0] sm:$0xff]
      %v806 = vld [vmem:[%s703 + $0xa8] sm:$0xff]
      %v807 = vld [vmem:[%s703 + $0xb0] sm:$0xff]
      %v808 = vld [vmem:[%s703 + $0xb8] sm:$0xff]
      %v809 = vld [vmem:[%s703 + $0xc0] sm:$0xff]
      %v810 = vld [vmem:[%s703 + $0xc8] sm:$0xff]
      %v811 = vld [vmem:[%s703 + $0xd0] sm:$0xff]
      %v812 = vld [vmem:[%s703 + $0xd8] sm:$0xff]
      %v813 = vld [vmem:[%s703 + $0xe0] sm:$0xff]
      %v814 = vld [vmem:[%s703 + $0xe8] sm:$0xff]
      %v815 = vld [vmem:[%s729] sm:$0xff]
      %v816 = vld [vmem:[%s729 + $0x8] sm:$0xff]
      %v817 = vld [vmem:[%s729 + $0x10] sm:$0xff]
      %v818 = vld [vmem:[%s729 + $0x18] sm:$0xff]
      %v819 = vld [vmem:[%s729 + $0x20] sm:$0xff]
      %v820 = vld [vmem:[%s729 + $0x28] sm:$0xff]
      %v821 = vld [vmem:[%s729 + $0x30] sm:$0xff]
      %v822 = vld [vmem:[%s729 + $0x38] sm:$0xff]
      %v823 = vld [vmem:[%s729 + $0x40] sm:$0xff]
      %v824 = vld [vmem:[%s729 + $0x48] sm:$0xff]
      %v825 = vld [vmem:[%s729 + $0x50] sm:$0xff]
      %v826 = vld [vmem:[%s729 + $0x58] sm:$0xff]
      %v827 = vld [vmem:[%s729 + $0x60] sm:$0xff]
      %v828 = vld [vmem:[%s729 + $0x68] sm:$0xff]
      %v829 = vld [vmem:[%s729 + $0x70] sm:$0xff]
      %v830 = vld [vmem:[%s729 + $0x78] sm:$0xff]
      %v831 = vpack.c.bf16 %v786, %v785
      %v832 = vpack.c.bf16 %v788, %v787
      %v833 = vpack.c.bf16 %v790, %v789
      %v834 = vpack.c.bf16 %v792, %v791
      %v835 = vpack.c.bf16 %v794, %v793
      %v836 = vpack.c.bf16 %v796, %v795
      %v837 = vpack.c.bf16 %v798, %v797
      %v838 = vpack.c.bf16 %v800, %v799
      %v839 = vpack.c.bf16 %v802, %v801
      %v840 = vpack.c.bf16 %v804, %v803
      %v841 = vpack.c.bf16 %v806, %v805
      %v842 = vpack.c.bf16 %v808, %v807
      %v843 = vpack.c.bf16 %v810, %v809
      %v844 = vpack.c.bf16 %v812, %v811
      %v845 = vpack.c.bf16 %v814, %v813
      %v846 = vpack.c.bf16 %v816, %v815
      %v847 = vpack.c.bf16 %v818, %v817
      %v848 = vpack.c.bf16 %v820, %v819
      %v849 = vpack.c.bf16 %v822, %v821
      %v850 = vpack.c.bf16 %v824, %v823
      %v851 = vpack.c.bf16 %v826, %v825
      %v852 = vpack.c.bf16 %v828, %v827
      %v853 = vpack.c.bf16 %v830, %v829
      %v854 = vld [vmem:[%s713] sm:$0xff]
      %v855 = vld [vmem:[%s713 + $0x8] sm:$0xff]
      %v856 = vld [vmem:[%s713 + $0x10] sm:$0xff]
      %v857 = vld [vmem:[%s713 + $0x18] sm:$0xff]
      %v858 = vld [vmem:[%s713 + $0x20] sm:$0xff]
      %v859 = vld [vmem:[%s713 + $0x28] sm:$0xff]
      %v860 = vld [vmem:[%s713 + $0x30] sm:$0xff]
      %v861 = vld [vmem:[%s713 + $0x38] sm:$0xff]
      %v862 = vld [vmem:[%s713 + $0x40] sm:$0xff]
      %v863 = vld [vmem:[%s713 + $0x48] sm:$0xff]
      %v864 = vld [vmem:[%s713 + $0x50] sm:$0xff]
      %v865 = vld [vmem:[%s713 + $0x58] sm:$0xff]
      %v866 = vld [vmem:[%s713 + $0x60] sm:$0xff]
      %v867 = vld [vmem:[%s713 + $0x68] sm:$0xff]
      %v868 = vld [vmem:[%s713 + $0x70] sm:$0xff]
      %v869 = vld [vmem:[%s713 + $0x78] sm:$0xff]
      %v870 = vld [vmem:[%s713 + $0x80] sm:$0xff]
      %v871 = vld [vmem:[%s713 + $0x88] sm:$0xff]
      %v872 = vld [vmem:[%s713 + $0x90] sm:$0xff]
      %v873 = vld [vmem:[%s713 + $0x98] sm:$0xff]
      %v874 = vld [vmem:[%s713 + $0xa0] sm:$0xff]
      %v875 = vld [vmem:[%s713 + $0xa8] sm:$0xff]
      %v876 = vld [vmem:[%s713 + $0xb0] sm:$0xff]
      %v877 = vld [vmem:[%s713 + $0xb8] sm:$0xff]
      %v878 = vld [vmem:[%s713 + $0xc0] sm:$0xff]
      %v879 = vld [vmem:[%s713 + $0xc8] sm:$0xff]
      %v880 = vld [vmem:[%s713 + $0xd0] sm:$0xff]
      %v881 = vld [vmem:[%s713 + $0xd8] sm:$0xff]
      %v882 = vld [vmem:[%s713 + $0xe0] sm:$0xff]
      %v883 = vld [vmem:[%s713 + $0xe8] sm:$0xff]
      %v884 = vld [vmem:[%s734] sm:$0xff]
      %v885 = vld [vmem:[%s734 + $0x8] sm:$0xff]
      %v886 = vld [vmem:[%s734 + $0x10] sm:$0xff]
      %v887 = vld [vmem:[%s734 + $0x18] sm:$0xff]
      %v888 = vld [vmem:[%s734 + $0x20] sm:$0xff]
      %v889 = vld [vmem:[%s734 + $0x28] sm:$0xff]
      %v890 = vld [vmem:[%s734 + $0x30] sm:$0xff]
      %v891 = vld [vmem:[%s734 + $0x38] sm:$0xff]
      %v892 = vld [vmem:[%s734 + $0x40] sm:$0xff]
      %v893 = vld [vmem:[%s734 + $0x48] sm:$0xff]
      %v894 = vld [vmem:[%s734 + $0x50] sm:$0xff]
      %v895 = vld [vmem:[%s734 + $0x58] sm:$0xff]
      %v896 = vld [vmem:[%s734 + $0x60] sm:$0xff]
      %v897 = vld [vmem:[%s734 + $0x68] sm:$0xff]
      %v898 = vld [vmem:[%s734 + $0x70] sm:$0xff]
      %v899 = vld [vmem:[%s734 + $0x78] sm:$0xff]
      %v900 = vpack.c.bf16 %v855, %v854
      %v901 = vpack.c.bf16 %v857, %v856
      %v902 = vpack.c.bf16 %v859, %v858
      %v903 = vpack.c.bf16 %v861, %v860
      %v904 = vpack.c.bf16 %v863, %v862
      %v905 = vpack.c.bf16 %v865, %v864
      %v906 = vpack.c.bf16 %v867, %v866
      %v907 = vpack.c.bf16 %v869, %v868
      %v908 = vpack.c.bf16 %v871, %v870
      %v909 = vpack.c.bf16 %v873, %v872
      %v910 = vpack.c.bf16 %v875, %v874
      %v911 = vpack.c.bf16 %v877, %v876
      %v912 = vpack.c.bf16 %v879, %v878
      %v913 = vpack.c.bf16 %v881, %v880
      %v914 = vpack.c.bf16 %v883, %v882
      %v915 = vpack.c.bf16 %v885, %v884
      %v916 = vpack.c.bf16 %v887, %v886
      %v917 = vpack.c.bf16 %v889, %v888
      %v918 = vpack.c.bf16 %v891, %v890
      %v919 = vpack.c.bf16 %v893, %v892
      %v920 = vpack.c.bf16 %v895, %v894
      %v921 = vpack.c.bf16 %v897, %v896
      %v922 = vpack.c.bf16 %v899, %v898
      %923 = vmatpush.bf16.msra.mxu0 %v922
      %924 = vmatpush.bf16.msra.mxu0 %v921
      %925 = vmatpush.bf16.msra.mxu0 %v920
      %926 = vmatpush.bf16.msra.mxu0 %v919
      %927 = vmatpush.bf16.msra.mxu0 %v918
      %928 = vmatpush.bf16.msra.mxu0 %v917
      %929 = vmatpush.bf16.msra.mxu0 %v916
      %930 = vmatpush.bf16.msra.mxu0 %v915
      %931 = vmatmul.bf16.gmra.mxu0 %v900
      %v932 = vpop.f32.mrf.mxu0
      %v933 = vadd.f32 0.0, %v932
      %v934 = vpop.f32.mrf.mxu0
      %v935 = vadd.f32 0.0, %v934
      %936 = vmatmul.bf16.gmra.mxu0 %v901
      %v937 = vpop.f32.mrf.mxu0
      %v938 = vadd.f32 0.0, %v937
      %v939 = vpop.f32.mrf.mxu0
      %v940 = vadd.f32 0.0, %v939
      %941 = vmatmul.bf16.gmra.mxu0 %v902
      %v942 = vpop.f32.mrf.mxu0
      %v943 = vadd.f32 0.0, %v942
      %v944 = vpop.f32.mrf.mxu0
      %v945 = vadd.f32 0.0, %v944
      %946 = vmatmul.bf16.gmra.mxu0 %v903
      %v947 = vpop.f32.mrf.mxu0
      %v948 = vadd.f32 0.0, %v947
      %v949 = vpop.f32.mrf.mxu0
      %v950 = vadd.f32 0.0, %v949
      %951 = vmatmul.bf16.gmra.mxu0 %v904
      %v952 = vpop.f32.mrf.mxu0
      %v953 = vadd.f32 0.0, %v952
      %v954 = vpop.f32.mrf.mxu0
      %v955 = vadd.f32 0.0, %v954
      %956 = vmatmul.bf16.gmra.mxu0 %v905
      %v957 = vpop.f32.mrf.mxu0
      %v958 = vadd.f32 0.0, %v957
      %v959 = vpop.f32.mrf.mxu0
      %v960 = vadd.f32 0.0, %v959
      %961 = vmatmul.bf16.gmra.mxu0 %v906
      %v962 = vpop.f32.mrf.mxu0
      %v963 = vadd.f32 0.0, %v962
      %v964 = vpop.f32.mrf.mxu0
      %v965 = vadd.f32 0.0, %v964
      %966 = vmatmul.bf16.gmra.mxu0 %v907
      %v967 = vpop.f32.mrf.mxu0
      %v968 = vadd.f32 0.0, %v967
      %v969 = vpop.f32.mrf.mxu0
      %v970 = vadd.f32 0.0, %v969
      %971 = vmatmul.bf16.gmra.mxu0 %v908
      %v972 = vpop.f32.mrf.mxu0
      %v973 = vadd.f32 0.0, %v972
      %v974 = vpop.f32.mrf.mxu0
      %v975 = vadd.f32 0.0, %v974
      %976 = vmatmul.bf16.gmra.mxu0 %v909
      %v977 = vpop.f32.mrf.mxu0
      %v978 = vadd.f32 0.0, %v977
      %v979 = vpop.f32.mrf.mxu0
      %v980 = vadd.f32 0.0, %v979
      %981 = vmatmul.bf16.gmra.mxu0 %v910
      %v982 = vpop.f32.mrf.mxu0
      %v983 = vadd.f32 0.0, %v982
      %v984 = vpop.f32.mrf.mxu0
      %v985 = vadd.f32 0.0, %v984
      %986 = vmatmul.bf16.gmra.mxu0 %v911
      %v987 = vpop.f32.mrf.mxu0
      %v988 = vadd.f32 0.0, %v987
      %v989 = vpop.f32.mrf.mxu0
      %v990 = vadd.f32 0.0, %v989
      %991 = vmatmul.bf16.gmra.mxu0 %v912
      %v992 = vpop.f32.mrf.mxu0
      %v993 = vadd.f32 0.0, %v992
      %v994 = vpop.f32.mrf.mxu0
      %v995 = vadd.f32 0.0, %v994
      %996 = vmatmul.bf16.gmra.mxu0 %v913
      %v997 = vpop.f32.mrf.mxu0
      %v998 = vadd.f32 0.0, %v997
      %v999 = vpop.f32.mrf.mxu0
      %v1000 = vadd.f32 0.0, %v999
      %1001 = vmatmul.bf16.gmra.mxu0 %v914
      %v1002 = vpop.f32.mrf.mxu0
      %v1003 = vadd.f32 0.0, %v1002
      %v1004 = vpop.f32.mrf.mxu0
      %v1005 = vadd.f32 0.0, %v1004
      %1006 = vdwg.mxu0
      %1007 = vmatpush.bf16.msra.mxu0 %v853
      %1008 = vmatpush.bf16.msra.mxu0 %v852
      %1009 = vmatpush.bf16.msra.mxu0 %v851
      %1010 = vmatpush.bf16.msra.mxu0 %v850
      %1011 = vmatpush.bf16.msra.mxu0 %v849
      %1012 = vmatpush.bf16.msra.mxu0 %v848
      %1013 = vmatpush.bf16.msra.mxu0 %v847
      %1014 = vmatpush.bf16.msra.mxu0 %v846
      %1015 = vmatmul.bf16.gmra.mxu0 %v831
      %v1016 = vpop.f32.mrf.mxu0
      %v1017 = vadd.f32 %v933, %v1016
      %v1018 = vpop.f32.mrf.mxu0
      %v1019 = vadd.f32 %v935, %v1018
      %1020 = vmatmul.bf16.gmra.mxu0 %v832
      %v1021 = vpop.f32.mrf.mxu0
      %v1022 = vadd.f32 %v938, %v1021
      %v1023 = vpop.f32.mrf.mxu0
      %v1024 = vadd.f32 %v940, %v1023
      %1025 = vmatmul.bf16.gmra.mxu0 %v833
      %v1026 = vpop.f32.mrf.mxu0
      %v1027 = vadd.f32 %v943, %v1026
      %v1028 = vpop.f32.mrf.mxu0
      %v1029 = vadd.f32 %v945, %v1028
      %1030 = vmatmul.bf16.gmra.mxu0 %v834
      %v1031 = vpop.f32.mrf.mxu0
      %v1032 = vadd.f32 %v948, %v1031
      %v1033 = vpop.f32.mrf.mxu0
      %v1034 = vadd.f32 %v950, %v1033
      %1035 = vmatmul.bf16.gmra.mxu0 %v835
      %v1036 = vpop.f32.mrf.mxu0
      %v1037 = vadd.f32 %v953, %v1036
      %v1038 = vpop.f32.mrf.mxu0
      %v1039 = vadd.f32 %v955, %v1038
      %1040 = vmatmul.bf16.gmra.mxu0 %v836
      %v1041 = vpop.f32.mrf.mxu0
      %v1042 = vadd.f32 %v958, %v1041
      %v1043 = vpop.f32.mrf.mxu0
      %v1044 = vadd.f32 %v960, %v1043
      %1045 = vmatmul.bf16.gmra.mxu0 %v837
      %v1046 = vpop.f32.mrf.mxu0
      %v1047 = vadd.f32 %v963, %v1046
      %v1048 = vpop.f32.mrf.mxu0
      %v1049 = vadd.f32 %v965, %v1048
      %1050 = vmatmul.bf16.gmra.mxu0 %v838
      %v1051 = vpop.f32.mrf.mxu0
      %v1052 = vadd.f32 %v968, %v1051
      %v1053 = vpop.f32.mrf.mxu0
      %v1054 = vadd.f32 %v970, %v1053
      %1055 = vmatmul.bf16.gmra.mxu0 %v839
      %v1056 = vpop.f32.mrf.mxu0
      %v1057 = vadd.f32 %v973, %v1056
      %v1058 = vpop.f32.mrf.mxu0
      %v1059 = vadd.f32 %v975, %v1058
      %1060 = vmatmul.bf16.gmra.mxu0 %v840
      %v1061 = vpop.f32.mrf.mxu0
      %v1062 = vadd.f32 %v978, %v1061
      %v1063 = vpop.f32.mrf.mxu0
      %v1064 = vadd.f32 %v980, %v1063
      %1065 = vmatmul.bf16.gmra.mxu0 %v841
      %v1066 = vpop.f32.mrf.mxu0
      %v1067 = vadd.f32 %v983, %v1066
      %v1068 = vpop.f32.mrf.mxu0
      %v1069 = vadd.f32 %v985, %v1068
      %1070 = vmatmul.bf16.gmra.mxu0 %v842
      %v1071 = vpop.f32.mrf.mxu0
      %v1072 = vadd.f32 %v988, %v1071
      %v1073 = vpop.f32.mrf.mxu0
      %v1074 = vadd.f32 %v990, %v1073
      %1075 = vmatmul.bf16.gmra.mxu0 %v843
      %v1076 = vpop.f32.mrf.mxu0
      %v1077 = vadd.f32 %v993, %v1076
      %v1078 = vpop.f32.mrf.mxu0
      %v1079 = vadd.f32 %v995, %v1078
      %1080 = vmatmul.bf16.gmra.mxu0 %v844
      %v1081 = vpop.f32.mrf.mxu0
      %v1082 = vadd.f32 %v998, %v1081
      %v1083 = vpop.f32.mrf.mxu0
      %v1084 = vadd.f32 %v1000, %v1083
      %1085 = vmatmul.bf16.gmra.mxu0 %v845
      %v1086 = vpop.f32.mrf.mxu0
      %v1087 = vadd.f32 %v1003, %v1086
      %v1088 = vpop.f32.mrf.mxu0
      %v1089 = vadd.f32 %v1005, %v1088
      %1090 = vdwg.mxu0
      %v1091 = vld [vmem:[%s723] sm:$0xff]
      %v1092 = vld [vmem:[%s723 + $0x8] sm:$0xff]
      %v1093 = vld [vmem:[%s723 + $0x10] sm:$0xff]
      %v1094 = vld [vmem:[%s723 + $0x18] sm:$0xff]
      %v1095 = vld [vmem:[%s723 + $0x20] sm:$0xff]
      %v1096 = vld [vmem:[%s723 + $0x28] sm:$0xff]
      %v1097 = vld [vmem:[%s723 + $0x30] sm:$0xff]
      %v1098 = vld [vmem:[%s723 + $0x38] sm:$0xff]
      %v1099 = vld [vmem:[%s723 + $0x40] sm:$0xff]
      %v1100 = vld [vmem:[%s723 + $0x48] sm:$0xff]
      %v1101 = vld [vmem:[%s723 + $0x50] sm:$0xff]
      %v1102 = vld [vmem:[%s723 + $0x58] sm:$0xff]
      %v1103 = vld [vmem:[%s723 + $0x60] sm:$0xff]
      %v1104 = vld [vmem:[%s723 + $0x68] sm:$0xff]
      %v1105 = vld [vmem:[%s723 + $0x70] sm:$0xff]
      %v1106 = vld [vmem:[%s723 + $0x78] sm:$0xff]
      %v1107 = vld [vmem:[%s723 + $0x80] sm:$0xff]
      %v1108 = vld [vmem:[%s723 + $0x88] sm:$0xff]
      %v1109 = vld [vmem:[%s723 + $0x90] sm:$0xff]
      %v1110 = vld [vmem:[%s723 + $0x98] sm:$0xff]
      %v1111 = vld [vmem:[%s723 + $0xa0] sm:$0xff]
      %v1112 = vld [vmem:[%s723 + $0xa8] sm:$0xff]
      %v1113 = vld [vmem:[%s723 + $0xb0] sm:$0xff]
      %v1114 = vld [vmem:[%s723 + $0xb8] sm:$0xff]
      %v1115 = vld [vmem:[%s723 + $0xc0] sm:$0xff]
      %v1116 = vld [vmem:[%s723 + $0xc8] sm:$0xff]
      %v1117 = vld [vmem:[%s723 + $0xd0] sm:$0xff]
      %v1118 = vld [vmem:[%s723 + $0xd8] sm:$0xff]
      %v1119 = vld [vmem:[%s723 + $0xe0] sm:$0xff]
      %v1120 = vld [vmem:[%s723 + $0xe8] sm:$0xff]
      %v1121 = vld [vmem:[%s739] sm:$0xff]
      %v1122 = vld [vmem:[%s739 + $0x8] sm:$0xff]
      %v1123 = vld [vmem:[%s739 + $0x10] sm:$0xff]
      %v1124 = vld [vmem:[%s739 + $0x18] sm:$0xff]
      %v1125 = vld [vmem:[%s739 + $0x20] sm:$0xff]
      %v1126 = vld [vmem:[%s739 + $0x28] sm:$0xff]
      %v1127 = vld [vmem:[%s739 + $0x30] sm:$0xff]
      %v1128 = vld [vmem:[%s739 + $0x38] sm:$0xff]
      %v1129 = vld [vmem:[%s739 + $0x40] sm:$0xff]
      %v1130 = vld [vmem:[%s739 + $0x48] sm:$0xff]
      %v1131 = vld [vmem:[%s739 + $0x50] sm:$0xff]
      %v1132 = vld [vmem:[%s739 + $0x58] sm:$0xff]
      %v1133 = vld [vmem:[%s739 + $0x60] sm:$0xff]
      %v1134 = vld [vmem:[%s739 + $0x68] sm:$0xff]
      %v1135 = vld [vmem:[%s739 + $0x70] sm:$0xff]
      %v1136 = vld [vmem:[%s739 + $0x78] sm:$0xff]
      %v1137 = vpack.c.bf16 %v1092, %v1091
      %v1138 = vpack.c.bf16 %v1094, %v1093
      %v1139 = vpack.c.bf16 %v1096, %v1095
      %v1140 = vpack.c.bf16 %v1098, %v1097
      %v1141 = vpack.c.bf16 %v1100, %v1099
      %v1142 = vpack.c.bf16 %v1102, %v1101
      %v1143 = vpack.c.bf16 %v1104, %v1103
      %v1144 = vpack.c.bf16 %v1106, %v1105
      %v1145 = vpack.c.bf16 %v1108, %v1107
      %v1146 = vpack.c.bf16 %v1110, %v1109
      %v1147 = vpack.c.bf16 %v1112, %v1111
      %v1148 = vpack.c.bf16 %v1114, %v1113
      %v1149 = vpack.c.bf16 %v1116, %v1115
      %v1150 = vpack.c.bf16 %v1118, %v1117
      %v1151 = vpack.c.bf16 %v1120, %v1119
      %v1152 = vpack.c.bf16 %v1122, %v1121
      %v1153 = vpack.c.bf16 %v1124, %v1123
      %v1154 = vpack.c.bf16 %v1126, %v1125
      %v1155 = vpack.c.bf16 %v1128, %v1127
      %v1156 = vpack.c.bf16 %v1130, %v1129
      %v1157 = vpack.c.bf16 %v1132, %v1131
      %v1158 = vpack.c.bf16 %v1134, %v1133
      %v1159 = vpack.c.bf16 %v1136, %v1135
      %1160 = vmatpush.bf16.msra.mxu0 %v1159
      %1161 = vmatpush.bf16.msra.mxu0 %v1158
      %1162 = vmatpush.bf16.msra.mxu0 %v1157
      %1163 = vmatpush.bf16.msra.mxu0 %v1156
      %1164 = vmatpush.bf16.msra.mxu0 %v1155
      %1165 = vmatpush.bf16.msra.mxu0 %v1154
      %1166 = vmatpush.bf16.msra.mxu0 %v1153
      %1167 = vmatpush.bf16.msra.mxu0 %v1152
      %1168 = vmatmul.bf16.gmra.mxu0 %v1137
      %v1169 = vpop.f32.mrf.mxu0
      %v1170 = vadd.f32 0.0, %v1169
      %v1171 = vpop.f32.mrf.mxu0
      %v1172 = vadd.f32 0.0, %v1171
      %1173 = vmatmul.bf16.gmra.mxu0 %v1138
      %v1174 = vpop.f32.mrf.mxu0
      %v1175 = vadd.f32 0.0, %v1174
      %v1176 = vpop.f32.mrf.mxu0
      %v1177 = vadd.f32 0.0, %v1176
      %1178 = vmatmul.bf16.gmra.mxu0 %v1139
      %v1179 = vpop.f32.mrf.mxu0
      %v1180 = vadd.f32 0.0, %v1179
      %v1181 = vpop.f32.mrf.mxu0
      %v1182 = vadd.f32 0.0, %v1181
      %1183 = vmatmul.bf16.gmra.mxu0 %v1140
      %v1184 = vpop.f32.mrf.mxu0
      %v1185 = vadd.f32 0.0, %v1184
      %v1186 = vpop.f32.mrf.mxu0
      %v1187 = vadd.f32 0.0, %v1186
      %1188 = vmatmul.bf16.gmra.mxu0 %v1141
      %v1189 = vpop.f32.mrf.mxu0
      %v1190 = vadd.f32 0.0, %v1189
      %v1191 = vpop.f32.mrf.mxu0
      %v1192 = vadd.f32 0.0, %v1191
      %1193 = vmatmul.bf16.gmra.mxu0 %v1142
      %v1194 = vpop.f32.mrf.mxu0
      %v1195 = vadd.f32 0.0, %v1194
      %v1196 = vpop.f32.mrf.mxu0
      %v1197 = vadd.f32 0.0, %v1196
      %1198 = vmatmul.bf16.gmra.mxu0 %v1143
      %v1199 = vpop.f32.mrf.mxu0
      %v1200 = vadd.f32 0.0, %v1199
      %v1201 = vpop.f32.mrf.mxu0
      %v1202 = vadd.f32 0.0, %v1201
      %1203 = vmatmul.bf16.gmra.mxu0 %v1144
      %v1204 = vpop.f32.mrf.mxu0
      %v1205 = vadd.f32 0.0, %v1204
      %v1206 = vpop.f32.mrf.mxu0
      %v1207 = vadd.f32 0.0, %v1206
      %1208 = vmatmul.bf16.gmra.mxu0 %v1145
      %v1209 = vpop.f32.mrf.mxu0
      %v1210 = vadd.f32 0.0, %v1209
      %v1211 = vpop.f32.mrf.mxu0
      %v1212 = vadd.f32 0.0, %v1211
      %1213 = vmatmul.bf16.gmra.mxu0 %v1146
      %v1214 = vpop.f32.mrf.mxu0
      %v1215 = vadd.f32 0.0, %v1214
      %v1216 = vpop.f32.mrf.mxu0
      %v1217 = vadd.f32 0.0, %v1216
      %1218 = vmatmul.bf16.gmra.mxu0 %v1147
      %v1219 = vpop.f32.mrf.mxu0
      %v1220 = vadd.f32 0.0, %v1219
      %v1221 = vpop.f32.mrf.mxu0
      %v1222 = vadd.f32 0.0, %v1221
      %1223 = vmatmul.bf16.gmra.mxu0 %v1148
      %v1224 = vpop.f32.mrf.mxu0
      %v1225 = vadd.f32 0.0, %v1224
      %v1226 = vpop.f32.mrf.mxu0
      %v1227 = vadd.f32 0.0, %v1226
      %1228 = vmatmul.bf16.gmra.mxu0 %v1149
      %v1229 = vpop.f32.mrf.mxu0
      %v1230 = vadd.f32 0.0, %v1229
      %v1231 = vpop.f32.mrf.mxu0
      %v1232 = vadd.f32 0.0, %v1231
      %1233 = vmatmul.bf16.gmra.mxu0 %v1150
      %v1234 = vpop.f32.mrf.mxu0
      %v1235 = vadd.f32 0.0, %v1234
      %v1236 = vpop.f32.mrf.mxu0
      %v1237 = vadd.f32 0.0, %v1236
      %1238 = vmatmul.bf16.gmra.mxu0 %v1151
      %v1239 = vpop.f32.mrf.mxu0
      %v1240 = vadd.f32 0.0, %v1239
      %v1241 = vpop.f32.mrf.mxu0
      %v1242 = vadd.f32 0.0, %v1241
      %1243 = vdwg.mxu0
      %v1244 = vadd.f32 %v1017, %v1170
      %v1245 = vadd.f32 %v1019, %v1172
      %v1246 = vadd.f32 %v1022, %v1175
      %v1247 = vadd.f32 %v1024, %v1177
      %v1248 = vadd.f32 %v1027, %v1180
      %v1249 = vadd.f32 %v1029, %v1182
      %v1250 = vadd.f32 %v1032, %v1185
      %v1251 = vadd.f32 %v1034, %v1187
      %v1252 = vadd.f32 %v1037, %v1190
      %v1253 = vadd.f32 %v1039, %v1192
      %v1254 = vadd.f32 %v1042, %v1195
      %v1255 = vadd.f32 %v1044, %v1197
      %v1256 = vadd.f32 %v1047, %v1200
      %v1257 = vadd.f32 %v1049, %v1202
      %v1258 = vadd.f32 %v1052, %v1205
      %v1259 = vadd.f32 %v1054, %v1207
      %v1260 = vadd.f32 %v1057, %v1210
      %v1261 = vadd.f32 %v1059, %v1212
      %v1262 = vadd.f32 %v1062, %v1215
      %v1263 = vadd.f32 %v1064, %v1217
      %v1264 = vadd.f32 %v1067, %v1220
      %v1265 = vadd.f32 %v1069, %v1222
      %v1266 = vadd.f32 %v1072, %v1225
      %v1267 = vadd.f32 %v1074, %v1227
      %v1268 = vadd.f32 %v1077, %v1230
      %v1269 = vadd.f32 %v1079, %v1232
      %v1270 = vadd.f32 %v1082, %v1235
      %v1271 = vadd.f32 %v1084, %v1237
      %v1272 = vadd.f32 %v1087, %v1240
      %v1273 = vadd.f32 %v1089, %v1242
      %v1274 = vld [vmem:[%s742] sm:$0x1]
      %v1276 = vperm.slane %v1274, 0
      %v1278 = vadd.f32 %v1244, %v1276
      %v1279 = vadd.f32 %v1245, %v1276
      %v1280 = vadd.f32 %v1246, %v1276
      %v1281 = vadd.f32 %v1247, %v1276
      %v1282 = vadd.f32 %v1248, %v1276
      %v1283 = vadd.f32 %v1249, %v1276
      %v1284 = vadd.f32 %v1250, %v1276
      %v1285 = vadd.f32 %v1251, %v1276
      %v1286 = vadd.f32 %v1252, %v1276
      %v1287 = vadd.f32 %v1253, %v1276
      %v1288 = vadd.f32 %v1254, %v1276
      %v1289 = vadd.f32 %v1255, %v1276
      %v1290 = vadd.f32 %v1256, %v1276
      %v1291 = vadd.f32 %v1257, %v1276
      %v1292 = vadd.f32 %v1258, %v1276
      %v1293 = vadd.f32 %v1259, %v1276
      %v1294 = vadd.f32 %v1260, %v1276
      %v1295 = vadd.f32 %v1261, %v1276
      %v1296 = vadd.f32 %v1262, %v1276
      %v1297 = vadd.f32 %v1263, %v1276
      %v1298 = vadd.f32 %v1264, %v1276
      %v1299 = vadd.f32 %v1265, %v1276
      %v1300 = vadd.f32 %v1266, %v1276
      %v1301 = vadd.f32 %v1267, %v1276
      %v1302 = vadd.f32 %v1268, %v1276
      %v1303 = vadd.f32 %v1269, %v1276
      %v1304 = vadd.f32 %v1270, %v1276
      %v1305 = vadd.f32 %v1271, %v1276
      %v1306 = vadd.f32 %v1272, %v1276
      %v1307 = vadd.f32 %v1273, %v1276
      %v1308 = vmax.f32 %v1278, 0.0
      %v1309 = vmax.f32 %v1279, 0.0
      %v1310 = vmax.f32 %v1280, 0.0
      %v1311 = vmax.f32 %v1281, 0.0
      %v1312 = vmax.f32 %v1282, 0.0
      %v1313 = vmax.f32 %v1283, 0.0
      %v1314 = vmax.f32 %v1284, 0.0
      %v1315 = vmax.f32 %v1285, 0.0
      %v1316 = vmax.f32 %v1286, 0.0
      %v1317 = vmax.f32 %v1287, 0.0
      %v1318 = vmax.f32 %v1288, 0.0
      %v1319 = vmax.f32 %v1289, 0.0
      %v1320 = vmax.f32 %v1290, 0.0
      %v1321 = vmax.f32 %v1291, 0.0
      %v1322 = vmax.f32 %v1292, 0.0
      %v1323 = vmax.f32 %v1293, 0.0
      %v1324 = vmax.f32 %v1294, 0.0
      %v1325 = vmax.f32 %v1295, 0.0
      %v1326 = vmax.f32 %v1296, 0.0
      %v1327 = vmax.f32 %v1297, 0.0
      %v1328 = vmax.f32 %v1298, 0.0
      %v1329 = vmax.f32 %v1299, 0.0
      %v1330 = vmax.f32 %v1300, 0.0
      %v1331 = vmax.f32 %v1301, 0.0
      %v1332 = vmax.f32 %v1302, 0.0
      %v1333 = vmax.f32 %v1303, 0.0
      %v1334 = vmax.f32 %v1304, 0.0
      %v1335 = vmax.f32 %v1305, 0.0
      %v1336 = vmax.f32 %v1306, 0.0
      %v1337 = vmax.f32 %v1307, 0.0
      %v1338 = vld [vmem:[%s747] sm:$0xff]
      %v1339 = vld [vmem:[%s747 + $0x8] sm:$0xff]
      %v1340 = vld [vmem:[%s747 + $0x10] sm:$0xff]
      %v1341 = vld [vmem:[%s747 + $0x18] sm:$0xff]
      %v1342 = vld [vmem:[%s747 + $0x20] sm:$0xff]
      %v1343 = vld [vmem:[%s747 + $0x28] sm:$0xff]
      %v1344 = vld [vmem:[%s747 + $0x30] sm:$0xff]
      %v1345 = vld [vmem:[%s747 + $0x38] sm:$0xff]
      %v1346 = vld [vmem:[%s747 + $0x40] sm:$0xff]
      %v1347 = vld [vmem:[%s747 + $0x48] sm:$0xff]
      %v1348 = vld [vmem:[%s747 + $0x50] sm:$0xff]
      %v1349 = vld [vmem:[%s747 + $0x58] sm:$0xff]
      %v1350 = vld [vmem:[%s747 + $0x60] sm:$0xff]
      %v1351 = vld [vmem:[%s747 + $0x68] sm:$0xff]
      %v1352 = vld [vmem:[%s747 + $0x70] sm:$0xff]
      %v1353 = vld [vmem:[%s747 + $0x78] sm:$0xff]
      %v1354 = vpack.c.bf16 %v1309, %v1308
      %v1355 = vpack.c.bf16 %v1311, %v1310
      %v1356 = vpack.c.bf16 %v1313, %v1312
      %v1357 = vpack.c.bf16 %v1315, %v1314
      %v1358 = vpack.c.bf16 %v1317, %v1316
      %v1359 = vpack.c.bf16 %v1319, %v1318
      %v1360 = vpack.c.bf16 %v1321, %v1320
      %v1361 = vpack.c.bf16 %v1323, %v1322
      %v1362 = vpack.c.bf16 %v1325, %v1324
      %v1363 = vpack.c.bf16 %v1327, %v1326
      %v1364 = vpack.c.bf16 %v1329, %v1328
      %v1365 = vpack.c.bf16 %v1331, %v1330
      %v1366 = vpack.c.bf16 %v1333, %v1332
      %v1367 = vpack.c.bf16 %v1335, %v1334
      %v1368 = vpack.c.bf16 %v1337, %v1336
      %v1369 = vpack.c.bf16 %v1339, %v1338
      %v1370 = vpack.c.bf16 %v1341, %v1340
      %v1371 = vpack.c.bf16 %v1343, %v1342
      %v1372 = vpack.c.bf16 %v1345, %v1344
      %v1373 = vpack.c.bf16 %v1347, %v1346
      %v1374 = vpack.c.bf16 %v1349, %v1348
      %v1375 = vpack.c.bf16 %v1351, %v1350
      %v1376 = vpack.c.bf16 %v1353, %v1352
      %v1377 = vld [vmem:[%s750] sm:$0x1]
      %v1379 = vperm.slane %v1377, 0
      %1381 = vmatpush.bf16.msra.mxu0 %v1376
      %1382 = vmatpush.bf16.msra.mxu0 %v1375
      %1383 = vmatpush.bf16.msra.mxu0 %v1374
      %1384 = vmatpush.bf16.msra.mxu0 %v1373
      %1385 = vmatpush.bf16.msra.mxu0 %v1372
      %1386 = vmatpush.bf16.msra.mxu0 %v1371
      %1387 = vmatpush.bf16.msra.mxu0 %v1370
      %1388 = vmatpush.bf16.msra.mxu0 %v1369
      %1389 = vmatmul.bf16.gmra.mxu0 %v1354
      %v1390 = vpop.f32.mrf.mxu0
      %v1391 = vadd.f32 %v1379, %v1390
      %v1392 = vpop.f32.mrf.mxu0
      %v1393 = vadd.f32 %v1379, %v1392
      %1394 = vmatmul.bf16.gmra.mxu0 %v1355
      %v1395 = vpop.f32.mrf.mxu0
      %v1396 = vadd.f32 %v1379, %v1395
      %v1397 = vpop.f32.mrf.mxu0
      %v1398 = vadd.f32 %v1379, %v1397
      %1399 = vmatmul.bf16.gmra.mxu0 %v1356
      %v1400 = vpop.f32.mrf.mxu0
      %v1401 = vadd.f32 %v1379, %v1400
      %v1402 = vpop.f32.mrf.mxu0
      %v1403 = vadd.f32 %v1379, %v1402
      %1404 = vmatmul.bf16.gmra.mxu0 %v1357
      %v1405 = vpop.f32.mrf.mxu0
      %v1406 = vadd.f32 %v1379, %v1405
      %v1407 = vpop.f32.mrf.mxu0
      %v1408 = vadd.f32 %v1379, %v1407
      %1409 = vmatmul.bf16.gmra.mxu0 %v1358
      %v1410 = vpop.f32.mrf.mxu0
      %v1411 = vadd.f32 %v1379, %v1410
      %v1412 = vpop.f32.mrf.mxu0
      %v1413 = vadd.f32 %v1379, %v1412
      %1414 = vmatmul.bf16.gmra.mxu0 %v1359
      %v1415 = vpop.f32.mrf.mxu0
      %v1416 = vadd.f32 %v1379, %v1415
      %v1417 = vpop.f32.mrf.mxu0
      %v1418 = vadd.f32 %v1379, %v1417
      %1419 = vmatmul.bf16.gmra.mxu0 %v1360
      %v1420 = vpop.f32.mrf.mxu0
      %v1421 = vadd.f32 %v1379, %v1420
      %v1422 = vpop.f32.mrf.mxu0
      %v1423 = vadd.f32 %v1379, %v1422
      %1424 = vmatmul.bf16.gmra.mxu0 %v1361
      %v1425 = vpop.f32.mrf.mxu0
      %v1426 = vadd.f32 %v1379, %v1425
      %v1427 = vpop.f32.mrf.mxu0
      %v1428 = vadd.f32 %v1379, %v1427
      %1429 = vmatmul.bf16.gmra.mxu0 %v1362
      %v1430 = vpop.f32.mrf.mxu0
      %v1431 = vadd.f32 %v1379, %v1430
      %v1432 = vpop.f32.mrf.mxu0
      %v1433 = vadd.f32 %v1379, %v1432
      %1434 = vmatmul.bf16.gmra.mxu0 %v1363
      %v1435 = vpop.f32.mrf.mxu0
      %v1436 = vadd.f32 %v1379, %v1435
      %v1437 = vpop.f32.mrf.mxu0
      %v1438 = vadd.f32 %v1379, %v1437
      %1439 = vmatmul.bf16.gmra.mxu0 %v1364
      %v1440 = vpop.f32.mrf.mxu0
      %v1441 = vadd.f32 %v1379, %v1440
      %v1442 = vpop.f32.mrf.mxu0
      %v1443 = vadd.f32 %v1379, %v1442
      %1444 = vmatmul.bf16.gmra.mxu0 %v1365
      %v1445 = vpop.f32.mrf.mxu0
      %v1446 = vadd.f32 %v1379, %v1445
      %v1447 = vpop.f32.mrf.mxu0
      %v1448 = vadd.f32 %v1379, %v1447
      %1449 = vmatmul.bf16.gmra.mxu0 %v1366
      %v1450 = vpop.f32.mrf.mxu0
      %v1451 = vadd.f32 %v1379, %v1450
      %v1452 = vpop.f32.mrf.mxu0
      %v1453 = vadd.f32 %v1379, %v1452
      %1454 = vmatmul.bf16.gmra.mxu0 %v1367
      %v1455 = vpop.f32.mrf.mxu0
      %v1456 = vadd.f32 %v1379, %v1455
      %v1457 = vpop.f32.mrf.mxu0
      %v1458 = vadd.f32 %v1379, %v1457
      %1459 = vmatmul.bf16.gmra.mxu0 %v1368
      %v1460 = vpop.f32.mrf.mxu0
      %v1461 = vadd.f32 %v1379, %v1460
      %v1462 = vpop.f32.mrf.mxu0
      %v1463 = vadd.f32 %v1379, %v1462
      %1464 = vdwg.mxu0
      %v1465 = vmax.f32 %v1391, 0.0
      %v1466 = vmax.f32 %v1393, 0.0
      %v1467 = vmax.f32 %v1396, 0.0
      %v1468 = vmax.f32 %v1398, 0.0
      %v1469 = vmax.f32 %v1401, 0.0
      %v1470 = vmax.f32 %v1403, 0.0
      %v1471 = vmax.f32 %v1406, 0.0
      %v1472 = vmax.f32 %v1408, 0.0
      %v1473 = vmax.f32 %v1411, 0.0
      %v1474 = vmax.f32 %v1413, 0.0
      %v1475 = vmax.f32 %v1416, 0.0
      %v1476 = vmax.f32 %v1418, 0.0
      %v1477 = vmax.f32 %v1421, 0.0
      %v1478 = vmax.f32 %v1423, 0.0
      %v1479 = vmax.f32 %v1426, 0.0
      %v1480 = vmax.f32 %v1428, 0.0
      %v1481 = vmax.f32 %v1431, 0.0
      %v1482 = vmax.f32 %v1433, 0.0
      %v1483 = vmax.f32 %v1436, 0.0
      %v1484 = vmax.f32 %v1438, 0.0
      %v1485 = vmax.f32 %v1441, 0.0
      %v1486 = vmax.f32 %v1443, 0.0
      %v1487 = vmax.f32 %v1446, 0.0
      %v1488 = vmax.f32 %v1448, 0.0
      %v1489 = vmax.f32 %v1451, 0.0
      %v1490 = vmax.f32 %v1453, 0.0
      %v1491 = vmax.f32 %v1456, 0.0
      %v1492 = vmax.f32 %v1458, 0.0
      %v1493 = vmax.f32 %v1461, 0.0
      %v1494 = vmax.f32 %v1463, 0.0
      %v1495 = vld [vmem:[%s755] sm:$0xff]
      %v1496 = vld [vmem:[%s755 + $0x8] sm:$0xff]
      %v1497 = vld [vmem:[%s755 + $0x10] sm:$0xff]
      %v1498 = vld [vmem:[%s755 + $0x18] sm:$0xff]
      %v1499 = vld [vmem:[%s755 + $0x20] sm:$0xff]
      %v1500 = vld [vmem:[%s755 + $0x28] sm:$0xff]
      %v1501 = vld [vmem:[%s755 + $0x30] sm:$0xff]
      %v1502 = vld [vmem:[%s755 + $0x38] sm:$0xff]
      %v1503 = vld [vmem:[%s755 + $0x40] sm:$0xff]
      %v1504 = vld [vmem:[%s755 + $0x48] sm:$0xff]
      %v1505 = vld [vmem:[%s755 + $0x50] sm:$0xff]
      %v1506 = vld [vmem:[%s755 + $0x58] sm:$0xff]
      %v1507 = vld [vmem:[%s755 + $0x60] sm:$0xff]
      %v1508 = vld [vmem:[%s755 + $0x68] sm:$0xff]
      %v1509 = vld [vmem:[%s755 + $0x70] sm:$0xff]
      %v1510 = vld [vmem:[%s755 + $0x78] sm:$0xff]
      %v1511 = vpack.c.bf16 %v1466, %v1465
      %v1512 = vpack.c.bf16 %v1468, %v1467
      %v1513 = vpack.c.bf16 %v1470, %v1469
      %v1514 = vpack.c.bf16 %v1472, %v1471
      %v1515 = vpack.c.bf16 %v1474, %v1473
      %v1516 = vpack.c.bf16 %v1476, %v1475
      %v1517 = vpack.c.bf16 %v1478, %v1477
      %v1518 = vpack.c.bf16 %v1480, %v1479
      %v1519 = vpack.c.bf16 %v1482, %v1481
      %v1520 = vpack.c.bf16 %v1484, %v1483
      %v1521 = vpack.c.bf16 %v1486, %v1485
      %v1522 = vpack.c.bf16 %v1488, %v1487
      %v1523 = vpack.c.bf16 %v1490, %v1489
      %v1524 = vpack.c.bf16 %v1492, %v1491
      %v1525 = vpack.c.bf16 %v1494, %v1493
      %v1526 = vpack.c.bf16 %v1496, %v1495
      %v1527 = vpack.c.bf16 %v1498, %v1497
      %v1528 = vpack.c.bf16 %v1500, %v1499
      %v1529 = vpack.c.bf16 %v1502, %v1501
      %v1530 = vpack.c.bf16 %v1504, %v1503
      %v1531 = vpack.c.bf16 %v1506, %v1505
      %v1532 = vpack.c.bf16 %v1508, %v1507
      %v1533 = vpack.c.bf16 %v1510, %v1509
      %v1534 = vld [vmem:[%s758] sm:$0x1]
      %v1536 = vperm.slane %v1534, 0
      %1538 = vmatpush.bf16.msra.mxu0 %v1533
      %1539 = vmatpush.bf16.msra.mxu0 %v1532
      %1540 = vmatpush.bf16.msra.mxu0 %v1531
      %1541 = vmatpush.bf16.msra.mxu0 %v1530
      %1542 = vmatpush.bf16.msra.mxu0 %v1529
      %1543 = vmatpush.bf16.msra.mxu0 %v1528
      %1544 = vmatpush.bf16.msra.mxu0 %v1527
      %1545 = vmatpush.bf16.msra.mxu0 %v1526
      %1546 = vmatmul.bf16.gmra.mxu0 %v1511
      %v1547 = vpop.f32.mrf.mxu0
      %v1548 = vadd.f32 %v1536, %v1547
      %v1549 = vpop.f32.mrf.mxu0
      %v1550 = vadd.f32 %v1536, %v1549
      %1551 = vmatmul.bf16.gmra.mxu0 %v1512
      %v1552 = vpop.f32.mrf.mxu0
      %v1553 = vadd.f32 %v1536, %v1552
      %v1554 = vpop.f32.mrf.mxu0
      %v1555 = vadd.f32 %v1536, %v1554
      %1556 = vmatmul.bf16.gmra.mxu0 %v1513
      %v1557 = vpop.f32.mrf.mxu0
      %v1558 = vadd.f32 %v1536, %v1557
      %v1559 = vpop.f32.mrf.mxu0
      %v1560 = vadd.f32 %v1536, %v1559
      %1561 = vmatmul.bf16.gmra.mxu0 %v1514
      %v1562 = vpop.f32.mrf.mxu0
      %v1563 = vadd.f32 %v1536, %v1562
      %v1564 = vpop.f32.mrf.mxu0
      %v1565 = vadd.f32 %v1536, %v1564
      %1566 = vmatmul.bf16.gmra.mxu0 %v1515
      %v1567 = vpop.f32.mrf.mxu0
      %v1568 = vadd.f32 %v1536, %v1567
      %v1569 = vpop.f32.mrf.mxu0
      %v1570 = vadd.f32 %v1536, %v1569
      %1571 = vmatmul.bf16.gmra.mxu0 %v1516
      %v1572 = vpop.f32.mrf.mxu0
      %v1573 = vadd.f32 %v1536, %v1572
      %v1574 = vpop.f32.mrf.mxu0
      %v1575 = vadd.f32 %v1536, %v1574
      %1576 = vmatmul.bf16.gmra.mxu0 %v1517
      %v1577 = vpop.f32.mrf.mxu0
      %v1578 = vadd.f32 %v1536, %v1577
      %v1579 = vpop.f32.mrf.mxu0
      %v1580 = vadd.f32 %v1536, %v1579
      %1581 = vmatmul.bf16.gmra.mxu0 %v1518
      %v1582 = vpop.f32.mrf.mxu0
      %v1583 = vadd.f32 %v1536, %v1582
      %v1584 = vpop.f32.mrf.mxu0
      %v1585 = vadd.f32 %v1536, %v1584
      %1586 = vmatmul.bf16.gmra.mxu0 %v1519
      %v1587 = vpop.f32.mrf.mxu0
      %v1588 = vadd.f32 %v1536, %v1587
      %v1589 = vpop.f32.mrf.mxu0
      %v1590 = vadd.f32 %v1536, %v1589
      %1591 = vmatmul.bf16.gmra.mxu0 %v1520
      %v1592 = vpop.f32.mrf.mxu0
      %v1593 = vadd.f32 %v1536, %v1592
      %v1594 = vpop.f32.mrf.mxu0
      %v1595 = vadd.f32 %v1536, %v1594
      %1596 = vmatmul.bf16.gmra.mxu0 %v1521
      %v1597 = vpop.f32.mrf.mxu0
      %v1598 = vadd.f32 %v1536, %v1597
      %v1599 = vpop.f32.mrf.mxu0
      %v1600 = vadd.f32 %v1536, %v1599
      %1601 = vmatmul.bf16.gmra.mxu0 %v1522
      %v1602 = vpop.f32.mrf.mxu0
      %v1603 = vadd.f32 %v1536, %v1602
      %v1604 = vpop.f32.mrf.mxu0
      %v1605 = vadd.f32 %v1536, %v1604
      %1606 = vmatmul.bf16.gmra.mxu0 %v1523
      %v1607 = vpop.f32.mrf.mxu0
      %v1608 = vadd.f32 %v1536, %v1607
      %v1609 = vpop.f32.mrf.mxu0
      %v1610 = vadd.f32 %v1536, %v1609
      %1611 = vmatmul.bf16.gmra.mxu0 %v1524
      %v1612 = vpop.f32.mrf.mxu0
      %v1613 = vadd.f32 %v1536, %v1612
      %v1614 = vpop.f32.mrf.mxu0
      %v1615 = vadd.f32 %v1536, %v1614
      %1616 = vmatmul.bf16.gmra.mxu0 %v1525
      %v1617 = vpop.f32.mrf.mxu0
      %v1618 = vadd.f32 %v1536, %v1617
      %v1619 = vpop.f32.mrf.mxu0
      %v1620 = vadd.f32 %v1536, %v1619
      %1621 = vdwg.mxu0
      %1622 = vadd.xlane.f32.xlu0 %v1548
      %v1623 = vpop.xlane.xlu0 %1622
      %1624 = vadd.xlane.f32.xlu0 %v1550
      %v1625 = vpop.xlane.xlu0 %1624
      %1626 = vadd.xlane.f32.xlu0 %v1553
      %v1627 = vpop.xlane.xlu0 %1626
      %1628 = vadd.xlane.f32.xlu0 %v1555
      %v1629 = vpop.xlane.xlu0 %1628
      %1630 = vadd.xlane.f32.xlu0 %v1558
      %v1631 = vpop.xlane.xlu0 %1630
      %1632 = vadd.xlane.f32.xlu0 %v1560
      %v1633 = vpop.xlane.xlu0 %1632
      %1634 = vadd.xlane.f32.xlu0 %v1563
      %v1635 = vpop.xlane.xlu0 %1634
      %1636 = vadd.xlane.f32.xlu0 %v1565
      %v1637 = vpop.xlane.xlu0 %1636
      %1638 = vadd.xlane.f32.xlu0 %v1568
      %v1639 = vpop.xlane.xlu0 %1638
      %1640 = vadd.xlane.f32.xlu0 %v1570
      %v1641 = vpop.xlane.xlu0 %1640
      %1642 = vadd.xlane.f32.xlu0 %v1573
      %v1643 = vpop.xlane.xlu0 %1642
      %1644 = vadd.xlane.f32.xlu0 %v1575
      %v1645 = vpop.xlane.xlu0 %1644
      %1646 = vadd.xlane.f32.xlu0 %v1578
      %v1647 = vpop.xlane.xlu0 %1646
      %1648 = vadd.xlane.f32.xlu0 %v1580
      %v1649 = vpop.xlane.xlu0 %1648
      %1650 = vadd.xlane.f32.xlu0 %v1583
      %v1651 = vpop.xlane.xlu0 %1650
      %1652 = vadd.xlane.f32.xlu0 %v1585
      %v1653 = vpop.xlane.xlu0 %1652
      %1654 = vadd.xlane.f32.xlu0 %v1588
      %v1655 = vpop.xlane.xlu0 %1654
      %1656 = vadd.xlane.f32.xlu0 %v1590
      %v1657 = vpop.xlane.xlu0 %1656
      %1658 = vadd.xlane.f32.xlu0 %v1593
      %v1659 = vpop.xlane.xlu0 %1658
      %1660 = vadd.xlane.f32.xlu0 %v1595
      %v1661 = vpop.xlane.xlu0 %1660
      %1662 = vadd.xlane.f32.xlu0 %v1598
      %v1663 = vpop.xlane.xlu0 %1662
      %1664 = vadd.xlane.f32.xlu0 %v1600
      %v1665 = vpop.xlane.xlu0 %1664
      %1666 = vadd.xlane.f32.xlu0 %v1603
      %v1667 = vpop.xlane.xlu0 %1666
      %1668 = vadd.xlane.f32.xlu0 %v1605
      %v1669 = vpop.xlane.xlu0 %1668
      %1670 = vadd.xlane.f32.xlu0 %v1608
      %v1671 = vpop.xlane.xlu0 %1670
      %1672 = vadd.xlane.f32.xlu0 %v1610
      %v1673 = vpop.xlane.xlu0 %1672
      %1674 = vadd.xlane.f32.xlu0 %v1613
      %v1675 = vpop.xlane.xlu0 %1674
      %1676 = vadd.xlane.f32.xlu0 %v1615
      %v1677 = vpop.xlane.xlu0 %1676
      %1678 = vadd.xlane.f32.xlu0 %v1618
      %v1679 = vpop.xlane.xlu0 %1678
      %1680 = vadd.xlane.f32.xlu0 %v1620
      %v1681 = vpop.xlane.xlu0 %1680
      %v1682 = vrcp.pop 128.0
      %v1683 = vmul.f32 128.0, %v1682
      %v1684 = vsub.f32 1.0, %v1683
      %v1685 = vmul.f32 %v1682, %v1684
      %v1686 = vadd.f32 %v1682, %v1685
      %vm1687 = vweird.f32 %v1682
      %v1688 = vsel %vm1687, %v1682, %v1686
      %v1689 = vmul.f32 %v1623, %v1688
      %v1690 = vmul.f32 %v1625, %v1688
      %v1691 = vmul.f32 %v1627, %v1688
      %v1692 = vmul.f32 %v1629, %v1688
      %v1693 = vmul.f32 %v1631, %v1688
      %v1694 = vmul.f32 %v1633, %v1688
      %v1695 = vmul.f32 %v1635, %v1688
      %v1696 = vmul.f32 %v1637, %v1688
      %v1697 = vmul.f32 %v1639, %v1688
      %v1698 = vmul.f32 %v1641, %v1688
      %v1699 = vmul.f32 %v1643, %v1688
      %v1700 = vmul.f32 %v1645, %v1688
      %v1701 = vmul.f32 %v1647, %v1688
      %v1702 = vmul.f32 %v1649, %v1688
      %v1703 = vmul.f32 %v1651, %v1688
      %v1704 = vmul.f32 %v1653, %v1688
      %v1705 = vmul.f32 %v1655, %v1688
      %v1706 = vmul.f32 %v1657, %v1688
      %v1707 = vmul.f32 %v1659, %v1688
      %v1708 = vmul.f32 %v1661, %v1688
      %v1709 = vmul.f32 %v1663, %v1688
      %v1710 = vmul.f32 %v1665, %v1688
      %v1711 = vmul.f32 %v1667, %v1688
      %v1712 = vmul.f32 %v1669, %v1688
      %v1713 = vmul.f32 %v1671, %v1688
      %v1714 = vmul.f32 %v1673, %v1688
      %v1715 = vmul.f32 %v1675, %v1688
      %v1716 = vmul.f32 %v1677, %v1688
      %v1717 = vmul.f32 %v1679, %v1688
      %v1718 = vmul.f32 %v1681, %v1688
      %v1719 = vsub.f32 %v1548, %v1689
      %v1720 = vsub.f32 %v1550, %v1690
      %v1721 = vsub.f32 %v1553, %v1691
      %v1722 = vsub.f32 %v1555, %v1692
      %v1723 = vsub.f32 %v1558, %v1693
      %v1724 = vsub.f32 %v1560, %v1694
      %v1725 = vsub.f32 %v1563, %v1695
      %v1726 = vsub.f32 %v1565, %v1696
      %v1727 = vsub.f32 %v1568, %v1697
      %v1728 = vsub.f32 %v1570, %v1698
      %v1729 = vsub.f32 %v1573, %v1699
      %v1730 = vsub.f32 %v1575, %v1700
      %v1731 = vsub.f32 %v1578, %v1701
      %v1732 = vsub.f32 %v1580, %v1702
      %v1733 = vsub.f32 %v1583, %v1703
      %v1734 = vsub.f32 %v1585, %v1704
      %v1735 = vsub.f32 %v1588, %v1705
      %v1736 = vsub.f32 %v1590, %v1706
      %v1737 = vsub.f32 %v1593, %v1707
      %v1738 = vsub.f32 %v1595, %v1708
      %v1739 = vsub.f32 %v1598, %v1709
      %v1740 = vsub.f32 %v1600, %v1710
      %v1741 = vsub.f32 %v1603, %v1711
      %v1742 = vsub.f32 %v1605, %v1712
      %v1743 = vsub.f32 %v1608, %v1713
      %v1744 = vsub.f32 %v1610, %v1714
      %v1745 = vsub.f32 %v1613, %v1715
      %v1746 = vsub.f32 %v1615, %v1716
      %v1747 = vsub.f32 %v1618, %v1717
      %v1748 = vsub.f32 %v1620, %v1718
      %v1749 = vmul.f32 %v1719, %v1719
      %v1750 = vmul.f32 %v1720, %v1720
      %v1751 = vmul.f32 %v1721, %v1721
      %v1752 = vmul.f32 %v1722, %v1722
      %v1753 = vmul.f32 %v1723, %v1723
      %v1754 = vmul.f32 %v1724, %v1724
      %v1755 = vmul.f32 %v1725, %v1725
      %v1756 = vmul.f32 %v1726, %v1726
      %v1757 = vmul.f32 %v1727, %v1727
      %v1758 = vmul.f32 %v1728, %v1728
      %v1759 = vmul.f32 %v1729, %v1729
      %v1760 = vmul.f32 %v1730, %v1730
      %v1761 = vmul.f32 %v1731, %v1731
      %v1762 = vmul.f32 %v1732, %v1732
      %v1763 = vmul.f32 %v1733, %v1733
      %v1764 = vmul.f32 %v1734, %v1734
      %v1765 = vmul.f32 %v1735, %v1735
      %v1766 = vmul.f32 %v1736, %v1736
      %v1767 = vmul.f32 %v1737, %v1737
      %v1768 = vmul.f32 %v1738, %v1738
      %v1769 = vmul.f32 %v1739, %v1739
      %v1770 = vmul.f32 %v1740, %v1740
      %v1771 = vmul.f32 %v1741, %v1741
      %v1772 = vmul.f32 %v1742, %v1742
      %v1773 = vmul.f32 %v1743, %v1743
      %v1774 = vmul.f32 %v1744, %v1744
      %v1775 = vmul.f32 %v1745, %v1745
      %v1776 = vmul.f32 %v1746, %v1746
      %v1777 = vmul.f32 %v1747, %v1747
      %v1778 = vmul.f32 %v1748, %v1748
      %1779 = vadd.xlane.f32.xlu0 %v1749
      %v1780 = vpop.xlane.xlu0 %1779
      %1781 = vadd.xlane.f32.xlu0 %v1750
      %v1782 = vpop.xlane.xlu0 %1781
      %1783 = vadd.xlane.f32.xlu0 %v1751
      %v1784 = vpop.xlane.xlu0 %1783
      %1785 = vadd.xlane.f32.xlu0 %v1752
      %v1786 = vpop.xlane.xlu0 %1785
      %1787 = vadd.xlane.f32.xlu0 %v1753
      %v1788 = vpop.xlane.xlu0 %1787
      %1789 = vadd.xlane.f32.xlu0 %v1754
      %v1790 = vpop.xlane.xlu0 %1789
      %1791 = vadd.xlane.f32.xlu0 %v1755
      %v1792 = vpop.xlane.xlu0 %1791
      %1793 = vadd.xlane.f32.xlu0 %v1756
      %v1794 = vpop.xlane.xlu0 %1793
      %1795 = vadd.xlane.f32.xlu0 %v1757
      %v1796 = vpop.xlane.xlu0 %1795
      %1797 = vadd.xlane.f32.xlu0 %v1758
      %v1798 = vpop.xlane.xlu0 %1797
      %1799 = vadd.xlane.f32.xlu0 %v1759
      %v1800 = vpop.xlane.xlu0 %1799
      %1801 = vadd.xlane.f32.xlu0 %v1760
      %v1802 = vpop.xlane.xlu0 %1801
      %1803 = vadd.xlane.f32.xlu0 %v1761
      %v1804 = vpop.xlane.xlu0 %1803
      %1805 = vadd.xlane.f32.xlu0 %v1762
      %v1806 = vpop.xlane.xlu0 %1805
      %1807 = vadd.xlane.f32.xlu0 %v1763
      %v1808 = vpop.xlane.xlu0 %1807
      %1809 = vadd.xlane.f32.xlu0 %v1764
      %v1810 = vpop.xlane.xlu0 %1809
      %1811 = vadd.xlane.f32.xlu0 %v1765
      %v1812 = vpop.xlane.xlu0 %1811
      %1813 = vadd.xlane.f32.xlu0 %v1766
      %v1814 = vpop.xlane.xlu0 %1813
      %1815 = vadd.xlane.f32.xlu0 %v1767
      %v1816 = vpop.xlane.xlu0 %1815
      %1817 = vadd.xlane.f32.xlu0 %v1768
      %v1818 = vpop.xlane.xlu0 %1817
      %1819 = vadd.xlane.f32.xlu0 %v1769
      %v1820 = vpop.xlane.xlu0 %1819
      %1821 = vadd.xlane.f32.xlu0 %v1770
      %v1822 = vpop.xlane.xlu0 %1821
      %1823 = vadd.xlane.f32.xlu0 %v1771
      %v1824 = vpop.xlane.xlu0 %1823
      %1825 = vadd.xlane.f32.xlu0 %v1772
      %v1826 = vpop.xlane.xlu0 %1825
      %1827 = vadd.xlane.f32.xlu0 %v1773
      %v1828 = vpop.xlane.xlu0 %1827
      %1829 = vadd.xlane.f32.xlu0 %v1774
      %v1830 = vpop.xlane.xlu0 %1829
      %1831 = vadd.xlane.f32.xlu0 %v1775
      %v1832 = vpop.xlane.xlu0 %1831
      %1833 = vadd.xlane.f32.xlu0 %v1776
      %v1834 = vpop.xlane.xlu0 %1833
      %1835 = vadd.xlane.f32.xlu0 %v1777
      %v1836 = vpop.xlane.xlu0 %1835
      %1837 = vadd.xlane.f32.xlu0 %v1778
      %v1838 = vpop.xlane.xlu0 %1837
      %v1839 = vmul.f32 %v1780, %v1688
      %v1840 = vmul.f32 %v1782, %v1688
      %v1841 = vmul.f32 %v1784, %v1688
      %v1842 = vmul.f32 %v1786, %v1688
      %v1843 = vmul.f32 %v1788, %v1688
      %v1844 = vmul.f32 %v1790, %v1688
      %v1845 = vmul.f32 %v1792, %v1688
      %v1846 = vmul.f32 %v1794, %v1688
      %v1847 = vmul.f32 %v1796, %v1688
      %v1848 = vmul.f32 %v1798, %v1688
      %v1849 = vmul.f32 %v1800, %v1688
      %v1850 = vmul.f32 %v1802, %v1688
      %v1851 = vmul.f32 %v1804, %v1688
      %v1852 = vmul.f32 %v1806, %v1688
      %v1853 = vmul.f32 %v1808, %v1688
      %v1854 = vmul.f32 %v1810, %v1688
      %v1855 = vmul.f32 %v1812, %v1688
      %v1856 = vmul.f32 %v1814, %v1688
      %v1857 = vmul.f32 %v1816, %v1688
      %v1858 = vmul.f32 %v1818, %v1688
      %v1859 = vmul.f32 %v1820, %v1688
      %v1860 = vmul.f32 %v1822, %v1688
      %v1861 = vmul.f32 %v1824, %v1688
      %v1862 = vmul.f32 %v1826, %v1688
      %v1863 = vmul.f32 %v1828, %v1688
      %v1864 = vmul.f32 %v1830, %v1688
      %v1865 = vmul.f32 %v1832, %v1688
      %v1866 = vmul.f32 %v1834, %v1688
      %v1867 = vmul.f32 %v1836, %v1688
      %v1868 = vmul.f32 %v1838, %v1688
      %v1869 = vadd.f32 %v1839, 1e-05
      %v1870 = vadd.f32 %v1840, 1e-05
      %v1871 = vadd.f32 %v1841, 1e-05
      %v1872 = vadd.f32 %v1842, 1e-05
      %v1873 = vadd.f32 %v1843, 1e-05
      %v1874 = vadd.f32 %v1844, 1e-05
      %v1875 = vadd.f32 %v1845, 1e-05
      %v1876 = vadd.f32 %v1846, 1e-05
      %v1877 = vadd.f32 %v1847, 1e-05
      %v1878 = vadd.f32 %v1848, 1e-05
      %v1879 = vadd.f32 %v1849, 1e-05
      %v1880 = vadd.f32 %v1850, 1e-05
      %v1881 = vadd.f32 %v1851, 1e-05
      %v1882 = vadd.f32 %v1852, 1e-05
      %v1883 = vadd.f32 %v1853, 1e-05
      %v1884 = vadd.f32 %v1854, 1e-05
      %v1885 = vadd.f32 %v1855, 1e-05
      %v1886 = vadd.f32 %v1856, 1e-05
      %v1887 = vadd.f32 %v1857, 1e-05
      %v1888 = vadd.f32 %v1858, 1e-05
      %v1889 = vadd.f32 %v1859, 1e-05
      %v1890 = vadd.f32 %v1860, 1e-05
      %v1891 = vadd.f32 %v1861, 1e-05
      %v1892 = vadd.f32 %v1862, 1e-05
      %v1893 = vadd.f32 %v1863, 1e-05
      %v1894 = vadd.f32 %v1864, 1e-05
      %v1895 = vadd.f32 %v1865, 1e-05
      %v1896 = vadd.f32 %v1866, 1e-05
      %v1897 = vadd.f32 %v1867, 1e-05
      %v1898 = vadd.f32 %v1868, 1e-05
      %v1899 = vrsqrt.pop %v1869
      %v1900 = vmul.f32 %v1899, %v1869
      %v1901 = vmul.f32 %v1900, %v1899
      %v1902 = vmul.f32 0.5, %v1901
      %v1903 = vsub.f32 1.5, %v1902
      %v1904 = vmul.f32 %v1899, %v1903
      %vm1905 = vweird.f32 %v1869
      %vm1906 = vweird.f32 %v1899
      %vm1907 = vmor %vm1905, %vm1906
      %v1908 = vsel %vm1907, %v1899, %v1904
      %v1909 = vrsqrt.pop %v1870
      %v1910 = vmul.f32 %v1909, %v1870
      %v1911 = vmul.f32 %v1910, %v1909
      %v1912 = vmul.f32 0.5, %v1911
      %v1913 = vsub.f32 1.5, %v1912
      %v1914 = vmul.f32 %v1909, %v1913
      %vm1915 = vweird.f32 %v1870
      %vm1916 = vweird.f32 %v1909
      %vm1917 = vmor %vm1915, %vm1916
      %v1918 = vsel %vm1917, %v1909, %v1914
      %v1919 = vrsqrt.pop %v1871
      %v1920 = vmul.f32 %v1919, %v1871
      %v1921 = vmul.f32 %v1920, %v1919
      %v1922 = vmul.f32 0.5, %v1921
      %v1923 = vsub.f32 1.5, %v1922
      %v1924 = vmul.f32 %v1919, %v1923
      %vm1925 = vweird.f32 %v1871
      %vm1926 = vweird.f32 %v1919
      %vm1927 = vmor %vm1925, %vm1926
      %v1928 = vsel %vm1927, %v1919, %v1924
      %v1929 = vrsqrt.pop %v1872
      %v1930 = vmul.f32 %v1929, %v1872
      %v1931 = vmul.f32 %v1930, %v1929
      %v1932 = vmul.f32 0.5, %v1931
      %v1933 = vsub.f32 1.5, %v1932
      %v1934 = vmul.f32 %v1929, %v1933
      %vm1935 = vweird.f32 %v1872
      %vm1936 = vweird.f32 %v1929
      %vm1937 = vmor %vm1935, %vm1936
      %v1938 = vsel %vm1937, %v1929, %v1934
      %v1939 = vrsqrt.pop %v1873
      %v1940 = vmul.f32 %v1939, %v1873
      %v1941 = vmul.f32 %v1940, %v1939
      %v1942 = vmul.f32 0.5, %v1941
      %v1943 = vsub.f32 1.5, %v1942
      %v1944 = vmul.f32 %v1939, %v1943
      %vm1945 = vweird.f32 %v1873
      %vm1946 = vweird.f32 %v1939
      %vm1947 = vmor %vm1945, %vm1946
      %v1948 = vsel %vm1947, %v1939, %v1944
      %v1949 = vrsqrt.pop %v1874
      %v1950 = vmul.f32 %v1949, %v1874
      %v1951 = vmul.f32 %v1950, %v1949
      %v1952 = vmul.f32 0.5, %v1951
      %v1953 = vsub.f32 1.5, %v1952
      %v1954 = vmul.f32 %v1949, %v1953
      %vm1955 = vweird.f32 %v1874
      %vm1956 = vweird.f32 %v1949
      %vm1957 = vmor %vm1955, %vm1956
      %v1958 = vsel %vm1957, %v1949, %v1954
      %v1959 = vrsqrt.pop %v1875
      %v1960 = vmul.f32 %v1959, %v1875
      %v1961 = vmul.f32 %v1960, %v1959
      %v1962 = vmul.f32 0.5, %v1961
      %v1963 = vsub.f32 1.5, %v1962
      %v1964 = vmul.f32 %v1959, %v1963
      %vm1965 = vweird.f32 %v1875
      %vm1966 = vweird.f32 %v1959
      %vm1967 = vmor %vm1965, %vm1966
      %v1968 = vsel %vm1967, %v1959, %v1964
      %v1969 = vrsqrt.pop %v1876
      %v1970 = vmul.f32 %v1969, %v1876
      %v1971 = vmul.f32 %v1970, %v1969
      %v1972 = vmul.f32 0.5, %v1971
      %v1973 = vsub.f32 1.5, %v1972
      %v1974 = vmul.f32 %v1969, %v1973
      %vm1975 = vweird.f32 %v1876
      %vm1976 = vweird.f32 %v1969
      %vm1977 = vmor %vm1975, %vm1976
      %v1978 = vsel %vm1977, %v1969, %v1974
      %v1979 = vrsqrt.pop %v1877
      %v1980 = vmul.f32 %v1979, %v1877
      %v1981 = vmul.f32 %v1980, %v1979
      %v1982 = vmul.f32 0.5, %v1981
      %v1983 = vsub.f32 1.5, %v1982
      %v1984 = vmul.f32 %v1979, %v1983
      %vm1985 = vweird.f32 %v1877
      %vm1986 = vweird.f32 %v1979
      %vm1987 = vmor %vm1985, %vm1986
      %v1988 = vsel %vm1987, %v1979, %v1984
      %v1989 = vrsqrt.pop %v1878
      %v1990 = vmul.f32 %v1989, %v1878
      %v1991 = vmul.f32 %v1990, %v1989
      %v1992 = vmul.f32 0.5, %v1991
      %v1993 = vsub.f32 1.5, %v1992
      %v1994 = vmul.f32 %v1989, %v1993
      %vm1995 = vweird.f32 %v1878
      %vm1996 = vweird.f32 %v1989
      %vm1997 = vmor %vm1995, %vm1996
      %v1998 = vsel %vm1997, %v1989, %v1994
      %v1999 = vrsqrt.pop %v1879
      %v2000 = vmul.f32 %v1999, %v1879
      %v2001 = vmul.f32 %v2000, %v1999
      %v2002 = vmul.f32 0.5, %v2001
      %v2003 = vsub.f32 1.5, %v2002
      %v2004 = vmul.f32 %v1999, %v2003
      %vm2005 = vweird.f32 %v1879
      %vm2006 = vweird.f32 %v1999
      %vm2007 = vmor %vm2005, %vm2006
      %v2008 = vsel %vm2007, %v1999, %v2004
      %v2009 = vrsqrt.pop %v1880
      %v2010 = vmul.f32 %v2009, %v1880
      %v2011 = vmul.f32 %v2010, %v2009
      %v2012 = vmul.f32 0.5, %v2011
      %v2013 = vsub.f32 1.5, %v2012
      %v2014 = vmul.f32 %v2009, %v2013
      %vm2015 = vweird.f32 %v1880
      %vm2016 = vweird.f32 %v2009
      %vm2017 = vmor %vm2015, %vm2016
      %v2018 = vsel %vm2017, %v2009, %v2014
      %v2019 = vrsqrt.pop %v1881
      %v2020 = vmul.f32 %v2019, %v1881
      %v2021 = vmul.f32 %v2020, %v2019
      %v2022 = vmul.f32 0.5, %v2021
      %v2023 = vsub.f32 1.5, %v2022
      %v2024 = vmul.f32 %v2019, %v2023
      %vm2025 = vweird.f32 %v1881
      %vm2026 = vweird.f32 %v2019
      %vm2027 = vmor %vm2025, %vm2026
      %v2028 = vsel %vm2027, %v2019, %v2024
      %v2029 = vrsqrt.pop %v1882
      %v2030 = vmul.f32 %v2029, %v1882
      %v2031 = vmul.f32 %v2030, %v2029
      %v2032 = vmul.f32 0.5, %v2031
      %v2033 = vsub.f32 1.5, %v2032
      %v2034 = vmul.f32 %v2029, %v2033
      %vm2035 = vweird.f32 %v1882
      %vm2036 = vweird.f32 %v2029
      %vm2037 = vmor %vm2035, %vm2036
      %v2038 = vsel %vm2037, %v2029, %v2034
      %v2039 = vrsqrt.pop %v1883
      %v2040 = vmul.f32 %v2039, %v1883
      %v2041 = vmul.f32 %v2040, %v2039
      %v2042 = vmul.f32 0.5, %v2041
      %v2043 = vsub.f32 1.5, %v2042
      %v2044 = vmul.f32 %v2039, %v2043
      %vm2045 = vweird.f32 %v1883
      %vm2046 = vweird.f32 %v2039
      %vm2047 = vmor %vm2045, %vm2046
      %v2048 = vsel %vm2047, %v2039, %v2044
      %v2049 = vrsqrt.pop %v1884
      %v2050 = vmul.f32 %v2049, %v1884
      %v2051 = vmul.f32 %v2050, %v2049
      %v2052 = vmul.f32 0.5, %v2051
      %v2053 = vsub.f32 1.5, %v2052
      %v2054 = vmul.f32 %v2049, %v2053
      %vm2055 = vweird.f32 %v1884
      %vm2056 = vweird.f32 %v2049
      %vm2057 = vmor %vm2055, %vm2056
      %v2058 = vsel %vm2057, %v2049, %v2054
      %v2059 = vrsqrt.pop %v1885
      %v2060 = vmul.f32 %v2059, %v1885
      %v2061 = vmul.f32 %v2060, %v2059
      %v2062 = vmul.f32 0.5, %v2061
      %v2063 = vsub.f32 1.5, %v2062
      %v2064 = vmul.f32 %v2059, %v2063
      %vm2065 = vweird.f32 %v1885
      %vm2066 = vweird.f32 %v2059
      %vm2067 = vmor %vm2065, %vm2066
      %v2068 = vsel %vm2067, %v2059, %v2064
      %v2069 = vrsqrt.pop %v1886
      %v2070 = vmul.f32 %v2069, %v1886
      %v2071 = vmul.f32 %v2070, %v2069
      %v2072 = vmul.f32 0.5, %v2071
      %v2073 = vsub.f32 1.5, %v2072
      %v2074 = vmul.f32 %v2069, %v2073
      %vm2075 = vweird.f32 %v1886
      %vm2076 = vweird.f32 %v2069
      %vm2077 = vmor %vm2075, %vm2076
      %v2078 = vsel %vm2077, %v2069, %v2074
      %v2079 = vrsqrt.pop %v1887
      %v2080 = vmul.f32 %v2079, %v1887
      %v2081 = vmul.f32 %v2080, %v2079
      %v2082 = vmul.f32 0.5, %v2081
      %v2083 = vsub.f32 1.5, %v2082
      %v2084 = vmul.f32 %v2079, %v2083
      %vm2085 = vweird.f32 %v1887
      %vm2086 = vweird.f32 %v2079
      %vm2087 = vmor %vm2085, %vm2086
      %v2088 = vsel %vm2087, %v2079, %v2084
      %v2089 = vrsqrt.pop %v1888
      %v2090 = vmul.f32 %v2089, %v1888
      %v2091 = vmul.f32 %v2090, %v2089
      %v2092 = vmul.f32 0.5, %v2091
      %v2093 = vsub.f32 1.5, %v2092
      %v2094 = vmul.f32 %v2089, %v2093
      %vm2095 = vweird.f32 %v1888
      %vm2096 = vweird.f32 %v2089
      %vm2097 = vmor %vm2095, %vm2096
      %v2098 = vsel %vm2097, %v2089, %v2094
      %v2099 = vrsqrt.pop %v1889
      %v2100 = vmul.f32 %v2099, %v1889
      %v2101 = vmul.f32 %v2100, %v2099
      %v2102 = vmul.f32 0.5, %v2101
      %v2103 = vsub.f32 1.5, %v2102
      %v2104 = vmul.f32 %v2099, %v2103
      %vm2105 = vweird.f32 %v1889
      %vm2106 = vweird.f32 %v2099
      %vm2107 = vmor %vm2105, %vm2106
      %v2108 = vsel %vm2107, %v2099, %v2104
      %v2109 = vrsqrt.pop %v1890
      %v2110 = vmul.f32 %v2109, %v1890
      %v2111 = vmul.f32 %v2110, %v2109
      %v2112 = vmul.f32 0.5, %v2111
      %v2113 = vsub.f32 1.5, %v2112
      %v2114 = vmul.f32 %v2109, %v2113
      %vm2115 = vweird.f32 %v1890
      %vm2116 = vweird.f32 %v2109
      %vm2117 = vmor %vm2115, %vm2116
      %v2118 = vsel %vm2117, %v2109, %v2114
      %v2119 = vrsqrt.pop %v1891
      %v2120 = vmul.f32 %v2119, %v1891
      %v2121 = vmul.f32 %v2120, %v2119
      %v2122 = vmul.f32 0.5, %v2121
      %v2123 = vsub.f32 1.5, %v2122
      %v2124 = vmul.f32 %v2119, %v2123
      %vm2125 = vweird.f32 %v1891
      %vm2126 = vweird.f32 %v2119
      %vm2127 = vmor %vm2125, %vm2126
      %v2128 = vsel %vm2127, %v2119, %v2124
      %v2129 = vrsqrt.pop %v1892
      %v2130 = vmul.f32 %v2129, %v1892
      %v2131 = vmul.f32 %v2130, %v2129
      %v2132 = vmul.f32 0.5, %v2131
      %v2133 = vsub.f32 1.5, %v2132
      %v2134 = vmul.f32 %v2129, %v2133
      %vm2135 = vweird.f32 %v1892
      %vm2136 = vweird.f32 %v2129
      %vm2137 = vmor %vm2135, %vm2136
      %v2138 = vsel %vm2137, %v2129, %v2134
      %v2139 = vrsqrt.pop %v1893
      %v2140 = vmul.f32 %v2139, %v1893
      %v2141 = vmul.f32 %v2140, %v2139
      %v2142 = vmul.f32 0.5, %v2141
      %v2143 = vsub.f32 1.5, %v2142
      %v2144 = vmul.f32 %v2139, %v2143
      %vm2145 = vweird.f32 %v1893
      %vm2146 = vweird.f32 %v2139
      %vm2147 = vmor %vm2145, %vm2146
      %v2148 = vsel %vm2147, %v2139, %v2144
      %v2149 = vrsqrt.pop %v1894
      %v2150 = vmul.f32 %v2149, %v1894
      %v2151 = vmul.f32 %v2150, %v2149
      %v2152 = vmul.f32 0.5, %v2151
      %v2153 = vsub.f32 1.5, %v2152
      %v2154 = vmul.f32 %v2149, %v2153
      %vm2155 = vweird.f32 %v1894
      %vm2156 = vweird.f32 %v2149
      %vm2157 = vmor %vm2155, %vm2156
      %v2158 = vsel %vm2157, %v2149, %v2154
      %v2159 = vrsqrt.pop %v1895
      %v2160 = vmul.f32 %v2159, %v1895
      %v2161 = vmul.f32 %v2160, %v2159
      %v2162 = vmul.f32 0.5, %v2161
      %v2163 = vsub.f32 1.5, %v2162
      %v2164 = vmul.f32 %v2159, %v2163
      %vm2165 = vweird.f32 %v1895
      %vm2166 = vweird.f32 %v2159
      %vm2167 = vmor %vm2165, %vm2166
      %v2168 = vsel %vm2167, %v2159, %v2164
      %v2169 = vrsqrt.pop %v1896
      %v2170 = vmul.f32 %v2169, %v1896
      %v2171 = vmul.f32 %v2170, %v2169
      %v2172 = vmul.f32 0.5, %v2171
      %v2173 = vsub.f32 1.5, %v2172
      %v2174 = vmul.f32 %v2169, %v2173
      %vm2175 = vweird.f32 %v1896
      %vm2176 = vweird.f32 %v2169
      %vm2177 = vmor %vm2175, %vm2176
      %v2178 = vsel %vm2177, %v2169, %v2174
      %v2179 = vrsqrt.pop %v1897
      %v2180 = vmul.f32 %v2179, %v1897
      %v2181 = vmul.f32 %v2180, %v2179
      %v2182 = vmul.f32 0.5, %v2181
      %v2183 = vsub.f32 1.5, %v2182
      %v2184 = vmul.f32 %v2179, %v2183
      %vm2185 = vweird.f32 %v1897
      %vm2186 = vweird.f32 %v2179
      %vm2187 = vmor %vm2185, %vm2186
      %v2188 = vsel %vm2187, %v2179, %v2184
      %v2189 = vrsqrt.pop %v1898
      %v2190 = vmul.f32 %v2189, %v1898
      %v2191 = vmul.f32 %v2190, %v2189
      %v2192 = vmul.f32 0.5, %v2191
      %v2193 = vsub.f32 1.5, %v2192
      %v2194 = vmul.f32 %v2189, %v2193
      %vm2195 = vweird.f32 %v1898
      %vm2196 = vweird.f32 %v2189
      %vm2197 = vmor %vm2195, %vm2196
      %v2198 = vsel %vm2197, %v2189, %v2194
      %v2199 = vmul.f32 %v1719, %v1908
      %v2200 = vmul.f32 %v1720, %v1918
      %v2201 = vmul.f32 %v1721, %v1928
      %v2202 = vmul.f32 %v1722, %v1938
      %v2203 = vmul.f32 %v1723, %v1948
      %v2204 = vmul.f32 %v1724, %v1958
      %v2205 = vmul.f32 %v1725, %v1968
      %v2206 = vmul.f32 %v1726, %v1978
      %v2207 = vmul.f32 %v1727, %v1988
      %v2208 = vmul.f32 %v1728, %v1998
      %v2209 = vmul.f32 %v1729, %v2008
      %v2210 = vmul.f32 %v1730, %v2018
      %v2211 = vmul.f32 %v1731, %v2028
      %v2212 = vmul.f32 %v1732, %v2038
      %v2213 = vmul.f32 %v1733, %v2048
      %v2214 = vmul.f32 %v1734, %v2058
      %v2215 = vmul.f32 %v1735, %v2068
      %v2216 = vmul.f32 %v1736, %v2078
      %v2217 = vmul.f32 %v1737, %v2088
      %v2218 = vmul.f32 %v1738, %v2098
      %v2219 = vmul.f32 %v1739, %v2108
      %v2220 = vmul.f32 %v1740, %v2118
      %v2221 = vmul.f32 %v1741, %v2128
      %v2222 = vmul.f32 %v1742, %v2138
      %v2223 = vmul.f32 %v1743, %v2148
      %v2224 = vmul.f32 %v1744, %v2158
      %v2225 = vmul.f32 %v1745, %v2168
      %v2226 = vmul.f32 %v1746, %v2178
      %v2227 = vmul.f32 %v1747, %v2188
      %v2228 = vmul.f32 %v1748, %v2198
      %v2229 = vld [vmem:[%s761] sm:$0x1]
      %v2231 = vperm.slane %v2229, 0
      %v2233 = vmul.f32 %v2199, %v2231
      %v2234 = vmul.f32 %v2200, %v2231
      %v2235 = vmul.f32 %v2201, %v2231
      %v2236 = vmul.f32 %v2202, %v2231
      %v2237 = vmul.f32 %v2203, %v2231
      %v2238 = vmul.f32 %v2204, %v2231
      %v2239 = vmul.f32 %v2205, %v2231
      %v2240 = vmul.f32 %v2206, %v2231
      %v2241 = vmul.f32 %v2207, %v2231
      %v2242 = vmul.f32 %v2208, %v2231
      %v2243 = vmul.f32 %v2209, %v2231
      %v2244 = vmul.f32 %v2210, %v2231
      %v2245 = vmul.f32 %v2211, %v2231
      %v2246 = vmul.f32 %v2212, %v2231
      %v2247 = vmul.f32 %v2213, %v2231
      %v2248 = vmul.f32 %v2214, %v2231
      %v2249 = vmul.f32 %v2215, %v2231
      %v2250 = vmul.f32 %v2216, %v2231
      %v2251 = vmul.f32 %v2217, %v2231
      %v2252 = vmul.f32 %v2218, %v2231
      %v2253 = vmul.f32 %v2219, %v2231
      %v2254 = vmul.f32 %v2220, %v2231
      %v2255 = vmul.f32 %v2221, %v2231
      %v2256 = vmul.f32 %v2222, %v2231
      %v2257 = vmul.f32 %v2223, %v2231
      %v2258 = vmul.f32 %v2224, %v2231
      %v2259 = vmul.f32 %v2225, %v2231
      %v2260 = vmul.f32 %v2226, %v2231
      %v2261 = vmul.f32 %v2227, %v2231
      %v2262 = vmul.f32 %v2228, %v2231
      %v2263 = vld [vmem:[%s764] sm:$0x1]
      %v2265 = vperm.slane %v2263, 0
      %v2267 = vadd.f32 %v2233, %v2265
      %v2268 = vadd.f32 %v2234, %v2265
      %v2269 = vadd.f32 %v2235, %v2265
      %v2270 = vadd.f32 %v2236, %v2265
      %v2271 = vadd.f32 %v2237, %v2265
      %v2272 = vadd.f32 %v2238, %v2265
      %v2273 = vadd.f32 %v2239, %v2265
      %v2274 = vadd.f32 %v2240, %v2265
      %v2275 = vadd.f32 %v2241, %v2265
      %v2276 = vadd.f32 %v2242, %v2265
      %v2277 = vadd.f32 %v2243, %v2265
      %v2278 = vadd.f32 %v2244, %v2265
      %v2279 = vadd.f32 %v2245, %v2265
      %v2280 = vadd.f32 %v2246, %v2265
      %v2281 = vadd.f32 %v2247, %v2265
      %v2282 = vadd.f32 %v2248, %v2265
      %v2283 = vadd.f32 %v2249, %v2265
      %v2284 = vadd.f32 %v2250, %v2265
      %v2285 = vadd.f32 %v2251, %v2265
      %v2286 = vadd.f32 %v2252, %v2265
      %v2287 = vadd.f32 %v2253, %v2265
      %v2288 = vadd.f32 %v2254, %v2265
      %v2289 = vadd.f32 %v2255, %v2265
      %v2290 = vadd.f32 %v2256, %v2265
      %v2291 = vadd.f32 %v2257, %v2265
      %v2292 = vadd.f32 %v2258, %v2265
      %v2293 = vadd.f32 %v2259, %v2265
      %v2294 = vadd.f32 %v2260, %v2265
      %v2295 = vadd.f32 %v2261, %v2265
      %v2296 = vadd.f32 %v2262, %v2265
      %v2297 = vld [vmem:[%s773] sm:$0xff]
      %v2298 = vld [vmem:[%s773 + $0x8] sm:$0xff]
      %v2299 = vld [vmem:[%s773 + $0x10] sm:$0xff]
      %v2300 = vld [vmem:[%s773 + $0x18] sm:$0xff]
      %v2301 = vld [vmem:[%s773 + $0x20] sm:$0xff]
      %v2302 = vld [vmem:[%s773 + $0x28] sm:$0xff]
      %v2303 = vld [vmem:[%s773 + $0x30] sm:$0xff]
      %v2304 = vld [vmem:[%s773 + $0x38] sm:$0xff]
      %v2305 = vld [vmem:[%s773 + $0x40] sm:$0xff]
      %v2306 = vld [vmem:[%s773 + $0x48] sm:$0xff]
      %v2307 = vld [vmem:[%s773 + $0x50] sm:$0xff]
      %v2308 = vld [vmem:[%s773 + $0x58] sm:$0xff]
      %v2309 = vld [vmem:[%s773 + $0x60] sm:$0xff]
      %v2310 = vld [vmem:[%s773 + $0x68] sm:$0xff]
      %v2311 = vld [vmem:[%s773 + $0x70] sm:$0xff]
      %v2312 = vld [vmem:[%s773 + $0x78] sm:$0xff]
      %v2313 = vld [vmem:[%s773 + $0x80] sm:$0xff]
      %v2314 = vld [vmem:[%s773 + $0x88] sm:$0xff]
      %v2315 = vld [vmem:[%s773 + $0x90] sm:$0xff]
      %v2316 = vld [vmem:[%s773 + $0x98] sm:$0xff]
      %v2317 = vld [vmem:[%s773 + $0xa0] sm:$0xff]
      %v2318 = vld [vmem:[%s773 + $0xa8] sm:$0xff]
      %v2319 = vld [vmem:[%s773 + $0xb0] sm:$0xff]
      %v2320 = vld [vmem:[%s773 + $0xb8] sm:$0xff]
      %v2321 = vld [vmem:[%s773 + $0xc0] sm:$0xff]
      %v2322 = vld [vmem:[%s773 + $0xc8] sm:$0xff]
      %v2323 = vld [vmem:[%s773 + $0xd0] sm:$0xff]
      %v2324 = vld [vmem:[%s773 + $0xd8] sm:$0xff]
      %v2325 = vld [vmem:[%s773 + $0xe0] sm:$0xff]
      %v2326 = vld [vmem:[%s773 + $0xe8] sm:$0xff]
      %v2327 = vadd.f32 %v2267, %v2297
      %v2328 = vadd.f32 %v2268, %v2298
      %v2329 = vadd.f32 %v2269, %v2299
      %v2330 = vadd.f32 %v2270, %v2300
      %v2331 = vadd.f32 %v2271, %v2301
      %v2332 = vadd.f32 %v2272, %v2302
      %v2333 = vadd.f32 %v2273, %v2303
      %v2334 = vadd.f32 %v2274, %v2304
      %v2335 = vadd.f32 %v2275, %v2305
      %v2336 = vadd.f32 %v2276, %v2306
      %v2337 = vadd.f32 %v2277, %v2307
      %v2338 = vadd.f32 %v2278, %v2308
      %v2339 = vadd.f32 %v2279, %v2309
      %v2340 = vadd.f32 %v2280, %v2310
      %v2341 = vadd.f32 %v2281, %v2311
      %v2342 = vadd.f32 %v2282, %v2312
      %v2343 = vadd.f32 %v2283, %v2313
      %v2344 = vadd.f32 %v2284, %v2314
      %v2345 = vadd.f32 %v2285, %v2315
      %v2346 = vadd.f32 %v2286, %v2316
      %v2347 = vadd.f32 %v2287, %v2317
      %v2348 = vadd.f32 %v2288, %v2318
      %v2349 = vadd.f32 %v2289, %v2319
      %v2350 = vadd.f32 %v2290, %v2320
      %v2351 = vadd.f32 %v2291, %v2321
      %v2352 = vadd.f32 %v2292, %v2322
      %v2353 = vadd.f32 %v2293, %v2323
      %v2354 = vadd.f32 %v2294, %v2324
      %v2355 = vadd.f32 %v2295, %v2325
      %v2356 = vadd.f32 %v2296, %v2326
      %2357 = vst [vmem:[%s783] sm:$0xff] %v2327
      %2358 = vst [vmem:[%s783 + $0x8] sm:$0xff] %v2328
      %2359 = vst [vmem:[%s783 + $0x10] sm:$0xff] %v2329
      %2360 = vst [vmem:[%s783 + $0x18] sm:$0xff] %v2330
      %2361 = vst [vmem:[%s783 + $0x20] sm:$0xff] %v2331
      %2362 = vst [vmem:[%s783 + $0x28] sm:$0xff] %v2332
      %2363 = vst [vmem:[%s783 + $0x30] sm:$0xff] %v2333
      %2364 = vst [vmem:[%s783 + $0x38] sm:$0xff] %v2334
      %2365 = vst [vmem:[%s783 + $0x40] sm:$0xff] %v2335
      %2366 = vst [vmem:[%s783 + $0x48] sm:$0xff] %v2336
      %2367 = vst [vmem:[%s783 + $0x50] sm:$0xff] %v2337
      %2368 = vst [vmem:[%s783 + $0x58] sm:$0xff] %v2338
      %2369 = vst [vmem:[%s783 + $0x60] sm:$0xff] %v2339
      %2370 = vst [vmem:[%s783 + $0x68] sm:$0xff] %v2340
      %2371 = vst [vmem:[%s783 + $0x70] sm:$0xff] %v2341
      %2372 = vst [vmem:[%s783 + $0x78] sm:$0xff] %v2342
      %2373 = vst [vmem:[%s783 + $0x80] sm:$0xff] %v2343
      %2374 = vst [vmem:[%s783 + $0x88] sm:$0xff] %v2344
      %2375 = vst [vmem:[%s783 + $0x90] sm:$0xff] %v2345
      %2376 = vst [vmem:[%s783 + $0x98] sm:$0xff] %v2346
      %2377 = vst [vmem:[%s783 + $0xa0] sm:$0xff] %v2347
      %2378 = vst [vmem:[%s783 + $0xa8] sm:$0xff] %v2348
      %2379 = vst [vmem:[%s783 + $0xb0] sm:$0xff] %v2349
      %2380 = vst [vmem:[%s783 + $0xb8] sm:$0xff] %v2350
      %2381 = vst [vmem:[%s783 + $0xc0] sm:$0xff] %v2351
      %2382 = vst [vmem:[%s783 + $0xc8] sm:$0xff] %v2352
      %2383 = vst [vmem:[%s783 + $0xd0] sm:$0xff] %v2353
      %2384 = vst [vmem:[%s783 + $0xd8] sm:$0xff] %v2354
      %2385 = vst [vmem:[%s783 + $0xe0] sm:$0xff] %v2355
      %2386 = vst [vmem:[%s783 + $0xe8] sm:$0xff] %v2356
      %s2387 = smul.u32 30, %s30
      %p2388 = scmp.lt.s32.totalorder %s29, 1
      %s2389 = scalar_select %p2388, %s29, 1
      %p2390 = scmp.lt.s32.totalorder %s2387, 29
      %s2391 = scalar_select %p2390, %s2387, 29
      %s2392 = smul.addr %s2389, 30
      %s2393 = sadd.s32 %s2391, %s2392
      %s2394 = smul.addr %s2393, 8
      %s2395 = scalar_lea.vmem %s14, %s2394
      // Predicated region
      $region77: #{model_forward.9} parent=75 // pred_check
        %p2396 = pneg %p429
      $region78: #{model_forward.9} parent=75 // pred_check_branch
        %2398 = sbr.rel (%p2396) target = $region80
      $region79: #{model_forward.9} parent=75 // pred_region
        %s2399 = smul.u32 30, %s30
      $region80: #{model_forward.9} parent=75 // pred_fallthru
        _
    $region76: #{model_forward.9} parent=5 // pred_fallthru
      _
    %p2400 = scmp.le.s32.totalorder 2, %s20
    // Predicated region
    $region81: #{model_forward.9} parent=5 // pred_check
      %p2401 = pneg %p2400
    $region82: #{model_forward.9} parent=5 // pred_check_branch
      %2403 = sbr.rel (%p2401) target = $region84
    $region83: #{model_forward.9} parent=5 // pred_region
      %s2404 = ssub.s32 %s20, 2
      // Predicated region
      $region85: #{model_forward.9} parent=83 // pred_check
        %p2405 = pneg %p435
      $region86: #{model_forward.9} parent=83 // pred_check_branch
        %2407 = sbr.rel (%p2405) target = $region88
      $region87: #{model_forward.9} parent=83 // pred_region
        %s2408 = smul.u32 30, %s32
        %p2409 = scmp.lt.s32.totalorder %s31, 1
        %s2410 = scalar_select %p2409, %s31, 1
        %p2411 = scmp.lt.s32.totalorder %s2408, 29
        %s2412 = scalar_select %p2411, %s2408, 29
        %s2413 = smul.addr %s2410, 30
        %s2414 = sadd.s32 %s2412, %s2413
        %s2415 = smul.addr %s2414, 8
        %s2416 = scalar_lea.vmem %s14, %s2415
      $region88: #{model_forward.9} parent=83 // pred_fallthru
        _
    $region84: #{model_forward.9} parent=5 // pred_fallthru
      _
  $region6: #{model_forward.9} parent=0 // loop_footer
    %s24 = sadd.s32 1, %s20
  $region7: #{model_forward.9} parent=0 // loop_footer_branch
    %19 = sbr.rel target = $region3
  $region8: #{model_forward.9} parent=0 // loop_exit
    _

// kernel: model_forward.13
$region0: #{model_forward.13}
  #allocation0 [shape = 'u32[]', space=smem, size = 0x4, offset = 0x4, fixed_abs, tag = 'smem constant byte address 0x4 - core index']
  #allocation1 [shape = 'u32[72,128]{1,0:T(1,128)}', space=vmem, size = 0x9000, scoped, tag = 'internal scratch']
  %s0 = inlined_call_operand.vmem [shape: f32[2,72,128], index: 0, kind: input, shape index: {}]
  %s1 = inlined_call_operand.vmem [shape: f32[2,128,128], index: 1, kind: input, shape index: {}]
  %s2 = inlined_call_operand.vmem [shape: f32[2,1,128], index: 2, kind: input, shape index: {}]
  %s3 = inlined_call_operand.vmem [shape: f32[2,128,128], index: 3, kind: input, shape index: {}]
  %s4 = inlined_call_operand.vmem [shape: f32[2,1,128], index: 4, kind: input, shape index: {}]
  %s5 = inlined_call_operand.vmem [shape: f32[2,128,128], index: 5, kind: input, shape index: {}]
  %s6 = inlined_call_operand.vmem [shape: f32[2,1,128], index: 6, kind: input, shape index: {}]
  %s7 = inlined_call_operand.vmem [shape: f32[2,72,128], index: 7, kind: output, shape index: {}]
  %s8 = sld [smem:[#allocation0]]
  $region61: #{model_forward.13} parent=0
    _
  %s10 = ssub.s32 1, %s8
  %s11 = scalar_select 0, %s10, %s8
  loop: start=0, step=1, limit=4
  $region2: #{model_forward.13} parent=0 // loop_pre_header
    _
  $region3: #{model_forward.13} parent=0 // loop_header
    %s13 = sphi 0, %s17
    %p14 = scmp.ge.s32.totalorder %s13, 4
    %s20 = sphi 0, %s32
    %s21 = sphi 0, %s28
    %s22 = sphi 0, %s20
    %s23 = sphi 0, %s21
    %s24 = sphi 0, %s22
    %s25 = sphi 0, %s23
    %s37 = sphi 0, %s39
    %s40 = sphi 0, %s37
    %s41 = sphi 0, %s40
    %s57 = sphi 0, %s41
    %s63 = sphi 0, %s65
    %s66 = sphi 0, %s63
    %s67 = sphi 0, %s66
    %s83 = sphi 0, %s67
    %s89 = sphi 0, %s91
    %s92 = sphi 0, %s89
    %s93 = sphi 0, %s92
    %s109 = sphi 0, %s93
    %s115 = sphi 0, %s117
    %s118 = sphi 0, %s115
    %s119 = sphi 0, %s118
    %s135 = sphi 0, %s119
    %s141 = sphi 0, %s143
    %s144 = sphi 0, %s141
    %s145 = sphi 0, %s144
    %s161 = sphi 0, %s145
    %s167 = sphi 0, %s169
    %s170 = sphi 0, %s167
    %s171 = sphi 0, %s170
    %s187 = sphi 0, %s171
    %s193 = sphi 0, %s195
    %s196 = sphi 0, %s193
    %s197 = sphi 0, %s196
    %s213 = sphi 0, %s197
    %s221 = sphi 0, %s223
    %s224 = sphi 0, %s221
    %s225 = sphi 0, %s224
    %s241 = sphi 0, %s225
  $region4: #{model_forward.13} parent=0 // loop_header_branch
    %16 = sbr.rel (%p14) target = $region8
  $region5: #{model_forward.13} parent=0 // loop_body
    %s18 = ssub.s32 %s13, 1
    %s19 = ssub.s32 %s13, 2
    %s26 = sadd.s32 1, %s21
    %p27 = scmp.ge.s32.totalorder %s26, 1
    %s28 = scalar_select %p27, 0, %s26
    %s29 = sadd.s32 1, %s20
    %s30 = scalar_select %p27, %s29, %s20
    %p31 = scmp.ge.s32.totalorder %s30, 2
    %s32 = scalar_select %p31, 0, %s30
    %s33 = ssub.s32 %s20, %s32
    %s34 = ssub.s32 %s21, %s28
    %s35 = sor.u32 %s33, %s34
    %p36 = scmp.eq.s32.totalorder %s35, 0
    %s38 = sadd.s32 %s37, 1
    %s39 = scalar_select %p36, %s37, %s38
    %p42 = pneg %p36
    %p43 = scmp.eq.s32.totalorder %s13, 1
    %p44 = por %p42, %p43
    %p45 = scmp.ne.s32.totalorder %s37, %s40
    %p46 = scmp.eq.s32.totalorder %s13, 0
    %p47 = por %p45, %p46
    %p48 = scmp.ne.s32.totalorder %s37, %s40
    %p49 = scmp.eq.s32.totalorder %s18, 1
    %p50 = por %p48, %p49
    %p51 = scmp.ne.s32.totalorder %s40, %s41
    %p52 = scmp.eq.s32.totalorder %s18, 0
    %p53 = por %p51, %p52
    %p54 = scmp.ne.s32.totalorder %s40, %s41
    %p55 = scmp.eq.s32.totalorder %s19, 1
    %p56 = por %p54, %p55
    %p58 = scmp.ne.s32.totalorder %s41, %s57
    %p59 = scmp.eq.s32.totalorder %s19, 0
    %p60 = por %p58, %p59
    %s61 = ssub.s32 %s20, %s32
    %p62 = scmp.eq.s32.totalorder %s61, 0
    %s64 = sadd.s32 %s63, 1
    %s65 = scalar_select %p62, %s63, %s64
    %p68 = pneg %p62
    %p69 = scmp.eq.s32.totalorder %s13, 1
    %p70 = por %p68, %p69
    %p71 = scmp.ne.s32.totalorder %s63, %s66
    %p72 = scmp.eq.s32.totalorder %s13, 0
    %p73 = por %p71, %p72
    %p74 = scmp.ne.s32.totalorder %s63, %s66
    %p75 = scmp.eq.s32.totalorder %s18, 1
    %p76 = por %p74, %p75
    %p77 = scmp.ne.s32.totalorder %s66, %s67
    %p78 = scmp.eq.s32.totalorder %s18, 0
    %p79 = por %p77, %p78
    %p80 = scmp.ne.s32.totalorder %s66, %s67
    %p81 = scmp.eq.s32.totalorder %s19, 1
    %p82 = por %p80, %p81
    %p84 = scmp.ne.s32.totalorder %s67, %s83
    %p85 = scmp.eq.s32.totalorder %s19, 0
    %p86 = por %p84, %p85
    %s87 = ssub.s32 %s20, %s32
    %p88 = scmp.eq.s32.totalorder %s87, 0
    %s90 = sadd.s32 %s89, 1
    %s91 = scalar_select %p88, %s89, %s90
    %p94 = pneg %p88
    %p95 = scmp.eq.s32.totalorder %s13, 1
    %p96 = por %p94, %p95
    %p97 = scmp.ne.s32.totalorder %s89, %s92
    %p98 = scmp.eq.s32.totalorder %s13, 0
    %p99 = por %p97, %p98
    %p100 = scmp.ne.s32.totalorder %s89, %s92
    %p101 = scmp.eq.s32.totalorder %s18, 1
    %p102 = por %p100, %p101
    %p103 = scmp.ne.s32.totalorder %s92, %s93
    %p104 = scmp.eq.s32.totalorder %s18, 0
    %p105 = por %p103, %p104
    %p106 = scmp.ne.s32.totalorder %s92, %s93
    %p107 = scmp.eq.s32.totalorder %s19, 1
    %p108 = por %p106, %p107
    %p110 = scmp.ne.s32.totalorder %s93, %s109
    %p111 = scmp.eq.s32.totalorder %s19, 0
    %p112 = por %p110, %p111
    %s113 = ssub.s32 %s20, %s32
    %p114 = scmp.eq.s32.totalorder %s113, 0
    %s116 = sadd.s32 %s115, 1
    %s117 = scalar_select %p114, %s115, %s116
    %p120 = pneg %p114
    %p121 = scmp.eq.s32.totalorder %s13, 1
    %p122 = por %p120, %p121
    %p123 = scmp.ne.s32.totalorder %s115, %s118
    %p124 = scmp.eq.s32.totalorder %s13, 0
    %p125 = por %p123, %p124
    %p126 = scmp.ne.s32.totalorder %s115, %s118
    %p127 = scmp.eq.s32.totalorder %s18, 1
    %p128 = por %p126, %p127
    %p129 = scmp.ne.s32.totalorder %s118, %s119
    %p130 = scmp.eq.s32.totalorder %s18, 0
    %p131 = por %p129, %p130
    %p132 = scmp.ne.s32.totalorder %s118, %s119
    %p133 = scmp.eq.s32.totalorder %s19, 1
    %p134 = por %p132, %p133
    %p136 = scmp.ne.s32.totalorder %s119, %s135
    %p137 = scmp.eq.s32.totalorder %s19, 0
    %p138 = por %p136, %p137
    %s139 = ssub.s32 %s20, %s32
    %p140 = scmp.eq.s32.totalorder %s139, 0
    %s142 = sadd.s32 %s141, 1
    %s143 = scalar_select %p140, %s141, %s142
    %p146 = pneg %p140
    %p147 = scmp.eq.s32.totalorder %s13, 1
    %p148 = por %p146, %p147
    %p149 = scmp.ne.s32.totalorder %s141, %s144
    %p150 = scmp.eq.s32.totalorder %s13, 0
    %p151 = por %p149, %p150
    %p152 = scmp.ne.s32.totalorder %s141, %s144
    %p153 = scmp.eq.s32.totalorder %s18, 1
    %p154 = por %p152, %p153
    %p155 = scmp.ne.s32.totalorder %s144, %s145
    %p156 = scmp.eq.s32.totalorder %s18, 0
    %p157 = por %p155, %p156
    %p158 = scmp.ne.s32.totalorder %s144, %s145
    %p159 = scmp.eq.s32.totalorder %s19, 1
    %p160 = por %p158, %p159
    %p162 = scmp.ne.s32.totalorder %s145, %s161
    %p163 = scmp.eq.s32.totalorder %s19, 0
    %p164 = por %p162, %p163
    %s165 = ssub.s32 %s20, %s32
    %p166 = scmp.eq.s32.totalorder %s165, 0
    %s168 = sadd.s32 %s167, 1
    %s169 = scalar_select %p166, %s167, %s168
    %p172 = pneg %p166
    %p173 = scmp.eq.s32.totalorder %s13, 1
    %p174 = por %p172, %p173
    %p175 = scmp.ne.s32.totalorder %s167, %s170
    %p176 = scmp.eq.s32.totalorder %s13, 0
    %p177 = por %p175, %p176
    %p178 = scmp.ne.s32.totalorder %s167, %s170
    %p179 = scmp.eq.s32.totalorder %s18, 1
    %p180 = por %p178, %p179
    %p181 = scmp.ne.s32.totalorder %s170, %s171
    %p182 = scmp.eq.s32.totalorder %s18, 0
    %p183 = por %p181, %p182
    %p184 = scmp.ne.s32.totalorder %s170, %s171
    %p185 = scmp.eq.s32.totalorder %s19, 1
    %p186 = por %p184, %p185
    %p188 = scmp.ne.s32.totalorder %s171, %s187
    %p189 = scmp.eq.s32.totalorder %s19, 0
    %p190 = por %p188, %p189
    %s191 = ssub.s32 %s20, %s32
    %p192 = scmp.eq.s32.totalorder %s191, 0
    %s194 = sadd.s32 %s193, 1
    %s195 = scalar_select %p192, %s193, %s194
    %p198 = pneg %p192
    %p199 = scmp.eq.s32.totalorder %s13, 1
    %p200 = por %p198, %p199
    %p201 = scmp.ne.s32.totalorder %s193, %s196
    %p202 = scmp.eq.s32.totalorder %s13, 0
    %p203 = por %p201, %p202
    %p204 = scmp.ne.s32.totalorder %s193, %s196
    %p205 = scmp.eq.s32.totalorder %s18, 1
    %p206 = por %p204, %p205
    %p207 = scmp.ne.s32.totalorder %s196, %s197
    %p208 = scmp.eq.s32.totalorder %s18, 0
    %p209 = por %p207, %p208
    %p210 = scmp.ne.s32.totalorder %s196, %s197
    %p211 = scmp.eq.s32.totalorder %s19, 1
    %p212 = por %p210, %p211
    %p214 = scmp.ne.s32.totalorder %s197, %s213
    %p215 = scmp.eq.s32.totalorder %s19, 0
    %p216 = por %p214, %p215
    %s217 = ssub.s32 %s20, %s32
    %s218 = ssub.s32 %s21, %s28
    %s219 = sor.u32 %s217, %s218
    %p220 = scmp.eq.s32.totalorder %s219, 0
    %s222 = sadd.s32 %s221, 1
    %s223 = scalar_select %p220, %s221, %s222
    %p226 = pneg %p220
    %p227 = scmp.eq.s32.totalorder %s13, 1
    %p228 = por %p226, %p227
    %p229 = scmp.ne.s32.totalorder %s221, %s224
    %p230 = scmp.eq.s32.totalorder %s13, 0
    %p231 = por %p229, %p230
    %p232 = scmp.ne.s32.totalorder %s221, %s224
    %p233 = scmp.eq.s32.totalorder %s18, 1
    %p234 = por %p232, %p233
    %p235 = scmp.ne.s32.totalorder %s224, %s225
    %p236 = scmp.eq.s32.totalorder %s18, 0
    %p237 = por %p235, %p236
    %p238 = scmp.ne.s32.totalorder %s224, %s225
    %p239 = scmp.eq.s32.totalorder %s19, 1
    %p240 = por %p238, %p239
    %p242 = scmp.ne.s32.totalorder %s225, %s241
    %p243 = scmp.eq.s32.totalorder %s19, 0
    %p244 = por %p242, %p243
    %p245 = scmp.le.s32.totalorder 1, %s13
    %p246 = scmp.lt.s32.totalorder %s13, 3
    %p247 = pnand %p245, %p246
    %p248 = pneg %p247
    // Predicated region
    $region9: #{model_forward.13} parent=5 // pred_check
      _
    $region10: #{model_forward.13} parent=5 // pred_check_branch
      %250 = sbr.rel (%p247) target = $region12
    $region11: #{model_forward.13} parent=5 // pred_region
      %s251 = ssub.s32 %s13, 1
    $region12: #{model_forward.13} parent=5 // pred_fallthru
      _
    %p252 = scmp.lt.s32.totalorder %s13, 2
    // Predicated region
    $region13: #{model_forward.13} parent=5 // pred_check
      %p253 = pneg %p252
    $region14: #{model_forward.13} parent=5 // pred_check_branch
      %255 = sbr.rel (%p253) target = $region16
    $region15: #{model_forward.13} parent=5 // pred_region
      // Predicated region
      $region17: #{model_forward.13} parent=15 // pred_check
        %p256 = pneg %p47
      $region18: #{model_forward.13} parent=15 // pred_check_branch
        %258 = sbr.rel (%p256) target = $region20
      $region19: #{model_forward.13} parent=15 // pred_region
        %s259 = smul.u32 9, %s21
        %p260 = scmp.lt.s32.totalorder %s20, 1
        %s261 = scalar_select %p260, %s20, 1
        %p262 = scmp.lt.s32.totalorder %s259, 8
        %s263 = scalar_select %p262, %s259, 8
        %s264 = smul.addr %s261, 9
        %s265 = sadd.s32 %s263, %s264
        %s266 = smul.addr %s265, 8
        %s267 = scalar_lea.vmem %s0, %s266
        %s268 = smul.u32 9, %s21
      $region20: #{model_forward.13} parent=15 // pred_fallthru
        _
      // Predicated region
      $region21: #{model_forward.13} parent=15 // pred_check
        %p269 = pneg %p73
      $region22: #{model_forward.13} parent=15 // pred_check_branch
        %271 = sbr.rel (%p269) target = $region24
      $region23: #{model_forward.13} parent=15 // pred_region
        %p272 = scmp.lt.s32.totalorder %s20, 1
        %s273 = scalar_select %p272, %s20, 1
        %s274 = smul.addr %s273, 16
        %s275 = smul.addr %s274, 8
        %s276 = scalar_lea.vmem %s1, %s275
      $region24: #{model_forward.13} parent=15 // pred_fallthru
        _
      // Predicated region
      $region25: #{model_forward.13} parent=15 // pred_check
        %p277 = pneg %p99
      $region26: #{model_forward.13} parent=15 // pred_check_branch
        %279 = sbr.rel (%p277) target = $region28
      $region27: #{model_forward.13} parent=15 // pred_region
        %p280 = scmp.lt.s32.totalorder %s20, 1
        %s281 = scalar_select %p280, %s20, 1
        %s282 = scalar_lea.vmem %s2, %s281
      $region28: #{model_forward.13} parent=15 // pred_fallthru
        _
      // Predicated region
      $region29: #{model_forward.13} parent=15 // pred_check
        %p283 = pneg %p125
      $region30: #{model_forward.13} parent=15 // pred_check_branch
        %285 = sbr.rel (%p283) target = $region32
      $region31: #{model_forward.13} parent=15 // pred_region
        %p286 = scmp.lt.s32.totalorder %s20, 1
        %s287 = scalar_select %p286, %s20, 1
        %s288 = smul.addr %s287, 16
        %s289 = smul.addr %s288, 8
        %s290 = scalar_lea.vmem %s3, %s289
      $region32: #{model_forward.13} parent=15 // pred_fallthru
        _
      // Predicated region
      $region33: #{model_forward.13} parent=15 // pred_check
        %p291 = pneg %p151
      $region34: #{model_forward.13} parent=15 // pred_check_branch
        %293 = sbr.rel (%p291) target = $region36
      $region35: #{model_forward.13} parent=15 // pred_region
        %p294 = scmp.lt.s32.totalorder %s20, 1
        %s295 = scalar_select %p294, %s20, 1
        %s296 = scalar_lea.vmem %s4, %s295
      $region36: #{model_forward.13} parent=15 // pred_fallthru
        _
      // Predicated region
      $region37: #{model_forward.13} parent=15 // pred_check
        %p297 = pneg %p177
      $region38: #{model_forward.13} parent=15 // pred_check_branch
        %299 = sbr.rel (%p297) target = $region40
      $region39: #{model_forward.13} parent=15 // pred_region
        %p300 = scmp.lt.s32.totalorder %s20, 1
        %s301 = scalar_select %p300, %s20, 1
        %s302 = smul.addr %s301, 16
        %s303 = smul.addr %s302, 8
        %s304 = scalar_lea.vmem %s5, %s303
      $region40: #{model_forward.13} parent=15 // pred_fallthru
        _
      // Predicated region
      $region41: #{model_forward.13} parent=15 // pred_check
        %p305 = pneg %p203
      $region42: #{model_forward.13} parent=15 // pred_check_branch
        %307 = sbr.rel (%p305) target = $region44
      $region43: #{model_forward.13} parent=15 // pred_region
        %p308 = scmp.lt.s32.totalorder %s20, 1
        %s309 = scalar_select %p308, %s20, 1
        %s310 = scalar_lea.vmem %s6, %s309
      $region44: #{model_forward.13} parent=15 // pred_fallthru
        _
    $region16: #{model_forward.13} parent=5 // pred_fallthru
      _
    %p311 = scmp.le.s32.totalorder 1, %s13
    %p312 = scmp.lt.s32.totalorder %s13, 3
    %p313 = pnand %p311, %p312
    %p314 = pneg %p313
    // Predicated region
    $region45: #{model_forward.13} parent=5 // pred_check
      _
    $region46: #{model_forward.13} parent=5 // pred_check_branch
      %316 = sbr.rel (%p313) target = $region48
    $region47: #{model_forward.13} parent=5 // pred_region
      %s317 = ssub.s32 %s13, 1
      %s318 = smul.u32 9, %s23
      %p319 = scmp.lt.s32.totalorder %s22, 1
      %s320 = scalar_select %p319, %s22, 1
      %p321 = scmp.lt.s32.totalorder %s318, 8
      %s322 = scalar_select %p321, %s318, 8
      %s323 = smul.addr %s320, 9
      %s324 = sadd.s32 %s322, %s323
      %s325 = smul.addr %s324, 8
      %s326 = scalar_lea.vmem %s0, %s325
      %p327 = pneg %p53
      %p328 = pneg %p50
      %p329 = scmp.lt.s32.totalorder %s22, 1
      %s330 = scalar_select %p329, %s22, 1
      %s331 = smul.addr %s330, 16
      %s332 = smul.addr %s331, 8
      %s333 = scalar_lea.vmem %s1, %s332
      %p334 = pneg %p79
      %p335 = pneg %p76
      %p336 = scmp.lt.s32.totalorder %s22, 1
      %s337 = scalar_select %p336, %s22, 1
      %s338 = scalar_lea.vmem %s2, %s337
      %p339 = pneg %p105
      %p340 = pneg %p102
      %p341 = scmp.lt.s32.totalorder %s22, 1
      %s342 = scalar_select %p341, %s22, 1
      %s343 = smul.addr %s342, 16
      %s344 = smul.addr %s343, 8
      %s345 = scalar_lea.vmem %s3, %s344
      %p346 = pneg %p131
      %p347 = pneg %p128
      %p348 = scmp.lt.s32.totalorder %s22, 1
      %s349 = scalar_select %p348, %s22, 1
      %s350 = scalar_lea.vmem %s4, %s349
      %p351 = pneg %p157
      %p352 = pneg %p154
      %p353 = scmp.lt.s32.totalorder %s22, 1
      %s354 = scalar_select %p353, %s22, 1
      %s355 = smul.addr %s354, 16
      %s356 = smul.addr %s355, 8
      %s357 = scalar_lea.vmem %s5, %s356
      %p358 = pneg %p183
      %p359 = pneg %p180
      %p360 = scmp.lt.s32.totalorder %s22, 1
      %s361 = scalar_select %p360, %s22, 1
      %s362 = scalar_lea.vmem %s6, %s361
      %p363 = pneg %p209
      %p364 = pneg %p206
      %p365 = pneg %p237
      %p366 = pneg %p234
      %s367 = smul.u32 9, %s23
      %p368 = scmp.lt.s32.totalorder %s22, 1
      %s369 = scalar_select %p368, %s22, 1
      %p370 = scmp.lt.s32.totalorder %s367, 8
      %s371 = scalar_select %p370, %s367, 8
      %s372 = smul.addr %s369, 9
      %s373 = sadd.s32 %s371, %s372
      %s374 = smul.addr %s373, 8
      %s375 = scalar_lea.vmem %s7, %s374
      %s376 = smul.u32 9, %s23
      %p377 = scmp.lt.s32.totalorder %s22, 1
      %s378 = scalar_select %p377, %s22, 1
      %p379 = scmp.lt.s32.totalorder %s376, 8
      %s380 = scalar_select %p379, %s376, 8
      %s381 = smul.addr %s378, 9
      %s382 = sadd.s32 %s380, %s381
      %s383 = smul.addr %s382, 8
      %s384 = scalar_lea.vmem %s0, %s383
      %s385 = smul.u32 9, %s23
      %p386 = scmp.lt.s32.totalorder %s22, 1
      %s387 = scalar_select %p386, %s22, 1
      %s388 = smul.addr %s387, 16
      %s389 = smul.addr %s388, 8
      %s390 = scalar_lea.vmem %s1, %s389
      %p391 = scmp.lt.s32.totalorder %s22, 1
      %s392 = scalar_select %p391, %s22, 1
      %s393 = scalar_lea.vmem %s2, %s392
      %p394 = scmp.lt.s32.totalorder %s22, 1
      %s395 = scalar_select %p394, %s22, 1
      %s396 = smul.addr %s395, 16
      %s397 = smul.addr %s396, 8
      %s398 = scalar_lea.vmem %s3, %s397
      %p399 = scmp.lt.s32.totalorder %s22, 1
      %s400 = scalar_select %p399, %s22, 1
      %s401 = scalar_lea.vmem %s4, %s400
      %p402 = scmp.lt.s32.totalorder %s22, 1
      %s403 = scalar_select %p402, %s22, 1
      %s404 = smul.addr %s403, 16
      %s405 = smul.addr %s404, 8
      %s406 = scalar_lea.vmem %s5, %s405
      %p407 = scmp.lt.s32.totalorder %s22, 1
      %s408 = scalar_select %p407, %s22, 1
      %s409 = scalar_lea.vmem %s6, %s408
      %s410 = smul.u32 9, %s23
      %p411 = scmp.lt.s32.totalorder %s22, 1
      %s412 = scalar_select %p411, %s22, 1
      %p413 = scmp.lt.s32.totalorder %s410, 8
      %s414 = scalar_select %p413, %s410, 8
      %s415 = smul.addr %s412, 9
      %s416 = sadd.s32 %s414, %s415
      %s417 = smul.addr %s416, 8
      %s418 = scalar_lea.vmem %s7, %s417
      %s419 = smul.u32 9, %s23
      %v420 = vld [vmem:[%s384] sm:$0xff]
      %v421 = vld [vmem:[%s384 + $0x8] sm:$0xff]
      %v422 = vld [vmem:[%s384 + $0x10] sm:$0xff]
      %v423 = vld [vmem:[%s384 + $0x18] sm:$0xff]
      %v424 = vld [vmem:[%s384 + $0x20] sm:$0xff]
      %v425 = vld [vmem:[%s384 + $0x28] sm:$0xff]
      %v426 = vld [vmem:[%s384 + $0x30] sm:$0xff]
      %v427 = vld [vmem:[%s384 + $0x38] sm:$0xff]
      %v428 = vld [vmem:[%s384 + $0x40] sm:$0xff]
      %v429 = vld [vmem:[%s390] sm:$0xff]
      %v430 = vld [vmem:[%s390 + $0x8] sm:$0xff]
      %v431 = vld [vmem:[%s390 + $0x10] sm:$0xff]
      %v432 = vld [vmem:[%s390 + $0x18] sm:$0xff]
      %v433 = vld [vmem:[%s390 + $0x20] sm:$0xff]
      %v434 = vld [vmem:[%s390 + $0x28] sm:$0xff]
      %v435 = vld [vmem:[%s390 + $0x30] sm:$0xff]
      %v436 = vld [vmem:[%s390 + $0x38] sm:$0xff]
      %v437 = vld [vmem:[%s390 + $0x40] sm:$0xff]
      %v438 = vld [vmem:[%s390 + $0x48] sm:$0xff]
      %v439 = vld [vmem:[%s390 + $0x50] sm:$0xff]
      %v440 = vld [vmem:[%s390 + $0x58] sm:$0xff]
      %v441 = vld [vmem:[%s390 + $0x60] sm:$0xff]
      %v442 = vld [vmem:[%s390 + $0x68] sm:$0xff]
      %v443 = vld [vmem:[%s390 + $0x70] sm:$0xff]
      %v444 = vld [vmem:[%s390 + $0x78] sm:$0xff]
      %v445 = vpack.c.bf16 %v421, %v420
      %v446 = vpack.c.bf16 %v423, %v422
      %v447 = vpack.c.bf16 %v425, %v424
      %v448 = vpack.c.bf16 %v427, %v426
      %v449 = vpack.c.bf16 %v428, %v428
      %v450 = vpack.c.bf16 %v430, %v429
      %v451 = vpack.c.bf16 %v432, %v431
      %v452 = vpack.c.bf16 %v434, %v433
      %v453 = vpack.c.bf16 %v436, %v435
      %v454 = vpack.c.bf16 %v438, %v437
      %v455 = vpack.c.bf16 %v440, %v439
      %v456 = vpack.c.bf16 %v442, %v441
      %v457 = vpack.c.bf16 %v444, %v443
      %v458 = vld [vmem:[%s393] sm:$0x1]
      %v460 = vperm.slane %v458, 0
      %462 = vmatpush.bf16.msra.mxu0 %v457
      %463 = vmatpush.bf16.msra.mxu0 %v456
      %464 = vmatpush.bf16.msra.mxu0 %v455
      %465 = vmatpush.bf16.msra.mxu0 %v454
      %466 = vmatpush.bf16.msra.mxu0 %v453
      %467 = vmatpush.bf16.msra.mxu0 %v452
      %468 = vmatpush.bf16.msra.mxu0 %v451
      %469 = vmatpush.bf16.msra.mxu0 %v450
      %470 = vmatmul.bf16.gmra.mxu0 %v445
      %v471 = vpop.f32.mrf.mxu0
      %v472 = vadd.f32 %v460, %v471
      %v473 = vpop.f32.mrf.mxu0
      %v474 = vadd.f32 %v460, %v473
      %475 = vmatmul.bf16.gmra.mxu0 %v446
      %v476 = vpop.f32.mrf.mxu0
      %v477 = vadd.f32 %v460, %v476
      %v478 = vpop.f32.mrf.mxu0
      %v479 = vadd.f32 %v460, %v478
      %480 = vmatmul.bf16.gmra.mxu0 %v447
      %v481 = vpop.f32.mrf.mxu0
      %v482 = vadd.f32 %v460, %v481
      %v483 = vpop.f32.mrf.mxu0
      %v484 = vadd.f32 %v460, %v483
      %485 = vmatmul.bf16.gmra.mxu0 %v448
      %v486 = vpop.f32.mrf.mxu0
      %v487 = vadd.f32 %v460, %v486
      %v488 = vpop.f32.mrf.mxu0
      %v489 = vadd.f32 %v460, %v488
      %490 = vmatmul.bf16.gmra.mxu0 %v449
      %v491 = vpop.f32.mrf.mxu0
      %v492 = vadd.f32 %v460, %v491
      %v493 = vpop.f32.mrf.mxu0
      %494 = vdwg.mxu0
      %v495 = vmax.f32 %v472, 0.0
      %v496 = vmax.f32 %v474, 0.0
      %v497 = vmax.f32 %v477, 0.0
      %v498 = vmax.f32 %v479, 0.0
      %v499 = vmax.f32 %v482, 0.0
      %v500 = vmax.f32 %v484, 0.0
      %v501 = vmax.f32 %v487, 0.0
      %v502 = vmax.f32 %v489, 0.0
      %v503 = vmax.f32 %v492, 0.0
      %v504 = vld [vmem:[%s398] sm:$0xff]
      %v505 = vld [vmem:[%s398 + $0x8] sm:$0xff]
      %v506 = vld [vmem:[%s398 + $0x10] sm:$0xff]
      %v507 = vld [vmem:[%s398 + $0x18] sm:$0xff]
      %v508 = vld [vmem:[%s398 + $0x20] sm:$0xff]
      %v509 = vld [vmem:[%s398 + $0x28] sm:$0xff]
      %v510 = vld [vmem:[%s398 + $0x30] sm:$0xff]
      %v511 = vld [vmem:[%s398 + $0x38] sm:$0xff]
      %v512 = vld [vmem:[%s398 + $0x40] sm:$0xff]
      %v513 = vld [vmem:[%s398 + $0x48] sm:$0xff]
      %v514 = vld [vmem:[%s398 + $0x50] sm:$0xff]
      %v515 = vld [vmem:[%s398 + $0x58] sm:$0xff]
      %v516 = vld [vmem:[%s398 + $0x60] sm:$0xff]
      %v517 = vld [vmem:[%s398 + $0x68] sm:$0xff]
      %v518 = vld [vmem:[%s398 + $0x70] sm:$0xff]
      %v519 = vld [vmem:[%s398 + $0x78] sm:$0xff]
      %v520 = vpack.c.bf16 %v496, %v495
      %v521 = vpack.c.bf16 %v498, %v497
      %v522 = vpack.c.bf16 %v500, %v499
      %v523 = vpack.c.bf16 %v502, %v501
      %v524 = vpack.c.bf16 %v503, %v503
      %v525 = vpack.c.bf16 %v505, %v504
      %v526 = vpack.c.bf16 %v507, %v506
      %v527 = vpack.c.bf16 %v509, %v508
      %v528 = vpack.c.bf16 %v511, %v510
      %v529 = vpack.c.bf16 %v513, %v512
      %v530 = vpack.c.bf16 %v515, %v514
      %v531 = vpack.c.bf16 %v517, %v516
      %v532 = vpack.c.bf16 %v519, %v518
      %v533 = vld [vmem:[%s401] sm:$0x1]
      %v535 = vperm.slane %v533, 0
      %537 = vmatpush.bf16.msra.mxu0 %v532
      %538 = vmatpush.bf16.msra.mxu0 %v531
      %539 = vmatpush.bf16.msra.mxu0 %v530
      %540 = vmatpush.bf16.msra.mxu0 %v529
      %541 = vmatpush.bf16.msra.mxu0 %v528
      %542 = vmatpush.bf16.msra.mxu0 %v527
      %543 = vmatpush.bf16.msra.mxu0 %v526
      %544 = vmatpush.bf16.msra.mxu0 %v525
      %545 = vmatmul.bf16.gmra.mxu0 %v520
      %v546 = vpop.f32.mrf.mxu0
      %v547 = vadd.f32 %v535, %v546
      %v548 = vpop.f32.mrf.mxu0
      %v549 = vadd.f32 %v535, %v548
      %550 = vmatmul.bf16.gmra.mxu0 %v521
      %v551 = vpop.f32.mrf.mxu0
      %v552 = vadd.f32 %v535, %v551
      %v553 = vpop.f32.mrf.mxu0
      %v554 = vadd.f32 %v535, %v553
      %555 = vmatmul.bf16.gmra.mxu0 %v522
      %v556 = vpop.f32.mrf.mxu0
      %v557 = vadd.f32 %v535, %v556
      %v558 = vpop.f32.mrf.mxu0
      %v559 = vadd.f32 %v535, %v558
      %560 = vmatmul.bf16.gmra.mxu0 %v523
      %v561 = vpop.f32.mrf.mxu0
      %v562 = vadd.f32 %v535, %v561
      %v563 = vpop.f32.mrf.mxu0
      %v564 = vadd.f32 %v535, %v563
      %565 = vmatmul.bf16.gmra.mxu0 %v524
      %v566 = vpop.f32.mrf.mxu0
      %v567 = vadd.f32 %v535, %v566
      %v568 = vpop.f32.mrf.mxu0
      %569 = vdwg.mxu0
      %v570 = vmax.f32 %v547, 0.0
      %v571 = vmax.f32 %v549, 0.0
      %v572 = vmax.f32 %v552, 0.0
      %v573 = vmax.f32 %v554, 0.0
      %v574 = vmax.f32 %v557, 0.0
      %v575 = vmax.f32 %v559, 0.0
      %v576 = vmax.f32 %v562, 0.0
      %v577 = vmax.f32 %v564, 0.0
      %v578 = vmax.f32 %v567, 0.0
      %v579 = vld [vmem:[%s406] sm:$0xff]
      %v580 = vld [vmem:[%s406 + $0x8] sm:$0xff]
      %v581 = vld [vmem:[%s406 + $0x10] sm:$0xff]
      %v582 = vld [vmem:[%s406 + $0x18] sm:$0xff]
      %v583 = vld [vmem:[%s406 + $0x20] sm:$0xff]
      %v584 = vld [vmem:[%s406 + $0x28] sm:$0xff]
      %v585 = vld [vmem:[%s406 + $0x30] sm:$0xff]
      %v586 = vld [vmem:[%s406 + $0x38] sm:$0xff]
      %v587 = vld [vmem:[%s406 + $0x40] sm:$0xff]
      %v588 = vld [vmem:[%s406 + $0x48] sm:$0xff]
      %v589 = vld [vmem:[%s406 + $0x50] sm:$0xff]
      %v590 = vld [vmem:[%s406 + $0x58] sm:$0xff]
      %v591 = vld [vmem:[%s406 + $0x60] sm:$0xff]
      %v592 = vld [vmem:[%s406 + $0x68] sm:$0xff]
      %v593 = vld [vmem:[%s406 + $0x70] sm:$0xff]
      %v594 = vld [vmem:[%s406 + $0x78] sm:$0xff]
      %v595 = vpack.c.bf16 %v571, %v570
      %v596 = vpack.c.bf16 %v573, %v572
      %v597 = vpack.c.bf16 %v575, %v574
      %v598 = vpack.c.bf16 %v577, %v576
      %v599 = vpack.c.bf16 %v578, %v578
      %v600 = vpack.c.bf16 %v580, %v579
      %v601 = vpack.c.bf16 %v582, %v581
      %v602 = vpack.c.bf16 %v584, %v583
      %v603 = vpack.c.bf16 %v586, %v585
      %v604 = vpack.c.bf16 %v588, %v587
      %v605 = vpack.c.bf16 %v590, %v589
      %v606 = vpack.c.bf16 %v592, %v591
      %v607 = vpack.c.bf16 %v594, %v593
      %v608 = vld [vmem:[%s409] sm:$0x1]
      %v610 = vperm.slane %v608, 0
      %612 = vmatpush.bf16.msra.mxu0 %v607
      %613 = vmatpush.bf16.msra.mxu0 %v606
      %614 = vmatpush.bf16.msra.mxu0 %v605
      %615 = vmatpush.bf16.msra.mxu0 %v604
      %616 = vmatpush.bf16.msra.mxu0 %v603
      %617 = vmatpush.bf16.msra.mxu0 %v602
      %618 = vmatpush.bf16.msra.mxu0 %v601
      %619 = vmatpush.bf16.msra.mxu0 %v600
      %620 = vmatmul.bf16.gmra.mxu0 %v595
      %v621 = vpop.f32.mrf.mxu0
      %v622 = vadd.f32 %v610, %v621
      %v623 = vpop.f32.mrf.mxu0
      %v624 = vadd.f32 %v610, %v623
      %625 = vmatmul.bf16.gmra.mxu0 %v596
      %v626 = vpop.f32.mrf.mxu0
      %v627 = vadd.f32 %v610, %v626
      %v628 = vpop.f32.mrf.mxu0
      %v629 = vadd.f32 %v610, %v628
      %630 = vmatmul.bf16.gmra.mxu0 %v597
      %v631 = vpop.f32.mrf.mxu0
      %v632 = vadd.f32 %v610, %v631
      %v633 = vpop.f32.mrf.mxu0
      %v634 = vadd.f32 %v610, %v633
      %635 = vmatmul.bf16.gmra.mxu0 %v598
      %v636 = vpop.f32.mrf.mxu0
      %v637 = vadd.f32 %v610, %v636
      %v638 = vpop.f32.mrf.mxu0
      %v639 = vadd.f32 %v610, %v638
      %640 = vmatmul.bf16.gmra.mxu0 %v599
      %v641 = vpop.f32.mrf.mxu0
      %v642 = vadd.f32 %v610, %v641
      %v643 = vpop.f32.mrf.mxu0
      %644 = vdwg.mxu0
      %645 = vst [vmem:[%s418] sm:$0xff] %v622
      %646 = vst [vmem:[%s418 + $0x8] sm:$0xff] %v624
      %647 = vst [vmem:[%s418 + $0x10] sm:$0xff] %v627
      %648 = vst [vmem:[%s418 + $0x18] sm:$0xff] %v629
      %649 = vst [vmem:[%s418 + $0x20] sm:$0xff] %v632
      %650 = vst [vmem:[%s418 + $0x28] sm:$0xff] %v634
      %651 = vst [vmem:[%s418 + $0x30] sm:$0xff] %v637
      %652 = vst [vmem:[%s418 + $0x38] sm:$0xff] %v639
      %653 = vst [vmem:[%s418 + $0x40] sm:$0xff] %v642
      %s654 = smul.u32 9, %s23
      %p655 = scmp.lt.s32.totalorder %s22, 1
      %s656 = scalar_select %p655, %s22, 1
      %p657 = scmp.lt.s32.totalorder %s654, 8
      %s658 = scalar_select %p657, %s654, 8
      %s659 = smul.addr %s656, 9
      %s660 = sadd.s32 %s658, %s659
      %s661 = smul.addr %s660, 8
      %s662 = scalar_lea.vmem %s7, %s661
      // Predicated region
      $region49: #{model_forward.13} parent=47 // pred_check
        %p663 = pneg %p234
      $region50: #{model_forward.13} parent=47 // pred_check_branch
        %665 = sbr.rel (%p663) target = $region52
      $region51: #{model_forward.13} parent=47 // pred_region
        %s666 = smul.u32 9, %s23
      $region52: #{model_forward.13} parent=47 // pred_fallthru
        _
    $region48: #{model_forward.13} parent=5 // pred_fallthru
      _
    %p667 = scmp.le.s32.totalorder 2, %s13
    // Predicated region
    $region53: #{model_forward.13} parent=5 // pred_check
      %p668 = pneg %p667
    $region54: #{model_forward.13} parent=5 // pred_check_branch
      %670 = sbr.rel (%p668) target = $region56
    $region55: #{model_forward.13} parent=5 // pred_region
      %s671 = ssub.s32 %s13, 2
      // Predicated region
      $region57: #{model_forward.13} parent=55 // pred_check
        %p672 = pneg %p240
      $region58: #{model_forward.13} parent=55 // pred_check_branch
        %674 = sbr.rel (%p672) target = $region60
      $region59: #{model_forward.13} parent=55 // pred_region
        %s675 = smul.u32 9, %s25
        %p676 = scmp.lt.s32.totalorder %s24, 1
        %s677 = scalar_select %p676, %s24, 1
        %p678 = scmp.lt.s32.totalorder %s675, 8
        %s679 = scalar_select %p678, %s675, 8
        %s680 = smul.addr %s677, 9
        %s681 = sadd.s32 %s679, %s680
        %s682 = smul.addr %s681, 8
        %s683 = scalar_lea.vmem %s7, %s682
      $region60: #{model_forward.13} parent=55 // pred_fallthru
        _
    $region56: #{model_forward.13} parent=5 // pred_fallthru
      _
  $region6: #{model_forward.13} parent=0 // loop_footer
    %s17 = sadd.s32 1, %s13
  $region7: #{model_forward.13} parent=0 // loop_footer_branch
    %12 = sbr.rel target = $region3
  $region8: #{model_forward.13} parent=0 // loop_exit
    _

// kernel: model_forward.10
$region0: #{model_forward.10}
  #allocation0 [shape = 'u32[]', space=smem, size = 0x4, offset = 0x4, fixed_abs, tag = 'smem constant byte address 0x4 - core index']
  #allocation1 [shape = 'u32[72,128]{1,0:T(1,128)}', space=vmem, size = 0x9000, scoped, tag = 'internal scratch']
  %s0 = inlined_call_operand.vmem [shape: f32[2,72,128], index: 0, kind: input, shape index: {}, may-alias: {0,11}]
  %s1 = inlined_call_operand.vmem [shape: f32[2,72,128], index: 1, kind: input, shape index: {}]
  %s2 = inlined_call_operand.vmem [shape: f32[2,128,128], index: 2, kind: input, shape index: {}]
  %s3 = inlined_call_operand.vmem [shape: f32[2,128,128], index: 3, kind: input, shape index: {}]
  %s4 = inlined_call_operand.vmem [shape: f32[2,1,128], index: 4, kind: input, shape index: {}]
  %s5 = inlined_call_operand.vmem [shape: f32[2,128,128], index: 5, kind: input, shape index: {}]
  %s6 = inlined_call_operand.vmem [shape: f32[2,1,128], index: 6, kind: input, shape index: {}]
  %s7 = inlined_call_operand.vmem [shape: f32[2,128,128], index: 7, kind: input, shape index: {}]
  %s8 = inlined_call_operand.vmem [shape: f32[2,1,128], index: 8, kind: input, shape index: {}]
  %s9 = inlined_call_operand.vmem [shape: f32[2,1,128], index: 9, kind: input, shape index: {}]
  %s10 = inlined_call_operand.vmem [shape: f32[2,1,128], index: 10, kind: input, shape index: {}]
  %s11 = inlined_call_operand.vmem [shape: f32[2,72,128], index: 11, kind: input, shape index: {}, may-alias: {0,11}]
  %s12 = inlined_call_operand.vmem [shape: f32[2,72,128], index: 12, kind: output, shape index: {}]
  %s13 = sld [smem:[#allocation0]]
  $region81: #{model_forward.10} parent=0
    _
  %s15 = ssub.s32 1, %s13
  %s16 = scalar_select 0, %s15, %s13
  loop: start=0, step=1, limit=4
  $region2: #{model_forward.10} parent=0 // loop_pre_header
    _
  $region3: #{model_forward.10} parent=0 // loop_header
    %s18 = sphi 0, %s22
    %p19 = scmp.ge.s32.totalorder %s18, 4
    %s25 = sphi 0, %s37
    %s26 = sphi 0, %s33
    %s27 = sphi 0, %s25
    %s28 = sphi 0, %s26
    %s29 = sphi 0, %s27
    %s30 = sphi 0, %s28
    %s42 = sphi 0, %s44
    %s45 = sphi 0, %s42
    %s46 = sphi 0, %s45
    %s62 = sphi 0, %s46
    %s70 = sphi 0, %s72
    %s73 = sphi 0, %s70
    %s74 = sphi 0, %s73
    %s90 = sphi 0, %s74
    %s96 = sphi 0, %s98
    %s99 = sphi 0, %s96
    %s100 = sphi 0, %s99
    %s116 = sphi 0, %s100
    %s122 = sphi 0, %s124
    %s125 = sphi 0, %s122
    %s126 = sphi 0, %s125
    %s142 = sphi 0, %s126
    %s148 = sphi 0, %s150
    %s151 = sphi 0, %s148
    %s152 = sphi 0, %s151
    %s168 = sphi 0, %s152
    %s174 = sphi 0, %s176
    %s177 = sphi 0, %s174
    %s178 = sphi 0, %s177
    %s194 = sphi 0, %s178
    %s200 = sphi 0, %s202
    %s203 = sphi 0, %s200
    %s204 = sphi 0, %s203
    %s220 = sphi 0, %s204
    %s226 = sphi 0, %s228
    %s229 = sphi 0, %s226
    %s230 = sphi 0, %s229
    %s246 = sphi 0, %s230
    %s252 = sphi 0, %s254
    %s255 = sphi 0, %s252
    %s256 = sphi 0, %s255
    %s272 = sphi 0, %s256
    %s278 = sphi 0, %s280
    %s281 = sphi 0, %s278
    %s282 = sphi 0, %s281
    %s298 = sphi 0, %s282
    %s304 = sphi 0, %s306
    %s307 = sphi 0, %s304
    %s308 = sphi 0, %s307
    %s324 = sphi 0, %s308
    %s332 = sphi 0, %s334
    %s335 = sphi 0, %s332
    %s336 = sphi 0, %s335
    %s352 = sphi 0, %s336
    %s360 = sphi 0, %s362
    %s363 = sphi 0, %s360
    %s364 = sphi 0, %s363
    %s380 = sphi 0, %s364
  $region4: #{model_forward.10} parent=0 // loop_header_branch
    %21 = sbr.rel (%p19) target = $region8
  $region5: #{model_forward.10} parent=0 // loop_body
    %s23 = ssub.s32 %s18, 1
    %s24 = ssub.s32 %s18, 2
    %s31 = sadd.s32 1, %s26
    %p32 = scmp.ge.s32.totalorder %s31, 1
    %s33 = scalar_select %p32, 0, %s31
    %s34 = sadd.s32 1, %s25
    %s35 = scalar_select %p32, %s34, %s25
    %p36 = scmp.ge.s32.totalorder %s35, 2
    %s37 = scalar_select %p36, 0, %s35
    %s38 = ssub.s32 %s25, %s37
    %s39 = ssub.s32 %s26, %s33
    %s40 = sor.u32 %s38, %s39
    %p41 = scmp.eq.s32.totalorder %s40, 0
    %s43 = sadd.s32 %s42, 1
    %s44 = scalar_select %p41, %s42, %s43
    %p47 = pneg %p41
    %p48 = scmp.eq.s32.totalorder %s18, 1
    %p49 = por %p47, %p48
    %p50 = scmp.ne.s32.totalorder %s42, %s45
    %p51 = scmp.eq.s32.totalorder %s18, 0
    %p52 = por %p50, %p51
    %p53 = scmp.ne.s32.totalorder %s42, %s45
    %p54 = scmp.eq.s32.totalorder %s23, 1
    %p55 = por %p53, %p54
    %p56 = scmp.ne.s32.totalorder %s45, %s46
    %p57 = scmp.eq.s32.totalorder %s23, 0
    %p58 = por %p56, %p57
    %p59 = scmp.ne.s32.totalorder %s45, %s46
    %p60 = scmp.eq.s32.totalorder %s24, 1
    %p61 = por %p59, %p60
    %p63 = scmp.ne.s32.totalorder %s46, %s62
    %p64 = scmp.eq.s32.totalorder %s24, 0
    %p65 = por %p63, %p64
    %s66 = ssub.s32 %s25, %s37
    %s67 = ssub.s32 %s26, %s33
    %s68 = sor.u32 %s66, %s67
    %p69 = scmp.eq.s32.totalorder %s68, 0
    %s71 = sadd.s32 %s70, 1
    %s72 = scalar_select %p69, %s70, %s71
    %p75 = pneg %p69
    %p76 = scmp.eq.s32.totalorder %s18, 1
    %p77 = por %p75, %p76
    %p78 = scmp.ne.s32.totalorder %s70, %s73
    %p79 = scmp.eq.s32.totalorder %s18, 0
    %p80 = por %p78, %p79
    %p81 = scmp.ne.s32.totalorder %s70, %s73
    %p82 = scmp.eq.s32.totalorder %s23, 1
    %p83 = por %p81, %p82
    %p84 = scmp.ne.s32.totalorder %s73, %s74
    %p85 = scmp.eq.s32.totalorder %s23, 0
    %p86 = por %p84, %p85
    %p87 = scmp.ne.s32.totalorder %s73, %s74
    %p88 = scmp.eq.s32.totalorder %s24, 1
    %p89 = por %p87, %p88
    %p91 = scmp.ne.s32.totalorder %s74, %s90
    %p92 = scmp.eq.s32.totalorder %s24, 0
    %p93 = por %p91, %p92
    %s94 = ssub.s32 %s25, %s37
    %p95 = scmp.eq.s32.totalorder %s94, 0
    %s97 = sadd.s32 %s96, 1
    %s98 = scalar_select %p95, %s96, %s97
    %p101 = pneg %p95
    %p102 = scmp.eq.s32.totalorder %s18, 1
    %p103 = por %p101, %p102
    %p104 = scmp.ne.s32.totalorder %s96, %s99
    %p105 = scmp.eq.s32.totalorder %s18, 0
    %p106 = por %p104, %p105
    %p107 = scmp.ne.s32.totalorder %s96, %s99
    %p108 = scmp.eq.s32.totalorder %s23, 1
    %p109 = por %p107, %p108
    %p110 = scmp.ne.s32.totalorder %s99, %s100
    %p111 = scmp.eq.s32.totalorder %s23, 0
    %p112 = por %p110, %p111
    %p113 = scmp.ne.s32.totalorder %s99, %s100
    %p114 = scmp.eq.s32.totalorder %s24, 1
    %p115 = por %p113, %p114
    %p117 = scmp.ne.s32.totalorder %s100, %s116
    %p118 = scmp.eq.s32.totalorder %s24, 0
    %p119 = por %p117, %p118
    %s120 = ssub.s32 %s25, %s37
    %p121 = scmp.eq.s32.totalorder %s120, 0
    %s123 = sadd.s32 %s122, 1
    %s124 = scalar_select %p121, %s122, %s123
    %p127 = pneg %p121
    %p128 = scmp.eq.s32.totalorder %s18, 1
    %p129 = por %p127, %p128
    %p130 = scmp.ne.s32.totalorder %s122, %s125
    %p131 = scmp.eq.s32.totalorder %s18, 0
    %p132 = por %p130, %p131
    %p133 = scmp.ne.s32.totalorder %s122, %s125
    %p134 = scmp.eq.s32.totalorder %s23, 1
    %p135 = por %p133, %p134
    %p136 = scmp.ne.s32.totalorder %s125, %s126
    %p137 = scmp.eq.s32.totalorder %s23, 0
    %p138 = por %p136, %p137
    %p139 = scmp.ne.s32.totalorder %s125, %s126
    %p140 = scmp.eq.s32.totalorder %s24, 1
    %p141 = por %p139, %p140
    %p143 = scmp.ne.s32.totalorder %s126, %s142
    %p144 = scmp.eq.s32.totalorder %s24, 0
    %p145 = por %p143, %p144
    %s146 = ssub.s32 %s25, %s37
    %p147 = scmp.eq.s32.totalorder %s146, 0
    %s149 = sadd.s32 %s148, 1
    %s150 = scalar_select %p147, %s148, %s149
    %p153 = pneg %p147
    %p154 = scmp.eq.s32.totalorder %s18, 1
    %p155 = por %p153, %p154
    %p156 = scmp.ne.s32.totalorder %s148, %s151
    %p157 = scmp.eq.s32.totalorder %s18, 0
    %p158 = por %p156, %p157
    %p159 = scmp.ne.s32.totalorder %s148, %s151
    %p160 = scmp.eq.s32.totalorder %s23, 1
    %p161 = por %p159, %p160
    %p162 = scmp.ne.s32.totalorder %s151, %s152
    %p163 = scmp.eq.s32.totalorder %s23, 0
    %p164 = por %p162, %p163
    %p165 = scmp.ne.s32.totalorder %s151, %s152
    %p166 = scmp.eq.s32.totalorder %s24, 1
    %p167 = por %p165, %p166
    %p169 = scmp.ne.s32.totalorder %s152, %s168
    %p170 = scmp.eq.s32.totalorder %s24, 0
    %p171 = por %p169, %p170
    %s172 = ssub.s32 %s25, %s37
    %p173 = scmp.eq.s32.totalorder %s172, 0
    %s175 = sadd.s32 %s174, 1
    %s176 = scalar_select %p173, %s174, %s175
    %p179 = pneg %p173
    %p180 = scmp.eq.s32.totalorder %s18, 1
    %p181 = por %p179, %p180
    %p182 = scmp.ne.s32.totalorder %s174, %s177
    %p183 = scmp.eq.s32.totalorder %s18, 0
    %p184 = por %p182, %p183
    %p185 = scmp.ne.s32.totalorder %s174, %s177
    %p186 = scmp.eq.s32.totalorder %s23, 1
    %p187 = por %p185, %p186
    %p188 = scmp.ne.s32.totalorder %s177, %s178
    %p189 = scmp.eq.s32.totalorder %s23, 0
    %p190 = por %p188, %p189
    %p191 = scmp.ne.s32.totalorder %s177, %s178
    %p192 = scmp.eq.s32.totalorder %s24, 1
    %p193 = por %p191, %p192
    %p195 = scmp.ne.s32.totalorder %s178, %s194
    %p196 = scmp.eq.s32.totalorder %s24, 0
    %p197 = por %p195, %p196
    %s198 = ssub.s32 %s25, %s37
    %p199 = scmp.eq.s32.totalorder %s198, 0
    %s201 = sadd.s32 %s200, 1
    %s202 = scalar_select %p199, %s200, %s201
    %p205 = pneg %p199
    %p206 = scmp.eq.s32.totalorder %s18, 1
    %p207 = por %p205, %p206
    %p208 = scmp.ne.s32.totalorder %s200, %s203
    %p209 = scmp.eq.s32.totalorder %s18, 0
    %p210 = por %p208, %p209
    %p211 = scmp.ne.s32.totalorder %s200, %s203
    %p212 = scmp.eq.s32.totalorder %s23, 1
    %p213 = por %p211, %p212
    %p214 = scmp.ne.s32.totalorder %s203, %s204
    %p215 = scmp.eq.s32.totalorder %s23, 0
    %p216 = por %p214, %p215
    %p217 = scmp.ne.s32.totalorder %s203, %s204
    %p218 = scmp.eq.s32.totalorder %s24, 1
    %p219 = por %p217, %p218
    %p221 = scmp.ne.s32.totalorder %s204, %s220
    %p222 = scmp.eq.s32.totalorder %s24, 0
    %p223 = por %p221, %p222
    %s224 = ssub.s32 %s25, %s37
    %p225 = scmp.eq.s32.totalorder %s224, 0
    %s227 = sadd.s32 %s226, 1
    %s228 = scalar_select %p225, %s226, %s227
    %p231 = pneg %p225
    %p232 = scmp.eq.s32.totalorder %s18, 1
    %p233 = por %p231, %p232
    %p234 = scmp.ne.s32.totalorder %s226, %s229
    %p235 = scmp.eq.s32.totalorder %s18, 0
    %p236 = por %p234, %p235
    %p237 = scmp.ne.s32.totalorder %s226, %s229
    %p238 = scmp.eq.s32.totalorder %s23, 1
    %p239 = por %p237, %p238
    %p240 = scmp.ne.s32.totalorder %s229, %s230
    %p241 = scmp.eq.s32.totalorder %s23, 0
    %p242 = por %p240, %p241
    %p243 = scmp.ne.s32.totalorder %s229, %s230
    %p244 = scmp.eq.s32.totalorder %s24, 1
    %p245 = por %p243, %p244
    %p247 = scmp.ne.s32.totalorder %s230, %s246
    %p248 = scmp.eq.s32.totalorder %s24, 0
    %p249 = por %p247, %p248
    %s250 = ssub.s32 %s25, %s37
    %p251 = scmp.eq.s32.totalorder %s250, 0
    %s253 = sadd.s32 %s252, 1
    %s254 = scalar_select %p251, %s252, %s253
    %p257 = pneg %p251
    %p258 = scmp.eq.s32.totalorder %s18, 1
    %p259 = por %p257, %p258
    %p260 = scmp.ne.s32.totalorder %s252, %s255
    %p261 = scmp.eq.s32.totalorder %s18, 0
    %p262 = por %p260, %p261
    %p263 = scmp.ne.s32.totalorder %s252, %s255
    %p264 = scmp.eq.s32.totalorder %s23, 1
    %p265 = por %p263, %p264
    %p266 = scmp.ne.s32.totalorder %s255, %s256
    %p267 = scmp.eq.s32.totalorder %s23, 0
    %p268 = por %p266, %p267
    %p269 = scmp.ne.s32.totalorder %s255, %s256
    %p270 = scmp.eq.s32.totalorder %s24, 1
    %p271 = por %p269, %p270
    %p273 = scmp.ne.s32.totalorder %s256, %s272
    %p274 = scmp.eq.s32.totalorder %s24, 0
    %p275 = por %p273, %p274
    %s276 = ssub.s32 %s25, %s37
    %p277 = scmp.eq.s32.totalorder %s276, 0
    %s279 = sadd.s32 %s278, 1
    %s280 = scalar_select %p277, %s278, %s279
    %p283 = pneg %p277
    %p284 = scmp.eq.s32.totalorder %s18, 1
    %p285 = por %p283, %p284
    %p286 = scmp.ne.s32.totalorder %s278, %s281
    %p287 = scmp.eq.s32.totalorder %s18, 0
    %p288 = por %p286, %p287
    %p289 = scmp.ne.s32.totalorder %s278, %s281
    %p290 = scmp.eq.s32.totalorder %s23, 1
    %p291 = por %p289, %p290
    %p292 = scmp.ne.s32.totalorder %s281, %s282
    %p293 = scmp.eq.s32.totalorder %s23, 0
    %p294 = por %p292, %p293
    %p295 = scmp.ne.s32.totalorder %s281, %s282
    %p296 = scmp.eq.s32.totalorder %s24, 1
    %p297 = por %p295, %p296
    %p299 = scmp.ne.s32.totalorder %s282, %s298
    %p300 = scmp.eq.s32.totalorder %s24, 0
    %p301 = por %p299, %p300
    %s302 = ssub.s32 %s25, %s37
    %p303 = scmp.eq.s32.totalorder %s302, 0
    %s305 = sadd.s32 %s304, 1
    %s306 = scalar_select %p303, %s304, %s305
    %p309 = pneg %p303
    %p310 = scmp.eq.s32.totalorder %s18, 1
    %p311 = por %p309, %p310
    %p312 = scmp.ne.s32.totalorder %s304, %s307
    %p313 = scmp.eq.s32.totalorder %s18, 0
    %p314 = por %p312, %p313
    %p315 = scmp.ne.s32.totalorder %s304, %s307
    %p316 = scmp.eq.s32.totalorder %s23, 1
    %p317 = por %p315, %p316
    %p318 = scmp.ne.s32.totalorder %s307, %s308
    %p319 = scmp.eq.s32.totalorder %s23, 0
    %p320 = por %p318, %p319
    %p321 = scmp.ne.s32.totalorder %s307, %s308
    %p322 = scmp.eq.s32.totalorder %s24, 1
    %p323 = por %p321, %p322
    %p325 = scmp.ne.s32.totalorder %s308, %s324
    %p326 = scmp.eq.s32.totalorder %s24, 0
    %p327 = por %p325, %p326
    %s328 = ssub.s32 %s25, %s37
    %s329 = ssub.s32 %s26, %s33
    %s330 = sor.u32 %s328, %s329
    %p331 = scmp.eq.s32.totalorder %s330, 0
    %s333 = sadd.s32 %s332, 1
    %s334 = scalar_select %p331, %s332, %s333
    %p337 = pneg %p331
    %p338 = scmp.eq.s32.totalorder %s18, 1
    %p339 = por %p337, %p338
    %p340 = scmp.ne.s32.totalorder %s332, %s335
    %p341 = scmp.eq.s32.totalorder %s18, 0
    %p342 = por %p340, %p341
    %p343 = scmp.ne.s32.totalorder %s332, %s335
    %p344 = scmp.eq.s32.totalorder %s23, 1
    %p345 = por %p343, %p344
    %p346 = scmp.ne.s32.totalorder %s335, %s336
    %p347 = scmp.eq.s32.totalorder %s23, 0
    %p348 = por %p346, %p347
    %p349 = scmp.ne.s32.totalorder %s335, %s336
    %p350 = scmp.eq.s32.totalorder %s24, 1
    %p351 = por %p349, %p350
    %p353 = scmp.ne.s32.totalorder %s336, %s352
    %p354 = scmp.eq.s32.totalorder %s24, 0
    %p355 = por %p353, %p354
    %s356 = ssub.s32 %s25, %s37
    %s357 = ssub.s32 %s26, %s33
    %s358 = sor.u32 %s356, %s357
    %p359 = scmp.eq.s32.totalorder %s358, 0
    %s361 = sadd.s32 %s360, 1
    %s362 = scalar_select %p359, %s360, %s361
    %p365 = pneg %p359
    %p366 = scmp.eq.s32.totalorder %s18, 1
    %p367 = por %p365, %p366
    %p368 = scmp.ne.s32.totalorder %s360, %s363
    %p369 = scmp.eq.s32.totalorder %s18, 0
    %p370 = por %p368, %p369
    %p371 = scmp.ne.s32.totalorder %s360, %s363
    %p372 = scmp.eq.s32.totalorder %s23, 1
    %p373 = por %p371, %p372
    %p374 = scmp.ne.s32.totalorder %s363, %s364
    %p375 = scmp.eq.s32.totalorder %s23, 0
    %p376 = por %p374, %p375
    %p377 = scmp.ne.s32.totalorder %s363, %s364
    %p378 = scmp.eq.s32.totalorder %s24, 1
    %p379 = por %p377, %p378
    %p381 = scmp.ne.s32.totalorder %s364, %s380
    %p382 = scmp.eq.s32.totalorder %s24, 0
    %p383 = por %p381, %p382
    %p384 = scmp.le.s32.totalorder 1, %s18
    %p385 = scmp.lt.s32.totalorder %s18, 3
    %p386 = pnand %p384, %p385
    %p387 = pneg %p386
    // Predicated region
    $region9: #{model_forward.10} parent=5 // pred_check
      _
    $region10: #{model_forward.10} parent=5 // pred_check_branch
      %389 = sbr.rel (%p386) target = $region12
    $region11: #{model_forward.10} parent=5 // pred_region
      %s390 = ssub.s32 %s18, 1
    $region12: #{model_forward.10} parent=5 // pred_fallthru
      _
    %p391 = scmp.lt.s32.totalorder %s18, 2
    // Predicated region
    $region13: #{model_forward.10} parent=5 // pred_check
      %p392 = pneg %p391
    $region14: #{model_forward.10} parent=5 // pred_check_branch
      %394 = sbr.rel (%p392) target = $region16
    $region15: #{model_forward.10} parent=5 // pred_region
      // Predicated region
      $region17: #{model_forward.10} parent=15 // pred_check
        %p395 = pneg %p52
      $region18: #{model_forward.10} parent=15 // pred_check_branch
        %397 = sbr.rel (%p395) target = $region20
      $region19: #{model_forward.10} parent=15 // pred_region
        %s398 = smul.u32 9, %s26
        %p399 = scmp.lt.s32.totalorder %s25, 1
        %s400 = scalar_select %p399, %s25, 1
        %p401 = scmp.lt.s32.totalorder %s398, 8
        %s402 = scalar_select %p401, %s398, 8
        %s403 = smul.addr %s400, 9
        %s404 = sadd.s32 %s402, %s403
        %s405 = smul.addr %s404, 8
        %s406 = scalar_lea.vmem %s0, %s405
        %s407 = smul.u32 9, %s26
      $region20: #{model_forward.10} parent=15 // pred_fallthru
        _
      // Predicated region
      $region21: #{model_forward.10} parent=15 // pred_check
        %p408 = pneg %p80
      $region22: #{model_forward.10} parent=15 // pred_check_branch
        %410 = sbr.rel (%p408) target = $region24
      $region23: #{model_forward.10} parent=15 // pred_region
        %s411 = smul.u32 9, %s26
        %p412 = scmp.lt.s32.totalorder %s25, 1
        %s413 = scalar_select %p412, %s25, 1
        %p414 = scmp.lt.s32.totalorder %s411, 8
        %s415 = scalar_select %p414, %s411, 8
        %s416 = smul.addr %s413, 9
        %s417 = sadd.s32 %s415, %s416
        %s418 = smul.addr %s417, 8
        %s419 = scalar_lea.vmem %s1, %s418
        %s420 = smul.u32 9, %s26
      $region24: #{model_forward.10} parent=15 // pred_fallthru
        _
      // Predicated region
      $region25: #{model_forward.10} parent=15 // pred_check
        %p421 = pneg %p106
      $region26: #{model_forward.10} parent=15 // pred_check_branch
        %423 = sbr.rel (%p421) target = $region28
      $region27: #{model_forward.10} parent=15 // pred_region
        %p424 = scmp.lt.s32.totalorder %s25, 1
        %s425 = scalar_select %p424, %s25, 1
        %s426 = smul.addr %s425, 16
        %s427 = smul.addr %s426, 8
        %s428 = scalar_lea.vmem %s2, %s427
      $region28: #{model_forward.10} parent=15 // pred_fallthru
        _
      // Predicated region
      $region29: #{model_forward.10} parent=15 // pred_check
        %p429 = pneg %p132
      $region30: #{model_forward.10} parent=15 // pred_check_branch
        %431 = sbr.rel (%p429) target = $region32
      $region31: #{model_forward.10} parent=15 // pred_region
        %p432 = scmp.lt.s32.totalorder %s25, 1
        %s433 = scalar_select %p432, %s25, 1
        %s434 = smul.addr %s433, 16
        %s435 = smul.addr %s434, 8
        %s436 = scalar_lea.vmem %s3, %s435
      $region32: #{model_forward.10} parent=15 // pred_fallthru
        _
      // Predicated region
      $region33: #{model_forward.10} parent=15 // pred_check
        %p437 = pneg %p158
      $region34: #{model_forward.10} parent=15 // pred_check_branch
        %439 = sbr.rel (%p437) target = $region36
      $region35: #{model_forward.10} parent=15 // pred_region
        %p440 = scmp.lt.s32.totalorder %s25, 1
        %s441 = scalar_select %p440, %s25, 1
        %s442 = scalar_lea.vmem %s4, %s441
      $region36: #{model_forward.10} parent=15 // pred_fallthru
        _
      // Predicated region
      $region37: #{model_forward.10} parent=15 // pred_check
        %p443 = pneg %p184
      $region38: #{model_forward.10} parent=15 // pred_check_branch
        %445 = sbr.rel (%p443) target = $region40
      $region39: #{model_forward.10} parent=15 // pred_region
        %p446 = scmp.lt.s32.totalorder %s25, 1
        %s447 = scalar_select %p446, %s25, 1
        %s448 = smul.addr %s447, 16
        %s449 = smul.addr %s448, 8
        %s450 = scalar_lea.vmem %s5, %s449
      $region40: #{model_forward.10} parent=15 // pred_fallthru
        _
      // Predicated region
      $region41: #{model_forward.10} parent=15 // pred_check
        %p451 = pneg %p210
      $region42: #{model_forward.10} parent=15 // pred_check_branch
        %453 = sbr.rel (%p451) target = $region44
      $region43: #{model_forward.10} parent=15 // pred_region
        %p454 = scmp.lt.s32.totalorder %s25, 1
        %s455 = scalar_select %p454, %s25, 1
        %s456 = scalar_lea.vmem %s6, %s455
      $region44: #{model_forward.10} parent=15 // pred_fallthru
        _
      // Predicated region
      $region45: #{model_forward.10} parent=15 // pred_check
        %p457 = pneg %p236
      $region46: #{model_forward.10} parent=15 // pred_check_branch
        %459 = sbr.rel (%p457) target = $region48
      $region47: #{model_forward.10} parent=15 // pred_region
        %p460 = scmp.lt.s32.totalorder %s25, 1
        %s461 = scalar_select %p460, %s25, 1
        %s462 = smul.addr %s461, 16
        %s463 = smul.addr %s462, 8
        %s464 = scalar_lea.vmem %s7, %s463
      $region48: #{model_forward.10} parent=15 // pred_fallthru
        _
      // Predicated region
      $region49: #{model_forward.10} parent=15 // pred_check
        %p465 = pneg %p262
      $region50: #{model_forward.10} parent=15 // pred_check_branch
        %467 = sbr.rel (%p465) target = $region52
      $region51: #{model_forward.10} parent=15 // pred_region
        %p468 = scmp.lt.s32.totalorder %s25, 1
        %s469 = scalar_select %p468, %s25, 1
        %s470 = scalar_lea.vmem %s8, %s469
      $region52: #{model_forward.10} parent=15 // pred_fallthru
        _
      // Predicated region
      $region53: #{model_forward.10} parent=15 // pred_check
        %p471 = pneg %p288
      $region54: #{model_forward.10} parent=15 // pred_check_branch
        %473 = sbr.rel (%p471) target = $region56
      $region55: #{model_forward.10} parent=15 // pred_region
        %p474 = scmp.lt.s32.totalorder %s25, 1
        %s475 = scalar_select %p474, %s25, 1
        %s476 = scalar_lea.vmem %s9, %s475
      $region56: #{model_forward.10} parent=15 // pred_fallthru
        _
      // Predicated region
      $region57: #{model_forward.10} parent=15 // pred_check
        %p477 = pneg %p314
      $region58: #{model_forward.10} parent=15 // pred_check_branch
        %479 = sbr.rel (%p477) target = $region60
      $region59: #{model_forward.10} parent=15 // pred_region
        %p480 = scmp.lt.s32.totalorder %s25, 1
        %s481 = scalar_select %p480, %s25, 1
        %s482 = scalar_lea.vmem %s10, %s481
      $region60: #{model_forward.10} parent=15 // pred_fallthru
        _
      // Predicated region
      $region61: #{model_forward.10} parent=15 // pred_check
        %p483 = pneg %p342
      $region62: #{model_forward.10} parent=15 // pred_check_branch
        %485 = sbr.rel (%p483) target = $region64
      $region63: #{model_forward.10} parent=15 // pred_region
        %s486 = smul.u32 9, %s26
        %p487 = scmp.lt.s32.totalorder %s25, 1
        %s488 = scalar_select %p487, %s25, 1
        %p489 = scmp.lt.s32.totalorder %s486, 8
        %s490 = scalar_select %p489, %s486, 8
        %s491 = smul.addr %s488, 9
        %s492 = sadd.s32 %s490, %s491
        %s493 = smul.addr %s492, 8
        %s494 = scalar_lea.vmem %s11, %s493
        %s495 = smul.u32 9, %s26
      $region64: #{model_forward.10} parent=15 // pred_fallthru
        _
    $region16: #{model_forward.10} parent=5 // pred_fallthru
      _
    %p496 = scmp.le.s32.totalorder 1, %s18
    %p497 = scmp.lt.s32.totalorder %s18, 3
    %p498 = pnand %p496, %p497
    %p499 = pneg %p498
    // Predicated region
    $region65: #{model_forward.10} parent=5 // pred_check
      _
    $region66: #{model_forward.10} parent=5 // pred_check_branch
      %501 = sbr.rel (%p498) target = $region68
    $region67: #{model_forward.10} parent=5 // pred_region
      %s502 = ssub.s32 %s18, 1
      %s503 = smul.u32 9, %s28
      %p504 = scmp.lt.s32.totalorder %s27, 1
      %s505 = scalar_select %p504, %s27, 1
      %p506 = scmp.lt.s32.totalorder %s503, 8
      %s507 = scalar_select %p506, %s503, 8
      %s508 = smul.addr %s505, 9
      %s509 = sadd.s32 %s507, %s508
      %s510 = smul.addr %s509, 8
      %s511 = scalar_lea.vmem %s0, %s510
      %p512 = pneg %p58
      %p513 = pneg %p55
      %s514 = smul.u32 9, %s28
      %p515 = scmp.lt.s32.totalorder %s27, 1
      %s516 = scalar_select %p515, %s27, 1
      %p517 = scmp.lt.s32.totalorder %s514, 8
      %s518 = scalar_select %p517, %s514, 8
      %s519 = smul.addr %s516, 9
      %s520 = sadd.s32 %s518, %s519
      %s521 = smul.addr %s520, 8
      %s522 = scalar_lea.vmem %s1, %s521
      %p523 = pneg %p86
      %p524 = pneg %p83
      %p525 = scmp.lt.s32.totalorder %s27, 1
      %s526 = scalar_select %p525, %s27, 1
      %s527 = smul.addr %s526, 16
      %s528 = smul.addr %s527, 8
      %s529 = scalar_lea.vmem %s2, %s528
      %p530 = pneg %p112
      %p531 = pneg %p109
      %p532 = scmp.lt.s32.totalorder %s27, 1
      %s533 = scalar_select %p532, %s27, 1
      %s534 = smul.addr %s533, 16
      %s535 = smul.addr %s534, 8
      %s536 = scalar_lea.vmem %s3, %s535
      %p537 = pneg %p138
      %p538 = pneg %p135
      %p539 = scmp.lt.s32.totalorder %s27, 1
      %s540 = scalar_select %p539, %s27, 1
      %s541 = scalar_lea.vmem %s4, %s540
      %p542 = pneg %p164
      %p543 = pneg %p161
      %p544 = scmp.lt.s32.totalorder %s27, 1
      %s545 = scalar_select %p544, %s27, 1
      %s546 = smul.addr %s545, 16
      %s547 = smul.addr %s546, 8
      %s548 = scalar_lea.vmem %s5, %s547
      %p549 = pneg %p190
      %p550 = pneg %p187
      %p551 = scmp.lt.s32.totalorder %s27, 1
      %s552 = scalar_select %p551, %s27, 1
      %s553 = scalar_lea.vmem %s6, %s552
      %p554 = pneg %p216
      %p555 = pneg %p213
      %p556 = scmp.lt.s32.totalorder %s27, 1
      %s557 = scalar_select %p556, %s27, 1
      %s558 = smul.addr %s557, 16
      %s559 = smul.addr %s558, 8
      %s560 = scalar_lea.vmem %s7, %s559
      %p561 = pneg %p242
      %p562 = pneg %p239
      %p563 = scmp.lt.s32.totalorder %s27, 1
      %s564 = scalar_select %p563, %s27, 1
      %s565 = scalar_lea.vmem %s8, %s564
      %p566 = pneg %p268
      %p567 = pneg %p265
      %p568 = scmp.lt.s32.totalorder %s27, 1
      %s569 = scalar_select %p568, %s27, 1
      %s570 = scalar_lea.vmem %s9, %s569
      %p571 = pneg %p294
      %p572 = pneg %p291
      %p573 = scmp.lt.s32.totalorder %s27, 1
      %s574 = scalar_select %p573, %s27, 1
      %s575 = scalar_lea.vmem %s10, %s574
      %p576 = pneg %p320
      %p577 = pneg %p317
      %s578 = smul.u32 9, %s28
      %p579 = scmp.lt.s32.totalorder %s27, 1
      %s580 = scalar_select %p579, %s27, 1
      %p581 = scmp.lt.s32.totalorder %s578, 8
      %s582 = scalar_select %p581, %s578, 8
      %s583 = smul.addr %s580, 9
      %s584 = sadd.s32 %s582, %s583
      %s585 = smul.addr %s584, 8
      %s586 = scalar_lea.vmem %s11, %s585
      %p587 = pneg %p348
      %p588 = pneg %p345
      %p589 = pneg %p376
      %p590 = pneg %p373
      %s591 = smul.u32 9, %s28
      %p592 = scmp.lt.s32.totalorder %s27, 1
      %s593 = scalar_select %p592, %s27, 1
      %p594 = scmp.lt.s32.totalorder %s591, 8
      %s595 = scalar_select %p594, %s591, 8
      %s596 = smul.addr %s593, 9
      %s597 = sadd.s32 %s595, %s596
      %s598 = smul.addr %s597, 8
      %s599 = scalar_lea.vmem %s12, %s598
      %s600 = smul.u32 9, %s28
      %p601 = scmp.lt.s32.totalorder %s27, 1
      %s602 = scalar_select %p601, %s27, 1
      %p603 = scmp.lt.s32.totalorder %s600, 8
      %s604 = scalar_select %p603, %s600, 8
      %s605 = smul.addr %s602, 9
      %s606 = sadd.s32 %s604, %s605
      %s607 = smul.addr %s606, 8
      %s608 = scalar_lea.vmem %s0, %s607
      %s609 = smul.u32 9, %s28
      %s610 = smul.u32 9, %s28
      %p611 = scmp.lt.s32.totalorder %s27, 1
      %s612 = scalar_select %p611, %s27, 1
      %p613 = scmp.lt.s32.totalorder %s610, 8
      %s614 = scalar_select %p613, %s610, 8
      %s615 = smul.addr %s612, 9
      %s616 = sadd.s32 %s614, %s615
      %s617 = smul.addr %s616, 8
      %s618 = scalar_lea.vmem %s1, %s617
      %s619 = smul.u32 9, %s28
      %p620 = scmp.lt.s32.totalorder %s27, 1
      %s621 = scalar_select %p620, %s27, 1
      %s622 = smul.addr %s621, 16
      %s623 = smul.addr %s622, 8
      %s624 = scalar_lea.vmem %s2, %s623
      %p625 = scmp.lt.s32.totalorder %s27, 1
      %s626 = scalar_select %p625, %s27, 1
      %s627 = smul.addr %s626, 16
      %s628 = smul.addr %s627, 8
      %s629 = scalar_lea.vmem %s3, %s628
      %p630 = scmp.lt.s32.totalorder %s27, 1
      %s631 = scalar_select %p630, %s27, 1
      %s632 = scalar_lea.vmem %s4, %s631
      %p633 = scmp.lt.s32.totalorder %s27, 1
      %s634 = scalar_select %p633, %s27, 1
      %s635 = smul.addr %s634, 16
      %s636 = smul.addr %s635, 8
      %s637 = scalar_lea.vmem %s5, %s636
      %p638 = scmp.lt.s32.totalorder %s27, 1
      %s639 = scalar_select %p638, %s27, 1
      %s640 = scalar_lea.vmem %s6, %s639
      %p641 = scmp.lt.s32.totalorder %s27, 1
      %s642 = scalar_select %p641, %s27, 1
      %s643 = smul.addr %s642, 16
      %s644 = smul.addr %s643, 8
      %s645 = scalar_lea.vmem %s7, %s644
      %p646 = scmp.lt.s32.totalorder %s27, 1
      %s647 = scalar_select %p646, %s27, 1
      %s648 = scalar_lea.vmem %s8, %s647
      %p649 = scmp.lt.s32.totalorder %s27, 1
      %s650 = scalar_select %p649, %s27, 1
      %s651 = scalar_lea.vmem %s9, %s650
      %p652 = scmp.lt.s32.totalorder %s27, 1
      %s653 = scalar_select %p652, %s27, 1
      %s654 = scalar_lea.vmem %s10, %s653
      %s655 = smul.u32 9, %s28
      %p656 = scmp.lt.s32.totalorder %s27, 1
      %s657 = scalar_select %p656, %s27, 1
      %p658 = scmp.lt.s32.totalorder %s655, 8
      %s659 = scalar_select %p658, %s655, 8
      %s660 = smul.addr %s657, 9
      %s661 = sadd.s32 %s659, %s660
      %s662 = smul.addr %s661, 8
      %s663 = scalar_lea.vmem %s11, %s662
      %s664 = smul.u32 9, %s28
      %s665 = smul.u32 9, %s28
      %p666 = scmp.lt.s32.totalorder %s27, 1
      %s667 = scalar_select %p666, %s27, 1
      %p668 = scmp.lt.s32.totalorder %s665, 8
      %s669 = scalar_select %p668, %s665, 8
      %s670 = smul.addr %s667, 9
      %s671 = sadd.s32 %s669, %s670
      %s672 = smul.addr %s671, 8
      %s673 = scalar_lea.vmem %s12, %s672
      %s674 = smul.u32 9, %s28
      %v675 = vld [vmem:[%s608] sm:$0xff]
      %v676 = vld [vmem:[%s608 + $0x8] sm:$0xff]
      %v677 = vld [vmem:[%s608 + $0x10] sm:$0xff]
      %v678 = vld [vmem:[%s608 + $0x18] sm:$0xff]
      %v679 = vld [vmem:[%s608 + $0x20] sm:$0xff]
      %v680 = vld [vmem:[%s608 + $0x28] sm:$0xff]
      %v681 = vld [vmem:[%s608 + $0x30] sm:$0xff]
      %v682 = vld [vmem:[%s608 + $0x38] sm:$0xff]
      %v683 = vld [vmem:[%s608 + $0x40] sm:$0xff]
      %v684 = vld [vmem:[%s624] sm:$0xff]
      %v685 = vld [vmem:[%s624 + $0x8] sm:$0xff]
      %v686 = vld [vmem:[%s624 + $0x10] sm:$0xff]
      %v687 = vld [vmem:[%s624 + $0x18] sm:$0xff]
      %v688 = vld [vmem:[%s624 + $0x20] sm:$0xff]
      %v689 = vld [vmem:[%s624 + $0x28] sm:$0xff]
      %v690 = vld [vmem:[%s624 + $0x30] sm:$0xff]
      %v691 = vld [vmem:[%s624 + $0x38] sm:$0xff]
      %v692 = vld [vmem:[%s624 + $0x40] sm:$0xff]
      %v693 = vld [vmem:[%s624 + $0x48] sm:$0xff]
      %v694 = vld [vmem:[%s624 + $0x50] sm:$0xff]
      %v695 = vld [vmem:[%s624 + $0x58] sm:$0xff]
      %v696 = vld [vmem:[%s624 + $0x60] sm:$0xff]
      %v697 = vld [vmem:[%s624 + $0x68] sm:$0xff]
      %v698 = vld [vmem:[%s624 + $0x70] sm:$0xff]
      %v699 = vld [vmem:[%s624 + $0x78] sm:$0xff]
      %v700 = vpack.c.bf16 %v676, %v675
      %v701 = vpack.c.bf16 %v678, %v677
      %v702 = vpack.c.bf16 %v680, %v679
      %v703 = vpack.c.bf16 %v682, %v681
      %v704 = vpack.c.bf16 %v683, %v683
      %v705 = vpack.c.bf16 %v685, %v684
      %v706 = vpack.c.bf16 %v687, %v686
      %v707 = vpack.c.bf16 %v689, %v688
      %v708 = vpack.c.bf16 %v691, %v690
      %v709 = vpack.c.bf16 %v693, %v692
      %v710 = vpack.c.bf16 %v695, %v694
      %v711 = vpack.c.bf16 %v697, %v696
      %v712 = vpack.c.bf16 %v699, %v698
      %v713 = vld [vmem:[%s618] sm:$0xff]
      %v714 = vld [vmem:[%s618 + $0x8] sm:$0xff]
      %v715 = vld [vmem:[%s618 + $0x10] sm:$0xff]
      %v716 = vld [vmem:[%s618 + $0x18] sm:$0xff]
      %v717 = vld [vmem:[%s618 + $0x20] sm:$0xff]
      %v718 = vld [vmem:[%s618 + $0x28] sm:$0xff]
      %v719 = vld [vmem:[%s618 + $0x30] sm:$0xff]
      %v720 = vld [vmem:[%s618 + $0x38] sm:$0xff]
      %v721 = vld [vmem:[%s618 + $0x40] sm:$0xff]
      %v722 = vld [vmem:[%s629] sm:$0xff]
      %v723 = vld [vmem:[%s629 + $0x8] sm:$0xff]
      %v724 = vld [vmem:[%s629 + $0x10] sm:$0xff]
      %v725 = vld [vmem:[%s629 + $0x18] sm:$0xff]
      %v726 = vld [vmem:[%s629 + $0x20] sm:$0xff]
      %v727 = vld [vmem:[%s629 + $0x28] sm:$0xff]
      %v728 = vld [vmem:[%s629 + $0x30] sm:$0xff]
      %v729 = vld [vmem:[%s629 + $0x38] sm:$0xff]
      %v730 = vld [vmem:[%s629 + $0x40] sm:$0xff]
      %v731 = vld [vmem:[%s629 + $0x48] sm:$0xff]
      %v732 = vld [vmem:[%s629 + $0x50] sm:$0xff]
      %v733 = vld [vmem:[%s629 + $0x58] sm:$0xff]
      %v734 = vld [vmem:[%s629 + $0x60] sm:$0xff]
      %v735 = vld [vmem:[%s629 + $0x68] sm:$0xff]
      %v736 = vld [vmem:[%s629 + $0x70] sm:$0xff]
      %v737 = vld [vmem:[%s629 + $0x78] sm:$0xff]
      %v738 = vpack.c.bf16 %v714, %v713
      %v739 = vpack.c.bf16 %v716, %v715
      %v740 = vpack.c.bf16 %v718, %v717
      %v741 = vpack.c.bf16 %v720, %v719
      %v742 = vpack.c.bf16 %v721, %v721
      %v743 = vpack.c.bf16 %v723, %v722
      %v744 = vpack.c.bf16 %v725, %v724
      %v745 = vpack.c.bf16 %v727, %v726
      %v746 = vpack.c.bf16 %v729, %v728
      %v747 = vpack.c.bf16 %v731, %v730
      %v748 = vpack.c.bf16 %v733, %v732
      %v749 = vpack.c.bf16 %v735, %v734
      %v750 = vpack.c.bf16 %v737, %v736
      %751 = vmatpush.bf16.msra.mxu0 %v750
      %752 = vmatpush.bf16.msra.mxu0 %v749
      %753 = vmatpush.bf16.msra.mxu0 %v748
      %754 = vmatpush.bf16.msra.mxu0 %v747
      %755 = vmatpush.bf16.msra.mxu0 %v746
      %756 = vmatpush.bf16.msra.mxu0 %v745
      %757 = vmatpush.bf16.msra.mxu0 %v744
      %758 = vmatpush.bf16.msra.mxu0 %v743
      %759 = vmatmul.bf16.gmra.mxu0 %v738
      %v760 = vpop.f32.mrf.mxu0
      %v761 = vadd.f32 0.0, %v760
      %v762 = vpop.f32.mrf.mxu0
      %v763 = vadd.f32 0.0, %v762
      %764 = vmatmul.bf16.gmra.mxu0 %v739
      %v765 = vpop.f32.mrf.mxu0
      %v766 = vadd.f32 0.0, %v765
      %v767 = vpop.f32.mrf.mxu0
      %v768 = vadd.f32 0.0, %v767
      %769 = vmatmul.bf16.gmra.mxu0 %v740
      %v770 = vpop.f32.mrf.mxu0
      %v771 = vadd.f32 0.0, %v770
      %v772 = vpop.f32.mrf.mxu0
      %v773 = vadd.f32 0.0, %v772
      %774 = vmatmul.bf16.gmra.mxu0 %v741
      %v775 = vpop.f32.mrf.mxu0
      %v776 = vadd.f32 0.0, %v775
      %v777 = vpop.f32.mrf.mxu0
      %v778 = vadd.f32 0.0, %v777
      %779 = vmatmul.bf16.gmra.mxu0 %v742
      %v780 = vpop.f32.mrf.mxu0
      %v781 = vadd.f32 0.0, %v780
      %v782 = vpop.f32.mrf.mxu0
      %783 = vdwg.mxu0
      %784 = vmatpush.bf16.msra.mxu0 %v712
      %785 = vmatpush.bf16.msra.mxu0 %v711
      %786 = vmatpush.bf16.msra.mxu0 %v710
      %787 = vmatpush.bf16.msra.mxu0 %v709
      %788 = vmatpush.bf16.msra.mxu0 %v708
      %789 = vmatpush.bf16.msra.mxu0 %v707
      %790 = vmatpush.bf16.msra.mxu0 %v706
      %791 = vmatpush.bf16.msra.mxu0 %v705
      %792 = vmatmul.bf16.gmra.mxu0 %v700
      %v793 = vpop.f32.mrf.mxu0
      %v794 = vadd.f32 %v761, %v793
      %v795 = vpop.f32.mrf.mxu0
      %v796 = vadd.f32 %v763, %v795
      %797 = vmatmul.bf16.gmra.mxu0 %v701
      %v798 = vpop.f32.mrf.mxu0
      %v799 = vadd.f32 %v766, %v798
      %v800 = vpop.f32.mrf.mxu0
      %v801 = vadd.f32 %v768, %v800
      %802 = vmatmul.bf16.gmra.mxu0 %v702
      %v803 = vpop.f32.mrf.mxu0
      %v804 = vadd.f32 %v771, %v803
      %v805 = vpop.f32.mrf.mxu0
      %v806 = vadd.f32 %v773, %v805
      %807 = vmatmul.bf16.gmra.mxu0 %v703
      %v808 = vpop.f32.mrf.mxu0
      %v809 = vadd.f32 %v776, %v808
      %v810 = vpop.f32.mrf.mxu0
      %v811 = vadd.f32 %v778, %v810
      %812 = vmatmul.bf16.gmra.mxu0 %v704
      %v813 = vpop.f32.mrf.mxu0
      %v814 = vadd.f32 %v781, %v813
      %v815 = vpop.f32.mrf.mxu0
      %816 = vdwg.mxu0
      %v817 = vld [vmem:[%s632] sm:$0x1]
      %v819 = vperm.slane %v817, 0
      %v821 = vadd.f32 %v794, %v819
      %v822 = vadd.f32 %v796, %v819
      %v823 = vadd.f32 %v799, %v819
      %v824 = vadd.f32 %v801, %v819
      %v825 = vadd.f32 %v804, %v819
      %v826 = vadd.f32 %v806, %v819
      %v827 = vadd.f32 %v809, %v819
      %v828 = vadd.f32 %v811, %v819
      %v829 = vadd.f32 %v814, %v819
      %v830 = vmax.f32 %v821, 0.0
      %v831 = vmax.f32 %v822, 0.0
      %v832 = vmax.f32 %v823, 0.0
      %v833 = vmax.f32 %v824, 0.0
      %v834 = vmax.f32 %v825, 0.0
      %v835 = vmax.f32 %v826, 0.0
      %v836 = vmax.f32 %v827, 0.0
      %v837 = vmax.f32 %v828, 0.0
      %v838 = vmax.f32 %v829, 0.0
      %v839 = vld [vmem:[%s637] sm:$0xff]
      %v840 = vld [vmem:[%s637 + $0x8] sm:$0xff]
      %v841 = vld [vmem:[%s637 + $0x10] sm:$0xff]
      %v842 = vld [vmem:[%s637 + $0x18] sm:$0xff]
      %v843 = vld [vmem:[%s637 + $0x20] sm:$0xff]
      %v844 = vld [vmem:[%s637 + $0x28] sm:$0xff]
      %v845 = vld [vmem:[%s637 + $0x30] sm:$0xff]
      %v846 = vld [vmem:[%s637 + $0x38] sm:$0xff]
      %v847 = vld [vmem:[%s637 + $0x40] sm:$0xff]
      %v848 = vld [vmem:[%s637 + $0x48] sm:$0xff]
      %v849 = vld [vmem:[%s637 + $0x50] sm:$0xff]
      %v850 = vld [vmem:[%s637 + $0x58] sm:$0xff]
      %v851 = vld [vmem:[%s637 + $0x60] sm:$0xff]
      %v852 = vld [vmem:[%s637 + $0x68] sm:$0xff]
      %v853 = vld [vmem:[%s637 + $0x70] sm:$0xff]
      %v854 = vld [vmem:[%s637 + $0x78] sm:$0xff]
      %v855 = vpack.c.bf16 %v831, %v830
      %v856 = vpack.c.bf16 %v833, %v832
      %v857 = vpack.c.bf16 %v835, %v834
      %v858 = vpack.c.bf16 %v837, %v836
      %v859 = vpack.c.bf16 %v838, %v838
      %v860 = vpack.c.bf16 %v840, %v839
      %v861 = vpack.c.bf16 %v842, %v841
      %v862 = vpack.c.bf16 %v844, %v843
      %v863 = vpack.c.bf16 %v846, %v845
      %v864 = vpack.c.bf16 %v848, %v847
      %v865 = vpack.c.bf16 %v850, %v849
      %v866 = vpack.c.bf16 %v852, %v851
      %v867 = vpack.c.bf16 %v854, %v853
      %v868 = vld [vmem:[%s640] sm:$0x1]
      %v870 = vperm.slane %v868, 0
      %872 = vmatpush.bf16.msra.mxu0 %v867
      %873 = vmatpush.bf16.msra.mxu0 %v866
      %874 = vmatpush.bf16.msra.mxu0 %v865
      %875 = vmatpush.bf16.msra.mxu0 %v864
      %876 = vmatpush.bf16.msra.mxu0 %v863
      %877 = vmatpush.bf16.msra.mxu0 %v862
      %878 = vmatpush.bf16.msra.mxu0 %v861
      %879 = vmatpush.bf16.msra.mxu0 %v860
      %880 = vmatmul.bf16.gmra.mxu0 %v855
      %v881 = vpop.f32.mrf.mxu0
      %v882 = vadd.f32 %v870, %v881
      %v883 = vpop.f32.mrf.mxu0
      %v884 = vadd.f32 %v870, %v883
      %885 = vmatmul.bf16.gmra.mxu0 %v856
      %v886 = vpop.f32.mrf.mxu0
      %v887 = vadd.f32 %v870, %v886
      %v888 = vpop.f32.mrf.mxu0
      %v889 = vadd.f32 %v870, %v888
      %890 = vmatmul.bf16.gmra.mxu0 %v857
      %v891 = vpop.f32.mrf.mxu0
      %v892 = vadd.f32 %v870, %v891
      %v893 = vpop.f32.mrf.mxu0
      %v894 = vadd.f32 %v870, %v893
      %895 = vmatmul.bf16.gmra.mxu0 %v858
      %v896 = vpop.f32.mrf.mxu0
      %v897 = vadd.f32 %v870, %v896
      %v898 = vpop.f32.mrf.mxu0
      %v899 = vadd.f32 %v870, %v898
      %900 = vmatmul.bf16.gmra.mxu0 %v859
      %v901 = vpop.f32.mrf.mxu0
      %v902 = vadd.f32 %v870, %v901
      %v903 = vpop.f32.mrf.mxu0
      %904 = vdwg.mxu0
      %v905 = vmax.f32 %v882, 0.0
      %v906 = vmax.f32 %v884, 0.0
      %v907 = vmax.f32 %v887, 0.0
      %v908 = vmax.f32 %v889, 0.0
      %v909 = vmax.f32 %v892, 0.0
      %v910 = vmax.f32 %v894, 0.0
      %v911 = vmax.f32 %v897, 0.0
      %v912 = vmax.f32 %v899, 0.0
      %v913 = vmax.f32 %v902, 0.0
      %v914 = vld [vmem:[%s645] sm:$0xff]
      %v915 = vld [vmem:[%s645 + $0x8] sm:$0xff]
      %v916 = vld [vmem:[%s645 + $0x10] sm:$0xff]
      %v917 = vld [vmem:[%s645 + $0x18] sm:$0xff]
      %v918 = vld [vmem:[%s645 + $0x20] sm:$0xff]
      %v919 = vld [vmem:[%s645 + $0x28] sm:$0xff]
      %v920 = vld [vmem:[%s645 + $0x30] sm:$0xff]
      %v921 = vld [vmem:[%s645 + $0x38] sm:$0xff]
      %v922 = vld [vmem:[%s645 + $0x40] sm:$0xff]
      %v923 = vld [vmem:[%s645 + $0x48] sm:$0xff]
      %v924 = vld [vmem:[%s645 + $0x50] sm:$0xff]
      %v925 = vld [vmem:[%s645 + $0x58] sm:$0xff]
      %v926 = vld [vmem:[%s645 + $0x60] sm:$0xff]
      %v927 = vld [vmem:[%s645 + $0x68] sm:$0xff]
      %v928 = vld [vmem:[%s645 + $0x70] sm:$0xff]
      %v929 = vld [vmem:[%s645 + $0x78] sm:$0xff]
      %v930 = vpack.c.bf16 %v906, %v905
      %v931 = vpack.c.bf16 %v908, %v907
      %v932 = vpack.c.bf16 %v910, %v909
      %v933 = vpack.c.bf16 %v912, %v911
      %v934 = vpack.c.bf16 %v913, %v913
      %v935 = vpack.c.bf16 %v915, %v914
      %v936 = vpack.c.bf16 %v917, %v916
      %v937 = vpack.c.bf16 %v919, %v918
      %v938 = vpack.c.bf16 %v921, %v920
      %v939 = vpack.c.bf16 %v923, %v922
      %v940 = vpack.c.bf16 %v925, %v924
      %v941 = vpack.c.bf16 %v927, %v926
      %v942 = vpack.c.bf16 %v929, %v928
      %v943 = vld [vmem:[%s648] sm:$0x1]
      %v945 = vperm.slane %v943, 0
      %947 = vmatpush.bf16.msra.mxu0 %v942
      %948 = vmatpush.bf16.msra.mxu0 %v941
      %949 = vmatpush.bf16.msra.mxu0 %v940
      %950 = vmatpush.bf16.msra.mxu0 %v939
      %951 = vmatpush.bf16.msra.mxu0 %v938
      %952 = vmatpush.bf16.msra.mxu0 %v937
      %953 = vmatpush.bf16.msra.mxu0 %v936
      %954 = vmatpush.bf16.msra.mxu0 %v935
      %955 = vmatmul.bf16.gmra.mxu0 %v930
      %v956 = vpop.f32.mrf.mxu0
      %v957 = vadd.f32 %v945, %v956
      %v958 = vpop.f32.mrf.mxu0
      %v959 = vadd.f32 %v945, %v958
      %960 = vmatmul.bf16.gmra.mxu0 %v931
      %v961 = vpop.f32.mrf.mxu0
      %v962 = vadd.f32 %v945, %v961
      %v963 = vpop.f32.mrf.mxu0
      %v964 = vadd.f32 %v945, %v963
      %965 = vmatmul.bf16.gmra.mxu0 %v932
      %v966 = vpop.f32.mrf.mxu0
      %v967 = vadd.f32 %v945, %v966
      %v968 = vpop.f32.mrf.mxu0
      %v969 = vadd.f32 %v945, %v968
      %970 = vmatmul.bf16.gmra.mxu0 %v933
      %v971 = vpop.f32.mrf.mxu0
      %v972 = vadd.f32 %v945, %v971
      %v973 = vpop.f32.mrf.mxu0
      %v974 = vadd.f32 %v945, %v973
      %975 = vmatmul.bf16.gmra.mxu0 %v934
      %v976 = vpop.f32.mrf.mxu0
      %v977 = vadd.f32 %v945, %v976
      %v978 = vpop.f32.mrf.mxu0
      %979 = vdwg.mxu0
      %980 = vadd.xlane.f32.xlu0 %v957
      %v981 = vpop.xlane.xlu0 %980
      %982 = vadd.xlane.f32.xlu0 %v959
      %v983 = vpop.xlane.xlu0 %982
      %984 = vadd.xlane.f32.xlu0 %v962
      %v985 = vpop.xlane.xlu0 %984
      %986 = vadd.xlane.f32.xlu0 %v964
      %v987 = vpop.xlane.xlu0 %986
      %988 = vadd.xlane.f32.xlu0 %v967
      %v989 = vpop.xlane.xlu0 %988
      %990 = vadd.xlane.f32.xlu0 %v969
      %v991 = vpop.xlane.xlu0 %990
      %992 = vadd.xlane.f32.xlu0 %v972
      %v993 = vpop.xlane.xlu0 %992
      %994 = vadd.xlane.f32.xlu0 %v974
      %v995 = vpop.xlane.xlu0 %994
      %996 = vadd.xlane.f32.xlu0 %v977
      %v997 = vpop.xlane.xlu0 %996
      %v998 = vrcp.pop 128.0
      %v999 = vmul.f32 128.0, %v998
      %v1000 = vsub.f32 1.0, %v999
      %v1001 = vmul.f32 %v998, %v1000
      %v1002 = vadd.f32 %v998, %v1001
      %vm1003 = vweird.f32 %v998
      %v1004 = vsel %vm1003, %v998, %v1002
      %v1005 = vmul.f32 %v981, %v1004
      %v1006 = vmul.f32 %v983, %v1004
      %v1007 = vmul.f32 %v985, %v1004
      %v1008 = vmul.f32 %v987, %v1004
      %v1009 = vmul.f32 %v989, %v1004
      %v1010 = vmul.f32 %v991, %v1004
      %v1011 = vmul.f32 %v993, %v1004
      %v1012 = vmul.f32 %v995, %v1004
      %v1013 = vmul.f32 %v997, %v1004
      %v1014 = vsub.f32 %v957, %v1005
      %v1015 = vsub.f32 %v959, %v1006
      %v1016 = vsub.f32 %v962, %v1007
      %v1017 = vsub.f32 %v964, %v1008
      %v1018 = vsub.f32 %v967, %v1009
      %v1019 = vsub.f32 %v969, %v1010
      %v1020 = vsub.f32 %v972, %v1011
      %v1021 = vsub.f32 %v974, %v1012
      %v1022 = vsub.f32 %v977, %v1013
      %v1023 = vmul.f32 %v1014, %v1014
      %v1024 = vmul.f32 %v1015, %v1015
      %v1025 = vmul.f32 %v1016, %v1016
      %v1026 = vmul.f32 %v1017, %v1017
      %v1027 = vmul.f32 %v1018, %v1018
      %v1028 = vmul.f32 %v1019, %v1019
      %v1029 = vmul.f32 %v1020, %v1020
      %v1030 = vmul.f32 %v1021, %v1021
      %v1031 = vmul.f32 %v1022, %v1022
      %1032 = vadd.xlane.f32.xlu0 %v1023
      %v1033 = vpop.xlane.xlu0 %1032
      %1034 = vadd.xlane.f32.xlu0 %v1024
      %v1035 = vpop.xlane.xlu0 %1034
      %1036 = vadd.xlane.f32.xlu0 %v1025
      %v1037 = vpop.xlane.xlu0 %1036
      %1038 = vadd.xlane.f32.xlu0 %v1026
      %v1039 = vpop.xlane.xlu0 %1038
      %1040 = vadd.xlane.f32.xlu0 %v1027
      %v1041 = vpop.xlane.xlu0 %1040
      %1042 = vadd.xlane.f32.xlu0 %v1028
      %v1043 = vpop.xlane.xlu0 %1042
      %1044 = vadd.xlane.f32.xlu0 %v1029
      %v1045 = vpop.xlane.xlu0 %1044
      %1046 = vadd.xlane.f32.xlu0 %v1030
      %v1047 = vpop.xlane.xlu0 %1046
      %1048 = vadd.xlane.f32.xlu0 %v1031
      %v1049 = vpop.xlane.xlu0 %1048
      %v1050 = vmul.f32 %v1033, %v1004
      %v1051 = vmul.f32 %v1035, %v1004
      %v1052 = vmul.f32 %v1037, %v1004
      %v1053 = vmul.f32 %v1039, %v1004
      %v1054 = vmul.f32 %v1041, %v1004
      %v1055 = vmul.f32 %v1043, %v1004
      %v1056 = vmul.f32 %v1045, %v1004
      %v1057 = vmul.f32 %v1047, %v1004
      %v1058 = vmul.f32 %v1049, %v1004
      %v1059 = vadd.f32 %v1050, 1e-05
      %v1060 = vadd.f32 %v1051, 1e-05
      %v1061 = vadd.f32 %v1052, 1e-05
      %v1062 = vadd.f32 %v1053, 1e-05
      %v1063 = vadd.f32 %v1054, 1e-05
      %v1064 = vadd.f32 %v1055, 1e-05
      %v1065 = vadd.f32 %v1056, 1e-05
      %v1066 = vadd.f32 %v1057, 1e-05
      %v1067 = vadd.f32 %v1058, 1e-05
      %v1068 = vrsqrt.pop %v1059
      %v1069 = vmul.f32 %v1068, %v1059
      %v1070 = vmul.f32 %v1069, %v1068
      %v1071 = vmul.f32 0.5, %v1070
      %v1072 = vsub.f32 1.5, %v1071
      %v1073 = vmul.f32 %v1068, %v1072
      %vm1074 = vweird.f32 %v1059
      %vm1075 = vweird.f32 %v1068
      %vm1076 = vmor %vm1074, %vm1075
      %v1077 = vsel %vm1076, %v1068, %v1073
      %v1078 = vrsqrt.pop %v1060
      %v1079 = vmul.f32 %v1078, %v1060
      %v1080 = vmul.f32 %v1079, %v1078
      %v1081 = vmul.f32 0.5, %v1080
      %v1082 = vsub.f32 1.5, %v1081
      %v1083 = vmul.f32 %v1078, %v1082
      %vm1084 = vweird.f32 %v1060
      %vm1085 = vweird.f32 %v1078
      %vm1086 = vmor %vm1084, %vm1085
      %v1087 = vsel %vm1086, %v1078, %v1083
      %v1088 = vrsqrt.pop %v1061
      %v1089 = vmul.f32 %v1088, %v1061
      %v1090 = vmul.f32 %v1089, %v1088
      %v1091 = vmul.f32 0.5, %v1090
      %v1092 = vsub.f32 1.5, %v1091
      %v1093 = vmul.f32 %v1088, %v1092
      %vm1094 = vweird.f32 %v1061
      %vm1095 = vweird.f32 %v1088
      %vm1096 = vmor %vm1094, %vm1095
      %v1097 = vsel %vm1096, %v1088, %v1093
      %v1098 = vrsqrt.pop %v1062
      %v1099 = vmul.f32 %v1098, %v1062
      %v1100 = vmul.f32 %v1099, %v1098
      %v1101 = vmul.f32 0.5, %v1100
      %v1102 = vsub.f32 1.5, %v1101
      %v1103 = vmul.f32 %v1098, %v1102
      %vm1104 = vweird.f32 %v1062
      %vm1105 = vweird.f32 %v1098
      %vm1106 = vmor %vm1104, %vm1105
      %v1107 = vsel %vm1106, %v1098, %v1103
      %v1108 = vrsqrt.pop %v1063
      %v1109 = vmul.f32 %v1108, %v1063
      %v1110 = vmul.f32 %v1109, %v1108
      %v1111 = vmul.f32 0.5, %v1110
      %v1112 = vsub.f32 1.5, %v1111
      %v1113 = vmul.f32 %v1108, %v1112
      %vm1114 = vweird.f32 %v1063
      %vm1115 = vweird.f32 %v1108
      %vm1116 = vmor %vm1114, %vm1115
      %v1117 = vsel %vm1116, %v1108, %v1113
      %v1118 = vrsqrt.pop %v1064
      %v1119 = vmul.f32 %v1118, %v1064
      %v1120 = vmul.f32 %v1119, %v1118
      %v1121 = vmul.f32 0.5, %v1120
      %v1122 = vsub.f32 1.5, %v1121
      %v1123 = vmul.f32 %v1118, %v1122
      %vm1124 = vweird.f32 %v1064
      %vm1125 = vweird.f32 %v1118
      %vm1126 = vmor %vm1124, %vm1125
      %v1127 = vsel %vm1126, %v1118, %v1123
      %v1128 = vrsqrt.pop %v1065
      %v1129 = vmul.f32 %v1128, %v1065
      %v1130 = vmul.f32 %v1129, %v1128
      %v1131 = vmul.f32 0.5, %v1130
      %v1132 = vsub.f32 1.5, %v1131
      %v1133 = vmul.f32 %v1128, %v1132
      %vm1134 = vweird.f32 %v1065
      %vm1135 = vweird.f32 %v1128
      %vm1136 = vmor %vm1134, %vm1135
      %v1137 = vsel %vm1136, %v1128, %v1133
      %v1138 = vrsqrt.pop %v1066
      %v1139 = vmul.f32 %v1138, %v1066
      %v1140 = vmul.f32 %v1139, %v1138
      %v1141 = vmul.f32 0.5, %v1140
      %v1142 = vsub.f32 1.5, %v1141
      %v1143 = vmul.f32 %v1138, %v1142
      %vm1144 = vweird.f32 %v1066
      %vm1145 = vweird.f32 %v1138
      %vm1146 = vmor %vm1144, %vm1145
      %v1147 = vsel %vm1146, %v1138, %v1143
      %v1148 = vrsqrt.pop %v1067
      %v1149 = vmul.f32 %v1148, %v1067
      %v1150 = vmul.f32 %v1149, %v1148
      %v1151 = vmul.f32 0.5, %v1150
      %v1152 = vsub.f32 1.5, %v1151
      %v1153 = vmul.f32 %v1148, %v1152
      %vm1154 = vweird.f32 %v1067
      %vm1155 = vweird.f32 %v1148
      %vm1156 = vmor %vm1154, %vm1155
      %v1157 = vsel %vm1156, %v1148, %v1153
      %v1158 = vmul.f32 %v1014, %v1077
      %v1159 = vmul.f32 %v1015, %v1087
      %v1160 = vmul.f32 %v1016, %v1097
      %v1161 = vmul.f32 %v1017, %v1107
      %v1162 = vmul.f32 %v1018, %v1117
      %v1163 = vmul.f32 %v1019, %v1127
      %v1164 = vmul.f32 %v1020, %v1137
      %v1165 = vmul.f32 %v1021, %v1147
      %v1166 = vmul.f32 %v1022, %v1157
      %v1167 = vld [vmem:[%s651] sm:$0x1]
      %v1169 = vperm.slane %v1167, 0
      %v1171 = vmul.f32 %v1158, %v1169
      %v1172 = vmul.f32 %v1159, %v1169
      %v1173 = vmul.f32 %v1160, %v1169
      %v1174 = vmul.f32 %v1161, %v1169
      %v1175 = vmul.f32 %v1162, %v1169
      %v1176 = vmul.f32 %v1163, %v1169
      %v1177 = vmul.f32 %v1164, %v1169
      %v1178 = vmul.f32 %v1165, %v1169
      %v1179 = vmul.f32 %v1166, %v1169
      %v1180 = vld [vmem:[%s654] sm:$0x1]
      %v1182 = vperm.slane %v1180, 0
      %v1184 = vadd.f32 %v1171, %v1182
      %v1185 = vadd.f32 %v1172, %v1182
      %v1186 = vadd.f32 %v1173, %v1182
      %v1187 = vadd.f32 %v1174, %v1182
      %v1188 = vadd.f32 %v1175, %v1182
      %v1189 = vadd.f32 %v1176, %v1182
      %v1190 = vadd.f32 %v1177, %v1182
      %v1191 = vadd.f32 %v1178, %v1182
      %v1192 = vadd.f32 %v1179, %v1182
      %v1193 = vld [vmem:[%s663] sm:$0xff]
      %v1194 = vld [vmem:[%s663 + $0x8] sm:$0xff]
      %v1195 = vld [vmem:[%s663 + $0x10] sm:$0xff]
      %v1196 = vld [vmem:[%s663 + $0x18] sm:$0xff]
      %v1197 = vld [vmem:[%s663 + $0x20] sm:$0xff]
      %v1198 = vld [vmem:[%s663 + $0x28] sm:$0xff]
      %v1199 = vld [vmem:[%s663 + $0x30] sm:$0xff]
      %v1200 = vld [vmem:[%s663 + $0x38] sm:$0xff]
      %v1201 = vld [vmem:[%s663 + $0x40] sm:$0xff]
      %v1202 = vadd.f32 %v1184, %v1193
      %v1203 = vadd.f32 %v1185, %v1194
      %v1204 = vadd.f32 %v1186, %v1195
      %v1205 = vadd.f32 %v1187, %v1196
      %v1206 = vadd.f32 %v1188, %v1197
      %v1207 = vadd.f32 %v1189, %v1198
      %v1208 = vadd.f32 %v1190, %v1199
      %v1209 = vadd.f32 %v1191, %v1200
      %v1210 = vadd.f32 %v1192, %v1201
      %1211 = vst [vmem:[%s673] sm:$0xff] %v1202
      %1212 = vst [vmem:[%s673 + $0x8] sm:$0xff] %v1203
      %1213 = vst [vmem:[%s673 + $0x10] sm:$0xff] %v1204
      %1214 = vst [vmem:[%s673 + $0x18] sm:$0xff] %v1205
      %1215 = vst [vmem:[%s673 + $0x20] sm:$0xff] %v1206
      %1216 = vst [vmem:[%s673 + $0x28] sm:$0xff] %v1207
      %1217 = vst [vmem:[%s673 + $0x30] sm:$0xff] %v1208
      %1218 = vst [vmem:[%s673 + $0x38] sm:$0xff] %v1209
      %1219 = vst [vmem:[%s673 + $0x40] sm:$0xff] %v1210
      %s1220 = smul.u32 9, %s28
      %p1221 = scmp.lt.s32.totalorder %s27, 1
      %s1222 = scalar_select %p1221, %s27, 1
      %p1223 = scmp.lt.s32.totalorder %s1220, 8
      %s1224 = scalar_select %p1223, %s1220, 8
      %s1225 = smul.addr %s1222, 9
      %s1226 = sadd.s32 %s1224, %s1225
      %s1227 = smul.addr %s1226, 8
      %s1228 = scalar_lea.vmem %s12, %s1227
      // Predicated region
      $region69: #{model_forward.10} parent=67 // pred_check
        %p1229 = pneg %p373
      $region70: #{model_forward.10} parent=67 // pred_check_branch
        %1231 = sbr.rel (%p1229) target = $region72
      $region71: #{model_forward.10} parent=67 // pred_region
        %s1232 = smul.u32 9, %s28
      $region72: #{model_forward.10} parent=67 // pred_fallthru
        _
    $region68: #{model_forward.10} parent=5 // pred_fallthru
      _
    %p1233 = scmp.le.s32.totalorder 2, %s18
    // Predicated region
    $region73: #{model_forward.10} parent=5 // pred_check
      %p1234 = pneg %p1233
    $region74: #{model_forward.10} parent=5 // pred_check_branch
      %1236 = sbr.rel (%p1234) target = $region76
    $region75: #{model_forward.10} parent=5 // pred_region
      %s1237 = ssub.s32 %s18, 2
      // Predicated region
      $region77: #{model_forward.10} parent=75 // pred_check
        %p1238 = pneg %p379
      $region78: #{model_forward.10} parent=75 // pred_check_branch
        %1240 = sbr.rel (%p1238) target = $region80
      $region79: #{model_forward.10} parent=75 // pred_region
        %s1241 = smul.u32 9, %s30
        %p1242 = scmp.lt.s32.totalorder %s29, 1
        %s1243 = scalar_select %p1242, %s29, 1
        %p1244 = scmp.lt.s32.totalorder %s1241, 8
        %s1245 = scalar_select %p1244, %s1241, 8
        %s1246 = smul.addr %s1243, 9
        %s1247 = sadd.s32 %s1245, %s1246
        %s1248 = smul.addr %s1247, 8
        %s1249 = scalar_lea.vmem %s12, %s1248
      $region80: #{model_forward.10} parent=75 // pred_fallthru
        _
    $region76: #{model_forward.10} parent=5 // pred_fallthru
      _
  $region6: #{model_forward.10} parent=0 // loop_footer
    %s22 = sadd.s32 1, %s18
  $region7: #{model_forward.10} parent=0 // loop_footer_branch
    %17 = sbr.rel target = $region3
  $region8: #{model_forward.10} parent=0 // loop_exit
    _

</llo_original>
